<compile_context>
chip_gen: v7x
topology: tpu7x:2x2x1
jax: 0.10.0
libtpu: 0.0.40
codegen_flags: <defaults>
</compile_context>

<pallas_src>
import math

import numpy as np
import jax
import jax.numpy as jnp
from jax.experimental import pallas as pl
from jax.experimental.pallas import tpu as pltpu

WEIGHT_DTYPE = jnp.bfloat16          # MXU-native weights, f32 accumulation
LANE_PAD = 128                       # 100 blocks padded to a full lane width
CLS_ROW_TILE = 512                   # K3 row tile (~20 MiB live, fits v7x)
VMEM_LIMIT = 48 * 1024 * 1024        # scoped VMEM budget (<= v7x 64 MiB)
_EPS = 1e-12                         # guard for the degenerate max == min case


def _mosaic_params():
    return pltpu.CompilerParams(
        dimension_semantics=("parallel",),
        vmem_limit_bytes=VMEM_LIMIT,
    )


def _pick_tile(total, tile):
    """Whole array if it fits in one block, else the fixed aligned tile."""
    if total <= tile:
        return total, 1
    return tile, pl.cdiv(total, tile)


def _pick_bt(batch):
    """Images per K2 grid step: divide the batch and keep >= 2 grid steps."""
    for bt in (8, 4, 2):
        if batch % bt == 0 and batch // bt >= 2:
            return bt
    return 1


# --------------------- fused block-MLP + attention kernel -------------------

def _make_attention_kernel(bt, n_block_layers, n_attn_layers, n_blocks):
    n_w = n_block_layers + n_attn_layers

    def kernel(bias_ref, x_ref, valid_ref, g_ref, *refs):
        blk_w = refs[:n_block_layers]
        att_w = refs[n_block_layers:n_w]
        o_ref = refs[n_w]

        win, lanes = valid_ref.shape
        lane_idx = jax.lax.broadcasted_iota(jnp.int32, (1, lanes), 1)
        col_valid = lane_idx < n_blocks                      # (1, lanes)
        valid_win = valid_ref[...] > 0.5                     # (win, lanes)
        bias2 = bias_ref[0, 0] ** 2                          # SMEM scalar
        xs = x_ref[...] * 255.0 + 100.0                      # (bt, 9, lanes)

        out_rows = []
        for img in range(bt):
            # --- block-identification MLP (transposed: h = W @ h) ---
            h = xs[img].astype(WEIGHT_DTYPE)                 # (9, lanes)
            for li, w in enumerate(blk_w):
                h = jnp.dot(w[...], h, preferred_element_type=jnp.float32)
                if li < n_block_layers - 1:
                    h = jnp.maximum(h, 0.0).astype(WEIGHT_DTYPE)
            b_raw = h                                        # (1, lanes) f32

            # --- per-image min-max -> [100, 355] (exact division) ---
            mx = jnp.max(jnp.where(col_valid, b_raw, -jnp.inf),
                         axis=1, keepdims=True)
            mn = jnp.min(jnp.where(col_valid, b_raw, jnp.inf),
                         axis=1, keepdims=True)
            b_norm = (b_raw - mn) * (255.0 / (mx - mn + _EPS)) + 100.0
            bnb = b_norm.astype(WEIGHT_DTYPE)                # (1, lanes)

            # --- 5x5-window gather as 25 static 0/1 matmuls ---
            g_rows = [jnp.dot(bnb, g_ref[c], preferred_element_type=jnp.float32)
                      for c in range(win)]
            gathered = jnp.concatenate(g_rows, axis=0)       # (win, lanes)
            n = jnp.where(valid_win, gathered, -1.0)         # -1 == ref fill

            # --- attention MLP (transposed), ReLU + bf16 cast between ---
            h = n.astype(WEIGHT_DTYPE)
            for li, w in enumerate(att_w):
                h = jnp.dot(w[...], h, preferred_element_type=jnp.float32)
                if li < n_attn_layers - 1:
                    h = jnp.maximum(h, 0.0).astype(WEIGHT_DTYPE)

            # --- epilogue: min-max [0,1], bias^2, ReLU, zero pad lanes ---
            e_mx = jnp.max(jnp.where(col_valid, h, -jnp.inf),
                           axis=1, keepdims=True)
            e_mn = jnp.min(jnp.where(col_valid, h, jnp.inf),
                           axis=1, keepdims=True)
            e = (h - e_mn) / (e_mx - e_mn + _EPS)
            e = jnp.maximum(e - bias2, 0.0)
            e = jnp.where(col_valid, e, 0.0)
            out_rows.append(e[None])                         # (1, 1, lanes)

        o_ref[...] = jnp.concatenate(out_rows, axis=0).astype(o_ref.dtype)

    return kernel


def attention_scores(bias, patches, valid_t, gather_t, block_w, attn_w, n_blocks):
    batch, feat, lanes = patches.shape
    bt = _pick_bt(batch)
    kernel = _make_attention_kernel(bt, len(block_w), len(attn_w), n_blocks)
    weights = list(block_w) + list(attn_w)
    in_specs = [
        pl.BlockSpec(memory_space=pltpu.MemorySpace.SMEM),        # bias (1,1)
        pl.BlockSpec((bt, feat, lanes), lambda i: (i, 0, 0)),     # patches
        pl.BlockSpec(valid_t.shape, lambda i: (0, 0)),            # resident
        pl.BlockSpec(gather_t.shape, lambda i: (0, 0, 0)),        # resident
    ] + [pl.BlockSpec(w.shape, lambda i: (0, 0)) for w in weights]
    return pl.pallas_call(
        kernel,
        grid=(batch // bt,),
        in_specs=in_specs,
        out_specs=pl.BlockSpec((bt, 1, lanes), lambda i: (i, 0, 0)),
        out_shape=jax.ShapeDtypeStruct((batch, 1, lanes), jnp.float32),
        compiler_params=_mosaic_params(),
    )(bias, patches, valid_t, gather_t, *weights)


# ----------------------- gating + classification kernel ---------------------

def _classify_kernel(x_ref, e_ref, r_ref, *refs):
    """x_ref: (T, 900) raw pixels, e_ref: (T, 128) padded attention map,
    r_ref: (128, 900) static bf16 0/1 block->pixel expansion (pad rows zero).
    Computes (x*255+100) * repeat3x3(e) and the classification MLP."""
    w_refs, o_ref = refs[:-1], refs[-1]
    xs = x_ref[...] * 255.0 + 100.0
    e_pix = jnp.dot(e_ref[...].astype(WEIGHT_DTYPE), r_ref[...],
                    preferred_element_type=jnp.float32)      # exact expansion
    h = (xs * e_pix).astype(WEIGHT_DTYPE)
    for i, w_ref in enumerate(w_refs):
        h = jnp.dot(h, w_ref[...], preferred_element_type=jnp.float32)
        if i < len(w_refs) - 1:
            h = jnp.maximum(h, 0.0).astype(WEIGHT_DTYPE)
    o_ref[...] = h.astype(o_ref.dtype)


def classify(x, e, r_expand, weights):
    batch = x.shape[0]
    out_dim = weights[-1].shape[1]
    tile, grid = _pick_tile(batch, CLS_ROW_TILE)
    in_specs = [
        pl.BlockSpec((tile, x.shape[1]), lambda i: (i, 0)),
        pl.BlockSpec((tile, e.shape[1]), lambda i: (i, 0)),
        pl.BlockSpec(r_expand.shape, lambda i: (0, 0)),
    ] + [pl.BlockSpec(w.shape, lambda i: (0, 0)) for w in weights]
    return pl.pallas_call(
        _classify_kernel,
        grid=(grid,),
        in_specs=in_specs,
        out_specs=pl.BlockSpec((tile, out_dim), lambda i: (i, 0)),
        out_shape=jax.ShapeDtypeStruct((batch, out_dim), jnp.float32),
        compiler_params=_mosaic_params(),
    )(x, e, r_expand, *weights)


# ------------------------------ static setup --------------------------------

def build_window_gather(n_nodes=100, window_radius=2, lanes=LANE_PAD):
    """0/1 gather tensor G (win, lanes, lanes) with G[cell, src, node] = 1 iff
    `src` is the in-window neighbour of `node` at window offset `cell`, plus
    the (win, lanes) validity mask.  Equivalent to the PyTorch
    BA[BA != 0] / masked_scatter construction: both enumerate in-window
    neighbours in ascending node order and the normalized scores lie in
    [100, 355] (never zero); out-of-window cells stay at -1."""
    side = int(np.sqrt(n_nodes))
    win = (2 * window_radius + 1) ** 2
    g = np.zeros((win, lanes, lanes), np.float32)
    valid = np.zeros((win, lanes), np.float32)
    for node in range(n_nodes):
        row, col = divmod(node, side)
        cell = 0
        for i in range(-window_radius, window_radius + 1):
            for j in range(-window_radius, window_radius + 1):
                r, c = row + i, col + j
                if 0 <= r < side and 0 <= c < side:
                    g[cell, r * side + c, node] = 1.0
                    valid[cell, node] = 1.0
                cell += 1
    return jnp.asarray(g, WEIGHT_DTYPE), jnp.asarray(valid, jnp.float32)


def build_expand_matrix(image_size=30, lanes=LANE_PAD):
    """Static 0/1 matrix R (128, 900), rows >= 100 zero: e @ R equals
    repeat_interleave(e.reshape(10,10), 3, dim=0/1).flatten().  Stored bf16
    (exact for 0/1 values)."""
    side = image_size // 3
    r_mat = np.zeros((lanes, image_size * image_size), np.float32)
    for p in range(image_size * image_size):
        r, c = divmod(p, image_size)
        r_mat[(r // 3) * side + (c // 3), p] = 1.0
    return jnp.asarray(r_mat, WEIGHT_DTYPE)


def init_params(key, window_radius=2):
    """Synthetic parameters mirroring PyTorch Linear(bias=False) default init:
    uniform(-1/sqrt(fan_in), 1/sqrt(fan_in)).  Stored in bf16 in the layout
    each kernel consumes ((out,in) for the block/attention MLPs, (in,out) for
    the classification MLP)."""
    def chain(key, dims, out_in):
        ws = []
        for fan_in, fan_out in zip(dims[:-1], dims[1:]):
            key, sub = jax.random.split(key)
            bound = 1.0 / math.sqrt(fan_in)
            shape = (fan_out, fan_in) if out_in else (fan_in, fan_out)
            w = jax.random.uniform(sub, shape, jnp.float32, -bound, bound)
            ws.append(w.astype(WEIGHT_DTYPE))
        return key, ws

    win = (2 * window_radius + 1) ** 2
    key, block_w = chain(key, [9, 128, 32, 16, 1], out_in=True)
    key, attn_w = chain(key, [win, 128, 64, 32, 16, 1], out_in=True)
    key, cls_w = chain(key, [900, 1024, 512, 128, 64, 10], out_in=False)
    gather_t, valid_t = build_window_gather(100, window_radius, LANE_PAD)
    return {
        "block_w": block_w,
        "attn_w": attn_w,
        "cls_w": cls_w,
        "relu_attention_bias": jnp.full((1, 1), 1e-16, jnp.float32),
        "gather_t": gather_t,
        "valid_t": valid_t,
        "r_expand": build_expand_matrix(30, LANE_PAD),
    }


# ------------------------------ forward pass --------------------------------

def lighter_forward(params, X, A):
    del A  # A is accepted but never used in the reference forward pass.
    batch = X.shape[0]
    image_size = int(math.sqrt(X.shape[1]))   # 30
    side = image_size // 3                    # 10 blocks per side
    n_blocks = side * side                    # 100
    lanes = LANE_PAD                          # 128

    # Layout plumbing (pure index shuffle + pad): 3x3 patches with features on
    # sublanes, blocks on (padded) lanes: (batch, 9, 128).
    img = X.reshape(batch, side, 3, side, 3)
    patches = img.transpose(0, 2, 4, 1, 3).reshape(batch, 9, n_blocks)
    patches = jnp.pad(patches, ((0, 0), (0, 0), (0, lanes - n_blocks)))

    # Fused kernel: block MLP -> min-max -> window gather -> attention MLP
    # -> min-max / bias^2 / ReLU.  Output is lane-padded (batch, 1, 128).
    e = attention_scores(params["relu_attention_bias"], patches,
                         params["valid_t"], params["gather_t"],
                         params["block_w"], params["attn_w"], n_blocks)
    e = e.reshape(batch, lanes)               # metadata-only reshape

    # Gating (in-kernel 3x3 expansion, bf16) + classification MLP.
    return classify(X, e, params["r_expand"], params["cls_w"])


# ---------------------------------- main -------------------------------------

if __name__ == "__main__":
    key = jax.random.PRNGKey(0)
    pkey, xkey = jax.random.split(key)
    params = init_params(pkey, window_radius=2)

    batch = 2
    X = jax.random.uniform(xkey, (batch, 900), jnp.float32)   # (B, 900) image
    A = jnp.zeros((batch, 100, 100), jnp.float32)              # unused by ref

    out = jax.jit(lighter_forward)(params, X, A)
    out = jax.block_until_ready(out)
    assert out.shape == (batch, 10) and out.dtype == jnp.float32
    assert bool(jnp.all(jnp.isfinite(out)))
    print("KERNEL_OK")
</pallas_src>

<mosaic_0001>
module attributes {stable_mosaic.version = 11 : i64} {
  func.func @kernel(%arg0: i32, %arg1: memref<1x1xf32, #tpu.memory_space<smem>>, %arg2: memref<1x9x128xf32, #tpu.memory_space<vmem>>, %arg3: memref<25x128xf32, #tpu.memory_space<vmem>>, %arg4: memref<25x128x128xbf16, #tpu.memory_space<vmem>>, %arg5: memref<128x9xbf16, #tpu.memory_space<vmem>>, %arg6: memref<32x128xbf16, #tpu.memory_space<vmem>>, %arg7: memref<16x32xbf16, #tpu.memory_space<vmem>>, %arg8: memref<1x16xbf16, #tpu.memory_space<vmem>>, %arg9: memref<128x25xbf16, #tpu.memory_space<vmem>>, %arg10: memref<64x128xbf16, #tpu.memory_space<vmem>>, %arg11: memref<32x64xbf16, #tpu.memory_space<vmem>>, %arg12: memref<16x32xbf16, #tpu.memory_space<vmem>>, %arg13: memref<1x16xbf16, #tpu.memory_space<vmem>>, %arg14: memref<1x1x128xf32, #tpu.memory_space<vmem>>) attributes {dimension_semantics = [#tpu.dimension_semantics<parallel>], iteration_bounds = array<i64: 2>, scalar_prefetch = 0 : i64, scratch_operands = 0 : i64, tpu.core_type = #tpu.core_type<tc>, window_params = [{transform_indices = @transform_0, window_bounds = array<i64: 1, 1>}, {transform_indices = @transform_1, window_bounds = array<i64: 1, 9, 128>}, {pipeline_mode = #tpu.pipeline_mode<synchronous>, transform_indices = @transform_2, window_bounds = array<i64: 25, 128>}, {pipeline_mode = #tpu.pipeline_mode<synchronous>, transform_indices = @transform_3, window_bounds = array<i64: 25, 128, 128>}, {pipeline_mode = #tpu.pipeline_mode<synchronous>, transform_indices = @transform_4, window_bounds = array<i64: 128, 9>}, {pipeline_mode = #tpu.pipeline_mode<synchronous>, transform_indices = @transform_5, window_bounds = array<i64: 32, 128>}, {pipeline_mode = #tpu.pipeline_mode<synchronous>, transform_indices = @transform_6, window_bounds = array<i64: 16, 32>}, {pipeline_mode = #tpu.pipeline_mode<synchronous>, transform_indices = @transform_7, window_bounds = array<i64: 1, 16>}, {pipeline_mode = #tpu.pipeline_mode<synchronous>, transform_indices = @transform_8, window_bounds = array<i64: 128, 25>}, {pipeline_mode = #tpu.pipeline_mode<synchronous>, transform_indices = @transform_9, window_bounds = array<i64: 64, 128>}, {pipeline_mode = #tpu.pipeline_mode<synchronous>, transform_indices = @transform_10, window_bounds = array<i64: 32, 64>}, {pipeline_mode = #tpu.pipeline_mode<synchronous>, transform_indices = @transform_11, window_bounds = array<i64: 16, 32>}, {pipeline_mode = #tpu.pipeline_mode<synchronous>, transform_indices = @transform_12, window_bounds = array<i64: 1, 16>}, {transform_indices = @transform_13, window_bounds = array<i64: 1, 1, 128>}]} {
    %0 = tpu.iota {dimensions = array<i32: 1>} : vector<1x128xi32>
    %c100_i32 = arith.constant 100 : i32
    %1 = vector.broadcast %c100_i32 : i32 to vector<1x128xi32>
    %2 = arith.cmpi slt, %0, %1 : vector<1x128xi32>
    %c0 = arith.constant 0 : index
    %c0_0 = arith.constant 0 : index
    %3 = vector.load %arg3[%c0, %c0_0] : memref<25x128xf32, #tpu.memory_space<vmem>>, vector<25x128xf32>
    %cst = arith.constant 5.000000e-01 : f32
    %4 = vector.broadcast %cst : f32 to vector<25x128xf32>
    %5 = arith.cmpf ogt, %3, %4 : vector<25x128xf32>
    %c0_1 = arith.constant 0 : index
    %c0_2 = arith.constant 0 : index
    %6 = memref.load %arg1[%c0_1, %c0_2] : memref<1x1xf32, #tpu.memory_space<smem>>
    %7 = arith.mulf %6, %6 : f32
    %c0_3 = arith.constant 0 : index
    %c0_4 = arith.constant 0 : index
    %c0_5 = arith.constant 0 : index
    %8 = vector.load %arg2[%c0_3, %c0_4, %c0_5] : memref<1x9x128xf32, #tpu.memory_space<vmem>>, vector<1x9x128xf32>
    %cst_6 = arith.constant 2.550000e+02 : f32
    %9 = vector.broadcast %cst_6 : f32 to vector<1x9x128xf32>
    %10 = arith.mulf %8, %9 : vector<1x9x128xf32>
    %cst_7 = arith.constant 1.000000e+02 : f32
    %11 = vector.broadcast %cst_7 : f32 to vector<1x9x128xf32>
    %12 = arith.addf %10, %11 : vector<1x9x128xf32>
    %13 = vector.shape_cast %12 : vector<1x9x128xf32> to vector<9x128xf32>
    %14 = arith.truncf %13 : vector<9x128xf32> to vector<9x128xbf16>
    %c0_8 = arith.constant 0 : index
    %c0_9 = arith.constant 0 : index
    %15 = vector.load %arg5[%c0_8, %c0_9] : memref<128x9xbf16, #tpu.memory_space<vmem>>, vector<128x9xbf16>
    %cst_10 = arith.constant dense<0.000000e+00> : vector<128x128xf32>
    %16 = tpu.matmul %15, %14, %cst_10 {dimension_numbers = #tpu.dot_dimension_numbers<[1], [0], [0], [1], [0, 0, 1, 1], [], []>} : vector<128x9xbf16>, vector<9x128xbf16>, vector<128x128xf32> -> vector<128x128xf32>
    %cst_11 = arith.constant 0.000000e+00 : f32
    %17 = vector.broadcast %cst_11 : f32 to vector<128x128xf32>
    %18 = arith.maximumf %16, %17 : vector<128x128xf32>
    %19 = arith.truncf %18 : vector<128x128xf32> to vector<128x128xbf16>
    %c0_12 = arith.constant 0 : index
    %c0_13 = arith.constant 0 : index
    %20 = vector.load %arg6[%c0_12, %c0_13] : memref<32x128xbf16, #tpu.memory_space<vmem>>, vector<32x128xbf16>
    %cst_14 = arith.constant dense<0.000000e+00> : vector<32x128xf32>
    %21 = tpu.matmul %20, %19, %cst_14 {dimension_numbers = #tpu.dot_dimension_numbers<[1], [0], [0], [1], [0, 0, 1, 1], [], []>} : vector<32x128xbf16>, vector<128x128xbf16>, vector<32x128xf32> -> vector<32x128xf32>
    %cst_15 = arith.constant 0.000000e+00 : f32
    %22 = vector.broadcast %cst_15 : f32 to vector<32x128xf32>
    %23 = arith.maximumf %21, %22 : vector<32x128xf32>
    %24 = arith.truncf %23 : vector<32x128xf32> to vector<32x128xbf16>
    %c0_16 = arith.constant 0 : index
    %c0_17 = arith.constant 0 : index
    %25 = vector.load %arg7[%c0_16, %c0_17] : memref<16x32xbf16, #tpu.memory_space<vmem>>, vector<16x32xbf16>
    %cst_18 = arith.constant dense<0.000000e+00> : vector<16x128xf32>
    %26 = tpu.matmul %25, %24, %cst_18 {dimension_numbers = #tpu.dot_dimension_numbers<[1], [0], [0], [1], [0, 0, 1, 1], [], []>} : vector<16x32xbf16>, vector<32x128xbf16>, vector<16x128xf32> -> vector<16x128xf32>
    %cst_19 = arith.constant 0.000000e+00 : f32
    %27 = vector.broadcast %cst_19 : f32 to vector<16x128xf32>
    %28 = arith.maximumf %26, %27 : vector<16x128xf32>
    %29 = arith.truncf %28 : vector<16x128xf32> to vector<16x128xbf16>
    %c0_20 = arith.constant 0 : index
    %c0_21 = arith.constant 0 : index
    %30 = vector.load %arg8[%c0_20, %c0_21] : memref<1x16xbf16, #tpu.memory_space<vmem>>, vector<1x16xbf16>
    %cst_22 = arith.constant dense<0.000000e+00> : vector<1x128xf32>
    %31 = tpu.matmul %30, %29, %cst_22 {dimension_numbers = #tpu.dot_dimension_numbers<[1], [0], [0], [1], [0, 0, 1, 1], [], []>} : vector<1x16xbf16>, vector<16x128xbf16>, vector<1x128xf32> -> vector<1x128xf32>
    %cst_23 = arith.constant 0xFF800000 : f32
    %32 = vector.broadcast %cst_23 : f32 to vector<1x128xf32>
    %33 = arith.select %2, %31, %32 : vector<1x128xi1>, vector<1x128xf32>
    %cst_24 = arith.constant dense<0xFF800000> : vector<1xf32>
    %34 = vector.multi_reduction <maximumf>, %33, %cst_24 [1] : vector<1x128xf32> to vector<1xf32>
    %35 = vector.shape_cast %34 : vector<1xf32> to vector<1x1xf32>
    %cst_25 = arith.constant 0x7F800000 : f32
    %36 = vector.broadcast %cst_25 : f32 to vector<1x128xf32>
    %37 = arith.select %2, %31, %36 : vector<1x128xi1>, vector<1x128xf32>
    %cst_26 = arith.constant dense<0x7F800000> : vector<1xf32>
    %38 = vector.multi_reduction <minimumf>, %37, %cst_26 [1] : vector<1x128xf32> to vector<1xf32>
    %39 = vector.shape_cast %38 : vector<1xf32> to vector<1x1xf32>
    %40 = vector.broadcast %39 : vector<1x1xf32> to vector<1x128xf32>
    %41 = arith.subf %31, %40 : vector<1x128xf32>
    %42 = arith.subf %35, %39 : vector<1x1xf32>
    %cst_27 = arith.constant 9.99999996E-13 : f32
    %43 = vector.broadcast %cst_27 : f32 to vector<1x1xf32>
    %44 = arith.addf %42, %43 : vector<1x1xf32>
    %cst_28 = arith.constant 2.550000e+02 : f32
    %45 = vector.broadcast %cst_28 : f32 to vector<1x1xf32>
    %46 = arith.divf %45, %44 : vector<1x1xf32>
    %47 = vector.broadcast %46 : vector<1x1xf32> to vector<1x128xf32>
    %48 = arith.mulf %41, %47 : vector<1x128xf32>
    %cst_29 = arith.constant 1.000000e+02 : f32
    %49 = vector.broadcast %cst_29 : f32 to vector<1x128xf32>
    %50 = arith.addf %48, %49 : vector<1x128xf32>
    %51 = arith.truncf %50 : vector<1x128xf32> to vector<1x128xbf16>
    %c0_30 = arith.constant 0 : index
    %c0_31 = arith.constant 0 : index
    %c0_32 = arith.constant 0 : index
    %52 = vector.load %arg4[%c0_30, %c0_31, %c0_32] : memref<25x128x128xbf16, #tpu.memory_space<vmem>>, vector<1x128x128xbf16>
    %53 = vector.shape_cast %52 : vector<1x128x128xbf16> to vector<128x128xbf16>
    %cst_33 = arith.constant dense<0.000000e+00> : vector<1x128xf32>
    %54 = tpu.matmul %51, %53, %cst_33 {dimension_numbers = #tpu.dot_dimension_numbers<[1], [0], [0], [1], [0, 0, 1, 1], [], []>} : vector<1x128xbf16>, vector<128x128xbf16>, vector<1x128xf32> -> vector<1x128xf32>
    %c1 = arith.constant 1 : index
    %c0_34 = arith.constant 0 : index
    %c0_35 = arith.constant 0 : index
    %55 = vector.load %arg4[%c1, %c0_34, %c0_35] : memref<25x128x128xbf16, #tpu.memory_space<vmem>>, vector<1x128x128xbf16>
    %56 = vector.shape_cast %55 : vector<1x128x128xbf16> to vector<128x128xbf16>
    %cst_36 = arith.constant dense<0.000000e+00> : vector<1x128xf32>
    %57 = tpu.matmul %51, %56, %cst_36 {dimension_numbers = #tpu.dot_dimension_numbers<[1], [0], [0], [1], [0, 0, 1, 1], [], []>} : vector<1x128xbf16>, vector<128x128xbf16>, vector<1x128xf32> -> vector<1x128xf32>
    %c2 = arith.constant 2 : index
    %c0_37 = arith.constant 0 : index
    %c0_38 = arith.constant 0 : index
    %58 = vector.load %arg4[%c2, %c0_37, %c0_38] : memref<25x128x128xbf16, #tpu.memory_space<vmem>>, vector<1x128x128xbf16>
    %59 = vector.shape_cast %58 : vector<1x128x128xbf16> to vector<128x128xbf16>
    %cst_39 = arith.constant dense<0.000000e+00> : vector<1x128xf32>
    %60 = tpu.matmul %51, %59, %cst_39 {dimension_numbers = #tpu.dot_dimension_numbers<[1], [0], [0], [1], [0, 0, 1, 1], [], []>} : vector<1x128xbf16>, vector<128x128xbf16>, vector<1x128xf32> -> vector<1x128xf32>
    %c3 = arith.constant 3 : index
    %c0_40 = arith.constant 0 : index
    %c0_41 = arith.constant 0 : index
    %61 = vector.load %arg4[%c3, %c0_40, %c0_41] : memref<25x128x128xbf16, #tpu.memory_space<vmem>>, vector<1x128x128xbf16>
    %62 = vector.shape_cast %61 : vector<1x128x128xbf16> to vector<128x128xbf16>
    %cst_42 = arith.constant dense<0.000000e+00> : vector<1x128xf32>
    %63 = tpu.matmul %51, %62, %cst_42 {dimension_numbers = #tpu.dot_dimension_numbers<[1], [0], [0], [1], [0, 0, 1, 1], [], []>} : vector<1x128xbf16>, vector<128x128xbf16>, vector<1x128xf32> -> vector<1x128xf32>
    %c4 = arith.constant 4 : index
    %c0_43 = arith.constant 0 : index
    %c0_44 = arith.constant 0 : index
    %64 = vector.load %arg4[%c4, %c0_43, %c0_44] : memref<25x128x128xbf16, #tpu.memory_space<vmem>>, vector<1x128x128xbf16>
    %65 = vector.shape_cast %64 : vector<1x128x128xbf16> to vector<128x128xbf16>
    %cst_45 = arith.constant dense<0.000000e+00> : vector<1x128xf32>
    %66 = tpu.matmul %51, %65, %cst_45 {dimension_numbers = #tpu.dot_dimension_numbers<[1], [0], [0], [1], [0, 0, 1, 1], [], []>} : vector<1x128xbf16>, vector<128x128xbf16>, vector<1x128xf32> -> vector<1x128xf32>
    %c5 = arith.constant 5 : index
    %c0_46 = arith.constant 0 : index
    %c0_47 = arith.constant 0 : index
    %67 = vector.load %arg4[%c5, %c0_46, %c0_47] : memref<25x128x128xbf16, #tpu.memory_space<vmem>>, vector<1x128x128xbf16>
    %68 = vector.shape_cast %67 : vector<1x128x128xbf16> to vector<128x128xbf16>
    %cst_48 = arith.constant dense<0.000000e+00> : vector<1x128xf32>
    %69 = tpu.matmul %51, %68, %cst_48 {dimension_numbers = #tpu.dot_dimension_numbers<[1], [0], [0], [1], [0, 0, 1, 1], [], []>} : vector<1x128xbf16>, vector<128x128xbf16>, vector<1x128xf32> -> vector<1x128xf32>
    %c6 = arith.constant 6 : index
    %c0_49 = arith.constant 0 : index
    %c0_50 = arith.constant 0 : index
    %70 = vector.load %arg4[%c6, %c0_49, %c0_50] : memref<25x128x128xbf16, #tpu.memory_space<vmem>>, vector<1x128x128xbf16>
    %71 = vector.shape_cast %70 : vector<1x128x128xbf16> to vector<128x128xbf16>
    %cst_51 = arith.constant dense<0.000000e+00> : vector<1x128xf32>
    %72 = tpu.matmul %51, %71, %cst_51 {dimension_numbers = #tpu.dot_dimension_numbers<[1], [0], [0], [1], [0, 0, 1, 1], [], []>} : vector<1x128xbf16>, vector<128x128xbf16>, vector<1x128xf32> -> vector<1x128xf32>
    %c7 = arith.constant 7 : index
    %c0_52 = arith.constant 0 : index
    %c0_53 = arith.constant 0 : index
    %73 = vector.load %arg4[%c7, %c0_52, %c0_53] : memref<25x128x128xbf16, #tpu.memory_space<vmem>>, vector<1x128x128xbf16>
    %74 = vector.shape_cast %73 : vector<1x128x128xbf16> to vector<128x128xbf16>
    %cst_54 = arith.constant dense<0.000000e+00> : vector<1x128xf32>
    %75 = tpu.matmul %51, %74, %cst_54 {dimension_numbers = #tpu.dot_dimension_numbers<[1], [0], [0], [1], [0, 0, 1, 1], [], []>} : vector<1x128xbf16>, vector<128x128xbf16>, vector<1x128xf32> -> vector<1x128xf32>
    %c8 = arith.constant 8 : index
    %c0_55 = arith.constant 0 : index
    %c0_56 = arith.constant 0 : index
    %76 = vector.load %arg4[%c8, %c0_55, %c0_56] : memref<25x128x128xbf16, #tpu.memory_space<vmem>>, vector<1x128x128xbf16>
    %77 = vector.shape_cast %76 : vector<1x128x128xbf16> to vector<128x128xbf16>
    %cst_57 = arith.constant dense<0.000000e+00> : vector<1x128xf32>
    %78 = tpu.matmul %51, %77, %cst_57 {dimension_numbers = #tpu.dot_dimension_numbers<[1], [0], [0], [1], [0, 0, 1, 1], [], []>} : vector<1x128xbf16>, vector<128x128xbf16>, vector<1x128xf32> -> vector<1x128xf32>
    %c9 = arith.constant 9 : index
    %c0_58 = arith.constant 0 : index
    %c0_59 = arith.constant 0 : index
    %79 = vector.load %arg4[%c9, %c0_58, %c0_59] : memref<25x128x128xbf16, #tpu.memory_space<vmem>>, vector<1x128x128xbf16>
    %80 = vector.shape_cast %79 : vector<1x128x128xbf16> to vector<128x128xbf16>
    %cst_60 = arith.constant dense<0.000000e+00> : vector<1x128xf32>
    %81 = tpu.matmul %51, %80, %cst_60 {dimension_numbers = #tpu.dot_dimension_numbers<[1], [0], [0], [1], [0, 0, 1, 1], [], []>} : vector<1x128xbf16>, vector<128x128xbf16>, vector<1x128xf32> -> vector<1x128xf32>
    %c10 = arith.constant 10 : index
    %c0_61 = arith.constant 0 : index
    %c0_62 = arith.constant 0 : index
    %82 = vector.load %arg4[%c10, %c0_61, %c0_62] : memref<25x128x128xbf16, #tpu.memory_space<vmem>>, vector<1x128x128xbf16>
    %83 = vector.shape_cast %82 : vector<1x128x128xbf16> to vector<128x128xbf16>
    %cst_63 = arith.constant dense<0.000000e+00> : vector<1x128xf32>
    %84 = tpu.matmul %51, %83, %cst_63 {dimension_numbers = #tpu.dot_dimension_numbers<[1], [0], [0], [1], [0, 0, 1, 1], [], []>} : vector<1x128xbf16>, vector<128x128xbf16>, vector<1x128xf32> -> vector<1x128xf32>
    %c11 = arith.constant 11 : index
    %c0_64 = arith.constant 0 : index
    %c0_65 = arith.constant 0 : index
    %85 = vector.load %arg4[%c11, %c0_64, %c0_65] : memref<25x128x128xbf16, #tpu.memory_space<vmem>>, vector<1x128x128xbf16>
    %86 = vector.shape_cast %85 : vector<1x128x128xbf16> to vector<128x128xbf16>
    %cst_66 = arith.constant dense<0.000000e+00> : vector<1x128xf32>
    %87 = tpu.matmul %51, %86, %cst_66 {dimension_numbers = #tpu.dot_dimension_numbers<[1], [0], [0], [1], [0, 0, 1, 1], [], []>} : vector<1x128xbf16>, vector<128x128xbf16>, vector<1x128xf32> -> vector<1x128xf32>
    %c12 = arith.constant 12 : index
    %c0_67 = arith.constant 0 : index
    %c0_68 = arith.constant 0 : index
    %88 = vector.load %arg4[%c12, %c0_67, %c0_68] : memref<25x128x128xbf16, #tpu.memory_space<vmem>>, vector<1x128x128xbf16>
    %89 = vector.shape_cast %88 : vector<1x128x128xbf16> to vector<128x128xbf16>
    %cst_69 = arith.constant dense<0.000000e+00> : vector<1x128xf32>
    %90 = tpu.matmul %51, %89, %cst_69 {dimension_numbers = #tpu.dot_dimension_numbers<[1], [0], [0], [1], [0, 0, 1, 1], [], []>} : vector<1x128xbf16>, vector<128x128xbf16>, vector<1x128xf32> -> vector<1x128xf32>
    %c13 = arith.constant 13 : index
    %c0_70 = arith.constant 0 : index
    %c0_71 = arith.constant 0 : index
    %91 = vector.load %arg4[%c13, %c0_70, %c0_71] : memref<25x128x128xbf16, #tpu.memory_space<vmem>>, vector<1x128x128xbf16>
    %92 = vector.shape_cast %91 : vector<1x128x128xbf16> to vector<128x128xbf16>
    %cst_72 = arith.constant dense<0.000000e+00> : vector<1x128xf32>
    %93 = tpu.matmul %51, %92, %cst_72 {dimension_numbers = #tpu.dot_dimension_numbers<[1], [0], [0], [1], [0, 0, 1, 1], [], []>} : vector<1x128xbf16>, vector<128x128xbf16>, vector<1x128xf32> -> vector<1x128xf32>
    %c14 = arith.constant 14 : index
    %c0_73 = arith.constant 0 : index
    %c0_74 = arith.constant 0 : index
    %94 = vector.load %arg4[%c14, %c0_73, %c0_74] : memref<25x128x128xbf16, #tpu.memory_space<vmem>>, vector<1x128x128xbf16>
    %95 = vector.shape_cast %94 : vector<1x128x128xbf16> to vector<128x128xbf16>
    %cst_75 = arith.constant dense<0.000000e+00> : vector<1x128xf32>
    %96 = tpu.matmul %51, %95, %cst_75 {dimension_numbers = #tpu.dot_dimension_numbers<[1], [0], [0], [1], [0, 0, 1, 1], [], []>} : vector<1x128xbf16>, vector<128x128xbf16>, vector<1x128xf32> -> vector<1x128xf32>
    %c15 = arith.constant 15 : index
    %c0_76 = arith.constant 0 : index
    %c0_77 = arith.constant 0 : index
    %97 = vector.load %arg4[%c15, %c0_76, %c0_77] : memref<25x128x128xbf16, #tpu.memory_space<vmem>>, vector<1x128x128xbf16>
    %98 = vector.shape_cast %97 : vector<1x128x128xbf16> to vector<128x128xbf16>
    %cst_78 = arith.constant dense<0.000000e+00> : vector<1x128xf32>
    %99 = tpu.matmul %51, %98, %cst_78 {dimension_numbers = #tpu.dot_dimension_numbers<[1], [0], [0], [1], [0, 0, 1, 1], [], []>} : vector<1x128xbf16>, vector<128x128xbf16>, vector<1x128xf32> -> vector<1x128xf32>
    %c16 = arith.constant 16 : index
    %c0_79 = arith.constant 0 : index
    %c0_80 = arith.constant 0 : index
    %100 = vector.load %arg4[%c16, %c0_79, %c0_80] : memref<25x128x128xbf16, #tpu.memory_space<vmem>>, vector<1x128x128xbf16>
    %101 = vector.shape_cast %100 : vector<1x128x128xbf16> to vector<128x128xbf16>
    %cst_81 = arith.constant dense<0.000000e+00> : vector<1x128xf32>
    %102 = tpu.matmul %51, %101, %cst_81 {dimension_numbers = #tpu.dot_dimension_numbers<[1], [0], [0], [1], [0, 0, 1, 1], [], []>} : vector<1x128xbf16>, vector<128x128xbf16>, vector<1x128xf32> -> vector<1x128xf32>
    %c17 = arith.constant 17 : index
    %c0_82 = arith.constant 0 : index
    %c0_83 = arith.constant 0 : index
    %103 = vector.load %arg4[%c17, %c0_82, %c0_83] : memref<25x128x128xbf16, #tpu.memory_space<vmem>>, vector<1x128x128xbf16>
    %104 = vector.shape_cast %103 : vector<1x128x128xbf16> to vector<128x128xbf16>
    %cst_84 = arith.constant dense<0.000000e+00> : vector<1x128xf32>
    %105 = tpu.matmul %51, %104, %cst_84 {dimension_numbers = #tpu.dot_dimension_numbers<[1], [0], [0], [1], [0, 0, 1, 1], [], []>} : vector<1x128xbf16>, vector<128x128xbf16>, vector<1x128xf32> -> vector<1x128xf32>
    %c18 = arith.constant 18 : index
    %c0_85 = arith.constant 0 : index
    %c0_86 = arith.constant 0 : index
    %106 = vector.load %arg4[%c18, %c0_85, %c0_86] : memref<25x128x128xbf16, #tpu.memory_space<vmem>>, vector<1x128x128xbf16>
    %107 = vector.shape_cast %106 : vector<1x128x128xbf16> to vector<128x128xbf16>
    %cst_87 = arith.constant dense<0.000000e+00> : vector<1x128xf32>
    %108 = tpu.matmul %51, %107, %cst_87 {dimension_numbers = #tpu.dot_dimension_numbers<[1], [0], [0], [1], [0, 0, 1, 1], [], []>} : vector<1x128xbf16>, vector<128x128xbf16>, vector<1x128xf32> -> vector<1x128xf32>
    %c19 = arith.constant 19 : index
    %c0_88 = arith.constant 0 : index
    %c0_89 = arith.constant 0 : index
    %109 = vector.load %arg4[%c19, %c0_88, %c0_89] : memref<25x128x128xbf16, #tpu.memory_space<vmem>>, vector<1x128x128xbf16>
    %110 = vector.shape_cast %109 : vector<1x128x128xbf16> to vector<128x128xbf16>
    %cst_90 = arith.constant dense<0.000000e+00> : vector<1x128xf32>
    %111 = tpu.matmul %51, %110, %cst_90 {dimension_numbers = #tpu.dot_dimension_numbers<[1], [0], [0], [1], [0, 0, 1, 1], [], []>} : vector<1x128xbf16>, vector<128x128xbf16>, vector<1x128xf32> -> vector<1x128xf32>
    %c20 = arith.constant 20 : index
    %c0_91 = arith.constant 0 : index
    %c0_92 = arith.constant 0 : index
    %112 = vector.load %arg4[%c20, %c0_91, %c0_92] : memref<25x128x128xbf16, #tpu.memory_space<vmem>>, vector<1x128x128xbf16>
    %113 = vector.shape_cast %112 : vector<1x128x128xbf16> to vector<128x128xbf16>
    %cst_93 = arith.constant dense<0.000000e+00> : vector<1x128xf32>
    %114 = tpu.matmul %51, %113, %cst_93 {dimension_numbers = #tpu.dot_dimension_numbers<[1], [0], [0], [1], [0, 0, 1, 1], [], []>} : vector<1x128xbf16>, vector<128x128xbf16>, vector<1x128xf32> -> vector<1x128xf32>
    %c21 = arith.constant 21 : index
    %c0_94 = arith.constant 0 : index
    %c0_95 = arith.constant 0 : index
    %115 = vector.load %arg4[%c21, %c0_94, %c0_95] : memref<25x128x128xbf16, #tpu.memory_space<vmem>>, vector<1x128x128xbf16>
    %116 = vector.shape_cast %115 : vector<1x128x128xbf16> to vector<128x128xbf16>
    %cst_96 = arith.constant dense<0.000000e+00> : vector<1x128xf32>
    %117 = tpu.matmul %51, %116, %cst_96 {dimension_numbers = #tpu.dot_dimension_numbers<[1], [0], [0], [1], [0, 0, 1, 1], [], []>} : vector<1x128xbf16>, vector<128x128xbf16>, vector<1x128xf32> -> vector<1x128xf32>
    %c22 = arith.constant 22 : index
    %c0_97 = arith.constant 0 : index
    %c0_98 = arith.constant 0 : index
    %118 = vector.load %arg4[%c22, %c0_97, %c0_98] : memref<25x128x128xbf16, #tpu.memory_space<vmem>>, vector<1x128x128xbf16>
    %119 = vector.shape_cast %118 : vector<1x128x128xbf16> to vector<128x128xbf16>
    %cst_99 = arith.constant dense<0.000000e+00> : vector<1x128xf32>
    %120 = tpu.matmul %51, %119, %cst_99 {dimension_numbers = #tpu.dot_dimension_numbers<[1], [0], [0], [1], [0, 0, 1, 1], [], []>} : vector<1x128xbf16>, vector<128x128xbf16>, vector<1x128xf32> -> vector<1x128xf32>
    %c23 = arith.constant 23 : index
    %c0_100 = arith.constant 0 : index
    %c0_101 = arith.constant 0 : index
    %121 = vector.load %arg4[%c23, %c0_100, %c0_101] : memref<25x128x128xbf16, #tpu.memory_space<vmem>>, vector<1x128x128xbf16>
    %122 = vector.shape_cast %121 : vector<1x128x128xbf16> to vector<128x128xbf16>
    %cst_102 = arith.constant dense<0.000000e+00> : vector<1x128xf32>
    %123 = tpu.matmul %51, %122, %cst_102 {dimension_numbers = #tpu.dot_dimension_numbers<[1], [0], [0], [1], [0, 0, 1, 1], [], []>} : vector<1x128xbf16>, vector<128x128xbf16>, vector<1x128xf32> -> vector<1x128xf32>
    %c24 = arith.constant 24 : index
    %c0_103 = arith.constant 0 : index
    %c0_104 = arith.constant 0 : index
    %124 = vector.load %arg4[%c24, %c0_103, %c0_104] : memref<25x128x128xbf16, #tpu.memory_space<vmem>>, vector<1x128x128xbf16>
    %125 = vector.shape_cast %124 : vector<1x128x128xbf16> to vector<128x128xbf16>
    %cst_105 = arith.constant dense<0.000000e+00> : vector<1x128xf32>
    %126 = tpu.matmul %51, %125, %cst_105 {dimension_numbers = #tpu.dot_dimension_numbers<[1], [0], [0], [1], [0, 0, 1, 1], [], []>} : vector<1x128xbf16>, vector<128x128xbf16>, vector<1x128xf32> -> vector<1x128xf32>
    %127 = tpu.concatenate %54, %57, %60, %63, %66, %69, %72, %75, %78, %81, %84, %87, %90, %93, %96, %99 in 0 : vector<1x128xf32>, vector<1x128xf32>, vector<1x128xf32>, vector<1x128xf32>, vector<1x128xf32>, vector<1x128xf32>, vector<1x128xf32>, vector<1x128xf32>, vector<1x128xf32>, vector<1x128xf32>, vector<1x128xf32>, vector<1x128xf32>, vector<1x128xf32>, vector<1x128xf32>, vector<1x128xf32>, vector<1x128xf32> -> vector<16x128xf32>
    %128 = tpu.concatenate %102, %105, %108, %111, %114, %117, %120, %123, %126 in 0 : vector<1x128xf32>, vector<1x128xf32>, vector<1x128xf32>, vector<1x128xf32>, vector<1x128xf32>, vector<1x128xf32>, vector<1x128xf32>, vector<1x128xf32>, vector<1x128xf32> -> vector<9x128xf32>
    %129 = tpu.concatenate %127, %128 in 0 : vector<16x128xf32>, vector<9x128xf32> -> vector<25x128xf32>
    %cst_106 = arith.constant -1.000000e+00 : f32
    %130 = vector.broadcast %cst_106 : f32 to vector<25x128xf32>
    %131 = arith.select %5, %129, %130 : vector<25x128xi1>, vector<25x128xf32>
    %132 = arith.truncf %131 : vector<25x128xf32> to vector<25x128xbf16>
    %c0_107 = arith.constant 0 : index
    %c0_108 = arith.constant 0 : index
    %133 = vector.load %arg9[%c0_107, %c0_108] : memref<128x25xbf16, #tpu.memory_space<vmem>>, vector<128x25xbf16>
    %cst_109 = arith.constant dense<0.000000e+00> : vector<128x128xf32>
    %134 = tpu.matmul %133, %132, %cst_109 {dimension_numbers = #tpu.dot_dimension_numbers<[1], [0], [0], [1], [0, 0, 1, 1], [], []>} : vector<128x25xbf16>, vector<25x128xbf16>, vector<128x128xf32> -> vector<128x128xf32>
    %cst_110 = arith.constant 0.000000e+00 : f32
    %135 = vector.broadcast %cst_110 : f32 to vector<128x128xf32>
    %136 = arith.maximumf %134, %135 : vector<128x128xf32>
    %137 = arith.truncf %136 : vector<128x128xf32> to vector<128x128xbf16>
    %c0_111 = arith.constant 0 : index
    %c0_112 = arith.constant 0 : index
    %138 = vector.load %arg10[%c0_111, %c0_112] : memref<64x128xbf16, #tpu.memory_space<vmem>>, vector<64x128xbf16>
    %cst_113 = arith.constant dense<0.000000e+00> : vector<64x128xf32>
    %139 = tpu.matmul %138, %137, %cst_113 {dimension_numbers = #tpu.dot_dimension_numbers<[1], [0], [0], [1], [0, 0, 1, 1], [], []>} : vector<64x128xbf16>, vector<128x128xbf16>, vector<64x128xf32> -> vector<64x128xf32>
    %cst_114 = arith.constant 0.000000e+00 : f32
    %140 = vector.broadcast %cst_114 : f32 to vector<64x128xf32>
    %141 = arith.maximumf %139, %140 : vector<64x128xf32>
    %142 = arith.truncf %141 : vector<64x128xf32> to vector<64x128xbf16>
    %c0_115 = arith.constant 0 : index
    %c0_116 = arith.constant 0 : index
    %143 = vector.load %arg11[%c0_115, %c0_116] : memref<32x64xbf16, #tpu.memory_space<vmem>>, vector<32x64xbf16>
    %cst_117 = arith.constant dense<0.000000e+00> : vector<32x128xf32>
    %144 = tpu.matmul %143, %142, %cst_117 {dimension_numbers = #tpu.dot_dimension_numbers<[1], [0], [0], [1], [0, 0, 1, 1], [], []>} : vector<32x64xbf16>, vector<64x128xbf16>, vector<32x128xf32> -> vector<32x128xf32>
    %cst_118 = arith.constant 0.000000e+00 : f32
    %145 = vector.broadcast %cst_118 : f32 to vector<32x128xf32>
    %146 = arith.maximumf %144, %145 : vector<32x128xf32>
    %147 = arith.truncf %146 : vector<32x128xf32> to vector<32x128xbf16>
    %c0_119 = arith.constant 0 : index
    %c0_120 = arith.constant 0 : index
    %148 = vector.load %arg12[%c0_119, %c0_120] : memref<16x32xbf16, #tpu.memory_space<vmem>>, vector<16x32xbf16>
    %cst_121 = arith.constant dense<0.000000e+00> : vector<16x128xf32>
    %149 = tpu.matmul %148, %147, %cst_121 {dimension_numbers = #tpu.dot_dimension_numbers<[1], [0], [0], [1], [0, 0, 1, 1], [], []>} : vector<16x32xbf16>, vector<32x128xbf16>, vector<16x128xf32> -> vector<16x128xf32>
    %cst_122 = arith.constant 0.000000e+00 : f32
    %150 = vector.broadcast %cst_122 : f32 to vector<16x128xf32>
    %151 = arith.maximumf %149, %150 : vector<16x128xf32>
    %152 = arith.truncf %151 : vector<16x128xf32> to vector<16x128xbf16>
    %c0_123 = arith.constant 0 : index
    %c0_124 = arith.constant 0 : index
    %153 = vector.load %arg13[%c0_123, %c0_124] : memref<1x16xbf16, #tpu.memory_space<vmem>>, vector<1x16xbf16>
    %cst_125 = arith.constant dense<0.000000e+00> : vector<1x128xf32>
    %154 = tpu.matmul %153, %152, %cst_125 {dimension_numbers = #tpu.dot_dimension_numbers<[1], [0], [0], [1], [0, 0, 1, 1], [], []>} : vector<1x16xbf16>, vector<16x128xbf16>, vector<1x128xf32> -> vector<1x128xf32>
    %cst_126 = arith.constant 0xFF800000 : f32
    %155 = vector.broadcast %cst_126 : f32 to vector<1x128xf32>
    %156 = arith.select %2, %154, %155 : vector<1x128xi1>, vector<1x128xf32>
    %cst_127 = arith.constant dense<0xFF800000> : vector<1xf32>
    %157 = vector.multi_reduction <maximumf>, %156, %cst_127 [1] : vector<1x128xf32> to vector<1xf32>
    %158 = vector.shape_cast %157 : vector<1xf32> to vector<1x1xf32>
    %cst_128 = arith.constant 0x7F800000 : f32
    %159 = vector.broadcast %cst_128 : f32 to vector<1x128xf32>
    %160 = arith.select %2, %154, %159 : vector<1x128xi1>, vector<1x128xf32>
    %cst_129 = arith.constant dense<0x7F800000> : vector<1xf32>
    %161 = vector.multi_reduction <minimumf>, %160, %cst_129 [1] : vector<1x128xf32> to vector<1xf32>
    %162 = vector.shape_cast %161 : vector<1xf32> to vector<1x1xf32>
    %163 = vector.broadcast %162 : vector<1x1xf32> to vector<1x128xf32>
    %164 = arith.subf %154, %163 : vector<1x128xf32>
    %165 = arith.subf %158, %162 : vector<1x1xf32>
    %cst_130 = arith.constant 9.99999996E-13 : f32
    %166 = vector.broadcast %cst_130 : f32 to vector<1x1xf32>
    %167 = arith.addf %165, %166 : vector<1x1xf32>
    %168 = vector.broadcast %167 : vector<1x1xf32> to vector<1x128xf32>
    %169 = arith.divf %164, %168 : vector<1x128xf32>
    %170 = vector.broadcast %7 : f32 to vector<1x128xf32>
    %171 = arith.subf %169, %170 : vector<1x128xf32>
    %cst_131 = arith.constant 0.000000e+00 : f32
    %172 = vector.broadcast %cst_131 : f32 to vector<1x128xf32>
    %173 = arith.maximumf %171, %172 : vector<1x128xf32>
    %cst_132 = arith.constant 0.000000e+00 : f32
    %174 = vector.broadcast %cst_132 : f32 to vector<1x128xf32>
    %175 = arith.select %2, %173, %174 : vector<1x128xi1>, vector<1x128xf32>
    %176 = vector.shape_cast %175 : vector<1x128xf32> to vector<1x1x128xf32>
    %c0_133 = arith.constant 0 : index
    %c0_134 = arith.constant 0 : index
    %c0_135 = arith.constant 0 : index
    %177 = vector.load %arg14[%c0_133, %c0_134, %c0_135] : memref<1x1x128xf32, #tpu.memory_space<vmem>>, vector<1x1x128xf32>
    tpu.vector_store %arg14[%c0_133, %c0_134, %c0_135], %176 {strides = array<i32>} : memref<1x1x128xf32, #tpu.memory_space<vmem>>, vector<1x1x128xf32>,
    return
  }
  func.func @transform_0(%arg0: i32) -> (i32, i32) {
    %c0_i32 = arith.constant 0 : i32
    %c0_i32_0 = arith.constant 0 : i32
    %c0_i32_1 = arith.constant 0 : i32
    return %c0_i32, %c0_i32_0 : i32, i32
  }
  func.func @transform_1(%arg0: i32) -> (i32, i32, i32) {
    %c0_i32 = arith.constant 0 : i32
    %c0_i32_0 = arith.constant 0 : i32
    %c0_i32_1 = arith.constant 0 : i32
    return %arg0, %c0_i32, %c0_i32_0 : i32, i32, i32
  }
  func.func @transform_2(%arg0: i32) -> (i32, i32) {
    %c0_i32 = arith.constant 0 : i32
    %c0_i32_0 = arith.constant 0 : i32
    %c0_i32_1 = arith.constant 0 : i32
    return %c0_i32, %c0_i32_0 : i32, i32
  }
  func.func @transform_3(%arg0: i32) -> (i32, i32, i32) {
    %c0_i32 = arith.constant 0 : i32
    %c0_i32_0 = arith.constant 0 : i32
    %c0_i32_1 = arith.constant 0 : i32
    %c0_i32_2 = arith.constant 0 : i32
    return %c0_i32, %c0_i32_0, %c0_i32_1 : i32, i32, i32
  }
  func.func @transform_4(%arg0: i32) -> (i32, i32) {
    %c0_i32 = arith.constant 0 : i32
    %c0_i32_0 = arith.constant 0 : i32
    %c0_i32_1 = arith.constant 0 : i32
    return %c0_i32, %c0_i32_0 : i32, i32
  }
  func.func @transform_5(%arg0: i32) -> (i32, i32) {
    %c0_i32 = arith.constant 0 : i32
    %c0_i32_0 = arith.constant 0 : i32
    %c0_i32_1 = arith.constant 0 : i32
    return %c0_i32, %c0_i32_0 : i32, i32
  }
  func.func @transform_6(%arg0: i32) -> (i32, i32) {
    %c0_i32 = arith.constant 0 : i32
    %c0_i32_0 = arith.constant 0 : i32
    %c0_i32_1 = arith.constant 0 : i32
    return %c0_i32, %c0_i32_0 : i32, i32
  }
  func.func @transform_7(%arg0: i32) -> (i32, i32) {
    %c0_i32 = arith.constant 0 : i32
    %c0_i32_0 = arith.constant 0 : i32
    %c0_i32_1 = arith.constant 0 : i32
    return %c0_i32, %c0_i32_0 : i32, i32
  }
  func.func @transform_8(%arg0: i32) -> (i32, i32) {
    %c0_i32 = arith.constant 0 : i32
    %c0_i32_0 = arith.constant 0 : i32
    %c0_i32_1 = arith.constant 0 : i32
    return %c0_i32, %c0_i32_0 : i32, i32
  }
  func.func @transform_9(%arg0: i32) -> (i32, i32) {
    %c0_i32 = arith.constant 0 : i32
    %c0_i32_0 = arith.constant 0 : i32
    %c0_i32_1 = arith.constant 0 : i32
    return %c0_i32, %c0_i32_0 : i32, i32
  }
  func.func @transform_10(%arg0: i32) -> (i32, i32) {
    %c0_i32 = arith.constant 0 : i32
    %c0_i32_0 = arith.constant 0 : i32
    %c0_i32_1 = arith.constant 0 : i32
    return %c0_i32, %c0_i32_0 : i32, i32
  }
  func.func @transform_11(%arg0: i32) -> (i32, i32) {
    %c0_i32 = arith.constant 0 : i32
    %c0_i32_0 = arith.constant 0 : i32
    %c0_i32_1 = arith.constant 0 : i32
    return %c0_i32, %c0_i32_0 : i32, i32
  }
  func.func @transform_12(%arg0: i32) -> (i32, i32) {
    %c0_i32 = arith.constant 0 : i32
    %c0_i32_0 = arith.constant 0 : i32
    %c0_i32_1 = arith.constant 0 : i32
    return %c0_i32, %c0_i32_0 : i32, i32
  }
  func.func @transform_13(%arg0: i32) -> (i32, i32, i32) {
    %c0_i32 = arith.constant 0 : i32
    %c0_i32_0 = arith.constant 0 : i32
    %c0_i32_1 = arith.constant 0 : i32
    return %arg0, %c0_i32, %c0_i32_0 : i32, i32, i32
  }
}

module attributes {stable_mosaic.version = 11 : i64} {
  func.func @_classify_kernel(%arg0: i32, %arg1: memref<2x900xf32, #tpu.memory_space<vmem>>, %arg2: memref<2x128xf32, #tpu.memory_space<vmem>>, %arg3: memref<128x900xbf16, #tpu.memory_space<vmem>>, %arg4: memref<900x1024xbf16, #tpu.memory_space<vmem>>, %arg5: memref<1024x512xbf16, #tpu.memory_space<vmem>>, %arg6: memref<512x128xbf16, #tpu.memory_space<vmem>>, %arg7: memref<128x64xbf16, #tpu.memory_space<vmem>>, %arg8: memref<64x10xbf16, #tpu.memory_space<vmem>>, %arg9: memref<2x10xf32, #tpu.memory_space<vmem>>) attributes {dimension_semantics = [#tpu.dimension_semantics<parallel>], iteration_bounds = array<i64: 1>, scalar_prefetch = 0 : i64, scratch_operands = 0 : i64, tpu.core_type = #tpu.core_type<tc>, window_params = [{transform_indices = @transform_0, window_bounds = array<i64: 2, 900>}, {transform_indices = @transform_1, window_bounds = array<i64: 2, 128>}, {pipeline_mode = #tpu.pipeline_mode<synchronous>, transform_indices = @transform_2, window_bounds = array<i64: 128, 900>}, {pipeline_mode = #tpu.pipeline_mode<synchronous>, transform_indices = @transform_3, window_bounds = array<i64: 900, 1024>}, {pipeline_mode = #tpu.pipeline_mode<synchronous>, transform_indices = @transform_4, window_bounds = array<i64: 1024, 512>}, {pipeline_mode = #tpu.pipeline_mode<synchronous>, transform_indices = @transform_5, window_bounds = array<i64: 512, 128>}, {pipeline_mode = #tpu.pipeline_mode<synchronous>, transform_indices = @transform_6, window_bounds = array<i64: 128, 64>}, {pipeline_mode = #tpu.pipeline_mode<synchronous>, transform_indices = @transform_7, window_bounds = array<i64: 64, 10>}, {transform_indices = @transform_8, window_bounds = array<i64: 2, 10>}]} {
    %c0 = arith.constant 0 : index
    %c0_0 = arith.constant 0 : index
    %0 = vector.load %arg1[%c0, %c0_0] : memref<2x900xf32, #tpu.memory_space<vmem>>, vector<2x900xf32>
    %cst = arith.constant 2.550000e+02 : f32
    %1 = vector.broadcast %cst : f32 to vector<2x900xf32>
    %2 = arith.mulf %0, %1 : vector<2x900xf32>
    %cst_1 = arith.constant 1.000000e+02 : f32
    %3 = vector.broadcast %cst_1 : f32 to vector<2x900xf32>
    %4 = arith.addf %2, %3 : vector<2x900xf32>
    %c0_2 = arith.constant 0 : index
    %c0_3 = arith.constant 0 : index
    %5 = vector.load %arg2[%c0_2, %c0_3] : memref<2x128xf32, #tpu.memory_space<vmem>>, vector<2x128xf32>
    %6 = arith.truncf %5 : vector<2x128xf32> to vector<2x128xbf16>
    %c0_4 = arith.constant 0 : index
    %c0_5 = arith.constant 0 : index
    %7 = vector.load %arg3[%c0_4, %c0_5] : memref<128x900xbf16, #tpu.memory_space<vmem>>, vector<128x900xbf16>
    %cst_6 = arith.constant dense<0.000000e+00> : vector<2x900xf32>
    %8 = tpu.matmul %6, %7, %cst_6 {dimension_numbers = #tpu.dot_dimension_numbers<[1], [0], [0], [1], [0, 0, 1, 1], [], []>} : vector<2x128xbf16>, vector<128x900xbf16>, vector<2x900xf32> -> vector<2x900xf32>
    %9 = arith.mulf %4, %8 : vector<2x900xf32>
    %10 = arith.truncf %9 : vector<2x900xf32> to vector<2x900xbf16>
    %c0_7 = arith.constant 0 : index
    %c0_8 = arith.constant 0 : index
    %11 = vector.load %arg4[%c0_7, %c0_8] : memref<900x1024xbf16, #tpu.memory_space<vmem>>, vector<900x1024xbf16>
    %cst_9 = arith.constant dense<0.000000e+00> : vector<2x1024xf32>
    %12 = tpu.matmul %10, %11, %cst_9 {dimension_numbers = #tpu.dot_dimension_numbers<[1], [0], [0], [1], [0, 0, 1, 1], [], []>} : vector<2x900xbf16>, vector<900x1024xbf16>, vector<2x1024xf32> -> vector<2x1024xf32>
    %cst_10 = arith.constant 0.000000e+00 : f32
    %13 = vector.broadcast %cst_10 : f32 to vector<2x1024xf32>
    %14 = arith.maximumf %12, %13 : vector<2x1024xf32>
    %15 = arith.truncf %14 : vector<2x1024xf32> to vector<2x1024xbf16>
    %c0_11 = arith.constant 0 : index
    %c0_12 = arith.constant 0 : index
    %16 = vector.load %arg5[%c0_11, %c0_12] : memref<1024x512xbf16, #tpu.memory_space<vmem>>, vector<1024x512xbf16>
    %cst_13 = arith.constant dense<0.000000e+00> : vector<2x512xf32>
    %17 = tpu.matmul %15, %16, %cst_13 {dimension_numbers = #tpu.dot_dimension_numbers<[1], [0], [0], [1], [0, 0, 1, 1], [], []>} : vector<2x1024xbf16>, vector<1024x512xbf16>, vector<2x512xf32> -> vector<2x512xf32>
    %cst_14 = arith.constant 0.000000e+00 : f32
    %18 = vector.broadcast %cst_14 : f32 to vector<2x512xf32>
    %19 = arith.maximumf %17, %18 : vector<2x512xf32>
    %20 = arith.truncf %19 : vector<2x512xf32> to vector<2x512xbf16>
    %c0_15 = arith.constant 0 : index
    %c0_16 = arith.constant 0 : index
    %21 = vector.load %arg6[%c0_15, %c0_16] : memref<512x128xbf16, #tpu.memory_space<vmem>>, vector<512x128xbf16>
    %cst_17 = arith.constant dense<0.000000e+00> : vector<2x128xf32>
    %22 = tpu.matmul %20, %21, %cst_17 {dimension_numbers = #tpu.dot_dimension_numbers<[1], [0], [0], [1], [0, 0, 1, 1], [], []>} : vector<2x512xbf16>, vector<512x128xbf16>, vector<2x128xf32> -> vector<2x128xf32>
    %cst_18 = arith.constant 0.000000e+00 : f32
    %23 = vector.broadcast %cst_18 : f32 to vector<2x128xf32>
    %24 = arith.maximumf %22, %23 : vector<2x128xf32>
    %25 = arith.truncf %24 : vector<2x128xf32> to vector<2x128xbf16>
    %c0_19 = arith.constant 0 : index
    %c0_20 = arith.constant 0 : index
    %26 = vector.load %arg7[%c0_19, %c0_20] : memref<128x64xbf16, #tpu.memory_space<vmem>>, vector<128x64xbf16>
    %cst_21 = arith.constant dense<0.000000e+00> : vector<2x64xf32>
    %27 = tpu.matmul %25, %26, %cst_21 {dimension_numbers = #tpu.dot_dimension_numbers<[1], [0], [0], [1], [0, 0, 1, 1], [], []>} : vector<2x128xbf16>, vector<128x64xbf16>, vector<2x64xf32> -> vector<2x64xf32>
    %cst_22 = arith.constant 0.000000e+00 : f32
    %28 = vector.broadcast %cst_22 : f32 to vector<2x64xf32>
    %29 = arith.maximumf %27, %28 : vector<2x64xf32>
    %30 = arith.truncf %29 : vector<2x64xf32> to vector<2x64xbf16>
    %c0_23 = arith.constant 0 : index
    %c0_24 = arith.constant 0 : index
    %31 = vector.load %arg8[%c0_23, %c0_24] : memref<64x10xbf16, #tpu.memory_space<vmem>>, vector<64x10xbf16>
    %cst_25 = arith.constant dense<0.000000e+00> : vector<2x10xf32>
    %32 = tpu.matmul %30, %31, %cst_25 {dimension_numbers = #tpu.dot_dimension_numbers<[1], [0], [0], [1], [0, 0, 1, 1], [], []>} : vector<2x64xbf16>, vector<64x10xbf16>, vector<2x10xf32> -> vector<2x10xf32>
    %c0_26 = arith.constant 0 : index
    %c0_27 = arith.constant 0 : index
    %33 = vector.load %arg9[%c0_26, %c0_27] : memref<2x10xf32, #tpu.memory_space<vmem>>, vector<2x10xf32>
    tpu.vector_store %arg9[%c0_26, %c0_27], %32 {strides = array<i32>} : memref<2x10xf32, #tpu.memory_space<vmem>>, vector<2x10xf32>,
    return
  }
  func.func @transform_0(%arg0: i32) -> (i32, i32) {
    %c0_i32 = arith.constant 0 : i32
    %c0_i32_0 = arith.constant 0 : i32
    return %arg0, %c0_i32 : i32, i32
  }
  func.func @transform_1(%arg0: i32) -> (i32, i32) {
    %c0_i32 = arith.constant 0 : i32
    %c0_i32_0 = arith.constant 0 : i32
    return %arg0, %c0_i32 : i32, i32
  }
  func.func @transform_2(%arg0: i32) -> (i32, i32) {
    %c0_i32 = arith.constant 0 : i32
    %c0_i32_0 = arith.constant 0 : i32
    %c0_i32_1 = arith.constant 0 : i32
    return %c0_i32, %c0_i32_0 : i32, i32
  }
  func.func @transform_3(%arg0: i32) -> (i32, i32) {
    %c0_i32 = arith.constant 0 : i32
    %c0_i32_0 = arith.constant 0 : i32
    %c0_i32_1 = arith.constant 0 : i32
    return %c0_i32, %c0_i32_0 : i32, i32
  }
  func.func @transform_4(%arg0: i32) -> (i32, i32) {
    %c0_i32 = arith.constant 0 : i32
    %c0_i32_0 = arith.constant 0 : i32
    %c0_i32_1 = arith.constant 0 : i32
    return %c0_i32, %c0_i32_0 : i32, i32
  }
  func.func @transform_5(%arg0: i32) -> (i32, i32) {
    %c0_i32 = arith.constant 0 : i32
    %c0_i32_0 = arith.constant 0 : i32
    %c0_i32_1 = arith.constant 0 : i32
    return %c0_i32, %c0_i32_0 : i32, i32
  }
  func.func @transform_6(%arg0: i32) -> (i32, i32) {
    %c0_i32 = arith.constant 0 : i32
    %c0_i32_0 = arith.constant 0 : i32
    %c0_i32_1 = arith.constant 0 : i32
    return %c0_i32, %c0_i32_0 : i32, i32
  }
  func.func @transform_7(%arg0: i32) -> (i32, i32) {
    %c0_i32 = arith.constant 0 : i32
    %c0_i32_0 = arith.constant 0 : i32
    %c0_i32_1 = arith.constant 0 : i32
    return %c0_i32, %c0_i32_0 : i32, i32
  }
  func.func @transform_8(%arg0: i32) -> (i32, i32) {
    %c0_i32 = arith.constant 0 : i32
    %c0_i32_0 = arith.constant 0 : i32
    return %arg0, %c0_i32 : i32, i32
  }
}

</mosaic_0001>

<llo_original>
// kernel: lighter_forward.2
$region0: #{lighter_forward.2}
  #allocation0 [shape = 'u32[]', space=smem, size = 0x4, offset = 0x4, fixed_abs, tag = 'smem constant byte address 0x4 - core index']
  #allocation1 [shape = 'u32[144,128]{1,0:T(1,128)}', space=vmem, size = 0x12000, scoped, tag = 'internal scratch']
  #allocation2 [shape = 'f32[1,1]{1,0:T(1,128)S(6)}', space=smem, size = 0x200, scoped, tag = 'scoped memory for lighter_forward.2']
  %s0 = inlined_call_operand.<no memory space> [shape: f32[1,1], index: 0, kind: input, shape index: {}]
  %s1 = inlined_call_operand.vmem [shape: f32[2,9,128], index: 1, kind: input, shape index: {}]
  %s2 = inlined_call_operand.hbm [shape: f32[25,128], index: 2, kind: input, shape index: {}]
  %s3 = inlined_call_operand.hbm [shape: bf16[25,128,128], index: 3, kind: input, shape index: {}]
  %s4 = inlined_call_operand.vmem [shape: bf16[128,9], index: 4, kind: input, shape index: {}]
  %s5 = inlined_call_operand.hbm [shape: bf16[32,128], index: 5, kind: input, shape index: {}]
  %s6 = inlined_call_operand.hbm [shape: bf16[16,32], index: 6, kind: input, shape index: {}]
  %s7 = inlined_call_operand.hbm [shape: bf16[1,16], index: 7, kind: input, shape index: {}]
  %s8 = inlined_call_operand.vmem [shape: bf16[128,25], index: 8, kind: input, shape index: {}]
  %s9 = inlined_call_operand.hbm [shape: bf16[64,128], index: 9, kind: input, shape index: {}]
  %s10 = inlined_call_operand.hbm [shape: bf16[32,64], index: 10, kind: input, shape index: {}]
  %s11 = inlined_call_operand.hbm [shape: bf16[16,32], index: 11, kind: input, shape index: {}]
  %s12 = inlined_call_operand.hbm [shape: bf16[1,16], index: 12, kind: input, shape index: {}]
  %s13 = inlined_call_operand.vmem [shape: f32[2,1,128], index: 13, kind: output, shape index: {}]
  %s14 = sld [smem:[#allocation0]]
  $region121: #{lighter_forward.2} parent=0
    _
  %s16 = ssub.s32 1, %s14
  %s17 = scalar_select 0, %s16, %s14
  %18 = sst [smem:[#allocation2]] %s0
  $region1: #{lighter_forward.2} parent=0
    #allocation3 [shape = 'u8[16384]{0}', space=vmem, size = 0x4000, scoped, tag = 'input window, operand 2, single buffered']
    #allocation4 [shape = 's32[2]{0}', space=sflag, size = 0x8, scoped, tag = 'scoped memory for lighter_forward.2']
    #allocation5 [shape = 'u8[819200]{0}', space=vmem, size = 0xc8000, scoped, tag = 'input window, operand 3, single buffered']
    #allocation6 [shape = 's32[1]{0}', space=sflag, size = 0x4, scoped, tag = 'scoped memory for lighter_forward.2']
    #allocation7 [shape = 'u8[8192]{0}', space=vmem, size = 0x2000, scoped, tag = 'input window, operand 5, single buffered']
    #allocation8 [shape = 'u8[4096]{0}', space=vmem, size = 0x1000, scoped, tag = 'input window, operand 6, single buffered']
    #allocation9 [shape = 's32[1]{0}', space=sflag, size = 0x4, scoped, tag = 'scoped memory for lighter_forward.2']
    #allocation10 [shape = 'u8[512]{0}', space=vmem, size = 0x400, scoped, tag = 'input window, operand 7, single buffered']
    #allocation11 [shape = 'u8[16384]{0}', space=vmem, size = 0x4000, scoped, tag = 'input window, operand 9, single buffered']
    #allocation12 [shape = 's32[1]{0}', space=sflag, size = 0x4, scoped, tag = 'scoped memory for lighter_forward.2']
    #allocation13 [shape = 'u8[8192]{0}', space=vmem, size = 0x2000, scoped, tag = 'input window, operand 10, single buffered']
    #allocation14 [shape = 'u8[4096]{0}', space=vmem, size = 0x1000, scoped, tag = 'input window, operand 11, single buffered']
    #allocation15 [shape = 's32[1]{0}', space=sflag, size = 0x4, scoped, tag = 'scoped memory for lighter_forward.2']
    #allocation16 [shape = 'u8[512]{0}', space=vmem, size = 0x400, scoped, tag = 'input window, operand 12, single buffered']
    %19 = vsyncpa [#allocation4], 0
    %20 = vsyncpa [#allocation6], 0
    %21 = vsyncpa [#allocation9], 0
    %22 = vsyncpa [#allocation12], 0
    %23 = vsyncpa [#allocation15], 0
    loop: start=0, step=1, limit=4
    $region2: #{lighter_forward.2} parent=1 // loop_pre_header
      _
    $region3: #{lighter_forward.2} parent=1 // loop_header
      %s25 = sphi 0, %s29
      %p26 = scmp.ge.s32.totalorder %s25, 4
      %s33 = sphi 0, %s33
      %s35 = sphi 0, %s33
      %s36 = sphi 0, %s35
      %s50 = sphi 0, %s36
      %s56 = sphi 0, %s58
      %s59 = sphi 0, %s56
      %s60 = sphi 0, %s59
      %s76 = sphi 0, %s60
      %s80 = sphi 0, %s80
      %s82 = sphi 0, %s80
      %s83 = sphi 0, %s82
      %s97 = sphi 0, %s83
      %s101 = sphi 0, %s101
      %s103 = sphi 0, %s101
      %s104 = sphi 0, %s103
      %s118 = sphi 0, %s104
      %s122 = sphi 0, %s122
      %s124 = sphi 0, %s122
      %s125 = sphi 0, %s124
      %s139 = sphi 0, %s125
      %s143 = sphi 0, %s143
      %s145 = sphi 0, %s143
      %s146 = sphi 0, %s145
      %s160 = sphi 0, %s146
      %s164 = sphi 0, %s164
      %s166 = sphi 0, %s164
      %s167 = sphi 0, %s166
      %s181 = sphi 0, %s167
      %s185 = sphi 0, %s185
      %s187 = sphi 0, %s185
      %s188 = sphi 0, %s187
      %s202 = sphi 0, %s188
      %s206 = sphi 0, %s206
      %s208 = sphi 0, %s206
      %s209 = sphi 0, %s208
      %s223 = sphi 0, %s209
      %s227 = sphi 0, %s227
      %s229 = sphi 0, %s227
      %s230 = sphi 0, %s229
      %s244 = sphi 0, %s230
      %s248 = sphi 0, %s248
      %s250 = sphi 0, %s248
      %s251 = sphi 0, %s250
      %s265 = sphi 0, %s251
      %s269 = sphi 0, %s269
      %s271 = sphi 0, %s269
      %s272 = sphi 0, %s271
      %s286 = sphi 0, %s272
      %s290 = sphi 0, %s290
      %s292 = sphi 0, %s290
      %s293 = sphi 0, %s292
      %s307 = sphi 0, %s293
      %s313 = sphi 0, %s315
      %s316 = sphi 0, %s313
      %s317 = sphi 0, %s316
      %s333 = sphi 0, %s317
    $region4: #{lighter_forward.2} parent=1 // loop_header_branch
      %28 = sbr.rel (%p26) target = $region8
    $region5: #{lighter_forward.2} parent=1 // loop_body
      %s30 = ssub.s32 %s25, 1
      %s31 = ssub.s32 %s25, 2
      %s32 = sadd.s32 %s25, 1
      %s34 = sadd.s32 %s33, 1
      %p37 = scmp.eq.s32.totalorder %s25, 1
      %p38 = scmp.ne.s32.totalorder %s33, %s35
      %p39 = scmp.eq.s32.totalorder %s25, 0
      %p40 = por %p38, %p39
      %p41 = scmp.ne.s32.totalorder %s33, %s35
      %p42 = scmp.eq.s32.totalorder %s30, 1
      %p43 = por %p41, %p42
      %p44 = scmp.ne.s32.totalorder %s35, %s36
      %p45 = scmp.eq.s32.totalorder %s30, 0
      %p46 = por %p44, %p45
      %p47 = scmp.ne.s32.totalorder %s35, %s36
      %p48 = scmp.eq.s32.totalorder %s31, 1
      %p49 = por %p47, %p48
      %p51 = scmp.ne.s32.totalorder %s36, %s50
      %p52 = scmp.eq.s32.totalorder %s31, 0
      %p53 = por %p51, %p52
      %s54 = ssub.s32 %s25, %s32
      %p55 = scmp.eq.s32.totalorder %s54, 0
      %s57 = sadd.s32 %s56, 1
      %s58 = scalar_select %p55, %s56, %s57
      %p61 = pneg %p55
      %p62 = scmp.eq.s32.totalorder %s25, 1
      %p63 = por %p61, %p62
      %p64 = scmp.ne.s32.totalorder %s56, %s59
      %p65 = scmp.eq.s32.totalorder %s25, 0
      %p66 = por %p64, %p65
      %p67 = scmp.ne.s32.totalorder %s56, %s59
      %p68 = scmp.eq.s32.totalorder %s30, 1
      %p69 = por %p67, %p68
      %p70 = scmp.ne.s32.totalorder %s59, %s60
      %p71 = scmp.eq.s32.totalorder %s30, 0
      %p72 = por %p70, %p71
      %p73 = scmp.ne.s32.totalorder %s59, %s60
      %p74 = scmp.eq.s32.totalorder %s31, 1
      %p75 = por %p73, %p74
      %p77 = scmp.ne.s32.totalorder %s60, %s76
      %p78 = scmp.eq.s32.totalorder %s31, 0
      %p79 = por %p77, %p78
      %s81 = sadd.s32 %s80, 1
      %p84 = scmp.eq.s32.totalorder %s25, 1
      %p85 = scmp.ne.s32.totalorder %s80, %s82
      %p86 = scmp.eq.s32.totalorder %s25, 0
      %p87 = por %p85, %p86
      %p88 = scmp.ne.s32.totalorder %s80, %s82
      %p89 = scmp.eq.s32.totalorder %s30, 1
      %p90 = por %p88, %p89
      %p91 = scmp.ne.s32.totalorder %s82, %s83
      %p92 = scmp.eq.s32.totalorder %s30, 0
      %p93 = por %p91, %p92
      %p94 = scmp.ne.s32.totalorder %s82, %s83
      %p95 = scmp.eq.s32.totalorder %s31, 1
      %p96 = por %p94, %p95
      %p98 = scmp.ne.s32.totalorder %s83, %s97
      %p99 = scmp.eq.s32.totalorder %s31, 0
      %p100 = por %p98, %p99
      %s102 = sadd.s32 %s101, 1
      %p105 = scmp.eq.s32.totalorder %s25, 1
      %p106 = scmp.ne.s32.totalorder %s101, %s103
      %p107 = scmp.eq.s32.totalorder %s25, 0
      %p108 = por %p106, %p107
      %p109 = scmp.ne.s32.totalorder %s101, %s103
      %p110 = scmp.eq.s32.totalorder %s30, 1
      %p111 = por %p109, %p110
      %p112 = scmp.ne.s32.totalorder %s103, %s104
      %p113 = scmp.eq.s32.totalorder %s30, 0
      %p114 = por %p112, %p113
      %p115 = scmp.ne.s32.totalorder %s103, %s104
      %p116 = scmp.eq.s32.totalorder %s31, 1
      %p117 = por %p115, %p116
      %p119 = scmp.ne.s32.totalorder %s104, %s118
      %p120 = scmp.eq.s32.totalorder %s31, 0
      %p121 = por %p119, %p120
      %s123 = sadd.s32 %s122, 1
      %p126 = scmp.eq.s32.totalorder %s25, 1
      %p127 = scmp.ne.s32.totalorder %s122, %s124
      %p128 = scmp.eq.s32.totalorder %s25, 0
      %p129 = por %p127, %p128
      %p130 = scmp.ne.s32.totalorder %s122, %s124
      %p131 = scmp.eq.s32.totalorder %s30, 1
      %p132 = por %p130, %p131
      %p133 = scmp.ne.s32.totalorder %s124, %s125
      %p134 = scmp.eq.s32.totalorder %s30, 0
      %p135 = por %p133, %p134
      %p136 = scmp.ne.s32.totalorder %s124, %s125
      %p137 = scmp.eq.s32.totalorder %s31, 1
      %p138 = por %p136, %p137
      %p140 = scmp.ne.s32.totalorder %s125, %s139
      %p141 = scmp.eq.s32.totalorder %s31, 0
      %p142 = por %p140, %p141
      %s144 = sadd.s32 %s143, 1
      %p147 = scmp.eq.s32.totalorder %s25, 1
      %p148 = scmp.ne.s32.totalorder %s143, %s145
      %p149 = scmp.eq.s32.totalorder %s25, 0
      %p150 = por %p148, %p149
      %p151 = scmp.ne.s32.totalorder %s143, %s145
      %p152 = scmp.eq.s32.totalorder %s30, 1
      %p153 = por %p151, %p152
      %p154 = scmp.ne.s32.totalorder %s145, %s146
      %p155 = scmp.eq.s32.totalorder %s30, 0
      %p156 = por %p154, %p155
      %p157 = scmp.ne.s32.totalorder %s145, %s146
      %p158 = scmp.eq.s32.totalorder %s31, 1
      %p159 = por %p157, %p158
      %p161 = scmp.ne.s32.totalorder %s146, %s160
      %p162 = scmp.eq.s32.totalorder %s31, 0
      %p163 = por %p161, %p162
      %s165 = sadd.s32 %s164, 1
      %p168 = scmp.eq.s32.totalorder %s25, 1
      %p169 = scmp.ne.s32.totalorder %s164, %s166
      %p170 = scmp.eq.s32.totalorder %s25, 0
      %p171 = por %p169, %p170
      %p172 = scmp.ne.s32.totalorder %s164, %s166
      %p173 = scmp.eq.s32.totalorder %s30, 1
      %p174 = por %p172, %p173
      %p175 = scmp.ne.s32.totalorder %s166, %s167
      %p176 = scmp.eq.s32.totalorder %s30, 0
      %p177 = por %p175, %p176
      %p178 = scmp.ne.s32.totalorder %s166, %s167
      %p179 = scmp.eq.s32.totalorder %s31, 1
      %p180 = por %p178, %p179
      %p182 = scmp.ne.s32.totalorder %s167, %s181
      %p183 = scmp.eq.s32.totalorder %s31, 0
      %p184 = por %p182, %p183
      %s186 = sadd.s32 %s185, 1
      %p189 = scmp.eq.s32.totalorder %s25, 1
      %p190 = scmp.ne.s32.totalorder %s185, %s187
      %p191 = scmp.eq.s32.totalorder %s25, 0
      %p192 = por %p190, %p191
      %p193 = scmp.ne.s32.totalorder %s185, %s187
      %p194 = scmp.eq.s32.totalorder %s30, 1
      %p195 = por %p193, %p194
      %p196 = scmp.ne.s32.totalorder %s187, %s188
      %p197 = scmp.eq.s32.totalorder %s30, 0
      %p198 = por %p196, %p197
      %p199 = scmp.ne.s32.totalorder %s187, %s188
      %p200 = scmp.eq.s32.totalorder %s31, 1
      %p201 = por %p199, %p200
      %p203 = scmp.ne.s32.totalorder %s188, %s202
      %p204 = scmp.eq.s32.totalorder %s31, 0
      %p205 = por %p203, %p204
      %s207 = sadd.s32 %s206, 1
      %p210 = scmp.eq.s32.totalorder %s25, 1
      %p211 = scmp.ne.s32.totalorder %s206, %s208
      %p212 = scmp.eq.s32.totalorder %s25, 0
      %p213 = por %p211, %p212
      %p214 = scmp.ne.s32.totalorder %s206, %s208
      %p215 = scmp.eq.s32.totalorder %s30, 1
      %p216 = por %p214, %p215
      %p217 = scmp.ne.s32.totalorder %s208, %s209
      %p218 = scmp.eq.s32.totalorder %s30, 0
      %p219 = por %p217, %p218
      %p220 = scmp.ne.s32.totalorder %s208, %s209
      %p221 = scmp.eq.s32.totalorder %s31, 1
      %p222 = por %p220, %p221
      %p224 = scmp.ne.s32.totalorder %s209, %s223
      %p225 = scmp.eq.s32.totalorder %s31, 0
      %p226 = por %p224, %p225
      %s228 = sadd.s32 %s227, 1
      %p231 = scmp.eq.s32.totalorder %s25, 1
      %p232 = scmp.ne.s32.totalorder %s227, %s229
      %p233 = scmp.eq.s32.totalorder %s25, 0
      %p234 = por %p232, %p233
      %p235 = scmp.ne.s32.totalorder %s227, %s229
      %p236 = scmp.eq.s32.totalorder %s30, 1
      %p237 = por %p235, %p236
      %p238 = scmp.ne.s32.totalorder %s229, %s230
      %p239 = scmp.eq.s32.totalorder %s30, 0
      %p240 = por %p238, %p239
      %p241 = scmp.ne.s32.totalorder %s229, %s230
      %p242 = scmp.eq.s32.totalorder %s31, 1
      %p243 = por %p241, %p242
      %p245 = scmp.ne.s32.totalorder %s230, %s244
      %p246 = scmp.eq.s32.totalorder %s31, 0
      %p247 = por %p245, %p246
      %s249 = sadd.s32 %s248, 1
      %p252 = scmp.eq.s32.totalorder %s25, 1
      %p253 = scmp.ne.s32.totalorder %s248, %s250
      %p254 = scmp.eq.s32.totalorder %s25, 0
      %p255 = por %p253, %p254
      %p256 = scmp.ne.s32.totalorder %s248, %s250
      %p257 = scmp.eq.s32.totalorder %s30, 1
      %p258 = por %p256, %p257
      %p259 = scmp.ne.s32.totalorder %s250, %s251
      %p260 = scmp.eq.s32.totalorder %s30, 0
      %p261 = por %p259, %p260
      %p262 = scmp.ne.s32.totalorder %s250, %s251
      %p263 = scmp.eq.s32.totalorder %s31, 1
      %p264 = por %p262, %p263
      %p266 = scmp.ne.s32.totalorder %s251, %s265
      %p267 = scmp.eq.s32.totalorder %s31, 0
      %p268 = por %p266, %p267
      %s270 = sadd.s32 %s269, 1
      %p273 = scmp.eq.s32.totalorder %s25, 1
      %p274 = scmp.ne.s32.totalorder %s269, %s271
      %p275 = scmp.eq.s32.totalorder %s25, 0
      %p276 = por %p274, %p275
      %p277 = scmp.ne.s32.totalorder %s269, %s271
      %p278 = scmp.eq.s32.totalorder %s30, 1
      %p279 = por %p277, %p278
      %p280 = scmp.ne.s32.totalorder %s271, %s272
      %p281 = scmp.eq.s32.totalorder %s30, 0
      %p282 = por %p280, %p281
      %p283 = scmp.ne.s32.totalorder %s271, %s272
      %p284 = scmp.eq.s32.totalorder %s31, 1
      %p285 = por %p283, %p284
      %p287 = scmp.ne.s32.totalorder %s272, %s286
      %p288 = scmp.eq.s32.totalorder %s31, 0
      %p289 = por %p287, %p288
      %s291 = sadd.s32 %s290, 1
      %p294 = scmp.eq.s32.totalorder %s25, 1
      %p295 = scmp.ne.s32.totalorder %s290, %s292
      %p296 = scmp.eq.s32.totalorder %s25, 0
      %p297 = por %p295, %p296
      %p298 = scmp.ne.s32.totalorder %s290, %s292
      %p299 = scmp.eq.s32.totalorder %s30, 1
      %p300 = por %p298, %p299
      %p301 = scmp.ne.s32.totalorder %s292, %s293
      %p302 = scmp.eq.s32.totalorder %s30, 0
      %p303 = por %p301, %p302
      %p304 = scmp.ne.s32.totalorder %s292, %s293
      %p305 = scmp.eq.s32.totalorder %s31, 1
      %p306 = por %p304, %p305
      %p308 = scmp.ne.s32.totalorder %s293, %s307
      %p309 = scmp.eq.s32.totalorder %s31, 0
      %p310 = por %p308, %p309
      %s311 = ssub.s32 %s25, %s32
      %p312 = scmp.eq.s32.totalorder %s311, 0
      %s314 = sadd.s32 %s313, 1
      %s315 = scalar_select %p312, %s313, %s314
      %p318 = pneg %p312
      %p319 = scmp.eq.s32.totalorder %s25, 1
      %p320 = por %p318, %p319
      %p321 = scmp.ne.s32.totalorder %s313, %s316
      %p322 = scmp.eq.s32.totalorder %s25, 0
      %p323 = por %p321, %p322
      %p324 = scmp.ne.s32.totalorder %s313, %s316
      %p325 = scmp.eq.s32.totalorder %s30, 1
      %p326 = por %p324, %p325
      %p327 = scmp.ne.s32.totalorder %s316, %s317
      %p328 = scmp.eq.s32.totalorder %s30, 0
      %p329 = por %p327, %p328
      %p330 = scmp.ne.s32.totalorder %s316, %s317
      %p331 = scmp.eq.s32.totalorder %s31, 1
      %p332 = por %p330, %p331
      %p334 = scmp.ne.s32.totalorder %s317, %s333
      %p335 = scmp.eq.s32.totalorder %s31, 0
      %p336 = por %p334, %p335
      %p337 = scmp.le.s32.totalorder 1, %s25
      %p338 = scmp.lt.s32.totalorder %s25, 3
      %p339 = pnand %p337, %p338
      %p340 = pneg %p339
      // Predicated region
      $region9: #{lighter_forward.2} parent=5 // pred_check
        _
      $region10: #{lighter_forward.2} parent=5 // pred_check_branch
        %342 = sbr.rel (%p339) target = $region12
      $region11: #{lighter_forward.2} parent=5 // pred_region
        %s343 = ssub.s32 %s25, 1
        // Predicated region
        $region13: #{lighter_forward.2} parent=11 // pred_check
          %p344 = pneg %p46
        $region14: #{lighter_forward.2} parent=11 // pred_check_branch
          %346 = sbr.rel (%p344) target = $region16
        $region15: #{lighter_forward.2} parent=11 // pred_region
          _
        $region16: #{lighter_forward.2} parent=11 // pred_fallthru
          _
        // Predicated region
        $region17: #{lighter_forward.2} parent=11 // pred_check
          %p347 = pneg %p93
        $region18: #{lighter_forward.2} parent=11 // pred_check_branch
          %349 = sbr.rel (%p347) target = $region20
        $region19: #{lighter_forward.2} parent=11 // pred_region
          %s351 = ssub.s32 512, 512
          %352 = vsyncadd [#allocation4], %s351
          %s353 = sshll.u32 [#allocation3], 4
          %s354 = int_to_ptr.vmem [resolvable:$true] %s353
          %359 = dma.hbm_to_vmem [thread:$0]  %s2, 512, %s354, [#allocation4], 128, 128, 8
        $region20: #{lighter_forward.2} parent=11 // pred_fallthru
          _
        // Predicated region
        $region21: #{lighter_forward.2} parent=11 // pred_check
          %p360 = pneg %p114
        $region22: #{lighter_forward.2} parent=11 // pred_check_branch
          %362 = sbr.rel (%p360) target = $region24
        $region23: #{lighter_forward.2} parent=11 // pred_region
          %s364 = ssub.s32 25600, 25600
          %365 = vsyncadd [#allocation6], %s364
          %s366 = sshll.u32 [#allocation5], 4
          %s367 = int_to_ptr.vmem [resolvable:$true] %s366
          %372 = dma.hbm_to_vmem [thread:$0]  %s3, 25600, %s367, [#allocation6], 64, 64, 4
        $region24: #{lighter_forward.2} parent=11 // pred_fallthru
          _
        // Predicated region
        $region25: #{lighter_forward.2} parent=11 // pred_check
          %p373 = pneg %p135
        $region26: #{lighter_forward.2} parent=11 // pred_check_branch
          %375 = sbr.rel (%p373) target = $region28
        $region27: #{lighter_forward.2} parent=11 // pred_region
          _
        $region28: #{lighter_forward.2} parent=11 // pred_fallthru
          _
        // Predicated region
        $region29: #{lighter_forward.2} parent=11 // pred_check
          %p376 = pneg %p156
        $region30: #{lighter_forward.2} parent=11 // pred_check_branch
          %378 = sbr.rel (%p376) target = $region32
        $region31: #{lighter_forward.2} parent=11 // pred_region
          %s380 = ssub.s32 256, 256
          %381 = vsyncadd [#allocation6], %s380
          %s382 = sshll.u32 [#allocation7], 4
          %s383 = int_to_ptr.vmem [resolvable:$true] %s382
          %388 = dma.hbm_to_vmem [thread:$0]  %s5, 256, %s383, [#allocation6], 64, 64, 4
        $region32: #{lighter_forward.2} parent=11 // pred_fallthru
          _
        // Predicated region
        $region33: #{lighter_forward.2} parent=11 // pred_check
          %p389 = pneg %p177
        $region34: #{lighter_forward.2} parent=11 // pred_check_branch
          %391 = sbr.rel (%p389) target = $region36
        $region35: #{lighter_forward.2} parent=11 // pred_region
          %s393 = ssub.s32 128, 128
          %394 = vsyncadd [#allocation9], %s393
          %s395 = sshll.u32 [#allocation8], 4
          %s396 = int_to_ptr.vmem [resolvable:$true] %s395
          %401 = dma.hbm_to_vmem [thread:$0]  %s6, 128, %s396, [#allocation9], 64, 64, 4
        $region36: #{lighter_forward.2} parent=11 // pred_fallthru
          _
        // Predicated region
        $region37: #{lighter_forward.2} parent=11 // pred_check
          %p402 = pneg %p198
        $region38: #{lighter_forward.2} parent=11 // pred_check_branch
          %404 = sbr.rel (%p402) target = $region40
        $region39: #{lighter_forward.2} parent=11 // pred_region
          %s406 = ssub.s32 16, 16
          %407 = vsyncadd [#allocation9], %s406
          %s409 = sshll.u32 [#allocation10], 4
          %s410 = int_to_ptr.vmem [resolvable:$true] %s409
          %412 = dma.hbm_to_vmem [thread:$0]  %s7, 16, %s410, [#allocation9]
        $region40: #{lighter_forward.2} parent=11 // pred_fallthru
          _
        // Predicated region
        $region41: #{lighter_forward.2} parent=11 // pred_check
          %p413 = pneg %p219
        $region42: #{lighter_forward.2} parent=11 // pred_check_branch
          %415 = sbr.rel (%p413) target = $region44
        $region43: #{lighter_forward.2} parent=11 // pred_region
          _
        $region44: #{lighter_forward.2} parent=11 // pred_fallthru
          _
        // Predicated region
        $region45: #{lighter_forward.2} parent=11 // pred_check
          %p416 = pneg %p240
        $region46: #{lighter_forward.2} parent=11 // pred_check_branch
          %418 = sbr.rel (%p416) target = $region48
        $region47: #{lighter_forward.2} parent=11 // pred_region
          %s420 = ssub.s32 512, 512
          %421 = vsyncadd [#allocation12], %s420
          %s422 = sshll.u32 [#allocation11], 4
          %s423 = int_to_ptr.vmem [resolvable:$true] %s422
          %428 = dma.hbm_to_vmem [thread:$0]  %s9, 512, %s423, [#allocation12], 64, 64, 4
        $region48: #{lighter_forward.2} parent=11 // pred_fallthru
          _
        // Predicated region
        $region49: #{lighter_forward.2} parent=11 // pred_check
          %p429 = pneg %p261
        $region50: #{lighter_forward.2} parent=11 // pred_check_branch
          %431 = sbr.rel (%p429) target = $region52
        $region51: #{lighter_forward.2} parent=11 // pred_region
          %s433 = ssub.s32 256, 256
          %434 = vsyncadd [#allocation12], %s433
          %s435 = sshll.u32 [#allocation13], 4
          %s436 = int_to_ptr.vmem [resolvable:$true] %s435
          %441 = dma.hbm_to_vmem [thread:$0]  %s10, 256, %s436, [#allocation12], 64, 64, 4
        $region52: #{lighter_forward.2} parent=11 // pred_fallthru
          _
        // Predicated region
        $region53: #{lighter_forward.2} parent=11 // pred_check
          %p442 = pneg %p282
        $region54: #{lighter_forward.2} parent=11 // pred_check_branch
          %444 = sbr.rel (%p442) target = $region56
        $region55: #{lighter_forward.2} parent=11 // pred_region
          %s446 = ssub.s32 128, 128
          %447 = vsyncadd [#allocation15], %s446
          %s448 = sshll.u32 [#allocation14], 4
          %s449 = int_to_ptr.vmem [resolvable:$true] %s448
          %454 = dma.hbm_to_vmem [thread:$0]  %s11, 128, %s449, [#allocation15], 64, 64, 4
        $region56: #{lighter_forward.2} parent=11 // pred_fallthru
          _
        // Predicated region
        $region57: #{lighter_forward.2} parent=11 // pred_check
          %p455 = pneg %p303
        $region58: #{lighter_forward.2} parent=11 // pred_check_branch
          %457 = sbr.rel (%p455) target = $region60
        $region59: #{lighter_forward.2} parent=11 // pred_region
          %s459 = ssub.s32 16, 16
          %460 = vsyncadd [#allocation15], %s459
          %s462 = sshll.u32 [#allocation16], 4
          %s463 = int_to_ptr.vmem [resolvable:$true] %s462
          %465 = dma.hbm_to_vmem [thread:$0]  %s12, 16, %s463, [#allocation15]
        $region60: #{lighter_forward.2} parent=11 // pred_fallthru
          _
      $region12: #{lighter_forward.2} parent=5 // pred_fallthru
        _
      %p466 = scmp.lt.s32.totalorder %s25, 2
      // Predicated region
      $region61: #{lighter_forward.2} parent=5 // pred_check
        %p467 = pneg %p466
      $region62: #{lighter_forward.2} parent=5 // pred_check_branch
        %469 = sbr.rel (%p467) target = $region64
      $region63: #{lighter_forward.2} parent=5 // pred_region
        // Predicated region
        $region65: #{lighter_forward.2} parent=63 // pred_check
          %p470 = pneg %p66
        $region66: #{lighter_forward.2} parent=63 // pred_check_branch
          %472 = sbr.rel (%p470) target = $region68
        $region67: #{lighter_forward.2} parent=63 // pred_region
          %p473 = scmp.lt.s32.totalorder %s25, 1
          %s474 = scalar_select %p473, %s25, 1
          %s475 = smul.addr %s474, 2
          %s476 = smul.addr %s475, 8
          %s477 = scalar_lea.vmem %s1, %s476
        $region68: #{lighter_forward.2} parent=63 // pred_fallthru
          _
      $region64: #{lighter_forward.2} parent=5 // pred_fallthru
        _
      %p478 = scmp.le.s32.totalorder 1, %s25
      %p479 = scmp.lt.s32.totalorder %s25, 3
      %p480 = pnand %p478, %p479
      %p481 = pneg %p480
      // Predicated region
      $region69: #{lighter_forward.2} parent=5 // pred_check
        _
      $region70: #{lighter_forward.2} parent=5 // pred_check_branch
        %483 = sbr.rel (%p480) target = $region72
      $region71: #{lighter_forward.2} parent=5 // pred_region
        %s484 = ssub.s32 %s25, 1
        // Predicated region
        $region73: #{lighter_forward.2} parent=71 // pred_check
          %p485 = pneg %p93
        $region74: #{lighter_forward.2} parent=71 // pred_check_branch
          %487 = sbr.rel (%p485) target = $region76
        $region75: #{lighter_forward.2} parent=71 // pred_region
          %488 = dma.done [#allocation4], 512
        $region76: #{lighter_forward.2} parent=71 // pred_fallthru
          _
        // Predicated region
        $region77: #{lighter_forward.2} parent=71 // pred_check
          %p489 = pneg %p114
        $region78: #{lighter_forward.2} parent=71 // pred_check_branch
          %491 = sbr.rel (%p489) target = $region80
        $region79: #{lighter_forward.2} parent=71 // pred_region
          %492 = dma.done [#allocation6], 25600
        $region80: #{lighter_forward.2} parent=71 // pred_fallthru
          _
        // Predicated region
        $region81: #{lighter_forward.2} parent=71 // pred_check
          %p493 = pneg %p156
        $region82: #{lighter_forward.2} parent=71 // pred_check_branch
          %495 = sbr.rel (%p493) target = $region84
        $region83: #{lighter_forward.2} parent=71 // pred_region
          %496 = dma.done [#allocation6], 256
        $region84: #{lighter_forward.2} parent=71 // pred_fallthru
          _
        // Predicated region
        $region85: #{lighter_forward.2} parent=71 // pred_check
          %p497 = pneg %p177
        $region86: #{lighter_forward.2} parent=71 // pred_check_branch
          %499 = sbr.rel (%p497) target = $region88
        $region87: #{lighter_forward.2} parent=71 // pred_region
          %500 = dma.done [#allocation9], 128
        $region88: #{lighter_forward.2} parent=71 // pred_fallthru
          _
        // Predicated region
        $region89: #{lighter_forward.2} parent=71 // pred_check
          %p501 = pneg %p198
        $region90: #{lighter_forward.2} parent=71 // pred_check_branch
          %503 = sbr.rel (%p501) target = $region92
        $region91: #{lighter_forward.2} parent=71 // pred_region
          %504 = dma.done [#allocation9], 16
        $region92: #{lighter_forward.2} parent=71 // pred_fallthru
          _
        // Predicated region
        $region93: #{lighter_forward.2} parent=71 // pred_check
          %p505 = pneg %p240
        $region94: #{lighter_forward.2} parent=71 // pred_check_branch
          %507 = sbr.rel (%p505) target = $region96
        $region95: #{lighter_forward.2} parent=71 // pred_region
          %508 = dma.done [#allocation12], 512
        $region96: #{lighter_forward.2} parent=71 // pred_fallthru
          _
        // Predicated region
        $region97: #{lighter_forward.2} parent=71 // pred_check
          %p509 = pneg %p261
        $region98: #{lighter_forward.2} parent=71 // pred_check_branch
          %511 = sbr.rel (%p509) target = $region100
        $region99: #{lighter_forward.2} parent=71 // pred_region
          %512 = dma.done [#allocation12], 256
        $region100: #{lighter_forward.2} parent=71 // pred_fallthru
          _
        // Predicated region
        $region101: #{lighter_forward.2} parent=71 // pred_check
          %p513 = pneg %p282
        $region102: #{lighter_forward.2} parent=71 // pred_check_branch
          %515 = sbr.rel (%p513) target = $region104
        $region103: #{lighter_forward.2} parent=71 // pred_region
          %516 = dma.done [#allocation15], 128
        $region104: #{lighter_forward.2} parent=71 // pred_fallthru
          _
        // Predicated region
        $region105: #{lighter_forward.2} parent=71 // pred_check
          %p517 = pneg %p303
        $region106: #{lighter_forward.2} parent=71 // pred_check_branch
          %519 = sbr.rel (%p517) target = $region108
        $region107: #{lighter_forward.2} parent=71 // pred_region
          %520 = dma.done [#allocation15], 16
        $region108: #{lighter_forward.2} parent=71 // pred_fallthru
          _
        %p521 = pneg %p46
        %p522 = pneg %p43
        %p523 = scmp.lt.s32.totalorder %s30, 1
        %s524 = scalar_select %p523, %s30, 1
        %s525 = smul.addr %s524, 2
        %s526 = smul.addr %s525, 8
        %s527 = scalar_lea.vmem %s1, %s526
        %p528 = pneg %p72
        %p529 = pneg %p69
        %p530 = pneg %p93
        %p531 = pneg %p90
        %p532 = pneg %p114
        %p533 = pneg %p111
        %p534 = pneg %p135
        %p535 = pneg %p132
        %p536 = pneg %p156
        %p537 = pneg %p153
        %p538 = pneg %p177
        %p539 = pneg %p174
        %p540 = pneg %p198
        %p541 = pneg %p195
        %p542 = pneg %p219
        %p543 = pneg %p216
        %p544 = pneg %p240
        %p545 = pneg %p237
        %p546 = pneg %p261
        %p547 = pneg %p258
        %p548 = pneg %p282
        %p549 = pneg %p279
        %p550 = pneg %p303
        %p551 = pneg %p300
        %p552 = pneg %p329
        %p553 = pneg %p326
        %p554 = scmp.lt.s32.totalorder %s30, 1
        %s555 = scalar_select %p554, %s30, 1
        %s556 = scalar_lea.vmem %s13, %s555
        %p557 = scmp.lt.s32.totalorder %s30, 1
        %s558 = scalar_select %p557, %s30, 1
        %s559 = smul.addr %s558, 2
        %s560 = smul.addr %s559, 8
        %s561 = scalar_lea.vmem %s1, %s560
        %p562 = scmp.lt.s32.totalorder %s30, 1
        %s563 = scalar_select %p562, %s30, 1
        %s564 = scalar_lea.vmem %s13, %s563
        %v566 = vlaneseq
        %v567 = vand.u32 %v566, 127
        %vm568 = vcmp.lt.s32.totalorder %v567, 100
        %v569 = vld [vmem:[#allocation3] sm:$0xff]
        %v570 = vld [vmem:[#allocation3 + $0x8] sm:$0xff]
        %v571 = vld [vmem:[#allocation3 + $0x10] sm:$0xff]
        %v572 = vld [vmem:[#allocation3 + $0x18] sm:$0x1]
        %vm573 = vcmp.gt.f32.partialorder %v569, 0.5
        %vm574 = vcmp.gt.f32.partialorder %v570, 0.5
        %vm575 = vcmp.gt.f32.partialorder %v571, 0.5
        %vm576 = vcmp.gt.f32.partialorder %v572, 0.5
        %s577 = sld [smem:[#allocation2]]
        %s578 = smul.f32 %s577, %s577
        %v579 = vld [vmem:[%s561] sm:$0xff]
        %v580 = vld [vmem:[%s561 + $0x8] sm:$0x1]
        %v581 = vmul.f32 %v579, 255.0
        %v582 = vmul.f32 %v580, 255.0
        %v583 = vadd.f32 %v581, 100.0
        %v584 = vadd.f32 %v582, 100.0
        %v585 = vpack.c.bf16 %v584, %v583
        %v586 = vld [vmem:[%s4] sm:$0xf]
        %v587 = vld [vmem:[%s4 + $0x4] sm:$0xf]
        %v588 = vld [vmem:[%s4 + $0x8] sm:$0xf]
        %v589 = vld [vmem:[%s4 + $0xc] sm:$0xf]
        %v590 = vld [vmem:[%s4 + $0x10] sm:$0xf]
        %v591 = vld [vmem:[%s4 + $0x14] sm:$0xf]
        %v592 = vld [vmem:[%s4 + $0x18] sm:$0xf]
        %v593 = vld [vmem:[%s4 + $0x1c] sm:$0xf]
        %v594 = vld [vmem:[%s4 + $0x20] sm:$0xf]
        %v595 = vld [vmem:[%s4 + $0x24] sm:$0xf]
        %v596 = vld [vmem:[%s4 + $0x28] sm:$0xf]
        %v597 = vld [vmem:[%s4 + $0x2c] sm:$0xf]
        %v598 = vld [vmem:[%s4 + $0x30] sm:$0xf]
        %v599 = vld [vmem:[%s4 + $0x34] sm:$0xf]
        %v600 = vld [vmem:[%s4 + $0x38] sm:$0xf]
        %v601 = vld [vmem:[%s4 + $0x3c] sm:$0xf]
        %v618 = vunpack.c.l.b16 %v586
        %v619 = vunpack.c.l.b16 %v587
        %v620 = vunpack.c.l.b16 %v588
        %v621 = vunpack.c.l.b16 %v589
        %v622 = vunpack.c.l.b16 %v590
        %v623 = vunpack.c.l.b16 %v591
        %v624 = vunpack.c.l.b16 %v592
        %v625 = vunpack.c.l.b16 %v593
        %v626 = vunpack.c.l.b16 %v594
        %v627 = vunpack.c.l.b16 %v595
        %v628 = vunpack.c.l.b16 %v596
        %v629 = vunpack.c.l.b16 %v597
        %v630 = vunpack.c.l.b16 %v598
        %v631 = vunpack.c.l.b16 %v599
        %v632 = vunpack.c.l.b16 %v600
        %v633 = vunpack.c.l.b16 %v601
        %v634 = vpack.c.b16 %v619, %v618
        %v635 = vpack.c.b16 %v621, %v620
        %v636 = vpack.c.b16 %v623, %v622
        %v637 = vpack.c.b16 %v625, %v624
        %v638 = vpack.c.b16 %v627, %v626
        %v639 = vpack.c.b16 %v629, %v628
        %v640 = vpack.c.b16 %v631, %v630
        %v641 = vpack.c.b16 %v633, %v632
        %vm642 = vcmask 72704
        %v644 = vsel %vm642, %v634, 0
        %v647 = vsel %vm642, %v635, 0
        %v650 = vsel %vm642, %v636, 0
        %v653 = vsel %vm642, %v637, 0
        %v656 = vsel %vm642, %v638, 0
        %v659 = vsel %vm642, %v639, 0
        %v662 = vsel %vm642, %v640, 0
        %v665 = vsel %vm642, %v641, 0
        %vm667 = vcmask 1043456
        %vm668 = vcmask 1044480
        %v669 = vsel %vm667, 4294967295, 65535
        %v670 = vsel %vm668, %v669, 0
        %v672 = vand.u32 %v585, %v670
        %674 = vmatprep.subr.bf16.mxu0 0
        %675 = vmatpush1.bf16.msra.mxu0 %v672
        %676 = vmatprep.subr.bf16.mxu0 0
        %677 = vmatpush1.bf16.msra.mxu0 0
        %678 = vmatprep.subr.bf16.mxu0 0
        %679 = vmatpush1.bf16.msra.mxu0 0
        %680 = vmatprep.subr.bf16.mxu0 0
        %681 = vmatpush1.bf16.msra.mxu0 0
        %682 = vmatprep.subr.bf16.mxu0 0
        %683 = vmatpush1.bf16.msra.mxu0 0
        %684 = vmatprep.subr.bf16.mxu0 0
        %685 = vmatpush1.bf16.msra.mxu0 0
        %686 = vmatprep.subr.bf16.mxu0 0
        %687 = vmatpush1.bf16.msra.mxu0 0
        %688 = vmatprep.subr.bf16.mxu0 0
        %689 = vmatpush1.bf16.msra.mxu0 0
        %690 = vmatprep.subr.bf16.mxu0 0
        %691 = vmatpush1.bf16.msra.mxu0 0
        %692 = vmatprep.subr.bf16.mxu0 0
        %693 = vmatpush1.bf16.msra.mxu0 0
        %694 = vmatprep.subr.bf16.mxu0 0
        %695 = vmatpush1.bf16.msra.mxu0 0
        %696 = vmatprep.subr.bf16.mxu0 0
        %697 = vmatpush1.bf16.msra.mxu0 0
        %698 = vmatprep.subr.bf16.mxu0 0
        %699 = vmatpush1.bf16.msra.mxu0 0
        %700 = vmatprep.subr.bf16.mxu0 0
        %701 = vmatpush1.bf16.msra.mxu0 0
        %702 = vmatprep.subr.bf16.mxu0 0
        %703 = vmatpush1.bf16.msra.mxu0 0
        %704 = vmatprep.subr.bf16.mxu0 0
        %705 = vmatpush1.bf16.msra.mxu0 0
        %706 = vmatprep.mubr.bf16.mxu0 0
        %707 = vmatmul.mubr.bf16.gmra.mrb[0].mxu0 %v644
        %v708 = vpop.f32.mrb[0].mxu0
        %v709 = vadd.f32 0.0, %v708
        %v710 = vpop.f32.mrb[0].mxu0
        %v711 = vpop.f32.mrb[0].mxu0
        %v712 = vadd.f32 0.0, %v711
        %v713 = vpop.f32.mrb[0].mxu0
        %714 = vmatprep.mubr.bf16.mxu0 0
        %715 = vmatmul.mubr.bf16.gmra.mrb[0].mxu0 %v647
        %v716 = vpop.f32.mrb[0].mxu0
        %v717 = vadd.f32 0.0, %v716
        %v718 = vpop.f32.mrb[0].mxu0
        %v719 = vpop.f32.mrb[0].mxu0
        %v720 = vadd.f32 0.0, %v719
        %v721 = vpop.f32.mrb[0].mxu0
        %722 = vmatprep.mubr.bf16.mxu0 0
        %723 = vmatmul.mubr.bf16.gmra.mrb[0].mxu0 %v650
        %v724 = vpop.f32.mrb[0].mxu0
        %v725 = vadd.f32 0.0, %v724
        %v726 = vpop.f32.mrb[0].mxu0
        %v727 = vpop.f32.mrb[0].mxu0
        %v728 = vadd.f32 0.0, %v727
        %v729 = vpop.f32.mrb[0].mxu0
        %730 = vmatprep.mubr.bf16.mxu0 0
        %731 = vmatmul.mubr.bf16.gmra.mrb[0].mxu0 %v653
        %v732 = vpop.f32.mrb[0].mxu0
        %v733 = vadd.f32 0.0, %v732
        %v734 = vpop.f32.mrb[0].mxu0
        %v735 = vpop.f32.mrb[0].mxu0
        %v736 = vadd.f32 0.0, %v735
        %v737 = vpop.f32.mrb[0].mxu0
        %738 = vmatprep.mubr.bf16.mxu0 0
        %739 = vmatmul.mubr.bf16.gmra.mrb[0].mxu0 %v656
        %v740 = vpop.f32.mrb[0].mxu0
        %v741 = vadd.f32 0.0, %v740
        %v742 = vpop.f32.mrb[0].mxu0
        %v743 = vpop.f32.mrb[0].mxu0
        %v744 = vadd.f32 0.0, %v743
        %v745 = vpop.f32.mrb[0].mxu0
        %746 = vmatprep.mubr.bf16.mxu0 0
        %747 = vmatmul.mubr.bf16.gmra.mrb[0].mxu0 %v659
        %v748 = vpop.f32.mrb[0].mxu0
        %v749 = vadd.f32 0.0, %v748
        %v750 = vpop.f32.mrb[0].mxu0
        %v751 = vpop.f32.mrb[0].mxu0
        %v752 = vadd.f32 0.0, %v751
        %v753 = vpop.f32.mrb[0].mxu0
        %754 = vmatprep.mubr.bf16.mxu0 0
        %755 = vmatmul.mubr.bf16.gmra.mrb[0].mxu0 %v662
        %v756 = vpop.f32.mrb[0].mxu0
        %v757 = vadd.f32 0.0, %v756
        %v758 = vpop.f32.mrb[0].mxu0
        %v759 = vpop.f32.mrb[0].mxu0
        %v760 = vadd.f32 0.0, %v759
        %v761 = vpop.f32.mrb[0].mxu0
        %762 = vmatprep.mubr.bf16.mxu0 0
        %763 = vmatmul.mubr.bf16.gmra.mrb[0].mxu0 %v665
        %v764 = vpop.f32.mrb[0].mxu0
        %v765 = vadd.f32 0.0, %v764
        %v766 = vpop.f32.mrb[0].mxu0
        %v767 = vpop.f32.mrb[0].mxu0
        %v768 = vadd.f32 0.0, %v767
        %v769 = vpop.f32.mrb[0].mxu0
        %770 = vdwg.mxu0
        %v771 = vmax.f32 %v709, 0.0
        %v772 = vmax.f32 %v712, 0.0
        %v773 = vmax.f32 %v717, 0.0
        %v774 = vmax.f32 %v720, 0.0
        %v775 = vmax.f32 %v725, 0.0
        %v776 = vmax.f32 %v728, 0.0
        %v777 = vmax.f32 %v733, 0.0
        %v778 = vmax.f32 %v736, 0.0
        %v779 = vmax.f32 %v741, 0.0
        %v780 = vmax.f32 %v744, 0.0
        %v781 = vmax.f32 %v749, 0.0
        %v782 = vmax.f32 %v752, 0.0
        %v783 = vmax.f32 %v757, 0.0
        %v784 = vmax.f32 %v760, 0.0
        %v785 = vmax.f32 %v765, 0.0
        %v786 = vmax.f32 %v768, 0.0
        %v787 = vpack.c.bf16 %v772, %v771
        %v788 = vpack.c.bf16 %v774, %v773
        %v789 = vpack.c.bf16 %v776, %v775
        %v790 = vpack.c.bf16 %v778, %v777
        %v791 = vpack.c.bf16 %v780, %v779
        %v792 = vpack.c.bf16 %v782, %v781
        %v793 = vpack.c.bf16 %v784, %v783
        %v794 = vpack.c.bf16 %v786, %v785
        %v795 = vld [vmem:[#allocation7] sm:$0xf]
        %v796 = vld [vmem:[#allocation7 + $0x4] sm:$0xf]
        %v797 = vld [vmem:[#allocation7 + $0x8] sm:$0xf]
        %v798 = vld [vmem:[#allocation7 + $0xc] sm:$0xf]
        %v803 = vunpack.c.l.b16 %v795
        %v804 = vunpack.c.l.b16 %v796
        %v805 = vunpack.c.l.b16 %v797
        %v806 = vunpack.c.l.b16 %v798
        %v807 = vpack.c.b16 %v804, %v803
        %v808 = vpack.c.b16 %v806, %v805
        %811 = vmatprep.subr.bf16.mxu0 0
        %812 = vmatpush1.bf16.msra.mxu0 %v787
        %813 = vmatprep.subr.bf16.mxu0 0
        %814 = vmatpush1.bf16.msra.mxu0 %v788
        %815 = vmatprep.subr.bf16.mxu0 0
        %816 = vmatpush1.bf16.msra.mxu0 %v789
        %817 = vmatprep.subr.bf16.mxu0 0
        %818 = vmatpush1.bf16.msra.mxu0 %v790
        %819 = vmatprep.subr.bf16.mxu0 0
        %820 = vmatpush1.bf16.msra.mxu0 %v791
        %821 = vmatprep.subr.bf16.mxu0 0
        %822 = vmatpush1.bf16.msra.mxu0 %v792
        %823 = vmatprep.subr.bf16.mxu0 0
        %824 = vmatpush1.bf16.msra.mxu0 %v793
        %825 = vmatprep.subr.bf16.mxu0 0
        %826 = vmatpush1.bf16.msra.mxu0 %v794
        %827 = vmatprep.subr.bf16.mxu0 0
        %828 = vmatpush1.bf16.msra.mxu0 0
        %829 = vmatprep.subr.bf16.mxu0 0
        %830 = vmatpush1.bf16.msra.mxu0 0
        %831 = vmatprep.subr.bf16.mxu0 0
        %832 = vmatpush1.bf16.msra.mxu0 0
        %833 = vmatprep.subr.bf16.mxu0 0
        %834 = vmatpush1.bf16.msra.mxu0 0
        %835 = vmatprep.subr.bf16.mxu0 0
        %836 = vmatpush1.bf16.msra.mxu0 0
        %837 = vmatprep.subr.bf16.mxu0 0
        %838 = vmatpush1.bf16.msra.mxu0 0
        %839 = vmatprep.subr.bf16.mxu0 0
        %840 = vmatpush1.bf16.msra.mxu0 0
        %841 = vmatprep.subr.bf16.mxu0 0
        %842 = vmatpush1.bf16.msra.mxu0 0
        %843 = vmatprep.mubr.bf16.mxu0 0
        %844 = vmatmul.mubr.bf16.gmra.mrb[0].mxu0 %v807
        %v845 = vpop.f32.mrb[0].mxu0
        %v846 = vadd.f32 0.0, %v845
        %v847 = vpop.f32.mrb[0].mxu0
        %v848 = vpop.f32.mrb[0].mxu0
        %v849 = vadd.f32 0.0, %v848
        %v850 = vpop.f32.mrb[0].mxu0
        %851 = vmatprep.mubr.bf16.mxu0 0
        %852 = vmatmul.mubr.bf16.gmra.mrb[0].mxu0 %v808
        %v853 = vpop.f32.mrb[0].mxu0
        %v854 = vadd.f32 0.0, %v853
        %v855 = vpop.f32.mrb[0].mxu0
        %v856 = vpop.f32.mrb[0].mxu0
        %v857 = vadd.f32 0.0, %v856
        %v858 = vpop.f32.mrb[0].mxu0
        %859 = vdwg.mxu0
        %v860 = vmax.f32 %v846, 0.0
        %v861 = vmax.f32 %v849, 0.0
        %v862 = vmax.f32 %v854, 0.0
        %v863 = vmax.f32 %v857, 0.0
        %v864 = vpack.c.bf16 %v861, %v860
        %v865 = vpack.c.bf16 %v863, %v862
        %v866 = vld [vmem:[#allocation8] sm:$0xf]
        %v867 = vld [vmem:[#allocation8 + $0x4] sm:$0xf]
        %v870 = vunpack.c.l.b16 %v866
        %v871 = vunpack.c.l.b16 %v867
        %v872 = vpack.c.b16 %v871, %v870
        %vm873 = vcmask 261120
        %v875 = vsel %vm873, %v872, 0
        %877 = vmatprep.subr.bf16.mxu0 0
        %878 = vmatpush1.bf16.msra.mxu0 %v864
        %879 = vmatprep.subr.bf16.mxu0 0
        %880 = vmatpush1.bf16.msra.mxu0 %v865
        %881 = vmatprep.subr.bf16.mxu0 0
        %882 = vmatpush1.bf16.msra.mxu0 0
        %883 = vmatprep.subr.bf16.mxu0 0
        %884 = vmatpush1.bf16.msra.mxu0 0
        %885 = vmatprep.subr.bf16.mxu0 0
        %886 = vmatpush1.bf16.msra.mxu0 0
        %887 = vmatprep.subr.bf16.mxu0 0
        %888 = vmatpush1.bf16.msra.mxu0 0
        %889 = vmatprep.subr.bf16.mxu0 0
        %890 = vmatpush1.bf16.msra.mxu0 0
        %891 = vmatprep.subr.bf16.mxu0 0
        %892 = vmatpush1.bf16.msra.mxu0 0
        %893 = vmatprep.subr.bf16.mxu0 0
        %894 = vmatpush1.bf16.msra.mxu0 0
        %895 = vmatprep.subr.bf16.mxu0 0
        %896 = vmatpush1.bf16.msra.mxu0 0
        %897 = vmatprep.subr.bf16.mxu0 0
        %898 = vmatpush1.bf16.msra.mxu0 0
        %899 = vmatprep.subr.bf16.mxu0 0
        %900 = vmatpush1.bf16.msra.mxu0 0
        %901 = vmatprep.subr.bf16.mxu0 0
        %902 = vmatpush1.bf16.msra.mxu0 0
        %903 = vmatprep.subr.bf16.mxu0 0
        %904 = vmatpush1.bf16.msra.mxu0 0
        %905 = vmatprep.subr.bf16.mxu0 0
        %906 = vmatpush1.bf16.msra.mxu0 0
        %907 = vmatprep.subr.bf16.mxu0 0
        %908 = vmatpush1.bf16.msra.mxu0 0
        %909 = vmatprep.mubr.bf16.mxu0 0
        %910 = vmatmul.mubr.bf16.gmra.mrb[0].mxu0 %v875
        %v911 = vpop.f32.mrb[0].mxu0
        %v912 = vadd.f32 0.0, %v911
        %v913 = vpop.f32.mrb[0].mxu0
        %v914 = vpop.f32.mrb[0].mxu0
        %v915 = vadd.f32 0.0, %v914
        %v916 = vpop.f32.mrb[0].mxu0
        %917 = vdwg.mxu0
        %v918 = vmax.f32 %v912, 0.0
        %v919 = vmax.f32 %v915, 0.0
        %v920 = vpack.c.bf16 %v919, %v918
        %v921 = vld [vmem:[#allocation10] sm:$0x1]
        %vm922 = vcmask 130048
        %v924 = vsel %vm922, %v921, 0
        %926 = vmatprep.subr.bf16.mxu0 0
        %927 = vmatpush1.bf16.msra.mxu0 %v920
        %928 = vmatprep.subr.bf16.mxu0 0
        %929 = vmatpush1.bf16.msra.mxu0 0
        %930 = vmatprep.subr.bf16.mxu0 0
        %931 = vmatpush1.bf16.msra.mxu0 0
        %932 = vmatprep.subr.bf16.mxu0 0
        %933 = vmatpush1.bf16.msra.mxu0 0
        %934 = vmatprep.subr.bf16.mxu0 0
        %935 = vmatpush1.bf16.msra.mxu0 0
        %936 = vmatprep.subr.bf16.mxu0 0
        %937 = vmatpush1.bf16.msra.mxu0 0
        %938 = vmatprep.subr.bf16.mxu0 0
        %939 = vmatpush1.bf16.msra.mxu0 0
        %940 = vmatprep.subr.bf16.mxu0 0
        %941 = vmatpush1.bf16.msra.mxu0 0
        %942 = vmatprep.subr.bf16.mxu0 0
        %943 = vmatpush1.bf16.msra.mxu0 0
        %944 = vmatprep.subr.bf16.mxu0 0
        %945 = vmatpush1.bf16.msra.mxu0 0
        %946 = vmatprep.subr.bf16.mxu0 0
        %947 = vmatpush1.bf16.msra.mxu0 0
        %948 = vmatprep.subr.bf16.mxu0 0
        %949 = vmatpush1.bf16.msra.mxu0 0
        %950 = vmatprep.subr.bf16.mxu0 0
        %951 = vmatpush1.bf16.msra.mxu0 0
        %952 = vmatprep.subr.bf16.mxu0 0
        %953 = vmatpush1.bf16.msra.mxu0 0
        %954 = vmatprep.subr.bf16.mxu0 0
        %955 = vmatpush1.bf16.msra.mxu0 0
        %956 = vmatprep.subr.bf16.mxu0 0
        %957 = vmatpush1.bf16.msra.mxu0 0
        %958 = vmatprep.mubr.bf16.mxu0 0
        %959 = vmatmul.mubr.bf16.gmra.mrb[0].mxu0 %v924
        %v960 = vpop.f32.mrb[0].mxu0
        %v961 = vadd.f32 0.0, %v960
        %v962 = vpop.f32.mrb[0].mxu0
        %v963 = vpop.f32.mrb[0].mxu0
        %v964 = vpop.f32.mrb[0].mxu0
        %965 = vdwg.mxu0
        %v966 = vsel %vm568, %v961, -inf
        %vm967 = vcmask 1040384
        %v968 = vsel %vm967, %v966, -inf
        %969 = vmax.xlane.f32.xlu0 %v968
        %v970 = vpop.xlane.xlu0 %969
        %v971 = vsel %vm568, %v961, inf
        %v972 = vsel %vm967, %v971, inf
        %973 = vmin.xlane.f32.xlu0 %v972
        %v974 = vpop.xlane.xlu0 %973
        %v975 = vsub.f32 %v961, %v974
        %v976 = vsub.f32 %v970, %v974
        %v977 = vadd.f32 %v976, 1e-12
        %v978 = vrcp.pop %v977
        %v979 = vmul.f32 255.0, %v978
        %v980 = vmul.f32 %v975, %v979
        %v981 = vadd.f32 %v980, 100.0
        %v982 = vpack.c.bf16 %v981, %v981
        %v983 = vld [vmem:[#allocation5] sm:$0xf]
        %v984 = vld [vmem:[#allocation5 + $0x4] sm:$0xf]
        %v985 = vld [vmem:[#allocation5 + $0x8] sm:$0xf]
        %v986 = vld [vmem:[#allocation5 + $0xc] sm:$0xf]
        %v987 = vld [vmem:[#allocation5 + $0x10] sm:$0xf]
        %v988 = vld [vmem:[#allocation5 + $0x14] sm:$0xf]
        %v989 = vld [vmem:[#allocation5 + $0x18] sm:$0xf]
        %v990 = vld [vmem:[#allocation5 + $0x1c] sm:$0xf]
        %v991 = vld [vmem:[#allocation5 + $0x20] sm:$0xf]
        %v992 = vld [vmem:[#allocation5 + $0x24] sm:$0xf]
        %v993 = vld [vmem:[#allocation5 + $0x28] sm:$0xf]
        %v994 = vld [vmem:[#allocation5 + $0x2c] sm:$0xf]
        %v995 = vld [vmem:[#allocation5 + $0x30] sm:$0xf]
        %v996 = vld [vmem:[#allocation5 + $0x34] sm:$0xf]
        %v997 = vld [vmem:[#allocation5 + $0x38] sm:$0xf]
        %v998 = vld [vmem:[#allocation5 + $0x3c] sm:$0xf]
        %v1015 = vunpack.c.l.b16 %v983
        %v1016 = vunpack.c.l.b16 %v984
        %v1017 = vunpack.c.l.b16 %v985
        %v1018 = vunpack.c.l.b16 %v986
        %v1019 = vunpack.c.l.b16 %v987
        %v1020 = vunpack.c.l.b16 %v988
        %v1021 = vunpack.c.l.b16 %v989
        %v1022 = vunpack.c.l.b16 %v990
        %v1023 = vunpack.c.l.b16 %v991
        %v1024 = vunpack.c.l.b16 %v992
        %v1025 = vunpack.c.l.b16 %v993
        %v1026 = vunpack.c.l.b16 %v994
        %v1027 = vunpack.c.l.b16 %v995
        %v1028 = vunpack.c.l.b16 %v996
        %v1029 = vunpack.c.l.b16 %v997
        %v1030 = vunpack.c.l.b16 %v998
        %v1031 = vpack.c.b16 %v1016, %v1015
        %v1032 = vpack.c.b16 %v1018, %v1017
        %v1033 = vpack.c.b16 %v1020, %v1019
        %v1034 = vpack.c.b16 %v1022, %v1021
        %v1035 = vpack.c.b16 %v1024, %v1023
        %v1036 = vpack.c.b16 %v1026, %v1025
        %v1037 = vpack.c.b16 %v1028, %v1027
        %v1038 = vpack.c.b16 %v1030, %v1029
        %1047 = vmatprep.subr.bf16.mxu0 0
        %1048 = vmatpush1.bf16.msra.mxu0 %v1031
        %1049 = vmatprep.subr.bf16.mxu0 0
        %1050 = vmatpush1.bf16.msra.mxu0 %v1032
        %1051 = vmatprep.subr.bf16.mxu0 0
        %1052 = vmatpush1.bf16.msra.mxu0 %v1033
        %1053 = vmatprep.subr.bf16.mxu0 0
        %1054 = vmatpush1.bf16.msra.mxu0 %v1034
        %1055 = vmatprep.subr.bf16.mxu0 0
        %1056 = vmatpush1.bf16.msra.mxu0 %v1035
        %1057 = vmatprep.subr.bf16.mxu0 0
        %1058 = vmatpush1.bf16.msra.mxu0 %v1036
        %1059 = vmatprep.subr.bf16.mxu0 0
        %1060 = vmatpush1.bf16.msra.mxu0 %v1037
        %1061 = vmatprep.subr.bf16.mxu0 0
        %1062 = vmatpush1.bf16.msra.mxu0 %v1038
        %1063 = vmatprep.subr.bf16.mxu0 0
        %1064 = vmatpush1.bf16.msra.mxu0 0
        %1065 = vmatprep.subr.bf16.mxu0 0
        %1066 = vmatpush1.bf16.msra.mxu0 0
        %1067 = vmatprep.subr.bf16.mxu0 0
        %1068 = vmatpush1.bf16.msra.mxu0 0
        %1069 = vmatprep.subr.bf16.mxu0 0
        %1070 = vmatpush1.bf16.msra.mxu0 0
        %1071 = vmatprep.subr.bf16.mxu0 0
        %1072 = vmatpush1.bf16.msra.mxu0 0
        %1073 = vmatprep.subr.bf16.mxu0 0
        %1074 = vmatpush1.bf16.msra.mxu0 0
        %1075 = vmatprep.subr.bf16.mxu0 0
        %1076 = vmatpush1.bf16.msra.mxu0 0
        %1077 = vmatprep.subr.bf16.mxu0 0
        %1078 = vmatpush1.bf16.msra.mxu0 0
        %1079 = vmatprep.mubr.bf16.mxu0 0
        %1080 = vmatmul.mubr.bf16.gmra.mrb[0].mxu0 %v982
        %v1081 = vpop.f32.mrb[0].mxu0
        %v1082 = vadd.f32 0.0, %v1081
        %v1083 = vpop.f32.mrb[0].mxu0
        %v1084 = vpop.f32.mrb[0].mxu0
        %v1085 = vpop.f32.mrb[0].mxu0
        %1086 = vdwg.mxu0
        %s1087 = scalar_lea.vmem [#allocation5], 64
        %v1088 = vld [vmem:[%s1087] sm:$0xf]
        %v1089 = vld [vmem:[%s1087 + $0x4] sm:$0xf]
        %v1090 = vld [vmem:[%s1087 + $0x8] sm:$0xf]
        %v1091 = vld [vmem:[%s1087 + $0xc] sm:$0xf]
        %v1092 = vld [vmem:[%s1087 + $0x10] sm:$0xf]
        %v1093 = vld [vmem:[%s1087 + $0x14] sm:$0xf]
        %v1094 = vld [vmem:[%s1087 + $0x18] sm:$0xf]
        %v1095 = vld [vmem:[%s1087 + $0x1c] sm:$0xf]
        %v1096 = vld [vmem:[%s1087 + $0x20] sm:$0xf]
        %v1097 = vld [vmem:[%s1087 + $0x24] sm:$0xf]
        %v1098 = vld [vmem:[%s1087 + $0x28] sm:$0xf]
        %v1099 = vld [vmem:[%s1087 + $0x2c] sm:$0xf]
        %v1100 = vld [vmem:[%s1087 + $0x30] sm:$0xf]
        %v1101 = vld [vmem:[%s1087 + $0x34] sm:$0xf]
        %v1102 = vld [vmem:[%s1087 + $0x38] sm:$0xf]
        %v1103 = vld [vmem:[%s1087 + $0x3c] sm:$0xf]
        %v1120 = vunpack.c.l.b16 %v1088
        %v1121 = vunpack.c.l.b16 %v1089
        %v1122 = vunpack.c.l.b16 %v1090
        %v1123 = vunpack.c.l.b16 %v1091
        %v1124 = vunpack.c.l.b16 %v1092
        %v1125 = vunpack.c.l.b16 %v1093
        %v1126 = vunpack.c.l.b16 %v1094
        %v1127 = vunpack.c.l.b16 %v1095
        %v1128 = vunpack.c.l.b16 %v1096
        %v1129 = vunpack.c.l.b16 %v1097
        %v1130 = vunpack.c.l.b16 %v1098
        %v1131 = vunpack.c.l.b16 %v1099
        %v1132 = vunpack.c.l.b16 %v1100
        %v1133 = vunpack.c.l.b16 %v1101
        %v1134 = vunpack.c.l.b16 %v1102
        %v1135 = vunpack.c.l.b16 %v1103
        %v1136 = vpack.c.b16 %v1121, %v1120
        %v1137 = vpack.c.b16 %v1123, %v1122
        %v1138 = vpack.c.b16 %v1125, %v1124
        %v1139 = vpack.c.b16 %v1127, %v1126
        %v1140 = vpack.c.b16 %v1129, %v1128
        %v1141 = vpack.c.b16 %v1131, %v1130
        %v1142 = vpack.c.b16 %v1133, %v1132
        %v1143 = vpack.c.b16 %v1135, %v1134
        %1152 = vmatprep.subr.bf16.mxu0 0
        %1153 = vmatpush1.bf16.msra.mxu0 %v1136
        %1154 = vmatprep.subr.bf16.mxu0 0
        %1155 = vmatpush1.bf16.msra.mxu0 %v1137
        %1156 = vmatprep.subr.bf16.mxu0 0
        %1157 = vmatpush1.bf16.msra.mxu0 %v1138
        %1158 = vmatprep.subr.bf16.mxu0 0
        %1159 = vmatpush1.bf16.msra.mxu0 %v1139
        %1160 = vmatprep.subr.bf16.mxu0 0
        %1161 = vmatpush1.bf16.msra.mxu0 %v1140
        %1162 = vmatprep.subr.bf16.mxu0 0
        %1163 = vmatpush1.bf16.msra.mxu0 %v1141
        %1164 = vmatprep.subr.bf16.mxu0 0
        %1165 = vmatpush1.bf16.msra.mxu0 %v1142
        %1166 = vmatprep.subr.bf16.mxu0 0
        %1167 = vmatpush1.bf16.msra.mxu0 %v1143
        %1168 = vmatprep.subr.bf16.mxu0 0
        %1169 = vmatpush1.bf16.msra.mxu0 0
        %1170 = vmatprep.subr.bf16.mxu0 0
        %1171 = vmatpush1.bf16.msra.mxu0 0
        %1172 = vmatprep.subr.bf16.mxu0 0
        %1173 = vmatpush1.bf16.msra.mxu0 0
        %1174 = vmatprep.subr.bf16.mxu0 0
        %1175 = vmatpush1.bf16.msra.mxu0 0
        %1176 = vmatprep.subr.bf16.mxu0 0
        %1177 = vmatpush1.bf16.msra.mxu0 0
        %1178 = vmatprep.subr.bf16.mxu0 0
        %1179 = vmatpush1.bf16.msra.mxu0 0
        %1180 = vmatprep.subr.bf16.mxu0 0
        %1181 = vmatpush1.bf16.msra.mxu0 0
        %1182 = vmatprep.subr.bf16.mxu0 0
        %1183 = vmatpush1.bf16.msra.mxu0 0
        %1184 = vmatprep.mubr.bf16.mxu0 0
        %1185 = vmatmul.mubr.bf16.gmra.mrb[0].mxu0 %v982
        %v1186 = vpop.f32.mrb[0].mxu0
        %v1187 = vadd.f32 0.0, %v1186
        %v1188 = vpop.f32.mrb[0].mxu0
        %v1189 = vpop.f32.mrb[0].mxu0
        %v1190 = vpop.f32.mrb[0].mxu0
        %1191 = vdwg.mxu0
        %s1192 = scalar_lea.vmem [#allocation5], 128
        %v1193 = vld [vmem:[%s1192] sm:$0xf]
        %v1194 = vld [vmem:[%s1192 + $0x4] sm:$0xf]
        %v1195 = vld [vmem:[%s1192 + $0x8] sm:$0xf]
        %v1196 = vld [vmem:[%s1192 + $0xc] sm:$0xf]
        %v1197 = vld [vmem:[%s1192 + $0x10] sm:$0xf]
        %v1198 = vld [vmem:[%s1192 + $0x14] sm:$0xf]
        %v1199 = vld [vmem:[%s1192 + $0x18] sm:$0xf]
        %v1200 = vld [vmem:[%s1192 + $0x1c] sm:$0xf]
        %v1201 = vld [vmem:[%s1192 + $0x20] sm:$0xf]
        %v1202 = vld [vmem:[%s1192 + $0x24] sm:$0xf]
        %v1203 = vld [vmem:[%s1192 + $0x28] sm:$0xf]
        %v1204 = vld [vmem:[%s1192 + $0x2c] sm:$0xf]
        %v1205 = vld [vmem:[%s1192 + $0x30] sm:$0xf]
        %v1206 = vld [vmem:[%s1192 + $0x34] sm:$0xf]
        %v1207 = vld [vmem:[%s1192 + $0x38] sm:$0xf]
        %v1208 = vld [vmem:[%s1192 + $0x3c] sm:$0xf]
        %v1225 = vunpack.c.l.b16 %v1193
        %v1226 = vunpack.c.l.b16 %v1194
        %v1227 = vunpack.c.l.b16 %v1195
        %v1228 = vunpack.c.l.b16 %v1196
        %v1229 = vunpack.c.l.b16 %v1197
        %v1230 = vunpack.c.l.b16 %v1198
        %v1231 = vunpack.c.l.b16 %v1199
        %v1232 = vunpack.c.l.b16 %v1200
        %v1233 = vunpack.c.l.b16 %v1201
        %v1234 = vunpack.c.l.b16 %v1202
        %v1235 = vunpack.c.l.b16 %v1203
        %v1236 = vunpack.c.l.b16 %v1204
        %v1237 = vunpack.c.l.b16 %v1205
        %v1238 = vunpack.c.l.b16 %v1206
        %v1239 = vunpack.c.l.b16 %v1207
        %v1240 = vunpack.c.l.b16 %v1208
        %v1241 = vpack.c.b16 %v1226, %v1225
        %v1242 = vpack.c.b16 %v1228, %v1227
        %v1243 = vpack.c.b16 %v1230, %v1229
        %v1244 = vpack.c.b16 %v1232, %v1231
        %v1245 = vpack.c.b16 %v1234, %v1233
        %v1246 = vpack.c.b16 %v1236, %v1235
        %v1247 = vpack.c.b16 %v1238, %v1237
        %v1248 = vpack.c.b16 %v1240, %v1239
        %1257 = vmatprep.subr.bf16.mxu0 0
        %1258 = vmatpush1.bf16.msra.mxu0 %v1241
        %1259 = vmatprep.subr.bf16.mxu0 0
        %1260 = vmatpush1.bf16.msra.mxu0 %v1242
        %1261 = vmatprep.subr.bf16.mxu0 0
        %1262 = vmatpush1.bf16.msra.mxu0 %v1243
        %1263 = vmatprep.subr.bf16.mxu0 0
        %1264 = vmatpush1.bf16.msra.mxu0 %v1244
        %1265 = vmatprep.subr.bf16.mxu0 0
        %1266 = vmatpush1.bf16.msra.mxu0 %v1245
        %1267 = vmatprep.subr.bf16.mxu0 0
        %1268 = vmatpush1.bf16.msra.mxu0 %v1246
        %1269 = vmatprep.subr.bf16.mxu0 0
        %1270 = vmatpush1.bf16.msra.mxu0 %v1247
        %1271 = vmatprep.subr.bf16.mxu0 0
        %1272 = vmatpush1.bf16.msra.mxu0 %v1248
        %1273 = vmatprep.subr.bf16.mxu0 0
        %1274 = vmatpush1.bf16.msra.mxu0 0
        %1275 = vmatprep.subr.bf16.mxu0 0
        %1276 = vmatpush1.bf16.msra.mxu0 0
        %1277 = vmatprep.subr.bf16.mxu0 0
        %1278 = vmatpush1.bf16.msra.mxu0 0
        %1279 = vmatprep.subr.bf16.mxu0 0
        %1280 = vmatpush1.bf16.msra.mxu0 0
        %1281 = vmatprep.subr.bf16.mxu0 0
        %1282 = vmatpush1.bf16.msra.mxu0 0
        %1283 = vmatprep.subr.bf16.mxu0 0
        %1284 = vmatpush1.bf16.msra.mxu0 0
        %1285 = vmatprep.subr.bf16.mxu0 0
        %1286 = vmatpush1.bf16.msra.mxu0 0
        %1287 = vmatprep.subr.bf16.mxu0 0
        %1288 = vmatpush1.bf16.msra.mxu0 0
        %1289 = vmatprep.mubr.bf16.mxu0 0
        %1290 = vmatmul.mubr.bf16.gmra.mrb[0].mxu0 %v982
        %v1291 = vpop.f32.mrb[0].mxu0
        %v1292 = vadd.f32 0.0, %v1291
        %v1293 = vpop.f32.mrb[0].mxu0
        %v1294 = vpop.f32.mrb[0].mxu0
        %v1295 = vpop.f32.mrb[0].mxu0
        %1296 = vdwg.mxu0
        %s1297 = scalar_lea.vmem [#allocation5], 192
        %v1298 = vld [vmem:[%s1297] sm:$0xf]
        %v1299 = vld [vmem:[%s1297 + $0x4] sm:$0xf]
        %v1300 = vld [vmem:[%s1297 + $0x8] sm:$0xf]
        %v1301 = vld [vmem:[%s1297 + $0xc] sm:$0xf]
        %v1302 = vld [vmem:[%s1297 + $0x10] sm:$0xf]
        %v1303 = vld [vmem:[%s1297 + $0x14] sm:$0xf]
        %v1304 = vld [vmem:[%s1297 + $0x18] sm:$0xf]
        %v1305 = vld [vmem:[%s1297 + $0x1c] sm:$0xf]
        %v1306 = vld [vmem:[%s1297 + $0x20] sm:$0xf]
        %v1307 = vld [vmem:[%s1297 + $0x24] sm:$0xf]
        %v1308 = vld [vmem:[%s1297 + $0x28] sm:$0xf]
        %v1309 = vld [vmem:[%s1297 + $0x2c] sm:$0xf]
        %v1310 = vld [vmem:[%s1297 + $0x30] sm:$0xf]
        %v1311 = vld [vmem:[%s1297 + $0x34] sm:$0xf]
        %v1312 = vld [vmem:[%s1297 + $0x38] sm:$0xf]
        %v1313 = vld [vmem:[%s1297 + $0x3c] sm:$0xf]
        %v1330 = vunpack.c.l.b16 %v1298
        %v1331 = vunpack.c.l.b16 %v1299
        %v1332 = vunpack.c.l.b16 %v1300
        %v1333 = vunpack.c.l.b16 %v1301
        %v1334 = vunpack.c.l.b16 %v1302
        %v1335 = vunpack.c.l.b16 %v1303
        %v1336 = vunpack.c.l.b16 %v1304
        %v1337 = vunpack.c.l.b16 %v1305
        %v1338 = vunpack.c.l.b16 %v1306
        %v1339 = vunpack.c.l.b16 %v1307
        %v1340 = vunpack.c.l.b16 %v1308
        %v1341 = vunpack.c.l.b16 %v1309
        %v1342 = vunpack.c.l.b16 %v1310
        %v1343 = vunpack.c.l.b16 %v1311
        %v1344 = vunpack.c.l.b16 %v1312
        %v1345 = vunpack.c.l.b16 %v1313
        %v1346 = vpack.c.b16 %v1331, %v1330
        %v1347 = vpack.c.b16 %v1333, %v1332
        %v1348 = vpack.c.b16 %v1335, %v1334
        %v1349 = vpack.c.b16 %v1337, %v1336
        %v1350 = vpack.c.b16 %v1339, %v1338
        %v1351 = vpack.c.b16 %v1341, %v1340
        %v1352 = vpack.c.b16 %v1343, %v1342
        %v1353 = vpack.c.b16 %v1345, %v1344
        %1362 = vmatprep.subr.bf16.mxu0 0
        %1363 = vmatpush1.bf16.msra.mxu0 %v1346
        %1364 = vmatprep.subr.bf16.mxu0 0
        %1365 = vmatpush1.bf16.msra.mxu0 %v1347
        %1366 = vmatprep.subr.bf16.mxu0 0
        %1367 = vmatpush1.bf16.msra.mxu0 %v1348
        %1368 = vmatprep.subr.bf16.mxu0 0
        %1369 = vmatpush1.bf16.msra.mxu0 %v1349
        %1370 = vmatprep.subr.bf16.mxu0 0
        %1371 = vmatpush1.bf16.msra.mxu0 %v1350
        %1372 = vmatprep.subr.bf16.mxu0 0
        %1373 = vmatpush1.bf16.msra.mxu0 %v1351
        %1374 = vmatprep.subr.bf16.mxu0 0
        %1375 = vmatpush1.bf16.msra.mxu0 %v1352
        %1376 = vmatprep.subr.bf16.mxu0 0
        %1377 = vmatpush1.bf16.msra.mxu0 %v1353
        %1378 = vmatprep.subr.bf16.mxu0 0
        %1379 = vmatpush1.bf16.msra.mxu0 0
        %1380 = vmatprep.subr.bf16.mxu0 0
        %1381 = vmatpush1.bf16.msra.mxu0 0
        %1382 = vmatprep.subr.bf16.mxu0 0
        %1383 = vmatpush1.bf16.msra.mxu0 0
        %1384 = vmatprep.subr.bf16.mxu0 0
        %1385 = vmatpush1.bf16.msra.mxu0 0
        %1386 = vmatprep.subr.bf16.mxu0 0
        %1387 = vmatpush1.bf16.msra.mxu0 0
        %1388 = vmatprep.subr.bf16.mxu0 0
        %1389 = vmatpush1.bf16.msra.mxu0 0
        %1390 = vmatprep.subr.bf16.mxu0 0
        %1391 = vmatpush1.bf16.msra.mxu0 0
        %1392 = vmatprep.subr.bf16.mxu0 0
        %1393 = vmatpush1.bf16.msra.mxu0 0
        %1394 = vmatprep.mubr.bf16.mxu0 0
        %1395 = vmatmul.mubr.bf16.gmra.mrb[0].mxu0 %v982
        %v1396 = vpop.f32.mrb[0].mxu0
        %v1397 = vadd.f32 0.0, %v1396
        %v1398 = vpop.f32.mrb[0].mxu0
        %v1399 = vpop.f32.mrb[0].mxu0
        %v1400 = vpop.f32.mrb[0].mxu0
        %1401 = vdwg.mxu0
        %s1402 = scalar_lea.vmem [#allocation5], 256
        %v1403 = vld [vmem:[%s1402] sm:$0xf]
        %v1404 = vld [vmem:[%s1402 + $0x4] sm:$0xf]
        %v1405 = vld [vmem:[%s1402 + $0x8] sm:$0xf]
        %v1406 = vld [vmem:[%s1402 + $0xc] sm:$0xf]
        %v1407 = vld [vmem:[%s1402 + $0x10] sm:$0xf]
        %v1408 = vld [vmem:[%s1402 + $0x14] sm:$0xf]
        %v1409 = vld [vmem:[%s1402 + $0x18] sm:$0xf]
        %v1410 = vld [vmem:[%s1402 + $0x1c] sm:$0xf]
        %v1411 = vld [vmem:[%s1402 + $0x20] sm:$0xf]
        %v1412 = vld [vmem:[%s1402 + $0x24] sm:$0xf]
        %v1413 = vld [vmem:[%s1402 + $0x28] sm:$0xf]
        %v1414 = vld [vmem:[%s1402 + $0x2c] sm:$0xf]
        %v1415 = vld [vmem:[%s1402 + $0x30] sm:$0xf]
        %v1416 = vld [vmem:[%s1402 + $0x34] sm:$0xf]
        %v1417 = vld [vmem:[%s1402 + $0x38] sm:$0xf]
        %v1418 = vld [vmem:[%s1402 + $0x3c] sm:$0xf]
        %v1435 = vunpack.c.l.b16 %v1403
        %v1436 = vunpack.c.l.b16 %v1404
        %v1437 = vunpack.c.l.b16 %v1405
        %v1438 = vunpack.c.l.b16 %v1406
        %v1439 = vunpack.c.l.b16 %v1407
        %v1440 = vunpack.c.l.b16 %v1408
        %v1441 = vunpack.c.l.b16 %v1409
        %v1442 = vunpack.c.l.b16 %v1410
        %v1443 = vunpack.c.l.b16 %v1411
        %v1444 = vunpack.c.l.b16 %v1412
        %v1445 = vunpack.c.l.b16 %v1413
        %v1446 = vunpack.c.l.b16 %v1414
        %v1447 = vunpack.c.l.b16 %v1415
        %v1448 = vunpack.c.l.b16 %v1416
        %v1449 = vunpack.c.l.b16 %v1417
        %v1450 = vunpack.c.l.b16 %v1418
        %v1451 = vpack.c.b16 %v1436, %v1435
        %v1452 = vpack.c.b16 %v1438, %v1437
        %v1453 = vpack.c.b16 %v1440, %v1439
        %v1454 = vpack.c.b16 %v1442, %v1441
        %v1455 = vpack.c.b16 %v1444, %v1443
        %v1456 = vpack.c.b16 %v1446, %v1445
        %v1457 = vpack.c.b16 %v1448, %v1447
        %v1458 = vpack.c.b16 %v1450, %v1449
        %1467 = vmatprep.subr.bf16.mxu0 0
        %1468 = vmatpush1.bf16.msra.mxu0 %v1451
        %1469 = vmatprep.subr.bf16.mxu0 0
        %1470 = vmatpush1.bf16.msra.mxu0 %v1452
        %1471 = vmatprep.subr.bf16.mxu0 0
        %1472 = vmatpush1.bf16.msra.mxu0 %v1453
        %1473 = vmatprep.subr.bf16.mxu0 0
        %1474 = vmatpush1.bf16.msra.mxu0 %v1454
        %1475 = vmatprep.subr.bf16.mxu0 0
        %1476 = vmatpush1.bf16.msra.mxu0 %v1455
        %1477 = vmatprep.subr.bf16.mxu0 0
        %1478 = vmatpush1.bf16.msra.mxu0 %v1456
        %1479 = vmatprep.subr.bf16.mxu0 0
        %1480 = vmatpush1.bf16.msra.mxu0 %v1457
        %1481 = vmatprep.subr.bf16.mxu0 0
        %1482 = vmatpush1.bf16.msra.mxu0 %v1458
        %1483 = vmatprep.subr.bf16.mxu0 0
        %1484 = vmatpush1.bf16.msra.mxu0 0
        %1485 = vmatprep.subr.bf16.mxu0 0
        %1486 = vmatpush1.bf16.msra.mxu0 0
        %1487 = vmatprep.subr.bf16.mxu0 0
        %1488 = vmatpush1.bf16.msra.mxu0 0
        %1489 = vmatprep.subr.bf16.mxu0 0
        %1490 = vmatpush1.bf16.msra.mxu0 0
        %1491 = vmatprep.subr.bf16.mxu0 0
        %1492 = vmatpush1.bf16.msra.mxu0 0
        %1493 = vmatprep.subr.bf16.mxu0 0
        %1494 = vmatpush1.bf16.msra.mxu0 0
        %1495 = vmatprep.subr.bf16.mxu0 0
        %1496 = vmatpush1.bf16.msra.mxu0 0
        %1497 = vmatprep.subr.bf16.mxu0 0
        %1498 = vmatpush1.bf16.msra.mxu0 0
        %1499 = vmatprep.mubr.bf16.mxu0 0
        %1500 = vmatmul.mubr.bf16.gmra.mrb[0].mxu0 %v982
        %v1501 = vpop.f32.mrb[0].mxu0
        %v1502 = vadd.f32 0.0, %v1501
        %v1503 = vpop.f32.mrb[0].mxu0
        %v1504 = vpop.f32.mrb[0].mxu0
        %v1505 = vpop.f32.mrb[0].mxu0
        %1506 = vdwg.mxu0
        %s1507 = scalar_lea.vmem [#allocation5], 320
        %v1508 = vld [vmem:[%s1507] sm:$0xf]
        %v1509 = vld [vmem:[%s1507 + $0x4] sm:$0xf]
        %v1510 = vld [vmem:[%s1507 + $0x8] sm:$0xf]
        %v1511 = vld [vmem:[%s1507 + $0xc] sm:$0xf]
        %v1512 = vld [vmem:[%s1507 + $0x10] sm:$0xf]
        %v1513 = vld [vmem:[%s1507 + $0x14] sm:$0xf]
        %v1514 = vld [vmem:[%s1507 + $0x18] sm:$0xf]
        %v1515 = vld [vmem:[%s1507 + $0x1c] sm:$0xf]
        %v1516 = vld [vmem:[%s1507 + $0x20] sm:$0xf]
        %v1517 = vld [vmem:[%s1507 + $0x24] sm:$0xf]
        %v1518 = vld [vmem:[%s1507 + $0x28] sm:$0xf]
        %v1519 = vld [vmem:[%s1507 + $0x2c] sm:$0xf]
        %v1520 = vld [vmem:[%s1507 + $0x30] sm:$0xf]
        %v1521 = vld [vmem:[%s1507 + $0x34] sm:$0xf]
        %v1522 = vld [vmem:[%s1507 + $0x38] sm:$0xf]
        %v1523 = vld [vmem:[%s1507 + $0x3c] sm:$0xf]
        %v1540 = vunpack.c.l.b16 %v1508
        %v1541 = vunpack.c.l.b16 %v1509
        %v1542 = vunpack.c.l.b16 %v1510
        %v1543 = vunpack.c.l.b16 %v1511
        %v1544 = vunpack.c.l.b16 %v1512
        %v1545 = vunpack.c.l.b16 %v1513
        %v1546 = vunpack.c.l.b16 %v1514
        %v1547 = vunpack.c.l.b16 %v1515
        %v1548 = vunpack.c.l.b16 %v1516
        %v1549 = vunpack.c.l.b16 %v1517
        %v1550 = vunpack.c.l.b16 %v1518
        %v1551 = vunpack.c.l.b16 %v1519
        %v1552 = vunpack.c.l.b16 %v1520
        %v1553 = vunpack.c.l.b16 %v1521
        %v1554 = vunpack.c.l.b16 %v1522
        %v1555 = vunpack.c.l.b16 %v1523
        %v1556 = vpack.c.b16 %v1541, %v1540
        %v1557 = vpack.c.b16 %v1543, %v1542
        %v1558 = vpack.c.b16 %v1545, %v1544
        %v1559 = vpack.c.b16 %v1547, %v1546
        %v1560 = vpack.c.b16 %v1549, %v1548
        %v1561 = vpack.c.b16 %v1551, %v1550
        %v1562 = vpack.c.b16 %v1553, %v1552
        %v1563 = vpack.c.b16 %v1555, %v1554
        %1572 = vmatprep.subr.bf16.mxu0 0
        %1573 = vmatpush1.bf16.msra.mxu0 %v1556
        %1574 = vmatprep.subr.bf16.mxu0 0
        %1575 = vmatpush1.bf16.msra.mxu0 %v1557
        %1576 = vmatprep.subr.bf16.mxu0 0
        %1577 = vmatpush1.bf16.msra.mxu0 %v1558
        %1578 = vmatprep.subr.bf16.mxu0 0
        %1579 = vmatpush1.bf16.msra.mxu0 %v1559
        %1580 = vmatprep.subr.bf16.mxu0 0
        %1581 = vmatpush1.bf16.msra.mxu0 %v1560
        %1582 = vmatprep.subr.bf16.mxu0 0
        %1583 = vmatpush1.bf16.msra.mxu0 %v1561
        %1584 = vmatprep.subr.bf16.mxu0 0
        %1585 = vmatpush1.bf16.msra.mxu0 %v1562
        %1586 = vmatprep.subr.bf16.mxu0 0
        %1587 = vmatpush1.bf16.msra.mxu0 %v1563
        %1588 = vmatprep.subr.bf16.mxu0 0
        %1589 = vmatpush1.bf16.msra.mxu0 0
        %1590 = vmatprep.subr.bf16.mxu0 0
        %1591 = vmatpush1.bf16.msra.mxu0 0
        %1592 = vmatprep.subr.bf16.mxu0 0
        %1593 = vmatpush1.bf16.msra.mxu0 0
        %1594 = vmatprep.subr.bf16.mxu0 0
        %1595 = vmatpush1.bf16.msra.mxu0 0
        %1596 = vmatprep.subr.bf16.mxu0 0
        %1597 = vmatpush1.bf16.msra.mxu0 0
        %1598 = vmatprep.subr.bf16.mxu0 0
        %1599 = vmatpush1.bf16.msra.mxu0 0
        %1600 = vmatprep.subr.bf16.mxu0 0
        %1601 = vmatpush1.bf16.msra.mxu0 0
        %1602 = vmatprep.subr.bf16.mxu0 0
        %1603 = vmatpush1.bf16.msra.mxu0 0
        %1604 = vmatprep.mubr.bf16.mxu0 0
        %1605 = vmatmul.mubr.bf16.gmra.mrb[0].mxu0 %v982
        %v1606 = vpop.f32.mrb[0].mxu0
        %v1607 = vadd.f32 0.0, %v1606
        %v1608 = vpop.f32.mrb[0].mxu0
        %v1609 = vpop.f32.mrb[0].mxu0
        %v1610 = vpop.f32.mrb[0].mxu0
        %1611 = vdwg.mxu0
        %s1612 = scalar_lea.vmem [#allocation5], 384
        %v1613 = vld [vmem:[%s1612] sm:$0xf]
        %v1614 = vld [vmem:[%s1612 + $0x4] sm:$0xf]
        %v1615 = vld [vmem:[%s1612 + $0x8] sm:$0xf]
        %v1616 = vld [vmem:[%s1612 + $0xc] sm:$0xf]
        %v1617 = vld [vmem:[%s1612 + $0x10] sm:$0xf]
        %v1618 = vld [vmem:[%s1612 + $0x14] sm:$0xf]
        %v1619 = vld [vmem:[%s1612 + $0x18] sm:$0xf]
        %v1620 = vld [vmem:[%s1612 + $0x1c] sm:$0xf]
        %v1621 = vld [vmem:[%s1612 + $0x20] sm:$0xf]
        %v1622 = vld [vmem:[%s1612 + $0x24] sm:$0xf]
        %v1623 = vld [vmem:[%s1612 + $0x28] sm:$0xf]
        %v1624 = vld [vmem:[%s1612 + $0x2c] sm:$0xf]
        %v1625 = vld [vmem:[%s1612 + $0x30] sm:$0xf]
        %v1626 = vld [vmem:[%s1612 + $0x34] sm:$0xf]
        %v1627 = vld [vmem:[%s1612 + $0x38] sm:$0xf]
        %v1628 = vld [vmem:[%s1612 + $0x3c] sm:$0xf]
        %v1645 = vunpack.c.l.b16 %v1613
        %v1646 = vunpack.c.l.b16 %v1614
        %v1647 = vunpack.c.l.b16 %v1615
        %v1648 = vunpack.c.l.b16 %v1616
        %v1649 = vunpack.c.l.b16 %v1617
        %v1650 = vunpack.c.l.b16 %v1618
        %v1651 = vunpack.c.l.b16 %v1619
        %v1652 = vunpack.c.l.b16 %v1620
        %v1653 = vunpack.c.l.b16 %v1621
        %v1654 = vunpack.c.l.b16 %v1622
        %v1655 = vunpack.c.l.b16 %v1623
        %v1656 = vunpack.c.l.b16 %v1624
        %v1657 = vunpack.c.l.b16 %v1625
        %v1658 = vunpack.c.l.b16 %v1626
        %v1659 = vunpack.c.l.b16 %v1627
        %v1660 = vunpack.c.l.b16 %v1628
        %v1661 = vpack.c.b16 %v1646, %v1645
        %v1662 = vpack.c.b16 %v1648, %v1647
        %v1663 = vpack.c.b16 %v1650, %v1649
        %v1664 = vpack.c.b16 %v1652, %v1651
        %v1665 = vpack.c.b16 %v1654, %v1653
        %v1666 = vpack.c.b16 %v1656, %v1655
        %v1667 = vpack.c.b16 %v1658, %v1657
        %v1668 = vpack.c.b16 %v1660, %v1659
        %1677 = vmatprep.subr.bf16.mxu0 0
        %1678 = vmatpush1.bf16.msra.mxu0 %v1661
        %1679 = vmatprep.subr.bf16.mxu0 0
        %1680 = vmatpush1.bf16.msra.mxu0 %v1662
        %1681 = vmatprep.subr.bf16.mxu0 0
        %1682 = vmatpush1.bf16.msra.mxu0 %v1663
        %1683 = vmatprep.subr.bf16.mxu0 0
        %1684 = vmatpush1.bf16.msra.mxu0 %v1664
        %1685 = vmatprep.subr.bf16.mxu0 0
        %1686 = vmatpush1.bf16.msra.mxu0 %v1665
        %1687 = vmatprep.subr.bf16.mxu0 0
        %1688 = vmatpush1.bf16.msra.mxu0 %v1666
        %1689 = vmatprep.subr.bf16.mxu0 0
        %1690 = vmatpush1.bf16.msra.mxu0 %v1667
        %1691 = vmatprep.subr.bf16.mxu0 0
        %1692 = vmatpush1.bf16.msra.mxu0 %v1668
        %1693 = vmatprep.subr.bf16.mxu0 0
        %1694 = vmatpush1.bf16.msra.mxu0 0
        %1695 = vmatprep.subr.bf16.mxu0 0
        %1696 = vmatpush1.bf16.msra.mxu0 0
        %1697 = vmatprep.subr.bf16.mxu0 0
        %1698 = vmatpush1.bf16.msra.mxu0 0
        %1699 = vmatprep.subr.bf16.mxu0 0
        %1700 = vmatpush1.bf16.msra.mxu0 0
        %1701 = vmatprep.subr.bf16.mxu0 0
        %1702 = vmatpush1.bf16.msra.mxu0 0
        %1703 = vmatprep.subr.bf16.mxu0 0
        %1704 = vmatpush1.bf16.msra.mxu0 0
        %1705 = vmatprep.subr.bf16.mxu0 0
        %1706 = vmatpush1.bf16.msra.mxu0 0
        %1707 = vmatprep.subr.bf16.mxu0 0
        %1708 = vmatpush1.bf16.msra.mxu0 0
        %1709 = vmatprep.mubr.bf16.mxu0 0
        %1710 = vmatmul.mubr.bf16.gmra.mrb[0].mxu0 %v982
        %v1711 = vpop.f32.mrb[0].mxu0
        %v1712 = vadd.f32 0.0, %v1711
        %v1713 = vpop.f32.mrb[0].mxu0
        %v1714 = vpop.f32.mrb[0].mxu0
        %v1715 = vpop.f32.mrb[0].mxu0
        %1716 = vdwg.mxu0
        %s1717 = scalar_lea.vmem [#allocation5], 448
        %v1718 = vld [vmem:[%s1717] sm:$0xf]
        %v1719 = vld [vmem:[%s1717 + $0x4] sm:$0xf]
        %v1720 = vld [vmem:[%s1717 + $0x8] sm:$0xf]
        %v1721 = vld [vmem:[%s1717 + $0xc] sm:$0xf]
        %v1722 = vld [vmem:[%s1717 + $0x10] sm:$0xf]
        %v1723 = vld [vmem:[%s1717 + $0x14] sm:$0xf]
        %v1724 = vld [vmem:[%s1717 + $0x18] sm:$0xf]
        %v1725 = vld [vmem:[%s1717 + $0x1c] sm:$0xf]
        %v1726 = vld [vmem:[%s1717 + $0x20] sm:$0xf]
        %v1727 = vld [vmem:[%s1717 + $0x24] sm:$0xf]
        %v1728 = vld [vmem:[%s1717 + $0x28] sm:$0xf]
        %v1729 = vld [vmem:[%s1717 + $0x2c] sm:$0xf]
        %v1730 = vld [vmem:[%s1717 + $0x30] sm:$0xf]
        %v1731 = vld [vmem:[%s1717 + $0x34] sm:$0xf]
        %v1732 = vld [vmem:[%s1717 + $0x38] sm:$0xf]
        %v1733 = vld [vmem:[%s1717 + $0x3c] sm:$0xf]
        %v1750 = vunpack.c.l.b16 %v1718
        %v1751 = vunpack.c.l.b16 %v1719
        %v1752 = vunpack.c.l.b16 %v1720
        %v1753 = vunpack.c.l.b16 %v1721
        %v1754 = vunpack.c.l.b16 %v1722
        %v1755 = vunpack.c.l.b16 %v1723
        %v1756 = vunpack.c.l.b16 %v1724
        %v1757 = vunpack.c.l.b16 %v1725
        %v1758 = vunpack.c.l.b16 %v1726
        %v1759 = vunpack.c.l.b16 %v1727
        %v1760 = vunpack.c.l.b16 %v1728
        %v1761 = vunpack.c.l.b16 %v1729
        %v1762 = vunpack.c.l.b16 %v1730
        %v1763 = vunpack.c.l.b16 %v1731
        %v1764 = vunpack.c.l.b16 %v1732
        %v1765 = vunpack.c.l.b16 %v1733
        %v1766 = vpack.c.b16 %v1751, %v1750
        %v1767 = vpack.c.b16 %v1753, %v1752
        %v1768 = vpack.c.b16 %v1755, %v1754
        %v1769 = vpack.c.b16 %v1757, %v1756
        %v1770 = vpack.c.b16 %v1759, %v1758
        %v1771 = vpack.c.b16 %v1761, %v1760
        %v1772 = vpack.c.b16 %v1763, %v1762
        %v1773 = vpack.c.b16 %v1765, %v1764
        %1782 = vmatprep.subr.bf16.mxu0 0
        %1783 = vmatpush1.bf16.msra.mxu0 %v1766
        %1784 = vmatprep.subr.bf16.mxu0 0
        %1785 = vmatpush1.bf16.msra.mxu0 %v1767
        %1786 = vmatprep.subr.bf16.mxu0 0
        %1787 = vmatpush1.bf16.msra.mxu0 %v1768
        %1788 = vmatprep.subr.bf16.mxu0 0
        %1789 = vmatpush1.bf16.msra.mxu0 %v1769
        %1790 = vmatprep.subr.bf16.mxu0 0
        %1791 = vmatpush1.bf16.msra.mxu0 %v1770
        %1792 = vmatprep.subr.bf16.mxu0 0
        %1793 = vmatpush1.bf16.msra.mxu0 %v1771
        %1794 = vmatprep.subr.bf16.mxu0 0
        %1795 = vmatpush1.bf16.msra.mxu0 %v1772
        %1796 = vmatprep.subr.bf16.mxu0 0
        %1797 = vmatpush1.bf16.msra.mxu0 %v1773
        %1798 = vmatprep.subr.bf16.mxu0 0
        %1799 = vmatpush1.bf16.msra.mxu0 0
        %1800 = vmatprep.subr.bf16.mxu0 0
        %1801 = vmatpush1.bf16.msra.mxu0 0
        %1802 = vmatprep.subr.bf16.mxu0 0
        %1803 = vmatpush1.bf16.msra.mxu0 0
        %1804 = vmatprep.subr.bf16.mxu0 0
        %1805 = vmatpush1.bf16.msra.mxu0 0
        %1806 = vmatprep.subr.bf16.mxu0 0
        %1807 = vmatpush1.bf16.msra.mxu0 0
        %1808 = vmatprep.subr.bf16.mxu0 0
        %1809 = vmatpush1.bf16.msra.mxu0 0
        %1810 = vmatprep.subr.bf16.mxu0 0
        %1811 = vmatpush1.bf16.msra.mxu0 0
        %1812 = vmatprep.subr.bf16.mxu0 0
        %1813 = vmatpush1.bf16.msra.mxu0 0
        %1814 = vmatprep.mubr.bf16.mxu0 0
        %1815 = vmatmul.mubr.bf16.gmra.mrb[0].mxu0 %v982
        %v1816 = vpop.f32.mrb[0].mxu0
        %v1817 = vadd.f32 0.0, %v1816
        %v1818 = vpop.f32.mrb[0].mxu0
        %v1819 = vpop.f32.mrb[0].mxu0
        %v1820 = vpop.f32.mrb[0].mxu0
        %1821 = vdwg.mxu0
        %s1822 = scalar_lea.vmem [#allocation5], 512
        %v1823 = vld [vmem:[%s1822] sm:$0xf]
        %v1824 = vld [vmem:[%s1822 + $0x4] sm:$0xf]
        %v1825 = vld [vmem:[%s1822 + $0x8] sm:$0xf]
        %v1826 = vld [vmem:[%s1822 + $0xc] sm:$0xf]
        %v1827 = vld [vmem:[%s1822 + $0x10] sm:$0xf]
        %v1828 = vld [vmem:[%s1822 + $0x14] sm:$0xf]
        %v1829 = vld [vmem:[%s1822 + $0x18] sm:$0xf]
        %v1830 = vld [vmem:[%s1822 + $0x1c] sm:$0xf]
        %v1831 = vld [vmem:[%s1822 + $0x20] sm:$0xf]
        %v1832 = vld [vmem:[%s1822 + $0x24] sm:$0xf]
        %v1833 = vld [vmem:[%s1822 + $0x28] sm:$0xf]
        %v1834 = vld [vmem:[%s1822 + $0x2c] sm:$0xf]
        %v1835 = vld [vmem:[%s1822 + $0x30] sm:$0xf]
        %v1836 = vld [vmem:[%s1822 + $0x34] sm:$0xf]
        %v1837 = vld [vmem:[%s1822 + $0x38] sm:$0xf]
        %v1838 = vld [vmem:[%s1822 + $0x3c] sm:$0xf]
        %v1855 = vunpack.c.l.b16 %v1823
        %v1856 = vunpack.c.l.b16 %v1824
        %v1857 = vunpack.c.l.b16 %v1825
        %v1858 = vunpack.c.l.b16 %v1826
        %v1859 = vunpack.c.l.b16 %v1827
        %v1860 = vunpack.c.l.b16 %v1828
        %v1861 = vunpack.c.l.b16 %v1829
        %v1862 = vunpack.c.l.b16 %v1830
        %v1863 = vunpack.c.l.b16 %v1831
        %v1864 = vunpack.c.l.b16 %v1832
        %v1865 = vunpack.c.l.b16 %v1833
        %v1866 = vunpack.c.l.b16 %v1834
        %v1867 = vunpack.c.l.b16 %v1835
        %v1868 = vunpack.c.l.b16 %v1836
        %v1869 = vunpack.c.l.b16 %v1837
        %v1870 = vunpack.c.l.b16 %v1838
        %v1871 = vpack.c.b16 %v1856, %v1855
        %v1872 = vpack.c.b16 %v1858, %v1857
        %v1873 = vpack.c.b16 %v1860, %v1859
        %v1874 = vpack.c.b16 %v1862, %v1861
        %v1875 = vpack.c.b16 %v1864, %v1863
        %v1876 = vpack.c.b16 %v1866, %v1865
        %v1877 = vpack.c.b16 %v1868, %v1867
        %v1878 = vpack.c.b16 %v1870, %v1869
        %1887 = vmatprep.subr.bf16.mxu0 0
        %1888 = vmatpush1.bf16.msra.mxu0 %v1871
        %1889 = vmatprep.subr.bf16.mxu0 0
        %1890 = vmatpush1.bf16.msra.mxu0 %v1872
        %1891 = vmatprep.subr.bf16.mxu0 0
        %1892 = vmatpush1.bf16.msra.mxu0 %v1873
        %1893 = vmatprep.subr.bf16.mxu0 0
        %1894 = vmatpush1.bf16.msra.mxu0 %v1874
        %1895 = vmatprep.subr.bf16.mxu0 0
        %1896 = vmatpush1.bf16.msra.mxu0 %v1875
        %1897 = vmatprep.subr.bf16.mxu0 0
        %1898 = vmatpush1.bf16.msra.mxu0 %v1876
        %1899 = vmatprep.subr.bf16.mxu0 0
        %1900 = vmatpush1.bf16.msra.mxu0 %v1877
        %1901 = vmatprep.subr.bf16.mxu0 0
        %1902 = vmatpush1.bf16.msra.mxu0 %v1878
        %1903 = vmatprep.subr.bf16.mxu0 0
        %1904 = vmatpush1.bf16.msra.mxu0 0
        %1905 = vmatprep.subr.bf16.mxu0 0
        %1906 = vmatpush1.bf16.msra.mxu0 0
        %1907 = vmatprep.subr.bf16.mxu0 0
        %1908 = vmatpush1.bf16.msra.mxu0 0
        %1909 = vmatprep.subr.bf16.mxu0 0
        %1910 = vmatpush1.bf16.msra.mxu0 0
        %1911 = vmatprep.subr.bf16.mxu0 0
        %1912 = vmatpush1.bf16.msra.mxu0 0
        %1913 = vmatprep.subr.bf16.mxu0 0
        %1914 = vmatpush1.bf16.msra.mxu0 0
        %1915 = vmatprep.subr.bf16.mxu0 0
        %1916 = vmatpush1.bf16.msra.mxu0 0
        %1917 = vmatprep.subr.bf16.mxu0 0
        %1918 = vmatpush1.bf16.msra.mxu0 0
        %1919 = vmatprep.mubr.bf16.mxu0 0
        %1920 = vmatmul.mubr.bf16.gmra.mrb[0].mxu0 %v982
        %v1921 = vpop.f32.mrb[0].mxu0
        %v1922 = vadd.f32 0.0, %v1921
        %v1923 = vpop.f32.mrb[0].mxu0
        %v1924 = vpop.f32.mrb[0].mxu0
        %v1925 = vpop.f32.mrb[0].mxu0
        %1926 = vdwg.mxu0
        %s1927 = scalar_lea.vmem [#allocation5], 576
        %v1928 = vld [vmem:[%s1927] sm:$0xf]
        %v1929 = vld [vmem:[%s1927 + $0x4] sm:$0xf]
        %v1930 = vld [vmem:[%s1927 + $0x8] sm:$0xf]
        %v1931 = vld [vmem:[%s1927 + $0xc] sm:$0xf]
        %v1932 = vld [vmem:[%s1927 + $0x10] sm:$0xf]
        %v1933 = vld [vmem:[%s1927 + $0x14] sm:$0xf]
        %v1934 = vld [vmem:[%s1927 + $0x18] sm:$0xf]
        %v1935 = vld [vmem:[%s1927 + $0x1c] sm:$0xf]
        %v1936 = vld [vmem:[%s1927 + $0x20] sm:$0xf]
        %v1937 = vld [vmem:[%s1927 + $0x24] sm:$0xf]
        %v1938 = vld [vmem:[%s1927 + $0x28] sm:$0xf]
        %v1939 = vld [vmem:[%s1927 + $0x2c] sm:$0xf]
        %v1940 = vld [vmem:[%s1927 + $0x30] sm:$0xf]
        %v1941 = vld [vmem:[%s1927 + $0x34] sm:$0xf]
        %v1942 = vld [vmem:[%s1927 + $0x38] sm:$0xf]
        %v1943 = vld [vmem:[%s1927 + $0x3c] sm:$0xf]
        %v1960 = vunpack.c.l.b16 %v1928
        %v1961 = vunpack.c.l.b16 %v1929
        %v1962 = vunpack.c.l.b16 %v1930
        %v1963 = vunpack.c.l.b16 %v1931
        %v1964 = vunpack.c.l.b16 %v1932
        %v1965 = vunpack.c.l.b16 %v1933
        %v1966 = vunpack.c.l.b16 %v1934
        %v1967 = vunpack.c.l.b16 %v1935
        %v1968 = vunpack.c.l.b16 %v1936
        %v1969 = vunpack.c.l.b16 %v1937
        %v1970 = vunpack.c.l.b16 %v1938
        %v1971 = vunpack.c.l.b16 %v1939
        %v1972 = vunpack.c.l.b16 %v1940
        %v1973 = vunpack.c.l.b16 %v1941
        %v1974 = vunpack.c.l.b16 %v1942
        %v1975 = vunpack.c.l.b16 %v1943
        %v1976 = vpack.c.b16 %v1961, %v1960
        %v1977 = vpack.c.b16 %v1963, %v1962
        %v1978 = vpack.c.b16 %v1965, %v1964
        %v1979 = vpack.c.b16 %v1967, %v1966
        %v1980 = vpack.c.b16 %v1969, %v1968
        %v1981 = vpack.c.b16 %v1971, %v1970
        %v1982 = vpack.c.b16 %v1973, %v1972
        %v1983 = vpack.c.b16 %v1975, %v1974
        %1992 = vmatprep.subr.bf16.mxu0 0
        %1993 = vmatpush1.bf16.msra.mxu0 %v1976
        %1994 = vmatprep.subr.bf16.mxu0 0
        %1995 = vmatpush1.bf16.msra.mxu0 %v1977
        %1996 = vmatprep.subr.bf16.mxu0 0
        %1997 = vmatpush1.bf16.msra.mxu0 %v1978
        %1998 = vmatprep.subr.bf16.mxu0 0
        %1999 = vmatpush1.bf16.msra.mxu0 %v1979
        %2000 = vmatprep.subr.bf16.mxu0 0
        %2001 = vmatpush1.bf16.msra.mxu0 %v1980
        %2002 = vmatprep.subr.bf16.mxu0 0
        %2003 = vmatpush1.bf16.msra.mxu0 %v1981
        %2004 = vmatprep.subr.bf16.mxu0 0
        %2005 = vmatpush1.bf16.msra.mxu0 %v1982
        %2006 = vmatprep.subr.bf16.mxu0 0
        %2007 = vmatpush1.bf16.msra.mxu0 %v1983
        %2008 = vmatprep.subr.bf16.mxu0 0
        %2009 = vmatpush1.bf16.msra.mxu0 0
        %2010 = vmatprep.subr.bf16.mxu0 0
        %2011 = vmatpush1.bf16.msra.mxu0 0
        %2012 = vmatprep.subr.bf16.mxu0 0
        %2013 = vmatpush1.bf16.msra.mxu0 0
        %2014 = vmatprep.subr.bf16.mxu0 0
        %2015 = vmatpush1.bf16.msra.mxu0 0
        %2016 = vmatprep.subr.bf16.mxu0 0
        %2017 = vmatpush1.bf16.msra.mxu0 0
        %2018 = vmatprep.subr.bf16.mxu0 0
        %2019 = vmatpush1.bf16.msra.mxu0 0
        %2020 = vmatprep.subr.bf16.mxu0 0
        %2021 = vmatpush1.bf16.msra.mxu0 0
        %2022 = vmatprep.subr.bf16.mxu0 0
        %2023 = vmatpush1.bf16.msra.mxu0 0
        %2024 = vmatprep.mubr.bf16.mxu0 0
        %2025 = vmatmul.mubr.bf16.gmra.mrb[0].mxu0 %v982
        %v2026 = vpop.f32.mrb[0].mxu0
        %v2027 = vadd.f32 0.0, %v2026
        %v2028 = vpop.f32.mrb[0].mxu0
        %v2029 = vpop.f32.mrb[0].mxu0
        %v2030 = vpop.f32.mrb[0].mxu0
        %2031 = vdwg.mxu0
        %s2032 = scalar_lea.vmem [#allocation5], 640
        %v2033 = vld [vmem:[%s2032] sm:$0xf]
        %v2034 = vld [vmem:[%s2032 + $0x4] sm:$0xf]
        %v2035 = vld [vmem:[%s2032 + $0x8] sm:$0xf]
        %v2036 = vld [vmem:[%s2032 + $0xc] sm:$0xf]
        %v2037 = vld [vmem:[%s2032 + $0x10] sm:$0xf]
        %v2038 = vld [vmem:[%s2032 + $0x14] sm:$0xf]
        %v2039 = vld [vmem:[%s2032 + $0x18] sm:$0xf]
        %v2040 = vld [vmem:[%s2032 + $0x1c] sm:$0xf]
        %v2041 = vld [vmem:[%s2032 + $0x20] sm:$0xf]
        %v2042 = vld [vmem:[%s2032 + $0x24] sm:$0xf]
        %v2043 = vld [vmem:[%s2032 + $0x28] sm:$0xf]
        %v2044 = vld [vmem:[%s2032 + $0x2c] sm:$0xf]
        %v2045 = vld [vmem:[%s2032 + $0x30] sm:$0xf]
        %v2046 = vld [vmem:[%s2032 + $0x34] sm:$0xf]
        %v2047 = vld [vmem:[%s2032 + $0x38] sm:$0xf]
        %v2048 = vld [vmem:[%s2032 + $0x3c] sm:$0xf]
        %v2065 = vunpack.c.l.b16 %v2033
        %v2066 = vunpack.c.l.b16 %v2034
        %v2067 = vunpack.c.l.b16 %v2035
        %v2068 = vunpack.c.l.b16 %v2036
        %v2069 = vunpack.c.l.b16 %v2037
        %v2070 = vunpack.c.l.b16 %v2038
        %v2071 = vunpack.c.l.b16 %v2039
        %v2072 = vunpack.c.l.b16 %v2040
        %v2073 = vunpack.c.l.b16 %v2041
        %v2074 = vunpack.c.l.b16 %v2042
        %v2075 = vunpack.c.l.b16 %v2043
        %v2076 = vunpack.c.l.b16 %v2044
        %v2077 = vunpack.c.l.b16 %v2045
        %v2078 = vunpack.c.l.b16 %v2046
        %v2079 = vunpack.c.l.b16 %v2047
        %v2080 = vunpack.c.l.b16 %v2048
        %v2081 = vpack.c.b16 %v2066, %v2065
        %v2082 = vpack.c.b16 %v2068, %v2067
        %v2083 = vpack.c.b16 %v2070, %v2069
        %v2084 = vpack.c.b16 %v2072, %v2071
        %v2085 = vpack.c.b16 %v2074, %v2073
        %v2086 = vpack.c.b16 %v2076, %v2075
        %v2087 = vpack.c.b16 %v2078, %v2077
        %v2088 = vpack.c.b16 %v2080, %v2079
        %2097 = vmatprep.subr.bf16.mxu0 0
        %2098 = vmatpush1.bf16.msra.mxu0 %v2081
        %2099 = vmatprep.subr.bf16.mxu0 0
        %2100 = vmatpush1.bf16.msra.mxu0 %v2082
        %2101 = vmatprep.subr.bf16.mxu0 0
        %2102 = vmatpush1.bf16.msra.mxu0 %v2083
        %2103 = vmatprep.subr.bf16.mxu0 0
        %2104 = vmatpush1.bf16.msra.mxu0 %v2084
        %2105 = vmatprep.subr.bf16.mxu0 0
        %2106 = vmatpush1.bf16.msra.mxu0 %v2085
        %2107 = vmatprep.subr.bf16.mxu0 0
        %2108 = vmatpush1.bf16.msra.mxu0 %v2086
        %2109 = vmatprep.subr.bf16.mxu0 0
        %2110 = vmatpush1.bf16.msra.mxu0 %v2087
        %2111 = vmatprep.subr.bf16.mxu0 0
        %2112 = vmatpush1.bf16.msra.mxu0 %v2088
        %2113 = vmatprep.subr.bf16.mxu0 0
        %2114 = vmatpush1.bf16.msra.mxu0 0
        %2115 = vmatprep.subr.bf16.mxu0 0
        %2116 = vmatpush1.bf16.msra.mxu0 0
        %2117 = vmatprep.subr.bf16.mxu0 0
        %2118 = vmatpush1.bf16.msra.mxu0 0
        %2119 = vmatprep.subr.bf16.mxu0 0
        %2120 = vmatpush1.bf16.msra.mxu0 0
        %2121 = vmatprep.subr.bf16.mxu0 0
        %2122 = vmatpush1.bf16.msra.mxu0 0
        %2123 = vmatprep.subr.bf16.mxu0 0
        %2124 = vmatpush1.bf16.msra.mxu0 0
        %2125 = vmatprep.subr.bf16.mxu0 0
        %2126 = vmatpush1.bf16.msra.mxu0 0
        %2127 = vmatprep.subr.bf16.mxu0 0
        %2128 = vmatpush1.bf16.msra.mxu0 0
        %2129 = vmatprep.mubr.bf16.mxu0 0
        %2130 = vmatmul.mubr.bf16.gmra.mrb[0].mxu0 %v982
        %v2131 = vpop.f32.mrb[0].mxu0
        %v2132 = vadd.f32 0.0, %v2131
        %v2133 = vpop.f32.mrb[0].mxu0
        %v2134 = vpop.f32.mrb[0].mxu0
        %v2135 = vpop.f32.mrb[0].mxu0
        %2136 = vdwg.mxu0
        %s2137 = scalar_lea.vmem [#allocation5], 704
        %v2138 = vld [vmem:[%s2137] sm:$0xf]
        %v2139 = vld [vmem:[%s2137 + $0x4] sm:$0xf]
        %v2140 = vld [vmem:[%s2137 + $0x8] sm:$0xf]
        %v2141 = vld [vmem:[%s2137 + $0xc] sm:$0xf]
        %v2142 = vld [vmem:[%s2137 + $0x10] sm:$0xf]
        %v2143 = vld [vmem:[%s2137 + $0x14] sm:$0xf]
        %v2144 = vld [vmem:[%s2137 + $0x18] sm:$0xf]
        %v2145 = vld [vmem:[%s2137 + $0x1c] sm:$0xf]
        %v2146 = vld [vmem:[%s2137 + $0x20] sm:$0xf]
        %v2147 = vld [vmem:[%s2137 + $0x24] sm:$0xf]
        %v2148 = vld [vmem:[%s2137 + $0x28] sm:$0xf]
        %v2149 = vld [vmem:[%s2137 + $0x2c] sm:$0xf]
        %v2150 = vld [vmem:[%s2137 + $0x30] sm:$0xf]
        %v2151 = vld [vmem:[%s2137 + $0x34] sm:$0xf]
        %v2152 = vld [vmem:[%s2137 + $0x38] sm:$0xf]
        %v2153 = vld [vmem:[%s2137 + $0x3c] sm:$0xf]
        %v2170 = vunpack.c.l.b16 %v2138
        %v2171 = vunpack.c.l.b16 %v2139
        %v2172 = vunpack.c.l.b16 %v2140
        %v2173 = vunpack.c.l.b16 %v2141
        %v2174 = vunpack.c.l.b16 %v2142
        %v2175 = vunpack.c.l.b16 %v2143
        %v2176 = vunpack.c.l.b16 %v2144
        %v2177 = vunpack.c.l.b16 %v2145
        %v2178 = vunpack.c.l.b16 %v2146
        %v2179 = vunpack.c.l.b16 %v2147
        %v2180 = vunpack.c.l.b16 %v2148
        %v2181 = vunpack.c.l.b16 %v2149
        %v2182 = vunpack.c.l.b16 %v2150
        %v2183 = vunpack.c.l.b16 %v2151
        %v2184 = vunpack.c.l.b16 %v2152
        %v2185 = vunpack.c.l.b16 %v2153
        %v2186 = vpack.c.b16 %v2171, %v2170
        %v2187 = vpack.c.b16 %v2173, %v2172
        %v2188 = vpack.c.b16 %v2175, %v2174
        %v2189 = vpack.c.b16 %v2177, %v2176
        %v2190 = vpack.c.b16 %v2179, %v2178
        %v2191 = vpack.c.b16 %v2181, %v2180
        %v2192 = vpack.c.b16 %v2183, %v2182
        %v2193 = vpack.c.b16 %v2185, %v2184
        %2202 = vmatprep.subr.bf16.mxu0 0
        %2203 = vmatpush1.bf16.msra.mxu0 %v2186
        %2204 = vmatprep.subr.bf16.mxu0 0
        %2205 = vmatpush1.bf16.msra.mxu0 %v2187
        %2206 = vmatprep.subr.bf16.mxu0 0
        %2207 = vmatpush1.bf16.msra.mxu0 %v2188
        %2208 = vmatprep.subr.bf16.mxu0 0
        %2209 = vmatpush1.bf16.msra.mxu0 %v2189
        %2210 = vmatprep.subr.bf16.mxu0 0
        %2211 = vmatpush1.bf16.msra.mxu0 %v2190
        %2212 = vmatprep.subr.bf16.mxu0 0
        %2213 = vmatpush1.bf16.msra.mxu0 %v2191
        %2214 = vmatprep.subr.bf16.mxu0 0
        %2215 = vmatpush1.bf16.msra.mxu0 %v2192
        %2216 = vmatprep.subr.bf16.mxu0 0
        %2217 = vmatpush1.bf16.msra.mxu0 %v2193
        %2218 = vmatprep.subr.bf16.mxu0 0
        %2219 = vmatpush1.bf16.msra.mxu0 0
        %2220 = vmatprep.subr.bf16.mxu0 0
        %2221 = vmatpush1.bf16.msra.mxu0 0
        %2222 = vmatprep.subr.bf16.mxu0 0
        %2223 = vmatpush1.bf16.msra.mxu0 0
        %2224 = vmatprep.subr.bf16.mxu0 0
        %2225 = vmatpush1.bf16.msra.mxu0 0
        %2226 = vmatprep.subr.bf16.mxu0 0
        %2227 = vmatpush1.bf16.msra.mxu0 0
        %2228 = vmatprep.subr.bf16.mxu0 0
        %2229 = vmatpush1.bf16.msra.mxu0 0
        %2230 = vmatprep.subr.bf16.mxu0 0
        %2231 = vmatpush1.bf16.msra.mxu0 0
        %2232 = vmatprep.subr.bf16.mxu0 0
        %2233 = vmatpush1.bf16.msra.mxu0 0
        %2234 = vmatprep.mubr.bf16.mxu0 0
        %2235 = vmatmul.mubr.bf16.gmra.mrb[0].mxu0 %v982
        %v2236 = vpop.f32.mrb[0].mxu0
        %v2237 = vadd.f32 0.0, %v2236
        %v2238 = vpop.f32.mrb[0].mxu0
        %v2239 = vpop.f32.mrb[0].mxu0
        %v2240 = vpop.f32.mrb[0].mxu0
        %2241 = vdwg.mxu0
        %s2242 = scalar_lea.vmem [#allocation5], 768
        %v2243 = vld [vmem:[%s2242] sm:$0xf]
        %v2244 = vld [vmem:[%s2242 + $0x4] sm:$0xf]
        %v2245 = vld [vmem:[%s2242 + $0x8] sm:$0xf]
        %v2246 = vld [vmem:[%s2242 + $0xc] sm:$0xf]
        %v2247 = vld [vmem:[%s2242 + $0x10] sm:$0xf]
        %v2248 = vld [vmem:[%s2242 + $0x14] sm:$0xf]
        %v2249 = vld [vmem:[%s2242 + $0x18] sm:$0xf]
        %v2250 = vld [vmem:[%s2242 + $0x1c] sm:$0xf]
        %v2251 = vld [vmem:[%s2242 + $0x20] sm:$0xf]
        %v2252 = vld [vmem:[%s2242 + $0x24] sm:$0xf]
        %v2253 = vld [vmem:[%s2242 + $0x28] sm:$0xf]
        %v2254 = vld [vmem:[%s2242 + $0x2c] sm:$0xf]
        %v2255 = vld [vmem:[%s2242 + $0x30] sm:$0xf]
        %v2256 = vld [vmem:[%s2242 + $0x34] sm:$0xf]
        %v2257 = vld [vmem:[%s2242 + $0x38] sm:$0xf]
        %v2258 = vld [vmem:[%s2242 + $0x3c] sm:$0xf]
        %v2275 = vunpack.c.l.b16 %v2243
        %v2276 = vunpack.c.l.b16 %v2244
        %v2277 = vunpack.c.l.b16 %v2245
        %v2278 = vunpack.c.l.b16 %v2246
        %v2279 = vunpack.c.l.b16 %v2247
        %v2280 = vunpack.c.l.b16 %v2248
        %v2281 = vunpack.c.l.b16 %v2249
        %v2282 = vunpack.c.l.b16 %v2250
        %v2283 = vunpack.c.l.b16 %v2251
        %v2284 = vunpack.c.l.b16 %v2252
        %v2285 = vunpack.c.l.b16 %v2253
        %v2286 = vunpack.c.l.b16 %v2254
        %v2287 = vunpack.c.l.b16 %v2255
        %v2288 = vunpack.c.l.b16 %v2256
        %v2289 = vunpack.c.l.b16 %v2257
        %v2290 = vunpack.c.l.b16 %v2258
        %v2291 = vpack.c.b16 %v2276, %v2275
        %v2292 = vpack.c.b16 %v2278, %v2277
        %v2293 = vpack.c.b16 %v2280, %v2279
        %v2294 = vpack.c.b16 %v2282, %v2281
        %v2295 = vpack.c.b16 %v2284, %v2283
        %v2296 = vpack.c.b16 %v2286, %v2285
        %v2297 = vpack.c.b16 %v2288, %v2287
        %v2298 = vpack.c.b16 %v2290, %v2289
        %2307 = vmatprep.subr.bf16.mxu0 0
        %2308 = vmatpush1.bf16.msra.mxu0 %v2291
        %2309 = vmatprep.subr.bf16.mxu0 0
        %2310 = vmatpush1.bf16.msra.mxu0 %v2292
        %2311 = vmatprep.subr.bf16.mxu0 0
        %2312 = vmatpush1.bf16.msra.mxu0 %v2293
        %2313 = vmatprep.subr.bf16.mxu0 0
        %2314 = vmatpush1.bf16.msra.mxu0 %v2294
        %2315 = vmatprep.subr.bf16.mxu0 0
        %2316 = vmatpush1.bf16.msra.mxu0 %v2295
        %2317 = vmatprep.subr.bf16.mxu0 0
        %2318 = vmatpush1.bf16.msra.mxu0 %v2296
        %2319 = vmatprep.subr.bf16.mxu0 0
        %2320 = vmatpush1.bf16.msra.mxu0 %v2297
        %2321 = vmatprep.subr.bf16.mxu0 0
        %2322 = vmatpush1.bf16.msra.mxu0 %v2298
        %2323 = vmatprep.subr.bf16.mxu0 0
        %2324 = vmatpush1.bf16.msra.mxu0 0
        %2325 = vmatprep.subr.bf16.mxu0 0
        %2326 = vmatpush1.bf16.msra.mxu0 0
        %2327 = vmatprep.subr.bf16.mxu0 0
        %2328 = vmatpush1.bf16.msra.mxu0 0
        %2329 = vmatprep.subr.bf16.mxu0 0
        %2330 = vmatpush1.bf16.msra.mxu0 0
        %2331 = vmatprep.subr.bf16.mxu0 0
        %2332 = vmatpush1.bf16.msra.mxu0 0
        %2333 = vmatprep.subr.bf16.mxu0 0
        %2334 = vmatpush1.bf16.msra.mxu0 0
        %2335 = vmatprep.subr.bf16.mxu0 0
        %2336 = vmatpush1.bf16.msra.mxu0 0
        %2337 = vmatprep.subr.bf16.mxu0 0
        %2338 = vmatpush1.bf16.msra.mxu0 0
        %2339 = vmatprep.mubr.bf16.mxu0 0
        %2340 = vmatmul.mubr.bf16.gmra.mrb[0].mxu0 %v982
        %v2341 = vpop.f32.mrb[0].mxu0
        %v2342 = vadd.f32 0.0, %v2341
        %v2343 = vpop.f32.mrb[0].mxu0
        %v2344 = vpop.f32.mrb[0].mxu0
        %v2345 = vpop.f32.mrb[0].mxu0
        %2346 = vdwg.mxu0
        %s2347 = scalar_lea.vmem [#allocation5], 832
        %v2348 = vld [vmem:[%s2347] sm:$0xf]
        %v2349 = vld [vmem:[%s2347 + $0x4] sm:$0xf]
        %v2350 = vld [vmem:[%s2347 + $0x8] sm:$0xf]
        %v2351 = vld [vmem:[%s2347 + $0xc] sm:$0xf]
        %v2352 = vld [vmem:[%s2347 + $0x10] sm:$0xf]
        %v2353 = vld [vmem:[%s2347 + $0x14] sm:$0xf]
        %v2354 = vld [vmem:[%s2347 + $0x18] sm:$0xf]
        %v2355 = vld [vmem:[%s2347 + $0x1c] sm:$0xf]
        %v2356 = vld [vmem:[%s2347 + $0x20] sm:$0xf]
        %v2357 = vld [vmem:[%s2347 + $0x24] sm:$0xf]
        %v2358 = vld [vmem:[%s2347 + $0x28] sm:$0xf]
        %v2359 = vld [vmem:[%s2347 + $0x2c] sm:$0xf]
        %v2360 = vld [vmem:[%s2347 + $0x30] sm:$0xf]
        %v2361 = vld [vmem:[%s2347 + $0x34] sm:$0xf]
        %v2362 = vld [vmem:[%s2347 + $0x38] sm:$0xf]
        %v2363 = vld [vmem:[%s2347 + $0x3c] sm:$0xf]
        %v2380 = vunpack.c.l.b16 %v2348
        %v2381 = vunpack.c.l.b16 %v2349
        %v2382 = vunpack.c.l.b16 %v2350
        %v2383 = vunpack.c.l.b16 %v2351
        %v2384 = vunpack.c.l.b16 %v2352
        %v2385 = vunpack.c.l.b16 %v2353
        %v2386 = vunpack.c.l.b16 %v2354
        %v2387 = vunpack.c.l.b16 %v2355
        %v2388 = vunpack.c.l.b16 %v2356
        %v2389 = vunpack.c.l.b16 %v2357
        %v2390 = vunpack.c.l.b16 %v2358
        %v2391 = vunpack.c.l.b16 %v2359
        %v2392 = vunpack.c.l.b16 %v2360
        %v2393 = vunpack.c.l.b16 %v2361
        %v2394 = vunpack.c.l.b16 %v2362
        %v2395 = vunpack.c.l.b16 %v2363
        %v2396 = vpack.c.b16 %v2381, %v2380
        %v2397 = vpack.c.b16 %v2383, %v2382
        %v2398 = vpack.c.b16 %v2385, %v2384
        %v2399 = vpack.c.b16 %v2387, %v2386
        %v2400 = vpack.c.b16 %v2389, %v2388
        %v2401 = vpack.c.b16 %v2391, %v2390
        %v2402 = vpack.c.b16 %v2393, %v2392
        %v2403 = vpack.c.b16 %v2395, %v2394
        %2412 = vmatprep.subr.bf16.mxu0 0
        %2413 = vmatpush1.bf16.msra.mxu0 %v2396
        %2414 = vmatprep.subr.bf16.mxu0 0
        %2415 = vmatpush1.bf16.msra.mxu0 %v2397
        %2416 = vmatprep.subr.bf16.mxu0 0
        %2417 = vmatpush1.bf16.msra.mxu0 %v2398
        %2418 = vmatprep.subr.bf16.mxu0 0
        %2419 = vmatpush1.bf16.msra.mxu0 %v2399
        %2420 = vmatprep.subr.bf16.mxu0 0
        %2421 = vmatpush1.bf16.msra.mxu0 %v2400
        %2422 = vmatprep.subr.bf16.mxu0 0
        %2423 = vmatpush1.bf16.msra.mxu0 %v2401
        %2424 = vmatprep.subr.bf16.mxu0 0
        %2425 = vmatpush1.bf16.msra.mxu0 %v2402
        %2426 = vmatprep.subr.bf16.mxu0 0
        %2427 = vmatpush1.bf16.msra.mxu0 %v2403
        %2428 = vmatprep.subr.bf16.mxu0 0
        %2429 = vmatpush1.bf16.msra.mxu0 0
        %2430 = vmatprep.subr.bf16.mxu0 0
        %2431 = vmatpush1.bf16.msra.mxu0 0
        %2432 = vmatprep.subr.bf16.mxu0 0
        %2433 = vmatpush1.bf16.msra.mxu0 0
        %2434 = vmatprep.subr.bf16.mxu0 0
        %2435 = vmatpush1.bf16.msra.mxu0 0
        %2436 = vmatprep.subr.bf16.mxu0 0
        %2437 = vmatpush1.bf16.msra.mxu0 0
        %2438 = vmatprep.subr.bf16.mxu0 0
        %2439 = vmatpush1.bf16.msra.mxu0 0
        %2440 = vmatprep.subr.bf16.mxu0 0
        %2441 = vmatpush1.bf16.msra.mxu0 0
        %2442 = vmatprep.subr.bf16.mxu0 0
        %2443 = vmatpush1.bf16.msra.mxu0 0
        %2444 = vmatprep.mubr.bf16.mxu0 0
        %2445 = vmatmul.mubr.bf16.gmra.mrb[0].mxu0 %v982
        %v2446 = vpop.f32.mrb[0].mxu0
        %v2447 = vadd.f32 0.0, %v2446
        %v2448 = vpop.f32.mrb[0].mxu0
        %v2449 = vpop.f32.mrb[0].mxu0
        %v2450 = vpop.f32.mrb[0].mxu0
        %2451 = vdwg.mxu0
        %s2452 = scalar_lea.vmem [#allocation5], 896
        %v2453 = vld [vmem:[%s2452] sm:$0xf]
        %v2454 = vld [vmem:[%s2452 + $0x4] sm:$0xf]
        %v2455 = vld [vmem:[%s2452 + $0x8] sm:$0xf]
        %v2456 = vld [vmem:[%s2452 + $0xc] sm:$0xf]
        %v2457 = vld [vmem:[%s2452 + $0x10] sm:$0xf]
        %v2458 = vld [vmem:[%s2452 + $0x14] sm:$0xf]
        %v2459 = vld [vmem:[%s2452 + $0x18] sm:$0xf]
        %v2460 = vld [vmem:[%s2452 + $0x1c] sm:$0xf]
        %v2461 = vld [vmem:[%s2452 + $0x20] sm:$0xf]
        %v2462 = vld [vmem:[%s2452 + $0x24] sm:$0xf]
        %v2463 = vld [vmem:[%s2452 + $0x28] sm:$0xf]
        %v2464 = vld [vmem:[%s2452 + $0x2c] sm:$0xf]
        %v2465 = vld [vmem:[%s2452 + $0x30] sm:$0xf]
        %v2466 = vld [vmem:[%s2452 + $0x34] sm:$0xf]
        %v2467 = vld [vmem:[%s2452 + $0x38] sm:$0xf]
        %v2468 = vld [vmem:[%s2452 + $0x3c] sm:$0xf]
        %v2485 = vunpack.c.l.b16 %v2453
        %v2486 = vunpack.c.l.b16 %v2454
        %v2487 = vunpack.c.l.b16 %v2455
        %v2488 = vunpack.c.l.b16 %v2456
        %v2489 = vunpack.c.l.b16 %v2457
        %v2490 = vunpack.c.l.b16 %v2458
        %v2491 = vunpack.c.l.b16 %v2459
        %v2492 = vunpack.c.l.b16 %v2460
        %v2493 = vunpack.c.l.b16 %v2461
        %v2494 = vunpack.c.l.b16 %v2462
        %v2495 = vunpack.c.l.b16 %v2463
        %v2496 = vunpack.c.l.b16 %v2464
        %v2497 = vunpack.c.l.b16 %v2465
        %v2498 = vunpack.c.l.b16 %v2466
        %v2499 = vunpack.c.l.b16 %v2467
        %v2500 = vunpack.c.l.b16 %v2468
        %v2501 = vpack.c.b16 %v2486, %v2485
        %v2502 = vpack.c.b16 %v2488, %v2487
        %v2503 = vpack.c.b16 %v2490, %v2489
        %v2504 = vpack.c.b16 %v2492, %v2491
        %v2505 = vpack.c.b16 %v2494, %v2493
        %v2506 = vpack.c.b16 %v2496, %v2495
        %v2507 = vpack.c.b16 %v2498, %v2497
        %v2508 = vpack.c.b16 %v2500, %v2499
        %2517 = vmatprep.subr.bf16.mxu0 0
        %2518 = vmatpush1.bf16.msra.mxu0 %v2501
        %2519 = vmatprep.subr.bf16.mxu0 0
        %2520 = vmatpush1.bf16.msra.mxu0 %v2502
        %2521 = vmatprep.subr.bf16.mxu0 0
        %2522 = vmatpush1.bf16.msra.mxu0 %v2503
        %2523 = vmatprep.subr.bf16.mxu0 0
        %2524 = vmatpush1.bf16.msra.mxu0 %v2504
        %2525 = vmatprep.subr.bf16.mxu0 0
        %2526 = vmatpush1.bf16.msra.mxu0 %v2505
        %2527 = vmatprep.subr.bf16.mxu0 0
        %2528 = vmatpush1.bf16.msra.mxu0 %v2506
        %2529 = vmatprep.subr.bf16.mxu0 0
        %2530 = vmatpush1.bf16.msra.mxu0 %v2507
        %2531 = vmatprep.subr.bf16.mxu0 0
        %2532 = vmatpush1.bf16.msra.mxu0 %v2508
        %2533 = vmatprep.subr.bf16.mxu0 0
        %2534 = vmatpush1.bf16.msra.mxu0 0
        %2535 = vmatprep.subr.bf16.mxu0 0
        %2536 = vmatpush1.bf16.msra.mxu0 0
        %2537 = vmatprep.subr.bf16.mxu0 0
        %2538 = vmatpush1.bf16.msra.mxu0 0
        %2539 = vmatprep.subr.bf16.mxu0 0
        %2540 = vmatpush1.bf16.msra.mxu0 0
        %2541 = vmatprep.subr.bf16.mxu0 0
        %2542 = vmatpush1.bf16.msra.mxu0 0
        %2543 = vmatprep.subr.bf16.mxu0 0
        %2544 = vmatpush1.bf16.msra.mxu0 0
        %2545 = vmatprep.subr.bf16.mxu0 0
        %2546 = vmatpush1.bf16.msra.mxu0 0
        %2547 = vmatprep.subr.bf16.mxu0 0
        %2548 = vmatpush1.bf16.msra.mxu0 0
        %2549 = vmatprep.mubr.bf16.mxu0 0
        %2550 = vmatmul.mubr.bf16.gmra.mrb[0].mxu0 %v982
        %v2551 = vpop.f32.mrb[0].mxu0
        %v2552 = vadd.f32 0.0, %v2551
        %v2553 = vpop.f32.mrb[0].mxu0
        %v2554 = vpop.f32.mrb[0].mxu0
        %v2555 = vpop.f32.mrb[0].mxu0
        %2556 = vdwg.mxu0
        %s2557 = scalar_lea.vmem [#allocation5], 960
        %v2558 = vld [vmem:[%s2557] sm:$0xf]
        %v2559 = vld [vmem:[%s2557 + $0x4] sm:$0xf]
        %v2560 = vld [vmem:[%s2557 + $0x8] sm:$0xf]
        %v2561 = vld [vmem:[%s2557 + $0xc] sm:$0xf]
        %v2562 = vld [vmem:[%s2557 + $0x10] sm:$0xf]
        %v2563 = vld [vmem:[%s2557 + $0x14] sm:$0xf]
        %v2564 = vld [vmem:[%s2557 + $0x18] sm:$0xf]
        %v2565 = vld [vmem:[%s2557 + $0x1c] sm:$0xf]
        %v2566 = vld [vmem:[%s2557 + $0x20] sm:$0xf]
        %v2567 = vld [vmem:[%s2557 + $0x24] sm:$0xf]
        %v2568 = vld [vmem:[%s2557 + $0x28] sm:$0xf]
        %v2569 = vld [vmem:[%s2557 + $0x2c] sm:$0xf]
        %v2570 = vld [vmem:[%s2557 + $0x30] sm:$0xf]
        %v2571 = vld [vmem:[%s2557 + $0x34] sm:$0xf]
        %v2572 = vld [vmem:[%s2557 + $0x38] sm:$0xf]
        %v2573 = vld [vmem:[%s2557 + $0x3c] sm:$0xf]
        %v2590 = vunpack.c.l.b16 %v2558
        %v2591 = vunpack.c.l.b16 %v2559
        %v2592 = vunpack.c.l.b16 %v2560
        %v2593 = vunpack.c.l.b16 %v2561
        %v2594 = vunpack.c.l.b16 %v2562
        %v2595 = vunpack.c.l.b16 %v2563
        %v2596 = vunpack.c.l.b16 %v2564
        %v2597 = vunpack.c.l.b16 %v2565
        %v2598 = vunpack.c.l.b16 %v2566
        %v2599 = vunpack.c.l.b16 %v2567
        %v2600 = vunpack.c.l.b16 %v2568
        %v2601 = vunpack.c.l.b16 %v2569
        %v2602 = vunpack.c.l.b16 %v2570
        %v2603 = vunpack.c.l.b16 %v2571
        %v2604 = vunpack.c.l.b16 %v2572
        %v2605 = vunpack.c.l.b16 %v2573
        %v2606 = vpack.c.b16 %v2591, %v2590
        %v2607 = vpack.c.b16 %v2593, %v2592
        %v2608 = vpack.c.b16 %v2595, %v2594
        %v2609 = vpack.c.b16 %v2597, %v2596
        %v2610 = vpack.c.b16 %v2599, %v2598
        %v2611 = vpack.c.b16 %v2601, %v2600
        %v2612 = vpack.c.b16 %v2603, %v2602
        %v2613 = vpack.c.b16 %v2605, %v2604
        %2622 = vmatprep.subr.bf16.mxu0 0
        %2623 = vmatpush1.bf16.msra.mxu0 %v2606
        %2624 = vmatprep.subr.bf16.mxu0 0
        %2625 = vmatpush1.bf16.msra.mxu0 %v2607
        %2626 = vmatprep.subr.bf16.mxu0 0
        %2627 = vmatpush1.bf16.msra.mxu0 %v2608
        %2628 = vmatprep.subr.bf16.mxu0 0
        %2629 = vmatpush1.bf16.msra.mxu0 %v2609
        %2630 = vmatprep.subr.bf16.mxu0 0
        %2631 = vmatpush1.bf16.msra.mxu0 %v2610
        %2632 = vmatprep.subr.bf16.mxu0 0
        %2633 = vmatpush1.bf16.msra.mxu0 %v2611
        %2634 = vmatprep.subr.bf16.mxu0 0
        %2635 = vmatpush1.bf16.msra.mxu0 %v2612
        %2636 = vmatprep.subr.bf16.mxu0 0
        %2637 = vmatpush1.bf16.msra.mxu0 %v2613
        %2638 = vmatprep.subr.bf16.mxu0 0
        %2639 = vmatpush1.bf16.msra.mxu0 0
        %2640 = vmatprep.subr.bf16.mxu0 0
        %2641 = vmatpush1.bf16.msra.mxu0 0
        %2642 = vmatprep.subr.bf16.mxu0 0
        %2643 = vmatpush1.bf16.msra.mxu0 0
        %2644 = vmatprep.subr.bf16.mxu0 0
        %2645 = vmatpush1.bf16.msra.mxu0 0
        %2646 = vmatprep.subr.bf16.mxu0 0
        %2647 = vmatpush1.bf16.msra.mxu0 0
        %2648 = vmatprep.subr.bf16.mxu0 0
        %2649 = vmatpush1.bf16.msra.mxu0 0
        %2650 = vmatprep.subr.bf16.mxu0 0
        %2651 = vmatpush1.bf16.msra.mxu0 0
        %2652 = vmatprep.subr.bf16.mxu0 0
        %2653 = vmatpush1.bf16.msra.mxu0 0
        %2654 = vmatprep.mubr.bf16.mxu0 0
        %2655 = vmatmul.mubr.bf16.gmra.mrb[0].mxu0 %v982
        %v2656 = vpop.f32.mrb[0].mxu0
        %v2657 = vadd.f32 0.0, %v2656
        %v2658 = vpop.f32.mrb[0].mxu0
        %v2659 = vpop.f32.mrb[0].mxu0
        %v2660 = vpop.f32.mrb[0].mxu0
        %2661 = vdwg.mxu0
        %s2662 = scalar_lea.vmem [#allocation5], 1024
        %v2663 = vld [vmem:[%s2662] sm:$0xf]
        %v2664 = vld [vmem:[%s2662 + $0x4] sm:$0xf]
        %v2665 = vld [vmem:[%s2662 + $0x8] sm:$0xf]
        %v2666 = vld [vmem:[%s2662 + $0xc] sm:$0xf]
        %v2667 = vld [vmem:[%s2662 + $0x10] sm:$0xf]
        %v2668 = vld [vmem:[%s2662 + $0x14] sm:$0xf]
        %v2669 = vld [vmem:[%s2662 + $0x18] sm:$0xf]
        %v2670 = vld [vmem:[%s2662 + $0x1c] sm:$0xf]
        %v2671 = vld [vmem:[%s2662 + $0x20] sm:$0xf]
        %v2672 = vld [vmem:[%s2662 + $0x24] sm:$0xf]
        %v2673 = vld [vmem:[%s2662 + $0x28] sm:$0xf]
        %v2674 = vld [vmem:[%s2662 + $0x2c] sm:$0xf]
        %v2675 = vld [vmem:[%s2662 + $0x30] sm:$0xf]
        %v2676 = vld [vmem:[%s2662 + $0x34] sm:$0xf]
        %v2677 = vld [vmem:[%s2662 + $0x38] sm:$0xf]
        %v2678 = vld [vmem:[%s2662 + $0x3c] sm:$0xf]
        %v2695 = vunpack.c.l.b16 %v2663
        %v2696 = vunpack.c.l.b16 %v2664
        %v2697 = vunpack.c.l.b16 %v2665
        %v2698 = vunpack.c.l.b16 %v2666
        %v2699 = vunpack.c.l.b16 %v2667
        %v2700 = vunpack.c.l.b16 %v2668
        %v2701 = vunpack.c.l.b16 %v2669
        %v2702 = vunpack.c.l.b16 %v2670
        %v2703 = vunpack.c.l.b16 %v2671
        %v2704 = vunpack.c.l.b16 %v2672
        %v2705 = vunpack.c.l.b16 %v2673
        %v2706 = vunpack.c.l.b16 %v2674
        %v2707 = vunpack.c.l.b16 %v2675
        %v2708 = vunpack.c.l.b16 %v2676
        %v2709 = vunpack.c.l.b16 %v2677
        %v2710 = vunpack.c.l.b16 %v2678
        %v2711 = vpack.c.b16 %v2696, %v2695
        %v2712 = vpack.c.b16 %v2698, %v2697
        %v2713 = vpack.c.b16 %v2700, %v2699
        %v2714 = vpack.c.b16 %v2702, %v2701
        %v2715 = vpack.c.b16 %v2704, %v2703
        %v2716 = vpack.c.b16 %v2706, %v2705
        %v2717 = vpack.c.b16 %v2708, %v2707
        %v2718 = vpack.c.b16 %v2710, %v2709
        %2727 = vmatprep.subr.bf16.mxu0 0
        %2728 = vmatpush1.bf16.msra.mxu0 %v2711
        %2729 = vmatprep.subr.bf16.mxu0 0
        %2730 = vmatpush1.bf16.msra.mxu0 %v2712
        %2731 = vmatprep.subr.bf16.mxu0 0
        %2732 = vmatpush1.bf16.msra.mxu0 %v2713
        %2733 = vmatprep.subr.bf16.mxu0 0
        %2734 = vmatpush1.bf16.msra.mxu0 %v2714
        %2735 = vmatprep.subr.bf16.mxu0 0
        %2736 = vmatpush1.bf16.msra.mxu0 %v2715
        %2737 = vmatprep.subr.bf16.mxu0 0
        %2738 = vmatpush1.bf16.msra.mxu0 %v2716
        %2739 = vmatprep.subr.bf16.mxu0 0
        %2740 = vmatpush1.bf16.msra.mxu0 %v2717
        %2741 = vmatprep.subr.bf16.mxu0 0
        %2742 = vmatpush1.bf16.msra.mxu0 %v2718
        %2743 = vmatprep.subr.bf16.mxu0 0
        %2744 = vmatpush1.bf16.msra.mxu0 0
        %2745 = vmatprep.subr.bf16.mxu0 0
        %2746 = vmatpush1.bf16.msra.mxu0 0
        %2747 = vmatprep.subr.bf16.mxu0 0
        %2748 = vmatpush1.bf16.msra.mxu0 0
        %2749 = vmatprep.subr.bf16.mxu0 0
        %2750 = vmatpush1.bf16.msra.mxu0 0
        %2751 = vmatprep.subr.bf16.mxu0 0
        %2752 = vmatpush1.bf16.msra.mxu0 0
        %2753 = vmatprep.subr.bf16.mxu0 0
        %2754 = vmatpush1.bf16.msra.mxu0 0
        %2755 = vmatprep.subr.bf16.mxu0 0
        %2756 = vmatpush1.bf16.msra.mxu0 0
        %2757 = vmatprep.subr.bf16.mxu0 0
        %2758 = vmatpush1.bf16.msra.mxu0 0
        %2759 = vmatprep.mubr.bf16.mxu0 0
        %2760 = vmatmul.mubr.bf16.gmra.mrb[0].mxu0 %v982
        %v2761 = vpop.f32.mrb[0].mxu0
        %v2762 = vadd.f32 0.0, %v2761
        %v2763 = vpop.f32.mrb[0].mxu0
        %v2764 = vpop.f32.mrb[0].mxu0
        %v2765 = vpop.f32.mrb[0].mxu0
        %2766 = vdwg.mxu0
        %s2767 = scalar_lea.vmem [#allocation5], 1088
        %v2768 = vld [vmem:[%s2767] sm:$0xf]
        %v2769 = vld [vmem:[%s2767 + $0x4] sm:$0xf]
        %v2770 = vld [vmem:[%s2767 + $0x8] sm:$0xf]
        %v2771 = vld [vmem:[%s2767 + $0xc] sm:$0xf]
        %v2772 = vld [vmem:[%s2767 + $0x10] sm:$0xf]
        %v2773 = vld [vmem:[%s2767 + $0x14] sm:$0xf]
        %v2774 = vld [vmem:[%s2767 + $0x18] sm:$0xf]
        %v2775 = vld [vmem:[%s2767 + $0x1c] sm:$0xf]
        %v2776 = vld [vmem:[%s2767 + $0x20] sm:$0xf]
        %v2777 = vld [vmem:[%s2767 + $0x24] sm:$0xf]
        %v2778 = vld [vmem:[%s2767 + $0x28] sm:$0xf]
        %v2779 = vld [vmem:[%s2767 + $0x2c] sm:$0xf]
        %v2780 = vld [vmem:[%s2767 + $0x30] sm:$0xf]
        %v2781 = vld [vmem:[%s2767 + $0x34] sm:$0xf]
        %v2782 = vld [vmem:[%s2767 + $0x38] sm:$0xf]
        %v2783 = vld [vmem:[%s2767 + $0x3c] sm:$0xf]
        %v2800 = vunpack.c.l.b16 %v2768
        %v2801 = vunpack.c.l.b16 %v2769
        %v2802 = vunpack.c.l.b16 %v2770
        %v2803 = vunpack.c.l.b16 %v2771
        %v2804 = vunpack.c.l.b16 %v2772
        %v2805 = vunpack.c.l.b16 %v2773
        %v2806 = vunpack.c.l.b16 %v2774
        %v2807 = vunpack.c.l.b16 %v2775
        %v2808 = vunpack.c.l.b16 %v2776
        %v2809 = vunpack.c.l.b16 %v2777
        %v2810 = vunpack.c.l.b16 %v2778
        %v2811 = vunpack.c.l.b16 %v2779
        %v2812 = vunpack.c.l.b16 %v2780
        %v2813 = vunpack.c.l.b16 %v2781
        %v2814 = vunpack.c.l.b16 %v2782
        %v2815 = vunpack.c.l.b16 %v2783
        %v2816 = vpack.c.b16 %v2801, %v2800
        %v2817 = vpack.c.b16 %v2803, %v2802
        %v2818 = vpack.c.b16 %v2805, %v2804
        %v2819 = vpack.c.b16 %v2807, %v2806
        %v2820 = vpack.c.b16 %v2809, %v2808
        %v2821 = vpack.c.b16 %v2811, %v2810
        %v2822 = vpack.c.b16 %v2813, %v2812
        %v2823 = vpack.c.b16 %v2815, %v2814
        %2832 = vmatprep.subr.bf16.mxu0 0
        %2833 = vmatpush1.bf16.msra.mxu0 %v2816
        %2834 = vmatprep.subr.bf16.mxu0 0
        %2835 = vmatpush1.bf16.msra.mxu0 %v2817
        %2836 = vmatprep.subr.bf16.mxu0 0
        %2837 = vmatpush1.bf16.msra.mxu0 %v2818
        %2838 = vmatprep.subr.bf16.mxu0 0
        %2839 = vmatpush1.bf16.msra.mxu0 %v2819
        %2840 = vmatprep.subr.bf16.mxu0 0
        %2841 = vmatpush1.bf16.msra.mxu0 %v2820
        %2842 = vmatprep.subr.bf16.mxu0 0
        %2843 = vmatpush1.bf16.msra.mxu0 %v2821
        %2844 = vmatprep.subr.bf16.mxu0 0
        %2845 = vmatpush1.bf16.msra.mxu0 %v2822
        %2846 = vmatprep.subr.bf16.mxu0 0
        %2847 = vmatpush1.bf16.msra.mxu0 %v2823
        %2848 = vmatprep.subr.bf16.mxu0 0
        %2849 = vmatpush1.bf16.msra.mxu0 0
        %2850 = vmatprep.subr.bf16.mxu0 0
        %2851 = vmatpush1.bf16.msra.mxu0 0
        %2852 = vmatprep.subr.bf16.mxu0 0
        %2853 = vmatpush1.bf16.msra.mxu0 0
        %2854 = vmatprep.subr.bf16.mxu0 0
        %2855 = vmatpush1.bf16.msra.mxu0 0
        %2856 = vmatprep.subr.bf16.mxu0 0
        %2857 = vmatpush1.bf16.msra.mxu0 0
        %2858 = vmatprep.subr.bf16.mxu0 0
        %2859 = vmatpush1.bf16.msra.mxu0 0
        %2860 = vmatprep.subr.bf16.mxu0 0
        %2861 = vmatpush1.bf16.msra.mxu0 0
        %2862 = vmatprep.subr.bf16.mxu0 0
        %2863 = vmatpush1.bf16.msra.mxu0 0
        %2864 = vmatprep.mubr.bf16.mxu0 0
        %2865 = vmatmul.mubr.bf16.gmra.mrb[0].mxu0 %v982
        %v2866 = vpop.f32.mrb[0].mxu0
        %v2867 = vadd.f32 0.0, %v2866
        %v2868 = vpop.f32.mrb[0].mxu0
        %v2869 = vpop.f32.mrb[0].mxu0
        %v2870 = vpop.f32.mrb[0].mxu0
        %2871 = vdwg.mxu0
        %s2872 = scalar_lea.vmem [#allocation5], 1152
        %v2873 = vld [vmem:[%s2872] sm:$0xf]
        %v2874 = vld [vmem:[%s2872 + $0x4] sm:$0xf]
        %v2875 = vld [vmem:[%s2872 + $0x8] sm:$0xf]
        %v2876 = vld [vmem:[%s2872 + $0xc] sm:$0xf]
        %v2877 = vld [vmem:[%s2872 + $0x10] sm:$0xf]
        %v2878 = vld [vmem:[%s2872 + $0x14] sm:$0xf]
        %v2879 = vld [vmem:[%s2872 + $0x18] sm:$0xf]
        %v2880 = vld [vmem:[%s2872 + $0x1c] sm:$0xf]
        %v2881 = vld [vmem:[%s2872 + $0x20] sm:$0xf]
        %v2882 = vld [vmem:[%s2872 + $0x24] sm:$0xf]
        %v2883 = vld [vmem:[%s2872 + $0x28] sm:$0xf]
        %v2884 = vld [vmem:[%s2872 + $0x2c] sm:$0xf]
        %v2885 = vld [vmem:[%s2872 + $0x30] sm:$0xf]
        %v2886 = vld [vmem:[%s2872 + $0x34] sm:$0xf]
        %v2887 = vld [vmem:[%s2872 + $0x38] sm:$0xf]
        %v2888 = vld [vmem:[%s2872 + $0x3c] sm:$0xf]
        %v2905 = vunpack.c.l.b16 %v2873
        %v2906 = vunpack.c.l.b16 %v2874
        %v2907 = vunpack.c.l.b16 %v2875
        %v2908 = vunpack.c.l.b16 %v2876
        %v2909 = vunpack.c.l.b16 %v2877
        %v2910 = vunpack.c.l.b16 %v2878
        %v2911 = vunpack.c.l.b16 %v2879
        %v2912 = vunpack.c.l.b16 %v2880
        %v2913 = vunpack.c.l.b16 %v2881
        %v2914 = vunpack.c.l.b16 %v2882
        %v2915 = vunpack.c.l.b16 %v2883
        %v2916 = vunpack.c.l.b16 %v2884
        %v2917 = vunpack.c.l.b16 %v2885
        %v2918 = vunpack.c.l.b16 %v2886
        %v2919 = vunpack.c.l.b16 %v2887
        %v2920 = vunpack.c.l.b16 %v2888
        %v2921 = vpack.c.b16 %v2906, %v2905
        %v2922 = vpack.c.b16 %v2908, %v2907
        %v2923 = vpack.c.b16 %v2910, %v2909
        %v2924 = vpack.c.b16 %v2912, %v2911
        %v2925 = vpack.c.b16 %v2914, %v2913
        %v2926 = vpack.c.b16 %v2916, %v2915
        %v2927 = vpack.c.b16 %v2918, %v2917
        %v2928 = vpack.c.b16 %v2920, %v2919
        %2937 = vmatprep.subr.bf16.mxu0 0
        %2938 = vmatpush1.bf16.msra.mxu0 %v2921
        %2939 = vmatprep.subr.bf16.mxu0 0
        %2940 = vmatpush1.bf16.msra.mxu0 %v2922
        %2941 = vmatprep.subr.bf16.mxu0 0
        %2942 = vmatpush1.bf16.msra.mxu0 %v2923
        %2943 = vmatprep.subr.bf16.mxu0 0
        %2944 = vmatpush1.bf16.msra.mxu0 %v2924
        %2945 = vmatprep.subr.bf16.mxu0 0
        %2946 = vmatpush1.bf16.msra.mxu0 %v2925
        %2947 = vmatprep.subr.bf16.mxu0 0
        %2948 = vmatpush1.bf16.msra.mxu0 %v2926
        %2949 = vmatprep.subr.bf16.mxu0 0
        %2950 = vmatpush1.bf16.msra.mxu0 %v2927
        %2951 = vmatprep.subr.bf16.mxu0 0
        %2952 = vmatpush1.bf16.msra.mxu0 %v2928
        %2953 = vmatprep.subr.bf16.mxu0 0
        %2954 = vmatpush1.bf16.msra.mxu0 0
        %2955 = vmatprep.subr.bf16.mxu0 0
        %2956 = vmatpush1.bf16.msra.mxu0 0
        %2957 = vmatprep.subr.bf16.mxu0 0
        %2958 = vmatpush1.bf16.msra.mxu0 0
        %2959 = vmatprep.subr.bf16.mxu0 0
        %2960 = vmatpush1.bf16.msra.mxu0 0
        %2961 = vmatprep.subr.bf16.mxu0 0
        %2962 = vmatpush1.bf16.msra.mxu0 0
        %2963 = vmatprep.subr.bf16.mxu0 0
        %2964 = vmatpush1.bf16.msra.mxu0 0
        %2965 = vmatprep.subr.bf16.mxu0 0
        %2966 = vmatpush1.bf16.msra.mxu0 0
        %2967 = vmatprep.subr.bf16.mxu0 0
        %2968 = vmatpush1.bf16.msra.mxu0 0
        %2969 = vmatprep.mubr.bf16.mxu0 0
        %2970 = vmatmul.mubr.bf16.gmra.mrb[0].mxu0 %v982
        %v2971 = vpop.f32.mrb[0].mxu0
        %v2972 = vadd.f32 0.0, %v2971
        %v2973 = vpop.f32.mrb[0].mxu0
        %v2974 = vpop.f32.mrb[0].mxu0
        %v2975 = vpop.f32.mrb[0].mxu0
        %2976 = vdwg.mxu0
        %s2977 = scalar_lea.vmem [#allocation5], 1216
        %v2978 = vld [vmem:[%s2977] sm:$0xf]
        %v2979 = vld [vmem:[%s2977 + $0x4] sm:$0xf]
        %v2980 = vld [vmem:[%s2977 + $0x8] sm:$0xf]
        %v2981 = vld [vmem:[%s2977 + $0xc] sm:$0xf]
        %v2982 = vld [vmem:[%s2977 + $0x10] sm:$0xf]
        %v2983 = vld [vmem:[%s2977 + $0x14] sm:$0xf]
        %v2984 = vld [vmem:[%s2977 + $0x18] sm:$0xf]
        %v2985 = vld [vmem:[%s2977 + $0x1c] sm:$0xf]
        %v2986 = vld [vmem:[%s2977 + $0x20] sm:$0xf]
        %v2987 = vld [vmem:[%s2977 + $0x24] sm:$0xf]
        %v2988 = vld [vmem:[%s2977 + $0x28] sm:$0xf]
        %v2989 = vld [vmem:[%s2977 + $0x2c] sm:$0xf]
        %v2990 = vld [vmem:[%s2977 + $0x30] sm:$0xf]
        %v2991 = vld [vmem:[%s2977 + $0x34] sm:$0xf]
        %v2992 = vld [vmem:[%s2977 + $0x38] sm:$0xf]
        %v2993 = vld [vmem:[%s2977 + $0x3c] sm:$0xf]
        %v3010 = vunpack.c.l.b16 %v2978
        %v3011 = vunpack.c.l.b16 %v2979
        %v3012 = vunpack.c.l.b16 %v2980
        %v3013 = vunpack.c.l.b16 %v2981
        %v3014 = vunpack.c.l.b16 %v2982
        %v3015 = vunpack.c.l.b16 %v2983
        %v3016 = vunpack.c.l.b16 %v2984
        %v3017 = vunpack.c.l.b16 %v2985
        %v3018 = vunpack.c.l.b16 %v2986
        %v3019 = vunpack.c.l.b16 %v2987
        %v3020 = vunpack.c.l.b16 %v2988
        %v3021 = vunpack.c.l.b16 %v2989
        %v3022 = vunpack.c.l.b16 %v2990
        %v3023 = vunpack.c.l.b16 %v2991
        %v3024 = vunpack.c.l.b16 %v2992
        %v3025 = vunpack.c.l.b16 %v2993
        %v3026 = vpack.c.b16 %v3011, %v3010
        %v3027 = vpack.c.b16 %v3013, %v3012
        %v3028 = vpack.c.b16 %v3015, %v3014
        %v3029 = vpack.c.b16 %v3017, %v3016
        %v3030 = vpack.c.b16 %v3019, %v3018
        %v3031 = vpack.c.b16 %v3021, %v3020
        %v3032 = vpack.c.b16 %v3023, %v3022
        %v3033 = vpack.c.b16 %v3025, %v3024
        %3042 = vmatprep.subr.bf16.mxu0 0
        %3043 = vmatpush1.bf16.msra.mxu0 %v3026
        %3044 = vmatprep.subr.bf16.mxu0 0
        %3045 = vmatpush1.bf16.msra.mxu0 %v3027
        %3046 = vmatprep.subr.bf16.mxu0 0
        %3047 = vmatpush1.bf16.msra.mxu0 %v3028
        %3048 = vmatprep.subr.bf16.mxu0 0
        %3049 = vmatpush1.bf16.msra.mxu0 %v3029
        %3050 = vmatprep.subr.bf16.mxu0 0
        %3051 = vmatpush1.bf16.msra.mxu0 %v3030
        %3052 = vmatprep.subr.bf16.mxu0 0
        %3053 = vmatpush1.bf16.msra.mxu0 %v3031
        %3054 = vmatprep.subr.bf16.mxu0 0
        %3055 = vmatpush1.bf16.msra.mxu0 %v3032
        %3056 = vmatprep.subr.bf16.mxu0 0
        %3057 = vmatpush1.bf16.msra.mxu0 %v3033
        %3058 = vmatprep.subr.bf16.mxu0 0
        %3059 = vmatpush1.bf16.msra.mxu0 0
        %3060 = vmatprep.subr.bf16.mxu0 0
        %3061 = vmatpush1.bf16.msra.mxu0 0
        %3062 = vmatprep.subr.bf16.mxu0 0
        %3063 = vmatpush1.bf16.msra.mxu0 0
        %3064 = vmatprep.subr.bf16.mxu0 0
        %3065 = vmatpush1.bf16.msra.mxu0 0
        %3066 = vmatprep.subr.bf16.mxu0 0
        %3067 = vmatpush1.bf16.msra.mxu0 0
        %3068 = vmatprep.subr.bf16.mxu0 0
        %3069 = vmatpush1.bf16.msra.mxu0 0
        %3070 = vmatprep.subr.bf16.mxu0 0
        %3071 = vmatpush1.bf16.msra.mxu0 0
        %3072 = vmatprep.subr.bf16.mxu0 0
        %3073 = vmatpush1.bf16.msra.mxu0 0
        %3074 = vmatprep.mubr.bf16.mxu0 0
        %3075 = vmatmul.mubr.bf16.gmra.mrb[0].mxu0 %v982
        %v3076 = vpop.f32.mrb[0].mxu0
        %v3077 = vadd.f32 0.0, %v3076
        %v3078 = vpop.f32.mrb[0].mxu0
        %v3079 = vpop.f32.mrb[0].mxu0
        %v3080 = vpop.f32.mrb[0].mxu0
        %3081 = vdwg.mxu0
        %s3082 = scalar_lea.vmem [#allocation5], 1280
        %v3083 = vld [vmem:[%s3082] sm:$0xf]
        %v3084 = vld [vmem:[%s3082 + $0x4] sm:$0xf]
        %v3085 = vld [vmem:[%s3082 + $0x8] sm:$0xf]
        %v3086 = vld [vmem:[%s3082 + $0xc] sm:$0xf]
        %v3087 = vld [vmem:[%s3082 + $0x10] sm:$0xf]
        %v3088 = vld [vmem:[%s3082 + $0x14] sm:$0xf]
        %v3089 = vld [vmem:[%s3082 + $0x18] sm:$0xf]
        %v3090 = vld [vmem:[%s3082 + $0x1c] sm:$0xf]
        %v3091 = vld [vmem:[%s3082 + $0x20] sm:$0xf]
        %v3092 = vld [vmem:[%s3082 + $0x24] sm:$0xf]
        %v3093 = vld [vmem:[%s3082 + $0x28] sm:$0xf]
        %v3094 = vld [vmem:[%s3082 + $0x2c] sm:$0xf]
        %v3095 = vld [vmem:[%s3082 + $0x30] sm:$0xf]
        %v3096 = vld [vmem:[%s3082 + $0x34] sm:$0xf]
        %v3097 = vld [vmem:[%s3082 + $0x38] sm:$0xf]
        %v3098 = vld [vmem:[%s3082 + $0x3c] sm:$0xf]
        %v3115 = vunpack.c.l.b16 %v3083
        %v3116 = vunpack.c.l.b16 %v3084
        %v3117 = vunpack.c.l.b16 %v3085
        %v3118 = vunpack.c.l.b16 %v3086
        %v3119 = vunpack.c.l.b16 %v3087
        %v3120 = vunpack.c.l.b16 %v3088
        %v3121 = vunpack.c.l.b16 %v3089
        %v3122 = vunpack.c.l.b16 %v3090
        %v3123 = vunpack.c.l.b16 %v3091
        %v3124 = vunpack.c.l.b16 %v3092
        %v3125 = vunpack.c.l.b16 %v3093
        %v3126 = vunpack.c.l.b16 %v3094
        %v3127 = vunpack.c.l.b16 %v3095
        %v3128 = vunpack.c.l.b16 %v3096
        %v3129 = vunpack.c.l.b16 %v3097
        %v3130 = vunpack.c.l.b16 %v3098
        %v3131 = vpack.c.b16 %v3116, %v3115
        %v3132 = vpack.c.b16 %v3118, %v3117
        %v3133 = vpack.c.b16 %v3120, %v3119
        %v3134 = vpack.c.b16 %v3122, %v3121
        %v3135 = vpack.c.b16 %v3124, %v3123
        %v3136 = vpack.c.b16 %v3126, %v3125
        %v3137 = vpack.c.b16 %v3128, %v3127
        %v3138 = vpack.c.b16 %v3130, %v3129
        %3147 = vmatprep.subr.bf16.mxu0 0
        %3148 = vmatpush1.bf16.msra.mxu0 %v3131
        %3149 = vmatprep.subr.bf16.mxu0 0
        %3150 = vmatpush1.bf16.msra.mxu0 %v3132
        %3151 = vmatprep.subr.bf16.mxu0 0
        %3152 = vmatpush1.bf16.msra.mxu0 %v3133
        %3153 = vmatprep.subr.bf16.mxu0 0
        %3154 = vmatpush1.bf16.msra.mxu0 %v3134
        %3155 = vmatprep.subr.bf16.mxu0 0
        %3156 = vmatpush1.bf16.msra.mxu0 %v3135
        %3157 = vmatprep.subr.bf16.mxu0 0
        %3158 = vmatpush1.bf16.msra.mxu0 %v3136
        %3159 = vmatprep.subr.bf16.mxu0 0
        %3160 = vmatpush1.bf16.msra.mxu0 %v3137
        %3161 = vmatprep.subr.bf16.mxu0 0
        %3162 = vmatpush1.bf16.msra.mxu0 %v3138
        %3163 = vmatprep.subr.bf16.mxu0 0
        %3164 = vmatpush1.bf16.msra.mxu0 0
        %3165 = vmatprep.subr.bf16.mxu0 0
        %3166 = vmatpush1.bf16.msra.mxu0 0
        %3167 = vmatprep.subr.bf16.mxu0 0
        %3168 = vmatpush1.bf16.msra.mxu0 0
        %3169 = vmatprep.subr.bf16.mxu0 0
        %3170 = vmatpush1.bf16.msra.mxu0 0
        %3171 = vmatprep.subr.bf16.mxu0 0
        %3172 = vmatpush1.bf16.msra.mxu0 0
        %3173 = vmatprep.subr.bf16.mxu0 0
        %3174 = vmatpush1.bf16.msra.mxu0 0
        %3175 = vmatprep.subr.bf16.mxu0 0
        %3176 = vmatpush1.bf16.msra.mxu0 0
        %3177 = vmatprep.subr.bf16.mxu0 0
        %3178 = vmatpush1.bf16.msra.mxu0 0
        %3179 = vmatprep.mubr.bf16.mxu0 0
        %3180 = vmatmul.mubr.bf16.gmra.mrb[0].mxu0 %v982
        %v3181 = vpop.f32.mrb[0].mxu0
        %v3182 = vadd.f32 0.0, %v3181
        %v3183 = vpop.f32.mrb[0].mxu0
        %v3184 = vpop.f32.mrb[0].mxu0
        %v3185 = vpop.f32.mrb[0].mxu0
        %3186 = vdwg.mxu0
        %s3187 = scalar_lea.vmem [#allocation5], 1344
        %v3188 = vld [vmem:[%s3187] sm:$0xf]
        %v3189 = vld [vmem:[%s3187 + $0x4] sm:$0xf]
        %v3190 = vld [vmem:[%s3187 + $0x8] sm:$0xf]
        %v3191 = vld [vmem:[%s3187 + $0xc] sm:$0xf]
        %v3192 = vld [vmem:[%s3187 + $0x10] sm:$0xf]
        %v3193 = vld [vmem:[%s3187 + $0x14] sm:$0xf]
        %v3194 = vld [vmem:[%s3187 + $0x18] sm:$0xf]
        %v3195 = vld [vmem:[%s3187 + $0x1c] sm:$0xf]
        %v3196 = vld [vmem:[%s3187 + $0x20] sm:$0xf]
        %v3197 = vld [vmem:[%s3187 + $0x24] sm:$0xf]
        %v3198 = vld [vmem:[%s3187 + $0x28] sm:$0xf]
        %v3199 = vld [vmem:[%s3187 + $0x2c] sm:$0xf]
        %v3200 = vld [vmem:[%s3187 + $0x30] sm:$0xf]
        %v3201 = vld [vmem:[%s3187 + $0x34] sm:$0xf]
        %v3202 = vld [vmem:[%s3187 + $0x38] sm:$0xf]
        %v3203 = vld [vmem:[%s3187 + $0x3c] sm:$0xf]
        %v3220 = vunpack.c.l.b16 %v3188
        %v3221 = vunpack.c.l.b16 %v3189
        %v3222 = vunpack.c.l.b16 %v3190
        %v3223 = vunpack.c.l.b16 %v3191
        %v3224 = vunpack.c.l.b16 %v3192
        %v3225 = vunpack.c.l.b16 %v3193
        %v3226 = vunpack.c.l.b16 %v3194
        %v3227 = vunpack.c.l.b16 %v3195
        %v3228 = vunpack.c.l.b16 %v3196
        %v3229 = vunpack.c.l.b16 %v3197
        %v3230 = vunpack.c.l.b16 %v3198
        %v3231 = vunpack.c.l.b16 %v3199
        %v3232 = vunpack.c.l.b16 %v3200
        %v3233 = vunpack.c.l.b16 %v3201
        %v3234 = vunpack.c.l.b16 %v3202
        %v3235 = vunpack.c.l.b16 %v3203
        %v3236 = vpack.c.b16 %v3221, %v3220
        %v3237 = vpack.c.b16 %v3223, %v3222
        %v3238 = vpack.c.b16 %v3225, %v3224
        %v3239 = vpack.c.b16 %v3227, %v3226
        %v3240 = vpack.c.b16 %v3229, %v3228
        %v3241 = vpack.c.b16 %v3231, %v3230
        %v3242 = vpack.c.b16 %v3233, %v3232
        %v3243 = vpack.c.b16 %v3235, %v3234
        %3252 = vmatprep.subr.bf16.mxu0 0
        %3253 = vmatpush1.bf16.msra.mxu0 %v3236
        %3254 = vmatprep.subr.bf16.mxu0 0
        %3255 = vmatpush1.bf16.msra.mxu0 %v3237
        %3256 = vmatprep.subr.bf16.mxu0 0
        %3257 = vmatpush1.bf16.msra.mxu0 %v3238
        %3258 = vmatprep.subr.bf16.mxu0 0
        %3259 = vmatpush1.bf16.msra.mxu0 %v3239
        %3260 = vmatprep.subr.bf16.mxu0 0
        %3261 = vmatpush1.bf16.msra.mxu0 %v3240
        %3262 = vmatprep.subr.bf16.mxu0 0
        %3263 = vmatpush1.bf16.msra.mxu0 %v3241
        %3264 = vmatprep.subr.bf16.mxu0 0
        %3265 = vmatpush1.bf16.msra.mxu0 %v3242
        %3266 = vmatprep.subr.bf16.mxu0 0
        %3267 = vmatpush1.bf16.msra.mxu0 %v3243
        %3268 = vmatprep.subr.bf16.mxu0 0
        %3269 = vmatpush1.bf16.msra.mxu0 0
        %3270 = vmatprep.subr.bf16.mxu0 0
        %3271 = vmatpush1.bf16.msra.mxu0 0
        %3272 = vmatprep.subr.bf16.mxu0 0
        %3273 = vmatpush1.bf16.msra.mxu0 0
        %3274 = vmatprep.subr.bf16.mxu0 0
        %3275 = vmatpush1.bf16.msra.mxu0 0
        %3276 = vmatprep.subr.bf16.mxu0 0
        %3277 = vmatpush1.bf16.msra.mxu0 0
        %3278 = vmatprep.subr.bf16.mxu0 0
        %3279 = vmatpush1.bf16.msra.mxu0 0
        %3280 = vmatprep.subr.bf16.mxu0 0
        %3281 = vmatpush1.bf16.msra.mxu0 0
        %3282 = vmatprep.subr.bf16.mxu0 0
        %3283 = vmatpush1.bf16.msra.mxu0 0
        %3284 = vmatprep.mubr.bf16.mxu0 0
        %3285 = vmatmul.mubr.bf16.gmra.mrb[0].mxu0 %v982
        %v3286 = vpop.f32.mrb[0].mxu0
        %v3287 = vadd.f32 0.0, %v3286
        %v3288 = vpop.f32.mrb[0].mxu0
        %v3289 = vpop.f32.mrb[0].mxu0
        %v3290 = vpop.f32.mrb[0].mxu0
        %3291 = vdwg.mxu0
        %s3292 = scalar_lea.vmem [#allocation5], 1408
        %v3293 = vld [vmem:[%s3292] sm:$0xf]
        %v3294 = vld [vmem:[%s3292 + $0x4] sm:$0xf]
        %v3295 = vld [vmem:[%s3292 + $0x8] sm:$0xf]
        %v3296 = vld [vmem:[%s3292 + $0xc] sm:$0xf]
        %v3297 = vld [vmem:[%s3292 + $0x10] sm:$0xf]
        %v3298 = vld [vmem:[%s3292 + $0x14] sm:$0xf]
        %v3299 = vld [vmem:[%s3292 + $0x18] sm:$0xf]
        %v3300 = vld [vmem:[%s3292 + $0x1c] sm:$0xf]
        %v3301 = vld [vmem:[%s3292 + $0x20] sm:$0xf]
        %v3302 = vld [vmem:[%s3292 + $0x24] sm:$0xf]
        %v3303 = vld [vmem:[%s3292 + $0x28] sm:$0xf]
        %v3304 = vld [vmem:[%s3292 + $0x2c] sm:$0xf]
        %v3305 = vld [vmem:[%s3292 + $0x30] sm:$0xf]
        %v3306 = vld [vmem:[%s3292 + $0x34] sm:$0xf]
        %v3307 = vld [vmem:[%s3292 + $0x38] sm:$0xf]
        %v3308 = vld [vmem:[%s3292 + $0x3c] sm:$0xf]
        %v3325 = vunpack.c.l.b16 %v3293
        %v3326 = vunpack.c.l.b16 %v3294
        %v3327 = vunpack.c.l.b16 %v3295
        %v3328 = vunpack.c.l.b16 %v3296
        %v3329 = vunpack.c.l.b16 %v3297
        %v3330 = vunpack.c.l.b16 %v3298
        %v3331 = vunpack.c.l.b16 %v3299
        %v3332 = vunpack.c.l.b16 %v3300
        %v3333 = vunpack.c.l.b16 %v3301
        %v3334 = vunpack.c.l.b16 %v3302
        %v3335 = vunpack.c.l.b16 %v3303
        %v3336 = vunpack.c.l.b16 %v3304
        %v3337 = vunpack.c.l.b16 %v3305
        %v3338 = vunpack.c.l.b16 %v3306
        %v3339 = vunpack.c.l.b16 %v3307
        %v3340 = vunpack.c.l.b16 %v3308
        %v3341 = vpack.c.b16 %v3326, %v3325
        %v3342 = vpack.c.b16 %v3328, %v3327
        %v3343 = vpack.c.b16 %v3330, %v3329
        %v3344 = vpack.c.b16 %v3332, %v3331
        %v3345 = vpack.c.b16 %v3334, %v3333
        %v3346 = vpack.c.b16 %v3336, %v3335
        %v3347 = vpack.c.b16 %v3338, %v3337
        %v3348 = vpack.c.b16 %v3340, %v3339
        %3357 = vmatprep.subr.bf16.mxu0 0
        %3358 = vmatpush1.bf16.msra.mxu0 %v3341
        %3359 = vmatprep.subr.bf16.mxu0 0
        %3360 = vmatpush1.bf16.msra.mxu0 %v3342
        %3361 = vmatprep.subr.bf16.mxu0 0
        %3362 = vmatpush1.bf16.msra.mxu0 %v3343
        %3363 = vmatprep.subr.bf16.mxu0 0
        %3364 = vmatpush1.bf16.msra.mxu0 %v3344
        %3365 = vmatprep.subr.bf16.mxu0 0
        %3366 = vmatpush1.bf16.msra.mxu0 %v3345
        %3367 = vmatprep.subr.bf16.mxu0 0
        %3368 = vmatpush1.bf16.msra.mxu0 %v3346
        %3369 = vmatprep.subr.bf16.mxu0 0
        %3370 = vmatpush1.bf16.msra.mxu0 %v3347
        %3371 = vmatprep.subr.bf16.mxu0 0
        %3372 = vmatpush1.bf16.msra.mxu0 %v3348
        %3373 = vmatprep.subr.bf16.mxu0 0
        %3374 = vmatpush1.bf16.msra.mxu0 0
        %3375 = vmatprep.subr.bf16.mxu0 0
        %3376 = vmatpush1.bf16.msra.mxu0 0
        %3377 = vmatprep.subr.bf16.mxu0 0
        %3378 = vmatpush1.bf16.msra.mxu0 0
        %3379 = vmatprep.subr.bf16.mxu0 0
        %3380 = vmatpush1.bf16.msra.mxu0 0
        %3381 = vmatprep.subr.bf16.mxu0 0
        %3382 = vmatpush1.bf16.msra.mxu0 0
        %3383 = vmatprep.subr.bf16.mxu0 0
        %3384 = vmatpush1.bf16.msra.mxu0 0
        %3385 = vmatprep.subr.bf16.mxu0 0
        %3386 = vmatpush1.bf16.msra.mxu0 0
        %3387 = vmatprep.subr.bf16.mxu0 0
        %3388 = vmatpush1.bf16.msra.mxu0 0
        %3389 = vmatprep.mubr.bf16.mxu0 0
        %3390 = vmatmul.mubr.bf16.gmra.mrb[0].mxu0 %v982
        %v3391 = vpop.f32.mrb[0].mxu0
        %v3392 = vadd.f32 0.0, %v3391
        %v3393 = vpop.f32.mrb[0].mxu0
        %v3394 = vpop.f32.mrb[0].mxu0
        %v3395 = vpop.f32.mrb[0].mxu0
        %3396 = vdwg.mxu0
        %s3397 = scalar_lea.vmem [#allocation5], 1472
        %v3398 = vld [vmem:[%s3397] sm:$0xf]
        %v3399 = vld [vmem:[%s3397 + $0x4] sm:$0xf]
        %v3400 = vld [vmem:[%s3397 + $0x8] sm:$0xf]
        %v3401 = vld [vmem:[%s3397 + $0xc] sm:$0xf]
        %v3402 = vld [vmem:[%s3397 + $0x10] sm:$0xf]
        %v3403 = vld [vmem:[%s3397 + $0x14] sm:$0xf]
        %v3404 = vld [vmem:[%s3397 + $0x18] sm:$0xf]
        %v3405 = vld [vmem:[%s3397 + $0x1c] sm:$0xf]
        %v3406 = vld [vmem:[%s3397 + $0x20] sm:$0xf]
        %v3407 = vld [vmem:[%s3397 + $0x24] sm:$0xf]
        %v3408 = vld [vmem:[%s3397 + $0x28] sm:$0xf]
        %v3409 = vld [vmem:[%s3397 + $0x2c] sm:$0xf]
        %v3410 = vld [vmem:[%s3397 + $0x30] sm:$0xf]
        %v3411 = vld [vmem:[%s3397 + $0x34] sm:$0xf]
        %v3412 = vld [vmem:[%s3397 + $0x38] sm:$0xf]
        %v3413 = vld [vmem:[%s3397 + $0x3c] sm:$0xf]
        %v3430 = vunpack.c.l.b16 %v3398
        %v3431 = vunpack.c.l.b16 %v3399
        %v3432 = vunpack.c.l.b16 %v3400
        %v3433 = vunpack.c.l.b16 %v3401
        %v3434 = vunpack.c.l.b16 %v3402
        %v3435 = vunpack.c.l.b16 %v3403
        %v3436 = vunpack.c.l.b16 %v3404
        %v3437 = vunpack.c.l.b16 %v3405
        %v3438 = vunpack.c.l.b16 %v3406
        %v3439 = vunpack.c.l.b16 %v3407
        %v3440 = vunpack.c.l.b16 %v3408
        %v3441 = vunpack.c.l.b16 %v3409
        %v3442 = vunpack.c.l.b16 %v3410
        %v3443 = vunpack.c.l.b16 %v3411
        %v3444 = vunpack.c.l.b16 %v3412
        %v3445 = vunpack.c.l.b16 %v3413
        %v3446 = vpack.c.b16 %v3431, %v3430
        %v3447 = vpack.c.b16 %v3433, %v3432
        %v3448 = vpack.c.b16 %v3435, %v3434
        %v3449 = vpack.c.b16 %v3437, %v3436
        %v3450 = vpack.c.b16 %v3439, %v3438
        %v3451 = vpack.c.b16 %v3441, %v3440
        %v3452 = vpack.c.b16 %v3443, %v3442
        %v3453 = vpack.c.b16 %v3445, %v3444
        %3462 = vmatprep.subr.bf16.mxu0 0
        %3463 = vmatpush1.bf16.msra.mxu0 %v3446
        %3464 = vmatprep.subr.bf16.mxu0 0
        %3465 = vmatpush1.bf16.msra.mxu0 %v3447
        %3466 = vmatprep.subr.bf16.mxu0 0
        %3467 = vmatpush1.bf16.msra.mxu0 %v3448
        %3468 = vmatprep.subr.bf16.mxu0 0
        %3469 = vmatpush1.bf16.msra.mxu0 %v3449
        %3470 = vmatprep.subr.bf16.mxu0 0
        %3471 = vmatpush1.bf16.msra.mxu0 %v3450
        %3472 = vmatprep.subr.bf16.mxu0 0
        %3473 = vmatpush1.bf16.msra.mxu0 %v3451
        %3474 = vmatprep.subr.bf16.mxu0 0
        %3475 = vmatpush1.bf16.msra.mxu0 %v3452
        %3476 = vmatprep.subr.bf16.mxu0 0
        %3477 = vmatpush1.bf16.msra.mxu0 %v3453
        %3478 = vmatprep.subr.bf16.mxu0 0
        %3479 = vmatpush1.bf16.msra.mxu0 0
        %3480 = vmatprep.subr.bf16.mxu0 0
        %3481 = vmatpush1.bf16.msra.mxu0 0
        %3482 = vmatprep.subr.bf16.mxu0 0
        %3483 = vmatpush1.bf16.msra.mxu0 0
        %3484 = vmatprep.subr.bf16.mxu0 0
        %3485 = vmatpush1.bf16.msra.mxu0 0
        %3486 = vmatprep.subr.bf16.mxu0 0
        %3487 = vmatpush1.bf16.msra.mxu0 0
        %3488 = vmatprep.subr.bf16.mxu0 0
        %3489 = vmatpush1.bf16.msra.mxu0 0
        %3490 = vmatprep.subr.bf16.mxu0 0
        %3491 = vmatpush1.bf16.msra.mxu0 0
        %3492 = vmatprep.subr.bf16.mxu0 0
        %3493 = vmatpush1.bf16.msra.mxu0 0
        %3494 = vmatprep.mubr.bf16.mxu0 0
        %3495 = vmatmul.mubr.bf16.gmra.mrb[0].mxu0 %v982
        %v3496 = vpop.f32.mrb[0].mxu0
        %v3497 = vadd.f32 0.0, %v3496
        %v3498 = vpop.f32.mrb[0].mxu0
        %v3499 = vpop.f32.mrb[0].mxu0
        %v3500 = vpop.f32.mrb[0].mxu0
        %3501 = vdwg.mxu0
        %s3502 = scalar_lea.vmem [#allocation5], 1536
        %v3503 = vld [vmem:[%s3502] sm:$0xf]
        %v3504 = vld [vmem:[%s3502 + $0x4] sm:$0xf]
        %v3505 = vld [vmem:[%s3502 + $0x8] sm:$0xf]
        %v3506 = vld [vmem:[%s3502 + $0xc] sm:$0xf]
        %v3507 = vld [vmem:[%s3502 + $0x10] sm:$0xf]
        %v3508 = vld [vmem:[%s3502 + $0x14] sm:$0xf]
        %v3509 = vld [vmem:[%s3502 + $0x18] sm:$0xf]
        %v3510 = vld [vmem:[%s3502 + $0x1c] sm:$0xf]
        %v3511 = vld [vmem:[%s3502 + $0x20] sm:$0xf]
        %v3512 = vld [vmem:[%s3502 + $0x24] sm:$0xf]
        %v3513 = vld [vmem:[%s3502 + $0x28] sm:$0xf]
        %v3514 = vld [vmem:[%s3502 + $0x2c] sm:$0xf]
        %v3515 = vld [vmem:[%s3502 + $0x30] sm:$0xf]
        %v3516 = vld [vmem:[%s3502 + $0x34] sm:$0xf]
        %v3517 = vld [vmem:[%s3502 + $0x38] sm:$0xf]
        %v3518 = vld [vmem:[%s3502 + $0x3c] sm:$0xf]
        %v3535 = vunpack.c.l.b16 %v3503
        %v3536 = vunpack.c.l.b16 %v3504
        %v3537 = vunpack.c.l.b16 %v3505
        %v3538 = vunpack.c.l.b16 %v3506
        %v3539 = vunpack.c.l.b16 %v3507
        %v3540 = vunpack.c.l.b16 %v3508
        %v3541 = vunpack.c.l.b16 %v3509
        %v3542 = vunpack.c.l.b16 %v3510
        %v3543 = vunpack.c.l.b16 %v3511
        %v3544 = vunpack.c.l.b16 %v3512
        %v3545 = vunpack.c.l.b16 %v3513
        %v3546 = vunpack.c.l.b16 %v3514
        %v3547 = vunpack.c.l.b16 %v3515
        %v3548 = vunpack.c.l.b16 %v3516
        %v3549 = vunpack.c.l.b16 %v3517
        %v3550 = vunpack.c.l.b16 %v3518
        %v3551 = vpack.c.b16 %v3536, %v3535
        %v3552 = vpack.c.b16 %v3538, %v3537
        %v3553 = vpack.c.b16 %v3540, %v3539
        %v3554 = vpack.c.b16 %v3542, %v3541
        %v3555 = vpack.c.b16 %v3544, %v3543
        %v3556 = vpack.c.b16 %v3546, %v3545
        %v3557 = vpack.c.b16 %v3548, %v3547
        %v3558 = vpack.c.b16 %v3550, %v3549
        %3567 = vmatprep.subr.bf16.mxu0 0
        %3568 = vmatpush1.bf16.msra.mxu0 %v3551
        %3569 = vmatprep.subr.bf16.mxu0 0
        %3570 = vmatpush1.bf16.msra.mxu0 %v3552
        %3571 = vmatprep.subr.bf16.mxu0 0
        %3572 = vmatpush1.bf16.msra.mxu0 %v3553
        %3573 = vmatprep.subr.bf16.mxu0 0
        %3574 = vmatpush1.bf16.msra.mxu0 %v3554
        %3575 = vmatprep.subr.bf16.mxu0 0
        %3576 = vmatpush1.bf16.msra.mxu0 %v3555
        %3577 = vmatprep.subr.bf16.mxu0 0
        %3578 = vmatpush1.bf16.msra.mxu0 %v3556
        %3579 = vmatprep.subr.bf16.mxu0 0
        %3580 = vmatpush1.bf16.msra.mxu0 %v3557
        %3581 = vmatprep.subr.bf16.mxu0 0
        %3582 = vmatpush1.bf16.msra.mxu0 %v3558
        %3583 = vmatprep.subr.bf16.mxu0 0
        %3584 = vmatpush1.bf16.msra.mxu0 0
        %3585 = vmatprep.subr.bf16.mxu0 0
        %3586 = vmatpush1.bf16.msra.mxu0 0
        %3587 = vmatprep.subr.bf16.mxu0 0
        %3588 = vmatpush1.bf16.msra.mxu0 0
        %3589 = vmatprep.subr.bf16.mxu0 0
        %3590 = vmatpush1.bf16.msra.mxu0 0
        %3591 = vmatprep.subr.bf16.mxu0 0
        %3592 = vmatpush1.bf16.msra.mxu0 0
        %3593 = vmatprep.subr.bf16.mxu0 0
        %3594 = vmatpush1.bf16.msra.mxu0 0
        %3595 = vmatprep.subr.bf16.mxu0 0
        %3596 = vmatpush1.bf16.msra.mxu0 0
        %3597 = vmatprep.subr.bf16.mxu0 0
        %3598 = vmatpush1.bf16.msra.mxu0 0
        %3599 = vmatprep.mubr.bf16.mxu0 0
        %3600 = vmatmul.mubr.bf16.gmra.mrb[0].mxu0 %v982
        %v3601 = vpop.f32.mrb[0].mxu0
        %v3602 = vadd.f32 0.0, %v3601
        %v3603 = vpop.f32.mrb[0].mxu0
        %v3604 = vpop.f32.mrb[0].mxu0
        %v3605 = vpop.f32.mrb[0].mxu0
        %3606 = vdwg.mxu0
        %v3608 = vrot.slane %v1187, 7
        %v3611 = vrot.slane %v1292, 6
        %v3614 = vrot.slane %v1397, 5
        %v3617 = vrot.slane %v1502, 4
        %v3620 = vrot.slane %v1607, 3
        %v3623 = vrot.slane %v1712, 2
        %v3626 = vrot.slane %v1817, 1
        %v3629 = vrot.slane %v2027, 7
        %v3632 = vrot.slane %v2132, 6
        %v3635 = vrot.slane %v2237, 5
        %v3638 = vrot.slane %v2342, 4
        %v3641 = vrot.slane %v2447, 3
        %v3644 = vrot.slane %v2552, 2
        %v3647 = vrot.slane %v2657, 1
        %v3649 = vsel %vm967, %v1082, %v3608
        %vm3650 = vcmask 1041408
        %v3651 = vsel %vm3650, %v3649, %v3611
        %vm3652 = vcmask 1042432
        %v3653 = vsel %vm3652, %v3651, %v3614
        %v3654 = vsel %vm667, %v3653, %v3617
        %v3655 = vsel %vm668, %v3654, %v3620
        %vm3656 = vcmask 1045504
        %v3657 = vsel %vm3656, %v3655, %v3623
        %vm3658 = vcmask 1046528
        %v3659 = vsel %vm3658, %v3657, %v3626
        %v3660 = vsel %vm967, %v1922, %v3629
        %v3661 = vsel %vm3650, %v3660, %v3632
        %v3662 = vsel %vm3652, %v3661, %v3635
        %v3663 = vsel %vm667, %v3662, %v3638
        %v3664 = vsel %vm668, %v3663, %v3641
        %v3665 = vsel %vm3656, %v3664, %v3644
        %v3666 = vsel %vm3658, %v3665, %v3647
        %v3668 = vrot.slane %v2867, 7
        %v3671 = vrot.slane %v2972, 6
        %v3674 = vrot.slane %v3077, 5
        %v3677 = vrot.slane %v3182, 4
        %v3680 = vrot.slane %v3287, 3
        %v3683 = vrot.slane %v3392, 2
        %v3686 = vrot.slane %v3497, 1
        %v3688 = vsel %vm967, %v2762, %v3668
        %v3689 = vsel %vm3650, %v3688, %v3671
        %v3690 = vsel %vm3652, %v3689, %v3674
        %v3691 = vsel %vm667, %v3690, %v3677
        %v3692 = vsel %vm668, %v3691, %v3680
        %v3693 = vsel %vm3656, %v3692, %v3683
        %v3694 = vsel %vm3658, %v3693, %v3686
        %v3695 = vsel %vm573, %v3659, -1.0
        %v3696 = vsel %vm574, %v3666, -1.0
        %v3697 = vsel %vm575, %v3694, -1.0
        %v3698 = vsel %vm576, %v3602, -1.0
        %v3699 = vpack.c.bf16 %v3696, %v3695
        %v3700 = vpack.c.bf16 %v3698, %v3697
        %v3701 = vld [vmem:[%s8] sm:$0xf]
        %v3702 = vld [vmem:[%s8 + $0x4] sm:$0xf]
        %v3703 = vld [vmem:[%s8 + $0x8] sm:$0xf]
        %v3704 = vld [vmem:[%s8 + $0xc] sm:$0xf]
        %v3705 = vld [vmem:[%s8 + $0x10] sm:$0xf]
        %v3706 = vld [vmem:[%s8 + $0x14] sm:$0xf]
        %v3707 = vld [vmem:[%s8 + $0x18] sm:$0xf]
        %v3708 = vld [vmem:[%s8 + $0x1c] sm:$0xf]
        %v3709 = vld [vmem:[%s8 + $0x20] sm:$0xf]
        %v3710 = vld [vmem:[%s8 + $0x24] sm:$0xf]
        %v3711 = vld [vmem:[%s8 + $0x28] sm:$0xf]
        %v3712 = vld [vmem:[%s8 + $0x2c] sm:$0xf]
        %v3713 = vld [vmem:[%s8 + $0x30] sm:$0xf]
        %v3714 = vld [vmem:[%s8 + $0x34] sm:$0xf]
        %v3715 = vld [vmem:[%s8 + $0x38] sm:$0xf]
        %v3716 = vld [vmem:[%s8 + $0x3c] sm:$0xf]
        %v3733 = vunpack.c.l.b16 %v3701
        %v3734 = vunpack.c.l.b16 %v3702
        %v3735 = vunpack.c.l.b16 %v3703
        %v3736 = vunpack.c.l.b16 %v3704
        %v3737 = vunpack.c.l.b16 %v3705
        %v3738 = vunpack.c.l.b16 %v3706
        %v3739 = vunpack.c.l.b16 %v3707
        %v3740 = vunpack.c.l.b16 %v3708
        %v3741 = vunpack.c.l.b16 %v3709
        %v3742 = vunpack.c.l.b16 %v3710
        %v3743 = vunpack.c.l.b16 %v3711
        %v3744 = vunpack.c.l.b16 %v3712
        %v3745 = vunpack.c.l.b16 %v3713
        %v3746 = vunpack.c.l.b16 %v3714
        %v3747 = vunpack.c.l.b16 %v3715
        %v3748 = vunpack.c.l.b16 %v3716
        %v3749 = vpack.c.b16 %v3734, %v3733
        %v3750 = vpack.c.b16 %v3736, %v3735
        %v3751 = vpack.c.b16 %v3738, %v3737
        %v3752 = vpack.c.b16 %v3740, %v3739
        %v3753 = vpack.c.b16 %v3742, %v3741
        %v3754 = vpack.c.b16 %v3744, %v3743
        %v3755 = vpack.c.b16 %v3746, %v3745
        %v3756 = vpack.c.b16 %v3748, %v3747
        %vm3757 = vcmask 203776
        %v3759 = vsel %vm3757, %v3749, 0
        %v3762 = vsel %vm3757, %v3750, 0
        %v3765 = vsel %vm3757, %v3751, 0
        %v3768 = vsel %vm3757, %v3752, 0
        %v3771 = vsel %vm3757, %v3753, 0
        %v3774 = vsel %vm3757, %v3754, 0
        %v3777 = vsel %vm3757, %v3755, 0
        %v3780 = vsel %vm3757, %v3756, 0
        %v3783 = vand.u32 %v3700, %v670
        %3785 = vmatprep.subr.bf16.mxu0 0
        %3786 = vmatpush1.bf16.msra.mxu0 %v3699
        %3787 = vmatprep.subr.bf16.mxu0 0
        %3788 = vmatpush1.bf16.msra.mxu0 %v3783
        %3789 = vmatprep.subr.bf16.mxu0 0
        %3790 = vmatpush1.bf16.msra.mxu0 0
        %3791 = vmatprep.subr.bf16.mxu0 0
        %3792 = vmatpush1.bf16.msra.mxu0 0
        %3793 = vmatprep.subr.bf16.mxu0 0
        %3794 = vmatpush1.bf16.msra.mxu0 0
        %3795 = vmatprep.subr.bf16.mxu0 0
        %3796 = vmatpush1.bf16.msra.mxu0 0
        %3797 = vmatprep.subr.bf16.mxu0 0
        %3798 = vmatpush1.bf16.msra.mxu0 0
        %3799 = vmatprep.subr.bf16.mxu0 0
        %3800 = vmatpush1.bf16.msra.mxu0 0
        %3801 = vmatprep.subr.bf16.mxu0 0
        %3802 = vmatpush1.bf16.msra.mxu0 0
        %3803 = vmatprep.subr.bf16.mxu0 0
        %3804 = vmatpush1.bf16.msra.mxu0 0
        %3805 = vmatprep.subr.bf16.mxu0 0
        %3806 = vmatpush1.bf16.msra.mxu0 0
        %3807 = vmatprep.subr.bf16.mxu0 0
        %3808 = vmatpush1.bf16.msra.mxu0 0
        %3809 = vmatprep.subr.bf16.mxu0 0
        %3810 = vmatpush1.bf16.msra.mxu0 0
        %3811 = vmatprep.subr.bf16.mxu0 0
        %3812 = vmatpush1.bf16.msra.mxu0 0
        %3813 = vmatprep.subr.bf16.mxu0 0
        %3814 = vmatpush1.bf16.msra.mxu0 0
        %3815 = vmatprep.subr.bf16.mxu0 0
        %3816 = vmatpush1.bf16.msra.mxu0 0
        %3817 = vmatprep.mubr.bf16.mxu0 0
        %3818 = vmatmul.mubr.bf16.gmra.mrb[0].mxu0 %v3759
        %v3819 = vpop.f32.mrb[0].mxu0
        %v3820 = vadd.f32 0.0, %v3819
        %v3821 = vpop.f32.mrb[0].mxu0
        %v3822 = vpop.f32.mrb[0].mxu0
        %v3823 = vadd.f32 0.0, %v3822
        %v3824 = vpop.f32.mrb[0].mxu0
        %3825 = vmatprep.mubr.bf16.mxu0 0
        %3826 = vmatmul.mubr.bf16.gmra.mrb[0].mxu0 %v3762
        %v3827 = vpop.f32.mrb[0].mxu0
        %v3828 = vadd.f32 0.0, %v3827
        %v3829 = vpop.f32.mrb[0].mxu0
        %v3830 = vpop.f32.mrb[0].mxu0
        %v3831 = vadd.f32 0.0, %v3830
        %v3832 = vpop.f32.mrb[0].mxu0
        %3833 = vmatprep.mubr.bf16.mxu0 0
        %3834 = vmatmul.mubr.bf16.gmra.mrb[0].mxu0 %v3765
        %v3835 = vpop.f32.mrb[0].mxu0
        %v3836 = vadd.f32 0.0, %v3835
        %v3837 = vpop.f32.mrb[0].mxu0
        %v3838 = vpop.f32.mrb[0].mxu0
        %v3839 = vadd.f32 0.0, %v3838
        %v3840 = vpop.f32.mrb[0].mxu0
        %3841 = vmatprep.mubr.bf16.mxu0 0
        %3842 = vmatmul.mubr.bf16.gmra.mrb[0].mxu0 %v3768
        %v3843 = vpop.f32.mrb[0].mxu0
        %v3844 = vadd.f32 0.0, %v3843
        %v3845 = vpop.f32.mrb[0].mxu0
        %v3846 = vpop.f32.mrb[0].mxu0
        %v3847 = vadd.f32 0.0, %v3846
        %v3848 = vpop.f32.mrb[0].mxu0
        %3849 = vmatprep.mubr.bf16.mxu0 0
        %3850 = vmatmul.mubr.bf16.gmra.mrb[0].mxu0 %v3771
        %v3851 = vpop.f32.mrb[0].mxu0
        %v3852 = vadd.f32 0.0, %v3851
        %v3853 = vpop.f32.mrb[0].mxu0
        %v3854 = vpop.f32.mrb[0].mxu0
        %v3855 = vadd.f32 0.0, %v3854
        %v3856 = vpop.f32.mrb[0].mxu0
        %3857 = vmatprep.mubr.bf16.mxu0 0
        %3858 = vmatmul.mubr.bf16.gmra.mrb[0].mxu0 %v3774
        %v3859 = vpop.f32.mrb[0].mxu0
        %v3860 = vadd.f32 0.0, %v3859
        %v3861 = vpop.f32.mrb[0].mxu0
        %v3862 = vpop.f32.mrb[0].mxu0
        %v3863 = vadd.f32 0.0, %v3862
        %v3864 = vpop.f32.mrb[0].mxu0
        %3865 = vmatprep.mubr.bf16.mxu0 0
        %3866 = vmatmul.mubr.bf16.gmra.mrb[0].mxu0 %v3777
        %v3867 = vpop.f32.mrb[0].mxu0
        %v3868 = vadd.f32 0.0, %v3867
        %v3869 = vpop.f32.mrb[0].mxu0
        %v3870 = vpop.f32.mrb[0].mxu0
        %v3871 = vadd.f32 0.0, %v3870
        %v3872 = vpop.f32.mrb[0].mxu0
        %3873 = vmatprep.mubr.bf16.mxu0 0
        %3874 = vmatmul.mubr.bf16.gmra.mrb[0].mxu0 %v3780
        %v3875 = vpop.f32.mrb[0].mxu0
        %v3876 = vadd.f32 0.0, %v3875
        %v3877 = vpop.f32.mrb[0].mxu0
        %v3878 = vpop.f32.mrb[0].mxu0
        %v3879 = vadd.f32 0.0, %v3878
        %v3880 = vpop.f32.mrb[0].mxu0
        %3881 = vdwg.mxu0
        %v3882 = vmax.f32 %v3820, 0.0
        %v3883 = vmax.f32 %v3823, 0.0
        %v3884 = vmax.f32 %v3828, 0.0
        %v3885 = vmax.f32 %v3831, 0.0
        %v3886 = vmax.f32 %v3836, 0.0
        %v3887 = vmax.f32 %v3839, 0.0
        %v3888 = vmax.f32 %v3844, 0.0
        %v3889 = vmax.f32 %v3847, 0.0
        %v3890 = vmax.f32 %v3852, 0.0
        %v3891 = vmax.f32 %v3855, 0.0
        %v3892 = vmax.f32 %v3860, 0.0
        %v3893 = vmax.f32 %v3863, 0.0
        %v3894 = vmax.f32 %v3868, 0.0
        %v3895 = vmax.f32 %v3871, 0.0
        %v3896 = vmax.f32 %v3876, 0.0
        %v3897 = vmax.f32 %v3879, 0.0
        %v3898 = vpack.c.bf16 %v3883, %v3882
        %v3899 = vpack.c.bf16 %v3885, %v3884
        %v3900 = vpack.c.bf16 %v3887, %v3886
        %v3901 = vpack.c.bf16 %v3889, %v3888
        %v3902 = vpack.c.bf16 %v3891, %v3890
        %v3903 = vpack.c.bf16 %v3893, %v3892
        %v3904 = vpack.c.bf16 %v3895, %v3894
        %v3905 = vpack.c.bf16 %v3897, %v3896
        %v3906 = vld [vmem:[#allocation11] sm:$0xf]
        %v3907 = vld [vmem:[#allocation11 + $0x4] sm:$0xf]
        %v3908 = vld [vmem:[#allocation11 + $0x8] sm:$0xf]
        %v3909 = vld [vmem:[#allocation11 + $0xc] sm:$0xf]
        %v3910 = vld [vmem:[#allocation11 + $0x10] sm:$0xf]
        %v3911 = vld [vmem:[#allocation11 + $0x14] sm:$0xf]
        %v3912 = vld [vmem:[#allocation11 + $0x18] sm:$0xf]
        %v3913 = vld [vmem:[#allocation11 + $0x1c] sm:$0xf]
        %v3922 = vunpack.c.l.b16 %v3906
        %v3923 = vunpack.c.l.b16 %v3907
        %v3924 = vunpack.c.l.b16 %v3908
        %v3925 = vunpack.c.l.b16 %v3909
        %v3926 = vunpack.c.l.b16 %v3910
        %v3927 = vunpack.c.l.b16 %v3911
        %v3928 = vunpack.c.l.b16 %v3912
        %v3929 = vunpack.c.l.b16 %v3913
        %v3930 = vpack.c.b16 %v3923, %v3922
        %v3931 = vpack.c.b16 %v3925, %v3924
        %v3932 = vpack.c.b16 %v3927, %v3926
        %v3933 = vpack.c.b16 %v3929, %v3928
        %3938 = vmatprep.subr.bf16.mxu0 0
        %3939 = vmatpush1.bf16.msra.mxu0 %v3898
        %3940 = vmatprep.subr.bf16.mxu0 0
        %3941 = vmatpush1.bf16.msra.mxu0 %v3899
        %3942 = vmatprep.subr.bf16.mxu0 0
        %3943 = vmatpush1.bf16.msra.mxu0 %v3900
        %3944 = vmatprep.subr.bf16.mxu0 0
        %3945 = vmatpush1.bf16.msra.mxu0 %v3901
        %3946 = vmatprep.subr.bf16.mxu0 0
        %3947 = vmatpush1.bf16.msra.mxu0 %v3902
        %3948 = vmatprep.subr.bf16.mxu0 0
        %3949 = vmatpush1.bf16.msra.mxu0 %v3903
        %3950 = vmatprep.subr.bf16.mxu0 0
        %3951 = vmatpush1.bf16.msra.mxu0 %v3904
        %3952 = vmatprep.subr.bf16.mxu0 0
        %3953 = vmatpush1.bf16.msra.mxu0 %v3905
        %3954 = vmatprep.subr.bf16.mxu0 0
        %3955 = vmatpush1.bf16.msra.mxu0 0
        %3956 = vmatprep.subr.bf16.mxu0 0
        %3957 = vmatpush1.bf16.msra.mxu0 0
        %3958 = vmatprep.subr.bf16.mxu0 0
        %3959 = vmatpush1.bf16.msra.mxu0 0
        %3960 = vmatprep.subr.bf16.mxu0 0
        %3961 = vmatpush1.bf16.msra.mxu0 0
        %3962 = vmatprep.subr.bf16.mxu0 0
        %3963 = vmatpush1.bf16.msra.mxu0 0
        %3964 = vmatprep.subr.bf16.mxu0 0
        %3965 = vmatpush1.bf16.msra.mxu0 0
        %3966 = vmatprep.subr.bf16.mxu0 0
        %3967 = vmatpush1.bf16.msra.mxu0 0
        %3968 = vmatprep.subr.bf16.mxu0 0
        %3969 = vmatpush1.bf16.msra.mxu0 0
        %3970 = vmatprep.mubr.bf16.mxu0 0
        %3971 = vmatmul.mubr.bf16.gmra.mrb[0].mxu0 %v3930
        %v3972 = vpop.f32.mrb[0].mxu0
        %v3973 = vadd.f32 0.0, %v3972
        %v3974 = vpop.f32.mrb[0].mxu0
        %v3975 = vpop.f32.mrb[0].mxu0
        %v3976 = vadd.f32 0.0, %v3975
        %v3977 = vpop.f32.mrb[0].mxu0
        %3978 = vmatprep.mubr.bf16.mxu0 0
        %3979 = vmatmul.mubr.bf16.gmra.mrb[0].mxu0 %v3931
        %v3980 = vpop.f32.mrb[0].mxu0
        %v3981 = vadd.f32 0.0, %v3980
        %v3982 = vpop.f32.mrb[0].mxu0
        %v3983 = vpop.f32.mrb[0].mxu0
        %v3984 = vadd.f32 0.0, %v3983
        %v3985 = vpop.f32.mrb[0].mxu0
        %3986 = vmatprep.mubr.bf16.mxu0 0
        %3987 = vmatmul.mubr.bf16.gmra.mrb[0].mxu0 %v3932
        %v3988 = vpop.f32.mrb[0].mxu0
        %v3989 = vadd.f32 0.0, %v3988
        %v3990 = vpop.f32.mrb[0].mxu0
        %v3991 = vpop.f32.mrb[0].mxu0
        %v3992 = vadd.f32 0.0, %v3991
        %v3993 = vpop.f32.mrb[0].mxu0
        %3994 = vmatprep.mubr.bf16.mxu0 0
        %3995 = vmatmul.mubr.bf16.gmra.mrb[0].mxu0 %v3933
        %v3996 = vpop.f32.mrb[0].mxu0
        %v3997 = vadd.f32 0.0, %v3996
        %v3998 = vpop.f32.mrb[0].mxu0
        %v3999 = vpop.f32.mrb[0].mxu0
        %v4000 = vadd.f32 0.0, %v3999
        %v4001 = vpop.f32.mrb[0].mxu0
        %4002 = vdwg.mxu0
        %v4003 = vmax.f32 %v3973, 0.0
        %v4004 = vmax.f32 %v3976, 0.0
        %v4005 = vmax.f32 %v3981, 0.0
        %v4006 = vmax.f32 %v3984, 0.0
        %v4007 = vmax.f32 %v3989, 0.0
        %v4008 = vmax.f32 %v3992, 0.0
        %v4009 = vmax.f32 %v3997, 0.0
        %v4010 = vmax.f32 %v4000, 0.0
        %v4011 = vpack.c.bf16 %v4004, %v4003
        %v4012 = vpack.c.bf16 %v4006, %v4005
        %v4013 = vpack.c.bf16 %v4008, %v4007
        %v4014 = vpack.c.bf16 %v4010, %v4009
        %v4015 = vld [vmem:[#allocation13] sm:$0xf]
        %v4016 = vld [vmem:[#allocation13 + $0x4] sm:$0xf]
        %v4017 = vld [vmem:[#allocation13 + $0x8] sm:$0xf]
        %v4018 = vld [vmem:[#allocation13 + $0xc] sm:$0xf]
        %v4023 = vunpack.c.l.b16 %v4015
        %v4024 = vunpack.c.l.b16 %v4016
        %v4025 = vunpack.c.l.b16 %v4017
        %v4026 = vunpack.c.l.b16 %v4018
        %v4027 = vpack.c.b16 %v4024, %v4023
        %v4028 = vpack.c.b16 %v4026, %v4025
        %vm4029 = vcmask 523264
        %v4031 = vsel %vm4029, %v4027, 0
        %v4034 = vsel %vm4029, %v4028, 0
        %4036 = vmatprep.subr.bf16.mxu0 0
        %4037 = vmatpush1.bf16.msra.mxu0 %v4011
        %4038 = vmatprep.subr.bf16.mxu0 0
        %4039 = vmatpush1.bf16.msra.mxu0 %v4012
        %4040 = vmatprep.subr.bf16.mxu0 0
        %4041 = vmatpush1.bf16.msra.mxu0 %v4013
        %4042 = vmatprep.subr.bf16.mxu0 0
        %4043 = vmatpush1.bf16.msra.mxu0 %v4014
        %4044 = vmatprep.subr.bf16.mxu0 0
        %4045 = vmatpush1.bf16.msra.mxu0 0
        %4046 = vmatprep.subr.bf16.mxu0 0
        %4047 = vmatpush1.bf16.msra.mxu0 0
        %4048 = vmatprep.subr.bf16.mxu0 0
        %4049 = vmatpush1.bf16.msra.mxu0 0
        %4050 = vmatprep.subr.bf16.mxu0 0
        %4051 = vmatpush1.bf16.msra.mxu0 0
        %4052 = vmatprep.subr.bf16.mxu0 0
        %4053 = vmatpush1.bf16.msra.mxu0 0
        %4054 = vmatprep.subr.bf16.mxu0 0
        %4055 = vmatpush1.bf16.msra.mxu0 0
        %4056 = vmatprep.subr.bf16.mxu0 0
        %4057 = vmatpush1.bf16.msra.mxu0 0
        %4058 = vmatprep.subr.bf16.mxu0 0
        %4059 = vmatpush1.bf16.msra.mxu0 0
        %4060 = vmatprep.subr.bf16.mxu0 0
        %4061 = vmatpush1.bf16.msra.mxu0 0
        %4062 = vmatprep.subr.bf16.mxu0 0
        %4063 = vmatpush1.bf16.msra.mxu0 0
        %4064 = vmatprep.subr.bf16.mxu0 0
        %4065 = vmatpush1.bf16.msra.mxu0 0
        %4066 = vmatprep.subr.bf16.mxu0 0
        %4067 = vmatpush1.bf16.msra.mxu0 0
        %4068 = vmatprep.mubr.bf16.mxu0 0
        %4069 = vmatmul.mubr.bf16.gmra.mrb[0].mxu0 %v4031
        %v4070 = vpop.f32.mrb[0].mxu0
        %v4071 = vadd.f32 0.0, %v4070
        %v4072 = vpop.f32.mrb[0].mxu0
        %v4073 = vpop.f32.mrb[0].mxu0
        %v4074 = vadd.f32 0.0, %v4073
        %v4075 = vpop.f32.mrb[0].mxu0
        %4076 = vmatprep.mubr.bf16.mxu0 0
        %4077 = vmatmul.mubr.bf16.gmra.mrb[0].mxu0 %v4034
        %v4078 = vpop.f32.mrb[0].mxu0
        %v4079 = vadd.f32 0.0, %v4078
        %v4080 = vpop.f32.mrb[0].mxu0
        %v4081 = vpop.f32.mrb[0].mxu0
        %v4082 = vadd.f32 0.0, %v4081
        %v4083 = vpop.f32.mrb[0].mxu0
        %4084 = vdwg.mxu0
        %v4085 = vmax.f32 %v4071, 0.0
        %v4086 = vmax.f32 %v4074, 0.0
        %v4087 = vmax.f32 %v4079, 0.0
        %v4088 = vmax.f32 %v4082, 0.0
        %v4089 = vpack.c.bf16 %v4086, %v4085
        %v4090 = vpack.c.bf16 %v4088, %v4087
        %v4091 = vld [vmem:[#allocation14] sm:$0xf]
        %v4092 = vld [vmem:[#allocation14 + $0x4] sm:$0xf]
        %v4095 = vunpack.c.l.b16 %v4091
        %v4096 = vunpack.c.l.b16 %v4092
        %v4097 = vpack.c.b16 %v4096, %v4095
        %v4099 = vsel %vm873, %v4097, 0
        %4101 = vmatprep.subr.bf16.mxu0 0
        %4102 = vmatpush1.bf16.msra.mxu0 %v4089
        %4103 = vmatprep.subr.bf16.mxu0 0
        %4104 = vmatpush1.bf16.msra.mxu0 %v4090
        %4105 = vmatprep.subr.bf16.mxu0 0
        %4106 = vmatpush1.bf16.msra.mxu0 0
        %4107 = vmatprep.subr.bf16.mxu0 0
        %4108 = vmatpush1.bf16.msra.mxu0 0
        %4109 = vmatprep.subr.bf16.mxu0 0
        %4110 = vmatpush1.bf16.msra.mxu0 0
        %4111 = vmatprep.subr.bf16.mxu0 0
        %4112 = vmatpush1.bf16.msra.mxu0 0
        %4113 = vmatprep.subr.bf16.mxu0 0
        %4114 = vmatpush1.bf16.msra.mxu0 0
        %4115 = vmatprep.subr.bf16.mxu0 0
        %4116 = vmatpush1.bf16.msra.mxu0 0
        %4117 = vmatprep.subr.bf16.mxu0 0
        %4118 = vmatpush1.bf16.msra.mxu0 0
        %4119 = vmatprep.subr.bf16.mxu0 0
        %4120 = vmatpush1.bf16.msra.mxu0 0
        %4121 = vmatprep.subr.bf16.mxu0 0
        %4122 = vmatpush1.bf16.msra.mxu0 0
        %4123 = vmatprep.subr.bf16.mxu0 0
        %4124 = vmatpush1.bf16.msra.mxu0 0
        %4125 = vmatprep.subr.bf16.mxu0 0
        %4126 = vmatpush1.bf16.msra.mxu0 0
        %4127 = vmatprep.subr.bf16.mxu0 0
        %4128 = vmatpush1.bf16.msra.mxu0 0
        %4129 = vmatprep.subr.bf16.mxu0 0
        %4130 = vmatpush1.bf16.msra.mxu0 0
        %4131 = vmatprep.subr.bf16.mxu0 0
        %4132 = vmatpush1.bf16.msra.mxu0 0
        %4133 = vmatprep.mubr.bf16.mxu0 0
        %4134 = vmatmul.mubr.bf16.gmra.mrb[0].mxu0 %v4099
        %v4135 = vpop.f32.mrb[0].mxu0
        %v4136 = vadd.f32 0.0, %v4135
        %v4137 = vpop.f32.mrb[0].mxu0
        %v4138 = vpop.f32.mrb[0].mxu0
        %v4139 = vadd.f32 0.0, %v4138
        %v4140 = vpop.f32.mrb[0].mxu0
        %4141 = vdwg.mxu0
        %v4142 = vmax.f32 %v4136, 0.0
        %v4143 = vmax.f32 %v4139, 0.0
        %v4144 = vpack.c.bf16 %v4143, %v4142
        %v4145 = vld [vmem:[#allocation16] sm:$0x1]
        %v4147 = vsel %vm922, %v4145, 0
        %4149 = vmatprep.subr.bf16.mxu0 0
        %4150 = vmatpush1.bf16.msra.mxu0 %v4144
        %4151 = vmatprep.subr.bf16.mxu0 0
        %4152 = vmatpush1.bf16.msra.mxu0 0
        %4153 = vmatprep.subr.bf16.mxu0 0
        %4154 = vmatpush1.bf16.msra.mxu0 0
        %4155 = vmatprep.subr.bf16.mxu0 0
        %4156 = vmatpush1.bf16.msra.mxu0 0
        %4157 = vmatprep.subr.bf16.mxu0 0
        %4158 = vmatpush1.bf16.msra.mxu0 0
        %4159 = vmatprep.subr.bf16.mxu0 0
        %4160 = vmatpush1.bf16.msra.mxu0 0
        %4161 = vmatprep.subr.bf16.mxu0 0
        %4162 = vmatpush1.bf16.msra.mxu0 0
        %4163 = vmatprep.subr.bf16.mxu0 0
        %4164 = vmatpush1.bf16.msra.mxu0 0
        %4165 = vmatprep.subr.bf16.mxu0 0
        %4166 = vmatpush1.bf16.msra.mxu0 0
        %4167 = vmatprep.subr.bf16.mxu0 0
        %4168 = vmatpush1.bf16.msra.mxu0 0
        %4169 = vmatprep.subr.bf16.mxu0 0
        %4170 = vmatpush1.bf16.msra.mxu0 0
        %4171 = vmatprep.subr.bf16.mxu0 0
        %4172 = vmatpush1.bf16.msra.mxu0 0
        %4173 = vmatprep.subr.bf16.mxu0 0
        %4174 = vmatpush1.bf16.msra.mxu0 0
        %4175 = vmatprep.subr.bf16.mxu0 0
        %4176 = vmatpush1.bf16.msra.mxu0 0
        %4177 = vmatprep.subr.bf16.mxu0 0
        %4178 = vmatpush1.bf16.msra.mxu0 0
        %4179 = vmatprep.subr.bf16.mxu0 0
        %4180 = vmatpush1.bf16.msra.mxu0 0
        %4181 = vmatprep.mubr.bf16.mxu0 0
        %4182 = vmatmul.mubr.bf16.gmra.mrb[0].mxu0 %v4147
        %v4183 = vpop.f32.mrb[0].mxu0
        %v4184 = vadd.f32 0.0, %v4183
        %v4185 = vpop.f32.mrb[0].mxu0
        %v4186 = vpop.f32.mrb[0].mxu0
        %v4187 = vpop.f32.mrb[0].mxu0
        %4188 = vdwg.mxu0
        %v4189 = vsel %vm568, %v4184, -inf
        %v4190 = vsel %vm967, %v4189, -inf
        %4191 = vmax.xlane.f32.xlu0 %v4190
        %v4192 = vpop.xlane.xlu0 %4191
        %v4193 = vsel %vm568, %v4184, inf
        %v4194 = vsel %vm967, %v4193, inf
        %4195 = vmin.xlane.f32.xlu0 %v4194
        %v4196 = vpop.xlane.xlu0 %4195
        %v4197 = vsub.f32 %v4184, %v4196
        %v4198 = vsub.f32 %v4192, %v4196
        %v4199 = vadd.f32 %v4198, 1e-12
        %v4200 = vrcp.pop %v4199
        %v4201 = vmul.f32 %v4197, %v4200
        %v4202 = vstv %s578
        %v4203 = vsub.f32 %v4201, %v4202
        %v4204 = vmax.f32 %v4203, 0.0
        %v4205 = vsel %vm568, %v4204, 0.0
        %4206 = vst [vmem:[%s564] sm:$0x1] %v4205
        %p4207 = scmp.lt.s32.totalorder %s30, 1
        %s4208 = scalar_select %p4207, %s30, 1
        %s4209 = scalar_lea.vmem %s13, %s4208
        // Predicated region
        $region109: #{lighter_forward.2} parent=71 // pred_check
          %p4210 = pneg %p326
        $region110: #{lighter_forward.2} parent=71 // pred_check_branch
          %4212 = sbr.rel (%p4210) target = $region112
        $region111: #{lighter_forward.2} parent=71 // pred_region
          _
        $region112: #{lighter_forward.2} parent=71 // pred_fallthru
          _
      $region72: #{lighter_forward.2} parent=5 // pred_fallthru
        _
      %p4213 = scmp.le.s32.totalorder 2, %s25
      // Predicated region
      $region113: #{lighter_forward.2} parent=5 // pred_check
        %p4214 = pneg %p4213
      $region114: #{lighter_forward.2} parent=5 // pred_check_branch
        %4216 = sbr.rel (%p4214) target = $region116
      $region115: #{lighter_forward.2} parent=5 // pred_region
        %s4217 = ssub.s32 %s25, 2
        // Predicated region
        $region117: #{lighter_forward.2} parent=115 // pred_check
          %p4218 = pneg %p332
        $region118: #{lighter_forward.2} parent=115 // pred_check_branch
          %4220 = sbr.rel (%p4218) target = $region120
        $region119: #{lighter_forward.2} parent=115 // pred_region
          %p4221 = scmp.lt.s32.totalorder %s31, 1
          %s4222 = scalar_select %p4221, %s31, 1
          %s4223 = scalar_lea.vmem %s13, %s4222
        $region120: #{lighter_forward.2} parent=115 // pred_fallthru
          _
      $region116: #{lighter_forward.2} parent=5 // pred_fallthru
        _
    $region6: #{lighter_forward.2} parent=1 // loop_footer
      %s29 = sadd.s32 1, %s25
    $region7: #{lighter_forward.2} parent=1 // loop_footer_branch
      %24 = sbr.rel target = $region3
    $region8: #{lighter_forward.2} parent=1 // loop_exit
      _
    %4224 = vsyncpa [#allocation4], 1
    %s4225 = scalar_lea.sflag [#allocation4], 1
    %4226 = vsyncpa %s4225, 1
    %4227 = vsyncpa [#allocation6], 1
    %4228 = vsyncpa [#allocation9], 1
    %4229 = vsyncpa [#allocation12], 1
    %4230 = vsyncpa [#allocation15], 1

// kernel: lighter_forward.3
$region0: #{lighter_forward.3}
  #allocation0 [shape = 'u32[]', space=smem, size = 0x4, offset = 0x4, fixed_abs, tag = 'smem constant byte address 0x4 - core index']
  #allocation1 [shape = 'u32[144,128]{1,0:T(1,128)}', space=vmem, size = 0x12000, scoped, tag = 'internal scratch']
  %s0 = inlined_call_operand.vmem [shape: f32[2,900], index: 0, kind: input, shape index: {}]
  %s1 = inlined_call_operand.vmem [shape: f32[2,128], index: 1, kind: input, shape index: {}]
  %s2 = inlined_call_operand.vmem [shape: bf16[128,900], index: 2, kind: input, shape index: {}]
  %s3 = inlined_call_operand.vmem [shape: bf16[900,1024], index: 3, kind: input, shape index: {}]
  %s4 = inlined_call_operand.vmem [shape: bf16[1024,512], index: 4, kind: input, shape index: {}]
  %s5 = inlined_call_operand.hbm [shape: bf16[512,128], index: 5, kind: input, shape index: {}]
  %s6 = inlined_call_operand.vmem [shape: bf16[128,64], index: 6, kind: input, shape index: {}]
  %s7 = inlined_call_operand.vmem [shape: bf16[64,10], index: 7, kind: input, shape index: {}]
  %s8 = inlined_call_operand.hbm [shape: f32[2,10], index: 8, kind: output, shape index: {}]
  %s9 = sld [smem:[#allocation0]]
  $region46: #{lighter_forward.3} parent=0
    _
  %s11 = ssub.s32 1, %s9
  %s12 = scalar_select 0, %s11, %s9
  $region1: #{lighter_forward.3} parent=0
    #allocation2 [shape = 'u8[131072]{0}', space=vmem, size = 0x20000, scoped, tag = 'input window, operand 5, single buffered']
    #allocation3 [shape = 's32[1]{0}', space=sflag, size = 0x4, scoped, tag = 'scoped memory for lighter_forward.3']
    #allocation4 [shape = 's32[1]{0}', space=sflag, size = 0x4, scoped, tag = 'scoped memory for lighter_forward.3']
    #allocation5 [shape = 'u8[1024]{0}', space=vmem, size = 0x400, scoped, tag = 'output window, operand 0, single buffered']
    %13 = vsyncpa [#allocation3], 0
    %14 = vsyncpa [#allocation4], 0
    // Predicated region
    $region2: #{lighter_forward.3} parent=1 // pred_check
      _
    $region3: #{lighter_forward.3} parent=1 // pred_check_branch
      %16 = sbr.rel (0) target = $region5
    $region4: #{lighter_forward.3} parent=1 // pred_region
      _
    $region5: #{lighter_forward.3} parent=1 // pred_fallthru
      _
    // Predicated region
    $region6: #{lighter_forward.3} parent=1 // pred_check
      _
    $region7: #{lighter_forward.3} parent=1 // pred_check_branch
      %18 = sbr.rel (0) target = $region9
    $region8: #{lighter_forward.3} parent=1 // pred_region
      _
    $region9: #{lighter_forward.3} parent=1 // pred_fallthru
      _
    // Predicated region
    $region10: #{lighter_forward.3} parent=1 // pred_check
      _
    $region11: #{lighter_forward.3} parent=1 // pred_check_branch
      %20 = sbr.rel (0) target = $region13
    $region12: #{lighter_forward.3} parent=1 // pred_region
      _
    $region13: #{lighter_forward.3} parent=1 // pred_fallthru
      _
    // Predicated region
    $region14: #{lighter_forward.3} parent=1 // pred_check
      _
    $region15: #{lighter_forward.3} parent=1 // pred_check_branch
      %22 = sbr.rel (0) target = $region17
    $region16: #{lighter_forward.3} parent=1 // pred_region
      _
    $region17: #{lighter_forward.3} parent=1 // pred_fallthru
      _
    // Predicated region
    $region18: #{lighter_forward.3} parent=1 // pred_check
      _
    $region19: #{lighter_forward.3} parent=1 // pred_check_branch
      %24 = sbr.rel (0) target = $region21
    $region20: #{lighter_forward.3} parent=1 // pred_region
      _
    $region21: #{lighter_forward.3} parent=1 // pred_fallthru
      _
    // Predicated region
    $region22: #{lighter_forward.3} parent=1 // pred_check
      _
    $region23: #{lighter_forward.3} parent=1 // pred_check_branch
      %26 = sbr.rel (0) target = $region25
    $region24: #{lighter_forward.3} parent=1 // pred_region
      %s28 = ssub.s32 4096, 4096
      %29 = vsyncadd [#allocation3], %s28
      %s30 = sshll.u32 [#allocation2], 4
      %s31 = int_to_ptr.vmem [resolvable:$true] %s30
      %36 = dma.hbm_to_vmem [thread:$0]  %s5, 4096, %s31, [#allocation3], 64, 64, 4
    $region25: #{lighter_forward.3} parent=1 // pred_fallthru
      _
    // Predicated region
    $region26: #{lighter_forward.3} parent=1 // pred_check
      _
    $region27: #{lighter_forward.3} parent=1 // pred_check_branch
      %38 = sbr.rel (0) target = $region29
    $region28: #{lighter_forward.3} parent=1 // pred_region
      _
    $region29: #{lighter_forward.3} parent=1 // pred_fallthru
      _
    // Predicated region
    $region30: #{lighter_forward.3} parent=1 // pred_check
      _
    $region31: #{lighter_forward.3} parent=1 // pred_check_branch
      %40 = sbr.rel (0) target = $region33
    $region32: #{lighter_forward.3} parent=1 // pred_region
      _
    $region33: #{lighter_forward.3} parent=1 // pred_fallthru
      _
    // Predicated region
    $region34: #{lighter_forward.3} parent=1 // pred_check
      _
    $region35: #{lighter_forward.3} parent=1 // pred_check_branch
      %42 = sbr.rel (0) target = $region37
    $region36: #{lighter_forward.3} parent=1 // pred_region
      %43 = dma.done [#allocation3], 4096
    $region37: #{lighter_forward.3} parent=1 // pred_fallthru
      _
    %v45 = vld [vmem:[%s0] sm:$0xff]
    %v46 = vld [vmem:[%s0 + $0x8] sm:$0xff]
    %v47 = vmul.f32 %v45, 255.0
    %v48 = vmul.f32 %v46, 255.0
    %v49 = vadd.f32 %v47, 100.0
    %v50 = vadd.f32 %v48, 100.0
    %v51 = vld [vmem:[%s1] sm:$0x3]
    %v52 = vpack.c.bf16 %v51, %v51
    %v53 = vld [vmem:[%s2] sm:$0xff]
    %v54 = vld [vmem:[%s2 + $0x8] sm:$0xff]
    %v55 = vld [vmem:[%s2 + $0x10] sm:$0xff]
    %v56 = vld [vmem:[%s2 + $0x18] sm:$0xff]
    %v57 = vld [vmem:[%s2 + $0x20] sm:$0xff]
    %v58 = vld [vmem:[%s2 + $0x28] sm:$0xff]
    %v59 = vld [vmem:[%s2 + $0x30] sm:$0xff]
    %v60 = vld [vmem:[%s2 + $0x38] sm:$0xff]
    %v61 = vld [vmem:[%s2 + $0x40] sm:$0xff]
    %v62 = vld [vmem:[%s2 + $0x48] sm:$0xff]
    %v63 = vld [vmem:[%s2 + $0x50] sm:$0xff]
    %v64 = vld [vmem:[%s2 + $0x58] sm:$0xff]
    %v65 = vld [vmem:[%s2 + $0x60] sm:$0xff]
    %v66 = vld [vmem:[%s2 + $0x68] sm:$0xff]
    %v67 = vld [vmem:[%s2 + $0x70] sm:$0xff]
    %v68 = vld [vmem:[%s2 + $0x78] sm:$0xff]
    %v69 = vld [vmem:[%s2 + $0x80] sm:$0xff]
    %v70 = vld [vmem:[%s2 + $0x88] sm:$0xff]
    %v71 = vld [vmem:[%s2 + $0x90] sm:$0xff]
    %v72 = vld [vmem:[%s2 + $0x98] sm:$0xff]
    %v73 = vld [vmem:[%s2 + $0xa0] sm:$0xff]
    %v74 = vld [vmem:[%s2 + $0xa8] sm:$0xff]
    %v75 = vld [vmem:[%s2 + $0xb0] sm:$0xff]
    %v76 = vld [vmem:[%s2 + $0xb8] sm:$0xff]
    %v77 = vld [vmem:[%s2 + $0xc0] sm:$0xff]
    %v78 = vld [vmem:[%s2 + $0xc8] sm:$0xff]
    %v79 = vld [vmem:[%s2 + $0xd0] sm:$0xff]
    %v80 = vld [vmem:[%s2 + $0xd8] sm:$0xff]
    %v81 = vld [vmem:[%s2 + $0xe0] sm:$0xff]
    %v82 = vld [vmem:[%s2 + $0xe8] sm:$0xff]
    %v83 = vld [vmem:[%s2 + $0xf0] sm:$0xff]
    %v84 = vld [vmem:[%s2 + $0xf8] sm:$0xff]
    %v85 = vld [vmem:[%s2 + $0x100] sm:$0xff]
    %v86 = vld [vmem:[%s2 + $0x108] sm:$0xff]
    %v87 = vld [vmem:[%s2 + $0x110] sm:$0xff]
    %v88 = vld [vmem:[%s2 + $0x118] sm:$0xff]
    %v89 = vld [vmem:[%s2 + $0x120] sm:$0xff]
    %v90 = vld [vmem:[%s2 + $0x128] sm:$0xff]
    %v91 = vld [vmem:[%s2 + $0x130] sm:$0xff]
    %v92 = vld [vmem:[%s2 + $0x138] sm:$0xff]
    %v93 = vld [vmem:[%s2 + $0x140] sm:$0xff]
    %v94 = vld [vmem:[%s2 + $0x148] sm:$0xff]
    %v95 = vld [vmem:[%s2 + $0x150] sm:$0xff]
    %v96 = vld [vmem:[%s2 + $0x158] sm:$0xff]
    %v97 = vld [vmem:[%s2 + $0x160] sm:$0xff]
    %v98 = vld [vmem:[%s2 + $0x168] sm:$0xff]
    %v99 = vld [vmem:[%s2 + $0x170] sm:$0xff]
    %v100 = vld [vmem:[%s2 + $0x178] sm:$0xff]
    %v101 = vld [vmem:[%s2 + $0x180] sm:$0xff]
    %v102 = vld [vmem:[%s2 + $0x188] sm:$0xff]
    %v103 = vld [vmem:[%s2 + $0x190] sm:$0xff]
    %v104 = vld [vmem:[%s2 + $0x198] sm:$0xff]
    %v105 = vld [vmem:[%s2 + $0x1a0] sm:$0xff]
    %v106 = vld [vmem:[%s2 + $0x1a8] sm:$0xff]
    %v107 = vld [vmem:[%s2 + $0x1b0] sm:$0xff]
    %v108 = vld [vmem:[%s2 + $0x1b8] sm:$0xff]
    %v109 = vld [vmem:[%s2 + $0x1c0] sm:$0xff]
    %v110 = vld [vmem:[%s2 + $0x1c8] sm:$0xff]
    %v111 = vld [vmem:[%s2 + $0x1d0] sm:$0xff]
    %v112 = vld [vmem:[%s2 + $0x1d8] sm:$0xff]
    %v113 = vld [vmem:[%s2 + $0x1e0] sm:$0xff]
    %v114 = vld [vmem:[%s2 + $0x1e8] sm:$0xff]
    %v115 = vld [vmem:[%s2 + $0x1f0] sm:$0xff]
    %v116 = vld [vmem:[%s2 + $0x1f8] sm:$0xff]
    %v181 = vunpack.c.l.b16 %v53
    %v182 = vunpack.c.h.b16 %v53
    %v183 = vunpack.c.l.b16 %v54
    %v184 = vunpack.c.h.b16 %v54
    %v185 = vunpack.c.l.b16 %v55
    %v186 = vunpack.c.h.b16 %v55
    %v187 = vunpack.c.l.b16 %v56
    %v188 = vunpack.c.h.b16 %v56
    %v189 = vunpack.c.l.b16 %v57
    %v190 = vunpack.c.h.b16 %v57
    %v191 = vunpack.c.l.b16 %v58
    %v192 = vunpack.c.h.b16 %v58
    %v193 = vunpack.c.l.b16 %v59
    %v194 = vunpack.c.h.b16 %v59
    %v195 = vunpack.c.l.b16 %v60
    %v196 = vunpack.c.h.b16 %v60
    %v197 = vunpack.c.l.b16 %v61
    %v198 = vunpack.c.h.b16 %v61
    %v199 = vunpack.c.l.b16 %v62
    %v200 = vunpack.c.h.b16 %v62
    %v201 = vunpack.c.l.b16 %v63
    %v202 = vunpack.c.h.b16 %v63
    %v203 = vunpack.c.l.b16 %v64
    %v204 = vunpack.c.h.b16 %v64
    %v205 = vunpack.c.l.b16 %v65
    %v206 = vunpack.c.h.b16 %v65
    %v207 = vunpack.c.l.b16 %v66
    %v208 = vunpack.c.h.b16 %v66
    %v209 = vunpack.c.l.b16 %v67
    %v210 = vunpack.c.h.b16 %v67
    %v211 = vunpack.c.l.b16 %v68
    %v212 = vunpack.c.h.b16 %v68
    %v213 = vunpack.c.l.b16 %v69
    %v214 = vunpack.c.h.b16 %v69
    %v215 = vunpack.c.l.b16 %v70
    %v216 = vunpack.c.h.b16 %v70
    %v217 = vunpack.c.l.b16 %v71
    %v218 = vunpack.c.h.b16 %v71
    %v219 = vunpack.c.l.b16 %v72
    %v220 = vunpack.c.h.b16 %v72
    %v221 = vunpack.c.l.b16 %v73
    %v222 = vunpack.c.h.b16 %v73
    %v223 = vunpack.c.l.b16 %v74
    %v224 = vunpack.c.h.b16 %v74
    %v225 = vunpack.c.l.b16 %v75
    %v226 = vunpack.c.h.b16 %v75
    %v227 = vunpack.c.l.b16 %v76
    %v228 = vunpack.c.h.b16 %v76
    %v229 = vunpack.c.l.b16 %v77
    %v230 = vunpack.c.h.b16 %v77
    %v231 = vunpack.c.l.b16 %v78
    %v232 = vunpack.c.h.b16 %v78
    %v233 = vunpack.c.l.b16 %v79
    %v234 = vunpack.c.h.b16 %v79
    %v235 = vunpack.c.l.b16 %v80
    %v236 = vunpack.c.h.b16 %v80
    %v237 = vunpack.c.l.b16 %v81
    %v238 = vunpack.c.h.b16 %v81
    %v239 = vunpack.c.l.b16 %v82
    %v240 = vunpack.c.h.b16 %v82
    %v241 = vunpack.c.l.b16 %v83
    %v242 = vunpack.c.h.b16 %v83
    %v243 = vunpack.c.l.b16 %v84
    %v244 = vunpack.c.h.b16 %v84
    %v245 = vunpack.c.l.b16 %v85
    %v246 = vunpack.c.h.b16 %v85
    %v247 = vunpack.c.l.b16 %v86
    %v248 = vunpack.c.h.b16 %v86
    %v249 = vunpack.c.l.b16 %v87
    %v250 = vunpack.c.h.b16 %v87
    %v251 = vunpack.c.l.b16 %v88
    %v252 = vunpack.c.h.b16 %v88
    %v253 = vunpack.c.l.b16 %v89
    %v254 = vunpack.c.h.b16 %v89
    %v255 = vunpack.c.l.b16 %v90
    %v256 = vunpack.c.h.b16 %v90
    %v257 = vunpack.c.l.b16 %v91
    %v258 = vunpack.c.h.b16 %v91
    %v259 = vunpack.c.l.b16 %v92
    %v260 = vunpack.c.h.b16 %v92
    %v261 = vunpack.c.l.b16 %v93
    %v262 = vunpack.c.h.b16 %v93
    %v263 = vunpack.c.l.b16 %v94
    %v264 = vunpack.c.h.b16 %v94
    %v265 = vunpack.c.l.b16 %v95
    %v266 = vunpack.c.h.b16 %v95
    %v267 = vunpack.c.l.b16 %v96
    %v268 = vunpack.c.h.b16 %v96
    %v269 = vunpack.c.l.b16 %v97
    %v270 = vunpack.c.h.b16 %v97
    %v271 = vunpack.c.l.b16 %v98
    %v272 = vunpack.c.h.b16 %v98
    %v273 = vunpack.c.l.b16 %v99
    %v274 = vunpack.c.h.b16 %v99
    %v275 = vunpack.c.l.b16 %v100
    %v276 = vunpack.c.h.b16 %v100
    %v277 = vunpack.c.l.b16 %v101
    %v278 = vunpack.c.h.b16 %v101
    %v279 = vunpack.c.l.b16 %v102
    %v280 = vunpack.c.h.b16 %v102
    %v281 = vunpack.c.l.b16 %v103
    %v282 = vunpack.c.h.b16 %v103
    %v283 = vunpack.c.l.b16 %v104
    %v284 = vunpack.c.h.b16 %v104
    %v285 = vunpack.c.l.b16 %v105
    %v286 = vunpack.c.h.b16 %v105
    %v287 = vunpack.c.l.b16 %v106
    %v288 = vunpack.c.h.b16 %v106
    %v289 = vunpack.c.l.b16 %v107
    %v290 = vunpack.c.h.b16 %v107
    %v291 = vunpack.c.l.b16 %v108
    %v292 = vunpack.c.h.b16 %v108
    %v293 = vunpack.c.l.b16 %v109
    %v294 = vunpack.c.h.b16 %v109
    %v295 = vunpack.c.l.b16 %v110
    %v296 = vunpack.c.h.b16 %v110
    %v297 = vunpack.c.l.b16 %v111
    %v298 = vunpack.c.h.b16 %v111
    %v299 = vunpack.c.l.b16 %v112
    %v300 = vunpack.c.h.b16 %v112
    %v301 = vunpack.c.l.b16 %v113
    %v302 = vunpack.c.h.b16 %v113
    %v303 = vunpack.c.l.b16 %v114
    %v304 = vunpack.c.h.b16 %v114
    %v305 = vunpack.c.l.b16 %v115
    %v306 = vunpack.c.h.b16 %v115
    %v307 = vunpack.c.l.b16 %v116
    %v308 = vunpack.c.h.b16 %v116
    %v309 = vpack.c.b16 %v189, %v181
    %v310 = vpack.c.b16 %v190, %v182
    %v311 = vpack.c.b16 %v191, %v183
    %v312 = vpack.c.b16 %v192, %v184
    %v313 = vpack.c.b16 %v193, %v185
    %v314 = vpack.c.b16 %v194, %v186
    %v315 = vpack.c.b16 %v195, %v187
    %v316 = vpack.c.b16 %v196, %v188
    %v317 = vpack.c.b16 %v205, %v197
    %v318 = vpack.c.b16 %v206, %v198
    %v319 = vpack.c.b16 %v207, %v199
    %v320 = vpack.c.b16 %v208, %v200
    %v321 = vpack.c.b16 %v209, %v201
    %v322 = vpack.c.b16 %v210, %v202
    %v323 = vpack.c.b16 %v211, %v203
    %v324 = vpack.c.b16 %v212, %v204
    %v325 = vpack.c.b16 %v221, %v213
    %v326 = vpack.c.b16 %v222, %v214
    %v327 = vpack.c.b16 %v223, %v215
    %v328 = vpack.c.b16 %v224, %v216
    %v329 = vpack.c.b16 %v225, %v217
    %v330 = vpack.c.b16 %v226, %v218
    %v331 = vpack.c.b16 %v227, %v219
    %v332 = vpack.c.b16 %v228, %v220
    %v333 = vpack.c.b16 %v237, %v229
    %v334 = vpack.c.b16 %v238, %v230
    %v335 = vpack.c.b16 %v239, %v231
    %v336 = vpack.c.b16 %v240, %v232
    %v337 = vpack.c.b16 %v241, %v233
    %v338 = vpack.c.b16 %v242, %v234
    %v339 = vpack.c.b16 %v243, %v235
    %v340 = vpack.c.b16 %v244, %v236
    %v341 = vpack.c.b16 %v253, %v245
    %v342 = vpack.c.b16 %v254, %v246
    %v343 = vpack.c.b16 %v255, %v247
    %v344 = vpack.c.b16 %v256, %v248
    %v345 = vpack.c.b16 %v257, %v249
    %v346 = vpack.c.b16 %v258, %v250
    %v347 = vpack.c.b16 %v259, %v251
    %v348 = vpack.c.b16 %v260, %v252
    %v349 = vpack.c.b16 %v269, %v261
    %v350 = vpack.c.b16 %v270, %v262
    %v351 = vpack.c.b16 %v271, %v263
    %v352 = vpack.c.b16 %v272, %v264
    %v353 = vpack.c.b16 %v273, %v265
    %v354 = vpack.c.b16 %v274, %v266
    %v355 = vpack.c.b16 %v275, %v267
    %v356 = vpack.c.b16 %v276, %v268
    %v357 = vpack.c.b16 %v285, %v277
    %v358 = vpack.c.b16 %v286, %v278
    %v359 = vpack.c.b16 %v287, %v279
    %v360 = vpack.c.b16 %v288, %v280
    %v361 = vpack.c.b16 %v289, %v281
    %v362 = vpack.c.b16 %v290, %v282
    %v363 = vpack.c.b16 %v291, %v283
    %v364 = vpack.c.b16 %v292, %v284
    %v365 = vpack.c.b16 %v301, %v293
    %v366 = vpack.c.b16 %v302, %v294
    %v367 = vpack.c.b16 %v303, %v295
    %v368 = vpack.c.b16 %v304, %v296
    %v369 = vpack.c.b16 %v305, %v297
    %v370 = vpack.c.b16 %v306, %v298
    %v371 = vpack.c.b16 %v307, %v299
    %v372 = vpack.c.b16 %v308, %v300
    %437 = vmatprep.subr.bf16.mxu0 %v310
    %438 = vmatpush1.bf16.msra.mxu0 %v309
    %439 = vmatprep.subr.bf16.mxu0 %v318
    %440 = vmatpush1.bf16.msra.mxu0 %v317
    %441 = vmatprep.subr.bf16.mxu0 %v326
    %442 = vmatpush1.bf16.msra.mxu0 %v325
    %443 = vmatprep.subr.bf16.mxu0 %v334
    %444 = vmatpush1.bf16.msra.mxu0 %v333
    %445 = vmatprep.subr.bf16.mxu0 %v342
    %446 = vmatpush1.bf16.msra.mxu0 %v341
    %447 = vmatprep.subr.bf16.mxu0 %v350
    %448 = vmatpush1.bf16.msra.mxu0 %v349
    %449 = vmatprep.subr.bf16.mxu0 %v358
    %450 = vmatpush1.bf16.msra.mxu0 %v357
    %451 = vmatprep.subr.bf16.mxu0 %v366
    %452 = vmatpush1.bf16.msra.mxu0 %v365
    %453 = vmatprep.subr.bf16.mxu0 0
    %454 = vmatpush1.bf16.msra.mxu0 0
    %455 = vmatprep.subr.bf16.mxu0 0
    %456 = vmatpush1.bf16.msra.mxu0 0
    %457 = vmatprep.subr.bf16.mxu0 0
    %458 = vmatpush1.bf16.msra.mxu0 0
    %459 = vmatprep.subr.bf16.mxu0 0
    %460 = vmatpush1.bf16.msra.mxu0 0
    %461 = vmatprep.subr.bf16.mxu0 0
    %462 = vmatpush1.bf16.msra.mxu0 0
    %463 = vmatprep.subr.bf16.mxu0 0
    %464 = vmatpush1.bf16.msra.mxu0 0
    %465 = vmatprep.subr.bf16.mxu0 0
    %466 = vmatpush1.bf16.msra.mxu0 0
    %467 = vmatprep.subr.bf16.mxu0 0
    %468 = vmatpush1.bf16.msra.mxu0 0
    %469 = vmatprep.mubr.bf16.mxu0 0
    %470 = vmatmul.mubr.bf16.gmra.mrb[0].mxu0 %v52
    %v471 = vpop.f32.mrb[0].mxu0
    %v472 = vadd.f32 0.0, %v471
    %v473 = vpop.f32.mrb[0].mxu0
    %v474 = vadd.f32 0.0, %v473
    %v475 = vpop.f32.mrb[0].mxu0
    %v476 = vpop.f32.mrb[0].mxu0
    %477 = vdwg.mxu0
    %478 = vmatprep.subr.bf16.mxu0 %v312
    %479 = vmatpush1.bf16.msra.mxu0 %v311
    %480 = vmatprep.subr.bf16.mxu0 %v320
    %481 = vmatpush1.bf16.msra.mxu0 %v319
    %482 = vmatprep.subr.bf16.mxu0 %v328
    %483 = vmatpush1.bf16.msra.mxu0 %v327
    %484 = vmatprep.subr.bf16.mxu0 %v336
    %485 = vmatpush1.bf16.msra.mxu0 %v335
    %486 = vmatprep.subr.bf16.mxu0 %v344
    %487 = vmatpush1.bf16.msra.mxu0 %v343
    %488 = vmatprep.subr.bf16.mxu0 %v352
    %489 = vmatpush1.bf16.msra.mxu0 %v351
    %490 = vmatprep.subr.bf16.mxu0 %v360
    %491 = vmatpush1.bf16.msra.mxu0 %v359
    %492 = vmatprep.subr.bf16.mxu0 %v368
    %493 = vmatpush1.bf16.msra.mxu0 %v367
    %494 = vmatprep.subr.bf16.mxu0 0
    %495 = vmatpush1.bf16.msra.mxu0 0
    %496 = vmatprep.subr.bf16.mxu0 0
    %497 = vmatpush1.bf16.msra.mxu0 0
    %498 = vmatprep.subr.bf16.mxu0 0
    %499 = vmatpush1.bf16.msra.mxu0 0
    %500 = vmatprep.subr.bf16.mxu0 0
    %501 = vmatpush1.bf16.msra.mxu0 0
    %502 = vmatprep.subr.bf16.mxu0 0
    %503 = vmatpush1.bf16.msra.mxu0 0
    %504 = vmatprep.subr.bf16.mxu0 0
    %505 = vmatpush1.bf16.msra.mxu0 0
    %506 = vmatprep.subr.bf16.mxu0 0
    %507 = vmatpush1.bf16.msra.mxu0 0
    %508 = vmatprep.subr.bf16.mxu0 0
    %509 = vmatpush1.bf16.msra.mxu0 0
    %510 = vmatprep.mubr.bf16.mxu0 0
    %511 = vmatmul.mubr.bf16.gmra.mrb[0].mxu0 %v52
    %v512 = vpop.f32.mrb[0].mxu0
    %v513 = vadd.f32 0.0, %v512
    %v514 = vpop.f32.mrb[0].mxu0
    %v515 = vadd.f32 0.0, %v514
    %v516 = vpop.f32.mrb[0].mxu0
    %v517 = vpop.f32.mrb[0].mxu0
    %518 = vdwg.mxu0
    %519 = vmatprep.subr.bf16.mxu0 %v314
    %520 = vmatpush1.bf16.msra.mxu0 %v313
    %521 = vmatprep.subr.bf16.mxu0 %v322
    %522 = vmatpush1.bf16.msra.mxu0 %v321
    %523 = vmatprep.subr.bf16.mxu0 %v330
    %524 = vmatpush1.bf16.msra.mxu0 %v329
    %525 = vmatprep.subr.bf16.mxu0 %v338
    %526 = vmatpush1.bf16.msra.mxu0 %v337
    %527 = vmatprep.subr.bf16.mxu0 %v346
    %528 = vmatpush1.bf16.msra.mxu0 %v345
    %529 = vmatprep.subr.bf16.mxu0 %v354
    %530 = vmatpush1.bf16.msra.mxu0 %v353
    %531 = vmatprep.subr.bf16.mxu0 %v362
    %532 = vmatpush1.bf16.msra.mxu0 %v361
    %533 = vmatprep.subr.bf16.mxu0 %v370
    %534 = vmatpush1.bf16.msra.mxu0 %v369
    %535 = vmatprep.subr.bf16.mxu0 0
    %536 = vmatpush1.bf16.msra.mxu0 0
    %537 = vmatprep.subr.bf16.mxu0 0
    %538 = vmatpush1.bf16.msra.mxu0 0
    %539 = vmatprep.subr.bf16.mxu0 0
    %540 = vmatpush1.bf16.msra.mxu0 0
    %541 = vmatprep.subr.bf16.mxu0 0
    %542 = vmatpush1.bf16.msra.mxu0 0
    %543 = vmatprep.subr.bf16.mxu0 0
    %544 = vmatpush1.bf16.msra.mxu0 0
    %545 = vmatprep.subr.bf16.mxu0 0
    %546 = vmatpush1.bf16.msra.mxu0 0
    %547 = vmatprep.subr.bf16.mxu0 0
    %548 = vmatpush1.bf16.msra.mxu0 0
    %549 = vmatprep.subr.bf16.mxu0 0
    %550 = vmatpush1.bf16.msra.mxu0 0
    %551 = vmatprep.mubr.bf16.mxu0 0
    %552 = vmatmul.mubr.bf16.gmra.mrb[0].mxu0 %v52
    %v553 = vpop.f32.mrb[0].mxu0
    %v554 = vadd.f32 0.0, %v553
    %v555 = vpop.f32.mrb[0].mxu0
    %v556 = vadd.f32 0.0, %v555
    %v557 = vpop.f32.mrb[0].mxu0
    %v558 = vpop.f32.mrb[0].mxu0
    %559 = vdwg.mxu0
    %560 = vmatprep.subr.bf16.mxu0 %v316
    %561 = vmatpush1.bf16.msra.mxu0 %v315
    %562 = vmatprep.subr.bf16.mxu0 %v324
    %563 = vmatpush1.bf16.msra.mxu0 %v323
    %564 = vmatprep.subr.bf16.mxu0 %v332
    %565 = vmatpush1.bf16.msra.mxu0 %v331
    %566 = vmatprep.subr.bf16.mxu0 %v340
    %567 = vmatpush1.bf16.msra.mxu0 %v339
    %568 = vmatprep.subr.bf16.mxu0 %v348
    %569 = vmatpush1.bf16.msra.mxu0 %v347
    %570 = vmatprep.subr.bf16.mxu0 %v356
    %571 = vmatpush1.bf16.msra.mxu0 %v355
    %572 = vmatprep.subr.bf16.mxu0 %v364
    %573 = vmatpush1.bf16.msra.mxu0 %v363
    %574 = vmatprep.subr.bf16.mxu0 %v372
    %575 = vmatpush1.bf16.msra.mxu0 %v371
    %576 = vmatprep.subr.bf16.mxu0 0
    %577 = vmatpush1.bf16.msra.mxu0 0
    %578 = vmatprep.subr.bf16.mxu0 0
    %579 = vmatpush1.bf16.msra.mxu0 0
    %580 = vmatprep.subr.bf16.mxu0 0
    %581 = vmatpush1.bf16.msra.mxu0 0
    %582 = vmatprep.subr.bf16.mxu0 0
    %583 = vmatpush1.bf16.msra.mxu0 0
    %584 = vmatprep.subr.bf16.mxu0 0
    %585 = vmatpush1.bf16.msra.mxu0 0
    %586 = vmatprep.subr.bf16.mxu0 0
    %587 = vmatpush1.bf16.msra.mxu0 0
    %588 = vmatprep.subr.bf16.mxu0 0
    %589 = vmatpush1.bf16.msra.mxu0 0
    %590 = vmatprep.subr.bf16.mxu0 0
    %591 = vmatpush1.bf16.msra.mxu0 0
    %592 = vmatprep.mubr.bf16.mxu0 0
    %593 = vmatmul.mubr.bf16.gmra.mrb[0].mxu0 %v52
    %v594 = vpop.f32.mrb[0].mxu0
    %v595 = vadd.f32 0.0, %v594
    %v596 = vpop.f32.mrb[0].mxu0
    %v597 = vadd.f32 0.0, %v596
    %v598 = vpop.f32.mrb[0].mxu0
    %v599 = vpop.f32.mrb[0].mxu0
    %600 = vdwg.mxu0
    %v609 = vcombine.low %v472, %v474
    %v610 = vcombine.low %v513, %v515
    %v612 = vunpack.c.l.s4 1983009808
    %v613 = vunpack.c.0.s8 %v612
    %v614 = vlaneseq
    %v615 = vshrl.u32 %v614, 7
    %v616 = vsub.s32 %v613, %v615
    %v617 = vrot.slane %v609, %v616
    %v619 = vunpack.c.l.s4 1983009808
    %v620 = vunpack.c.0.s8 %v619
    %v621 = vlaneseq
    %v622 = vshrl.u32 %v621, 7
    %v623 = vsub.s32 %v620, %v622
    %v624 = vrot.slane %v610, %v623
    %v625 = vcombine.low %v617, %v624
    %v626 = vcombine.low %v554, %v556
    %v627 = vcombine.low %v595, %v597
    %v629 = vunpack.c.l.s4 1983009808
    %v630 = vunpack.c.0.s8 %v629
    %v631 = vlaneseq
    %v632 = vshrl.u32 %v631, 7
    %v633 = vsub.s32 %v630, %v632
    %v634 = vrot.slane %v626, %v633
    %v636 = vunpack.c.l.s4 1983009808
    %v637 = vunpack.c.0.s8 %v636
    %v638 = vlaneseq
    %v639 = vshrl.u32 %v638, 7
    %v640 = vsub.s32 %v637, %v639
    %v641 = vrot.slane %v627, %v640
    %v642 = vcombine.low %v634, %v641
    %v645 = vmul.f32 %v49, %v625
    %v646 = vmul.f32 %v50, %v642
    %v649 = vcombine.high %v645, %v645
    %v651 = vunpack.c.l.s4 1983009808
    %v652 = vunpack.c.0.s8 %v651
    %v653 = vlaneseq
    %v654 = vshrl.u32 %v653, 7
    %v655 = vsub.s32 %v652, %v654
    %v656 = vrot.slane %v645, %v655
    %v658 = vunpack.c.l.s4 1983009808
    %v659 = vunpack.c.0.s8 %v658
    %v660 = vlaneseq
    %v661 = vshrl.u32 %v660, 7
    %v662 = vsub.s32 %v659, %v661
    %v663 = vrot.slane %v649, %v662
    %v664 = vcombine.high %v656, %v656
    %v665 = vcombine.high %v663, %v663
    %v666 = vcombine.high %v646, %v646
    %v668 = vunpack.c.l.s4 1983009808
    %v669 = vunpack.c.0.s8 %v668
    %v670 = vlaneseq
    %v671 = vshrl.u32 %v670, 7
    %v672 = vsub.s32 %v669, %v671
    %v673 = vrot.slane %v646, %v672
    %v675 = vunpack.c.l.s4 1983009808
    %v676 = vunpack.c.0.s8 %v675
    %v677 = vlaneseq
    %v678 = vshrl.u32 %v677, 7
    %v679 = vsub.s32 %v676, %v678
    %v680 = vrot.slane %v666, %v679
    %v681 = vcombine.high %v673, %v673
    %v682 = vcombine.high %v680, %v680
    %v691 = vpack.c.bf16 %v656, %v656
    %v692 = vpack.c.bf16 %v664, %v664
    %v693 = vpack.c.bf16 %v663, %v663
    %v694 = vpack.c.bf16 %v665, %v665
    %v695 = vpack.c.bf16 %v673, %v673
    %v696 = vpack.c.bf16 %v681, %v681
    %v697 = vpack.c.bf16 %v680, %v680
    %v698 = vpack.c.bf16 %v682, %v682
    %v699 = vld [vmem:[%s3] sm:$0xff]
    %v700 = vld [vmem:[%s3 + $0x8] sm:$0xff]
    %v701 = vld [vmem:[%s3 + $0x10] sm:$0xff]
    %v702 = vld [vmem:[%s3 + $0x18] sm:$0xff]
    %v703 = vld [vmem:[%s3 + $0x20] sm:$0xff]
    %v704 = vld [vmem:[%s3 + $0x28] sm:$0xff]
    %v705 = vld [vmem:[%s3 + $0x30] sm:$0xff]
    %v706 = vld [vmem:[%s3 + $0x38] sm:$0xff]
    %v707 = vld [vmem:[%s3 + $0x40] sm:$0xff]
    %v708 = vld [vmem:[%s3 + $0x48] sm:$0xff]
    %v709 = vld [vmem:[%s3 + $0x50] sm:$0xff]
    %v710 = vld [vmem:[%s3 + $0x58] sm:$0xff]
    %v711 = vld [vmem:[%s3 + $0x60] sm:$0xff]
    %v712 = vld [vmem:[%s3 + $0x68] sm:$0xff]
    %v713 = vld [vmem:[%s3 + $0x70] sm:$0xff]
    %v714 = vld [vmem:[%s3 + $0x78] sm:$0xff]
    %v715 = vld [vmem:[%s3 + $0x80] sm:$0xff]
    %v716 = vld [vmem:[%s3 + $0x88] sm:$0xff]
    %v717 = vld [vmem:[%s3 + $0x90] sm:$0xff]
    %v718 = vld [vmem:[%s3 + $0x98] sm:$0xff]
    %v719 = vld [vmem:[%s3 + $0xa0] sm:$0xff]
    %v720 = vld [vmem:[%s3 + $0xa8] sm:$0xff]
    %v721 = vld [vmem:[%s3 + $0xb0] sm:$0xff]
    %v722 = vld [vmem:[%s3 + $0xb8] sm:$0xff]
    %v723 = vld [vmem:[%s3 + $0xc0] sm:$0xff]
    %v724 = vld [vmem:[%s3 + $0xc8] sm:$0xff]
    %v725 = vld [vmem:[%s3 + $0xd0] sm:$0xff]
    %v726 = vld [vmem:[%s3 + $0xd8] sm:$0xff]
    %v727 = vld [vmem:[%s3 + $0xe0] sm:$0xff]
    %v728 = vld [vmem:[%s3 + $0xe8] sm:$0xff]
    %v729 = vld [vmem:[%s3 + $0xf0] sm:$0xff]
    %v730 = vld [vmem:[%s3 + $0xf8] sm:$0xff]
    %v731 = vld [vmem:[%s3 + $0x100] sm:$0xff]
    %v732 = vld [vmem:[%s3 + $0x108] sm:$0xff]
    %v733 = vld [vmem:[%s3 + $0x110] sm:$0xff]
    %v734 = vld [vmem:[%s3 + $0x118] sm:$0xff]
    %v735 = vld [vmem:[%s3 + $0x120] sm:$0xff]
    %v736 = vld [vmem:[%s3 + $0x128] sm:$0xff]
    %v737 = vld [vmem:[%s3 + $0x130] sm:$0xff]
    %v738 = vld [vmem:[%s3 + $0x138] sm:$0xff]
    %v739 = vld [vmem:[%s3 + $0x140] sm:$0xff]
    %v740 = vld [vmem:[%s3 + $0x148] sm:$0xff]
    %v741 = vld [vmem:[%s3 + $0x150] sm:$0xff]
    %v742 = vld [vmem:[%s3 + $0x158] sm:$0xff]
    %v743 = vld [vmem:[%s3 + $0x160] sm:$0xff]
    %v744 = vld [vmem:[%s3 + $0x168] sm:$0xff]
    %v745 = vld [vmem:[%s3 + $0x170] sm:$0xff]
    %v746 = vld [vmem:[%s3 + $0x178] sm:$0xff]
    %v747 = vld [vmem:[%s3 + $0x180] sm:$0xff]
    %v748 = vld [vmem:[%s3 + $0x188] sm:$0xff]
    %v749 = vld [vmem:[%s3 + $0x190] sm:$0xff]
    %v750 = vld [vmem:[%s3 + $0x198] sm:$0xff]
    %v751 = vld [vmem:[%s3 + $0x1a0] sm:$0xff]
    %v752 = vld [vmem:[%s3 + $0x1a8] sm:$0xff]
    %v753 = vld [vmem:[%s3 + $0x1b0] sm:$0xff]
    %v754 = vld [vmem:[%s3 + $0x1b8] sm:$0xff]
    %v755 = vld [vmem:[%s3 + $0x1c0] sm:$0xff]
    %v756 = vld [vmem:[%s3 + $0x1c8] sm:$0xff]
    %v757 = vld [vmem:[%s3 + $0x1d0] sm:$0xff]
    %v758 = vld [vmem:[%s3 + $0x1d8] sm:$0xff]
    %v759 = vld [vmem:[%s3 + $0x1e0] sm:$0xff]
    %v760 = vld [vmem:[%s3 + $0x1e8] sm:$0xff]
    %v761 = vld [vmem:[%s3 + $0x1f0] sm:$0xff]
    %v762 = vld [vmem:[%s3 + $0x1f8] sm:$0xff]
    %v763 = vld [vmem:[%s3 + $0x200] sm:$0xff]
    %v764 = vld [vmem:[%s3 + $0x208] sm:$0xff]
    %v765 = vld [vmem:[%s3 + $0x210] sm:$0xff]
    %v766 = vld [vmem:[%s3 + $0x218] sm:$0xff]
    %v767 = vld [vmem:[%s3 + $0x220] sm:$0xff]
    %v768 = vld [vmem:[%s3 + $0x228] sm:$0xff]
    %v769 = vld [vmem:[%s3 + $0x230] sm:$0xff]
    %v770 = vld [vmem:[%s3 + $0x238] sm:$0xff]
    %v771 = vld [vmem:[%s3 + $0x240] sm:$0xff]
    %v772 = vld [vmem:[%s3 + $0x248] sm:$0xff]
    %v773 = vld [vmem:[%s3 + $0x250] sm:$0xff]
    %v774 = vld [vmem:[%s3 + $0x258] sm:$0xff]
    %v775 = vld [vmem:[%s3 + $0x260] sm:$0xff]
    %v776 = vld [vmem:[%s3 + $0x268] sm:$0xff]
    %v777 = vld [vmem:[%s3 + $0x270] sm:$0xff]
    %v778 = vld [vmem:[%s3 + $0x278] sm:$0xff]
    %v779 = vld [vmem:[%s3 + $0x280] sm:$0xff]
    %v780 = vld [vmem:[%s3 + $0x288] sm:$0xff]
    %v781 = vld [vmem:[%s3 + $0x290] sm:$0xff]
    %v782 = vld [vmem:[%s3 + $0x298] sm:$0xff]
    %v783 = vld [vmem:[%s3 + $0x2a0] sm:$0xff]
    %v784 = vld [vmem:[%s3 + $0x2a8] sm:$0xff]
    %v785 = vld [vmem:[%s3 + $0x2b0] sm:$0xff]
    %v786 = vld [vmem:[%s3 + $0x2b8] sm:$0xff]
    %v787 = vld [vmem:[%s3 + $0x2c0] sm:$0xff]
    %v788 = vld [vmem:[%s3 + $0x2c8] sm:$0xff]
    %v789 = vld [vmem:[%s3 + $0x2d0] sm:$0xff]
    %v790 = vld [vmem:[%s3 + $0x2d8] sm:$0xff]
    %v791 = vld [vmem:[%s3 + $0x2e0] sm:$0xff]
    %v792 = vld [vmem:[%s3 + $0x2e8] sm:$0xff]
    %v793 = vld [vmem:[%s3 + $0x2f0] sm:$0xff]
    %v794 = vld [vmem:[%s3 + $0x2f8] sm:$0xff]
    %v795 = vld [vmem:[%s3 + $0x300] sm:$0xff]
    %v796 = vld [vmem:[%s3 + $0x308] sm:$0xff]
    %v797 = vld [vmem:[%s3 + $0x310] sm:$0xff]
    %v798 = vld [vmem:[%s3 + $0x318] sm:$0xff]
    %v799 = vld [vmem:[%s3 + $0x320] sm:$0xff]
    %v800 = vld [vmem:[%s3 + $0x328] sm:$0xff]
    %v801 = vld [vmem:[%s3 + $0x330] sm:$0xff]
    %v802 = vld [vmem:[%s3 + $0x338] sm:$0xff]
    %v803 = vld [vmem:[%s3 + $0x340] sm:$0xff]
    %v804 = vld [vmem:[%s3 + $0x348] sm:$0xff]
    %v805 = vld [vmem:[%s3 + $0x350] sm:$0xff]
    %v806 = vld [vmem:[%s3 + $0x358] sm:$0xff]
    %v807 = vld [vmem:[%s3 + $0x360] sm:$0xff]
    %v808 = vld [vmem:[%s3 + $0x368] sm:$0xff]
    %v809 = vld [vmem:[%s3 + $0x370] sm:$0xff]
    %v810 = vld [vmem:[%s3 + $0x378] sm:$0xff]
    %v811 = vld [vmem:[%s3 + $0x380] sm:$0xff]
    %v812 = vld [vmem:[%s3 + $0x388] sm:$0xff]
    %v813 = vld [vmem:[%s3 + $0x390] sm:$0xff]
    %v814 = vld [vmem:[%s3 + $0x398] sm:$0xff]
    %v815 = vld [vmem:[%s3 + $0x3a0] sm:$0xff]
    %v816 = vld [vmem:[%s3 + $0x3a8] sm:$0xff]
    %v817 = vld [vmem:[%s3 + $0x3b0] sm:$0xff]
    %v818 = vld [vmem:[%s3 + $0x3b8] sm:$0xff]
    %v819 = vld [vmem:[%s3 + $0x3c0] sm:$0xff]
    %v820 = vld [vmem:[%s3 + $0x3c8] sm:$0xff]
    %v821 = vld [vmem:[%s3 + $0x3d0] sm:$0xff]
    %v822 = vld [vmem:[%s3 + $0x3d8] sm:$0xff]
    %v823 = vld [vmem:[%s3 + $0x3e0] sm:$0xff]
    %v824 = vld [vmem:[%s3 + $0x3e8] sm:$0xff]
    %v825 = vld [vmem:[%s3 + $0x3f0] sm:$0xff]
    %v826 = vld [vmem:[%s3 + $0x3f8] sm:$0xff]
    %v827 = vld [vmem:[%s3 + $0x400] sm:$0xff]
    %v828 = vld [vmem:[%s3 + $0x408] sm:$0xff]
    %v829 = vld [vmem:[%s3 + $0x410] sm:$0xff]
    %v830 = vld [vmem:[%s3 + $0x418] sm:$0xff]
    %v831 = vld [vmem:[%s3 + $0x420] sm:$0xff]
    %v832 = vld [vmem:[%s3 + $0x428] sm:$0xff]
    %v833 = vld [vmem:[%s3 + $0x430] sm:$0xff]
    %v834 = vld [vmem:[%s3 + $0x438] sm:$0xff]
    %v835 = vld [vmem:[%s3 + $0x440] sm:$0xff]
    %v836 = vld [vmem:[%s3 + $0x448] sm:$0xff]
    %v837 = vld [vmem:[%s3 + $0x450] sm:$0xff]
    %v838 = vld [vmem:[%s3 + $0x458] sm:$0xff]
    %v839 = vld [vmem:[%s3 + $0x460] sm:$0xff]
    %v840 = vld [vmem:[%s3 + $0x468] sm:$0xff]
    %v841 = vld [vmem:[%s3 + $0x470] sm:$0xff]
    %v842 = vld [vmem:[%s3 + $0x478] sm:$0xff]
    %v843 = vld [vmem:[%s3 + $0x480] sm:$0xff]
    %v844 = vld [vmem:[%s3 + $0x488] sm:$0xff]
    %v845 = vld [vmem:[%s3 + $0x490] sm:$0xff]
    %v846 = vld [vmem:[%s3 + $0x498] sm:$0xff]
    %v847 = vld [vmem:[%s3 + $0x4a0] sm:$0xff]
    %v848 = vld [vmem:[%s3 + $0x4a8] sm:$0xff]
    %v849 = vld [vmem:[%s3 + $0x4b0] sm:$0xff]
    %v850 = vld [vmem:[%s3 + $0x4b8] sm:$0xff]
    %v851 = vld [vmem:[%s3 + $0x4c0] sm:$0xff]
    %v852 = vld [vmem:[%s3 + $0x4c8] sm:$0xff]
    %v853 = vld [vmem:[%s3 + $0x4d0] sm:$0xff]
    %v854 = vld [vmem:[%s3 + $0x4d8] sm:$0xff]
    %v855 = vld [vmem:[%s3 + $0x4e0] sm:$0xff]
    %v856 = vld [vmem:[%s3 + $0x4e8] sm:$0xff]
    %v857 = vld [vmem:[%s3 + $0x4f0] sm:$0xff]
    %v858 = vld [vmem:[%s3 + $0x4f8] sm:$0xff]
    %v859 = vld [vmem:[%s3 + $0x500] sm:$0xff]
    %v860 = vld [vmem:[%s3 + $0x508] sm:$0xff]
    %v861 = vld [vmem:[%s3 + $0x510] sm:$0xff]
    %v862 = vld [vmem:[%s3 + $0x518] sm:$0xff]
    %v863 = vld [vmem:[%s3 + $0x520] sm:$0xff]
    %v864 = vld [vmem:[%s3 + $0x528] sm:$0xff]
    %v865 = vld [vmem:[%s3 + $0x530] sm:$0xff]
    %v866 = vld [vmem:[%s3 + $0x538] sm:$0xff]
    %v867 = vld [vmem:[%s3 + $0x540] sm:$0xff]
    %v868 = vld [vmem:[%s3 + $0x548] sm:$0xff]
    %v869 = vld [vmem:[%s3 + $0x550] sm:$0xff]
    %v870 = vld [vmem:[%s3 + $0x558] sm:$0xff]
    %v871 = vld [vmem:[%s3 + $0x560] sm:$0xff]
    %v872 = vld [vmem:[%s3 + $0x568] sm:$0xff]
    %v873 = vld [vmem:[%s3 + $0x570] sm:$0xff]
    %v874 = vld [vmem:[%s3 + $0x578] sm:$0xff]
    %v875 = vld [vmem:[%s3 + $0x580] sm:$0xff]
    %v876 = vld [vmem:[%s3 + $0x588] sm:$0xff]
    %v877 = vld [vmem:[%s3 + $0x590] sm:$0xff]
    %v878 = vld [vmem:[%s3 + $0x598] sm:$0xff]
    %v879 = vld [vmem:[%s3 + $0x5a0] sm:$0xff]
    %v880 = vld [vmem:[%s3 + $0x5a8] sm:$0xff]
    %v881 = vld [vmem:[%s3 + $0x5b0] sm:$0xff]
    %v882 = vld [vmem:[%s3 + $0x5b8] sm:$0xff]
    %v883 = vld [vmem:[%s3 + $0x5c0] sm:$0xff]
    %v884 = vld [vmem:[%s3 + $0x5c8] sm:$0xff]
    %v885 = vld [vmem:[%s3 + $0x5d0] sm:$0xff]
    %v886 = vld [vmem:[%s3 + $0x5d8] sm:$0xff]
    %v887 = vld [vmem:[%s3 + $0x5e0] sm:$0xff]
    %v888 = vld [vmem:[%s3 + $0x5e8] sm:$0xff]
    %v889 = vld [vmem:[%s3 + $0x5f0] sm:$0xff]
    %v890 = vld [vmem:[%s3 + $0x5f8] sm:$0xff]
    %v891 = vld [vmem:[%s3 + $0x600] sm:$0xff]
    %v892 = vld [vmem:[%s3 + $0x608] sm:$0xff]
    %v893 = vld [vmem:[%s3 + $0x610] sm:$0xff]
    %v894 = vld [vmem:[%s3 + $0x618] sm:$0xff]
    %v895 = vld [vmem:[%s3 + $0x620] sm:$0xff]
    %v896 = vld [vmem:[%s3 + $0x628] sm:$0xff]
    %v897 = vld [vmem:[%s3 + $0x630] sm:$0xff]
    %v898 = vld [vmem:[%s3 + $0x638] sm:$0xff]
    %v899 = vld [vmem:[%s3 + $0x640] sm:$0xff]
    %v900 = vld [vmem:[%s3 + $0x648] sm:$0xff]
    %v901 = vld [vmem:[%s3 + $0x650] sm:$0xff]
    %v902 = vld [vmem:[%s3 + $0x658] sm:$0xff]
    %v903 = vld [vmem:[%s3 + $0x660] sm:$0xff]
    %v904 = vld [vmem:[%s3 + $0x668] sm:$0xff]
    %v905 = vld [vmem:[%s3 + $0x670] sm:$0xff]
    %v906 = vld [vmem:[%s3 + $0x678] sm:$0xff]
    %v907 = vld [vmem:[%s3 + $0x680] sm:$0xff]
    %v908 = vld [vmem:[%s3 + $0x688] sm:$0xff]
    %v909 = vld [vmem:[%s3 + $0x690] sm:$0xff]
    %v910 = vld [vmem:[%s3 + $0x698] sm:$0xff]
    %v911 = vld [vmem:[%s3 + $0x6a0] sm:$0xff]
    %v912 = vld [vmem:[%s3 + $0x6a8] sm:$0xff]
    %v913 = vld [vmem:[%s3 + $0x6b0] sm:$0xff]
    %v914 = vld [vmem:[%s3 + $0x6b8] sm:$0xff]
    %v915 = vld [vmem:[%s3 + $0x6c0] sm:$0xff]
    %v916 = vld [vmem:[%s3 + $0x6c8] sm:$0xff]
    %v917 = vld [vmem:[%s3 + $0x6d0] sm:$0xff]
    %v918 = vld [vmem:[%s3 + $0x6d8] sm:$0xff]
    %v919 = vld [vmem:[%s3 + $0x6e0] sm:$0xff]
    %v920 = vld [vmem:[%s3 + $0x6e8] sm:$0xff]
    %v921 = vld [vmem:[%s3 + $0x6f0] sm:$0xff]
    %v922 = vld [vmem:[%s3 + $0x6f8] sm:$0xff]
    %v923 = vld [vmem:[%s3 + $0x700] sm:$0xff]
    %v924 = vld [vmem:[%s3 + $0x708] sm:$0xff]
    %v925 = vld [vmem:[%s3 + $0x710] sm:$0xff]
    %v926 = vld [vmem:[%s3 + $0x718] sm:$0xff]
    %v927 = vld [vmem:[%s3 + $0x720] sm:$0xff]
    %v928 = vld [vmem:[%s3 + $0x728] sm:$0xff]
    %v929 = vld [vmem:[%s3 + $0x730] sm:$0xff]
    %v930 = vld [vmem:[%s3 + $0x738] sm:$0xff]
    %v931 = vld [vmem:[%s3 + $0x740] sm:$0xff]
    %v932 = vld [vmem:[%s3 + $0x748] sm:$0xff]
    %v933 = vld [vmem:[%s3 + $0x750] sm:$0xff]
    %v934 = vld [vmem:[%s3 + $0x758] sm:$0xff]
    %v935 = vld [vmem:[%s3 + $0x760] sm:$0xff]
    %v936 = vld [vmem:[%s3 + $0x768] sm:$0xff]
    %v937 = vld [vmem:[%s3 + $0x770] sm:$0xff]
    %v938 = vld [vmem:[%s3 + $0x778] sm:$0xff]
    %v939 = vld [vmem:[%s3 + $0x780] sm:$0xff]
    %v940 = vld [vmem:[%s3 + $0x788] sm:$0xff]
    %v941 = vld [vmem:[%s3 + $0x790] sm:$0xff]
    %v942 = vld [vmem:[%s3 + $0x798] sm:$0xff]
    %v943 = vld [vmem:[%s3 + $0x7a0] sm:$0xff]
    %v944 = vld [vmem:[%s3 + $0x7a8] sm:$0xff]
    %v945 = vld [vmem:[%s3 + $0x7b0] sm:$0xff]
    %v946 = vld [vmem:[%s3 + $0x7b8] sm:$0xff]
    %v947 = vld [vmem:[%s3 + $0x7c0] sm:$0xff]
    %v948 = vld [vmem:[%s3 + $0x7c8] sm:$0xff]
    %v949 = vld [vmem:[%s3 + $0x7d0] sm:$0xff]
    %v950 = vld [vmem:[%s3 + $0x7d8] sm:$0xff]
    %v951 = vld [vmem:[%s3 + $0x7e0] sm:$0xff]
    %v952 = vld [vmem:[%s3 + $0x7e8] sm:$0xff]
    %v953 = vld [vmem:[%s3 + $0x7f0] sm:$0xff]
    %v954 = vld [vmem:[%s3 + $0x7f8] sm:$0xff]
    %v955 = vld [vmem:[%s3 + $0x800] sm:$0xff]
    %v956 = vld [vmem:[%s3 + $0x808] sm:$0xff]
    %v957 = vld [vmem:[%s3 + $0x810] sm:$0xff]
    %v958 = vld [vmem:[%s3 + $0x818] sm:$0xff]
    %v959 = vld [vmem:[%s3 + $0x820] sm:$0xff]
    %v960 = vld [vmem:[%s3 + $0x828] sm:$0xff]
    %v961 = vld [vmem:[%s3 + $0x830] sm:$0xff]
    %v962 = vld [vmem:[%s3 + $0x838] sm:$0xff]
    %v963 = vld [vmem:[%s3 + $0x840] sm:$0xff]
    %v964 = vld [vmem:[%s3 + $0x848] sm:$0xff]
    %v965 = vld [vmem:[%s3 + $0x850] sm:$0xff]
    %v966 = vld [vmem:[%s3 + $0x858] sm:$0xff]
    %v967 = vld [vmem:[%s3 + $0x860] sm:$0xff]
    %v968 = vld [vmem:[%s3 + $0x868] sm:$0xff]
    %v969 = vld [vmem:[%s3 + $0x870] sm:$0xff]
    %v970 = vld [vmem:[%s3 + $0x878] sm:$0xff]
    %v971 = vld [vmem:[%s3 + $0x880] sm:$0xff]
    %v972 = vld [vmem:[%s3 + $0x888] sm:$0xff]
    %v973 = vld [vmem:[%s3 + $0x890] sm:$0xff]
    %v974 = vld [vmem:[%s3 + $0x898] sm:$0xff]
    %v975 = vld [vmem:[%s3 + $0x8a0] sm:$0xff]
    %v976 = vld [vmem:[%s3 + $0x8a8] sm:$0xff]
    %v977 = vld [vmem:[%s3 + $0x8b0] sm:$0xff]
    %v978 = vld [vmem:[%s3 + $0x8b8] sm:$0xff]
    %v979 = vld [vmem:[%s3 + $0x8c0] sm:$0xff]
    %v980 = vld [vmem:[%s3 + $0x8c8] sm:$0xff]
    %v981 = vld [vmem:[%s3 + $0x8d0] sm:$0xff]
    %v982 = vld [vmem:[%s3 + $0x8d8] sm:$0xff]
    %v983 = vld [vmem:[%s3 + $0x8e0] sm:$0xff]
    %v984 = vld [vmem:[%s3 + $0x8e8] sm:$0xff]
    %v985 = vld [vmem:[%s3 + $0x8f0] sm:$0xff]
    %v986 = vld [vmem:[%s3 + $0x8f8] sm:$0xff]
    %v987 = vld [vmem:[%s3 + $0x900] sm:$0xff]
    %v988 = vld [vmem:[%s3 + $0x908] sm:$0xff]
    %v989 = vld [vmem:[%s3 + $0x910] sm:$0xff]
    %v990 = vld [vmem:[%s3 + $0x918] sm:$0xff]
    %v991 = vld [vmem:[%s3 + $0x920] sm:$0xff]
    %v992 = vld [vmem:[%s3 + $0x928] sm:$0xff]
    %v993 = vld [vmem:[%s3 + $0x930] sm:$0xff]
    %v994 = vld [vmem:[%s3 + $0x938] sm:$0xff]
    %v995 = vld [vmem:[%s3 + $0x940] sm:$0xff]
    %v996 = vld [vmem:[%s3 + $0x948] sm:$0xff]
    %v997 = vld [vmem:[%s3 + $0x950] sm:$0xff]
    %v998 = vld [vmem:[%s3 + $0x958] sm:$0xff]
    %v999 = vld [vmem:[%s3 + $0x960] sm:$0xff]
    %v1000 = vld [vmem:[%s3 + $0x968] sm:$0xff]
    %v1001 = vld [vmem:[%s3 + $0x970] sm:$0xff]
    %v1002 = vld [vmem:[%s3 + $0x978] sm:$0xff]
    %v1003 = vld [vmem:[%s3 + $0x980] sm:$0xff]
    %v1004 = vld [vmem:[%s3 + $0x988] sm:$0xff]
    %v1005 = vld [vmem:[%s3 + $0x990] sm:$0xff]
    %v1006 = vld [vmem:[%s3 + $0x998] sm:$0xff]
    %v1007 = vld [vmem:[%s3 + $0x9a0] sm:$0xff]
    %v1008 = vld [vmem:[%s3 + $0x9a8] sm:$0xff]
    %v1009 = vld [vmem:[%s3 + $0x9b0] sm:$0xff]
    %v1010 = vld [vmem:[%s3 + $0x9b8] sm:$0xff]
    %v1011 = vld [vmem:[%s3 + $0x9c0] sm:$0xff]
    %v1012 = vld [vmem:[%s3 + $0x9c8] sm:$0xff]
    %v1013 = vld [vmem:[%s3 + $0x9d0] sm:$0xff]
    %v1014 = vld [vmem:[%s3 + $0x9d8] sm:$0xff]
    %v1015 = vld [vmem:[%s3 + $0x9e0] sm:$0xff]
    %v1016 = vld [vmem:[%s3 + $0x9e8] sm:$0xff]
    %v1017 = vld [vmem:[%s3 + $0x9f0] sm:$0xff]
    %v1018 = vld [vmem:[%s3 + $0x9f8] sm:$0xff]
    %v1019 = vld [vmem:[%s3 + $0xa00] sm:$0xff]
    %v1020 = vld [vmem:[%s3 + $0xa08] sm:$0xff]
    %v1021 = vld [vmem:[%s3 + $0xa10] sm:$0xff]
    %v1022 = vld [vmem:[%s3 + $0xa18] sm:$0xff]
    %v1023 = vld [vmem:[%s3 + $0xa20] sm:$0xff]
    %v1024 = vld [vmem:[%s3 + $0xa28] sm:$0xff]
    %v1025 = vld [vmem:[%s3 + $0xa30] sm:$0xff]
    %v1026 = vld [vmem:[%s3 + $0xa38] sm:$0xff]
    %v1027 = vld [vmem:[%s3 + $0xa40] sm:$0xff]
    %v1028 = vld [vmem:[%s3 + $0xa48] sm:$0xff]
    %v1029 = vld [vmem:[%s3 + $0xa50] sm:$0xff]
    %v1030 = vld [vmem:[%s3 + $0xa58] sm:$0xff]
    %v1031 = vld [vmem:[%s3 + $0xa60] sm:$0xff]
    %v1032 = vld [vmem:[%s3 + $0xa68] sm:$0xff]
    %v1033 = vld [vmem:[%s3 + $0xa70] sm:$0xff]
    %v1034 = vld [vmem:[%s3 + $0xa78] sm:$0xff]
    %v1035 = vld [vmem:[%s3 + $0xa80] sm:$0xff]
    %v1036 = vld [vmem:[%s3 + $0xa88] sm:$0xff]
    %v1037 = vld [vmem:[%s3 + $0xa90] sm:$0xff]
    %v1038 = vld [vmem:[%s3 + $0xa98] sm:$0xff]
    %v1039 = vld [vmem:[%s3 + $0xaa0] sm:$0xff]
    %v1040 = vld [vmem:[%s3 + $0xaa8] sm:$0xff]
    %v1041 = vld [vmem:[%s3 + $0xab0] sm:$0xff]
    %v1042 = vld [vmem:[%s3 + $0xab8] sm:$0xff]
    %v1043 = vld [vmem:[%s3 + $0xac0] sm:$0xff]
    %v1044 = vld [vmem:[%s3 + $0xac8] sm:$0xff]
    %v1045 = vld [vmem:[%s3 + $0xad0] sm:$0xff]
    %v1046 = vld [vmem:[%s3 + $0xad8] sm:$0xff]
    %v1047 = vld [vmem:[%s3 + $0xae0] sm:$0xff]
    %v1048 = vld [vmem:[%s3 + $0xae8] sm:$0xff]
    %v1049 = vld [vmem:[%s3 + $0xaf0] sm:$0xff]
    %v1050 = vld [vmem:[%s3 + $0xaf8] sm:$0xff]
    %v1051 = vld [vmem:[%s3 + $0xb00] sm:$0xff]
    %v1052 = vld [vmem:[%s3 + $0xb08] sm:$0xff]
    %v1053 = vld [vmem:[%s3 + $0xb10] sm:$0xff]
    %v1054 = vld [vmem:[%s3 + $0xb18] sm:$0xff]
    %v1055 = vld [vmem:[%s3 + $0xb20] sm:$0xff]
    %v1056 = vld [vmem:[%s3 + $0xb28] sm:$0xff]
    %v1057 = vld [vmem:[%s3 + $0xb30] sm:$0xff]
    %v1058 = vld [vmem:[%s3 + $0xb38] sm:$0xff]
    %v1059 = vld [vmem:[%s3 + $0xb40] sm:$0xff]
    %v1060 = vld [vmem:[%s3 + $0xb48] sm:$0xff]
    %v1061 = vld [vmem:[%s3 + $0xb50] sm:$0xff]
    %v1062 = vld [vmem:[%s3 + $0xb58] sm:$0xff]
    %v1063 = vld [vmem:[%s3 + $0xb60] sm:$0xff]
    %v1064 = vld [vmem:[%s3 + $0xb68] sm:$0xff]
    %v1065 = vld [vmem:[%s3 + $0xb70] sm:$0xff]
    %v1066 = vld [vmem:[%s3 + $0xb78] sm:$0xff]
    %v1067 = vld [vmem:[%s3 + $0xb80] sm:$0xff]
    %v1068 = vld [vmem:[%s3 + $0xb88] sm:$0xff]
    %v1069 = vld [vmem:[%s3 + $0xb90] sm:$0xff]
    %v1070 = vld [vmem:[%s3 + $0xb98] sm:$0xff]
    %v1071 = vld [vmem:[%s3 + $0xba0] sm:$0xff]
    %v1072 = vld [vmem:[%s3 + $0xba8] sm:$0xff]
    %v1073 = vld [vmem:[%s3 + $0xbb0] sm:$0xff]
    %v1074 = vld [vmem:[%s3 + $0xbb8] sm:$0xff]
    %v1075 = vld [vmem:[%s3 + $0xbc0] sm:$0xff]
    %v1076 = vld [vmem:[%s3 + $0xbc8] sm:$0xff]
    %v1077 = vld [vmem:[%s3 + $0xbd0] sm:$0xff]
    %v1078 = vld [vmem:[%s3 + $0xbd8] sm:$0xff]
    %v1079 = vld [vmem:[%s3 + $0xbe0] sm:$0xff]
    %v1080 = vld [vmem:[%s3 + $0xbe8] sm:$0xff]
    %v1081 = vld [vmem:[%s3 + $0xbf0] sm:$0xff]
    %v1082 = vld [vmem:[%s3 + $0xbf8] sm:$0xff]
    %v1083 = vld [vmem:[%s3 + $0xc00] sm:$0xff]
    %v1084 = vld [vmem:[%s3 + $0xc08] sm:$0xff]
    %v1085 = vld [vmem:[%s3 + $0xc10] sm:$0xff]
    %v1086 = vld [vmem:[%s3 + $0xc18] sm:$0xff]
    %v1087 = vld [vmem:[%s3 + $0xc20] sm:$0xff]
    %v1088 = vld [vmem:[%s3 + $0xc28] sm:$0xff]
    %v1089 = vld [vmem:[%s3 + $0xc30] sm:$0xff]
    %v1090 = vld [vmem:[%s3 + $0xc38] sm:$0xff]
    %v1091 = vld [vmem:[%s3 + $0xc40] sm:$0xff]
    %v1092 = vld [vmem:[%s3 + $0xc48] sm:$0xff]
    %v1093 = vld [vmem:[%s3 + $0xc50] sm:$0xff]
    %v1094 = vld [vmem:[%s3 + $0xc58] sm:$0xff]
    %v1095 = vld [vmem:[%s3 + $0xc60] sm:$0xff]
    %v1096 = vld [vmem:[%s3 + $0xc68] sm:$0xff]
    %v1097 = vld [vmem:[%s3 + $0xc70] sm:$0xff]
    %v1098 = vld [vmem:[%s3 + $0xc78] sm:$0xff]
    %v1099 = vld [vmem:[%s3 + $0xc80] sm:$0xff]
    %v1100 = vld [vmem:[%s3 + $0xc88] sm:$0xff]
    %v1101 = vld [vmem:[%s3 + $0xc90] sm:$0xff]
    %v1102 = vld [vmem:[%s3 + $0xc98] sm:$0xff]
    %v1103 = vld [vmem:[%s3 + $0xca0] sm:$0xff]
    %v1104 = vld [vmem:[%s3 + $0xca8] sm:$0xff]
    %v1105 = vld [vmem:[%s3 + $0xcb0] sm:$0xff]
    %v1106 = vld [vmem:[%s3 + $0xcb8] sm:$0xff]
    %v1107 = vld [vmem:[%s3 + $0xcc0] sm:$0xff]
    %v1108 = vld [vmem:[%s3 + $0xcc8] sm:$0xff]
    %v1109 = vld [vmem:[%s3 + $0xcd0] sm:$0xff]
    %v1110 = vld [vmem:[%s3 + $0xcd8] sm:$0xff]
    %v1111 = vld [vmem:[%s3 + $0xce0] sm:$0xff]
    %v1112 = vld [vmem:[%s3 + $0xce8] sm:$0xff]
    %v1113 = vld [vmem:[%s3 + $0xcf0] sm:$0xff]
    %v1114 = vld [vmem:[%s3 + $0xcf8] sm:$0xff]
    %v1115 = vld [vmem:[%s3 + $0xd00] sm:$0xff]
    %v1116 = vld [vmem:[%s3 + $0xd08] sm:$0xff]
    %v1117 = vld [vmem:[%s3 + $0xd10] sm:$0xff]
    %v1118 = vld [vmem:[%s3 + $0xd18] sm:$0xff]
    %v1119 = vld [vmem:[%s3 + $0xd20] sm:$0xff]
    %v1120 = vld [vmem:[%s3 + $0xd28] sm:$0xff]
    %v1121 = vld [vmem:[%s3 + $0xd30] sm:$0xff]
    %v1122 = vld [vmem:[%s3 + $0xd38] sm:$0xff]
    %v1123 = vld [vmem:[%s3 + $0xd40] sm:$0xff]
    %v1124 = vld [vmem:[%s3 + $0xd48] sm:$0xff]
    %v1125 = vld [vmem:[%s3 + $0xd50] sm:$0xff]
    %v1126 = vld [vmem:[%s3 + $0xd58] sm:$0xff]
    %v1127 = vld [vmem:[%s3 + $0xd60] sm:$0xff]
    %v1128 = vld [vmem:[%s3 + $0xd68] sm:$0xff]
    %v1129 = vld [vmem:[%s3 + $0xd70] sm:$0xff]
    %v1130 = vld [vmem:[%s3 + $0xd78] sm:$0xff]
    %v1131 = vld [vmem:[%s3 + $0xd80] sm:$0xff]
    %v1132 = vld [vmem:[%s3 + $0xd88] sm:$0xff]
    %v1133 = vld [vmem:[%s3 + $0xd90] sm:$0xff]
    %v1134 = vld [vmem:[%s3 + $0xd98] sm:$0xff]
    %v1135 = vld [vmem:[%s3 + $0xda0] sm:$0xff]
    %v1136 = vld [vmem:[%s3 + $0xda8] sm:$0xff]
    %v1137 = vld [vmem:[%s3 + $0xdb0] sm:$0xff]
    %v1138 = vld [vmem:[%s3 + $0xdb8] sm:$0xff]
    %v1139 = vld [vmem:[%s3 + $0xdc0] sm:$0xff]
    %v1140 = vld [vmem:[%s3 + $0xdc8] sm:$0xff]
    %v1141 = vld [vmem:[%s3 + $0xdd0] sm:$0xff]
    %v1142 = vld [vmem:[%s3 + $0xdd8] sm:$0xff]
    %v1143 = vld [vmem:[%s3 + $0xde0] sm:$0xff]
    %v1144 = vld [vmem:[%s3 + $0xde8] sm:$0xff]
    %v1145 = vld [vmem:[%s3 + $0xdf0] sm:$0xff]
    %v1146 = vld [vmem:[%s3 + $0xdf8] sm:$0xff]
    %v1147 = vld [vmem:[%s3 + $0xe00] sm:$0x33]
    %v1148 = vld [vmem:[%s3 + $0xe08] sm:$0x33]
    %v1149 = vld [vmem:[%s3 + $0xe10] sm:$0x33]
    %v1150 = vld [vmem:[%s3 + $0xe18] sm:$0x33]
    %v1603 = vunpack.c.l.b16 %v699
    %v1604 = vunpack.c.h.b16 %v699
    %v1605 = vunpack.c.l.b16 %v700
    %v1606 = vunpack.c.h.b16 %v700
    %v1607 = vunpack.c.l.b16 %v701
    %v1608 = vunpack.c.h.b16 %v701
    %v1609 = vunpack.c.l.b16 %v702
    %v1610 = vunpack.c.h.b16 %v702
    %v1611 = vunpack.c.l.b16 %v703
    %v1612 = vunpack.c.h.b16 %v703
    %v1613 = vunpack.c.l.b16 %v704
    %v1614 = vunpack.c.h.b16 %v704
    %v1615 = vunpack.c.l.b16 %v705
    %v1616 = vunpack.c.h.b16 %v705
    %v1617 = vunpack.c.l.b16 %v706
    %v1618 = vunpack.c.h.b16 %v706
    %v1619 = vunpack.c.l.b16 %v707
    %v1620 = vunpack.c.h.b16 %v707
    %v1621 = vunpack.c.l.b16 %v708
    %v1622 = vunpack.c.h.b16 %v708
    %v1623 = vunpack.c.l.b16 %v709
    %v1624 = vunpack.c.h.b16 %v709
    %v1625 = vunpack.c.l.b16 %v710
    %v1626 = vunpack.c.h.b16 %v710
    %v1627 = vunpack.c.l.b16 %v711
    %v1628 = vunpack.c.h.b16 %v711
    %v1629 = vunpack.c.l.b16 %v712
    %v1630 = vunpack.c.h.b16 %v712
    %v1631 = vunpack.c.l.b16 %v713
    %v1632 = vunpack.c.h.b16 %v713
    %v1633 = vunpack.c.l.b16 %v714
    %v1634 = vunpack.c.h.b16 %v714
    %v1635 = vunpack.c.l.b16 %v715
    %v1636 = vunpack.c.h.b16 %v715
    %v1637 = vunpack.c.l.b16 %v716
    %v1638 = vunpack.c.h.b16 %v716
    %v1639 = vunpack.c.l.b16 %v717
    %v1640 = vunpack.c.h.b16 %v717
    %v1641 = vunpack.c.l.b16 %v718
    %v1642 = vunpack.c.h.b16 %v718
    %v1643 = vunpack.c.l.b16 %v719
    %v1644 = vunpack.c.h.b16 %v719
    %v1645 = vunpack.c.l.b16 %v720
    %v1646 = vunpack.c.h.b16 %v720
    %v1647 = vunpack.c.l.b16 %v721
    %v1648 = vunpack.c.h.b16 %v721
    %v1649 = vunpack.c.l.b16 %v722
    %v1650 = vunpack.c.h.b16 %v722
    %v1651 = vunpack.c.l.b16 %v723
    %v1652 = vunpack.c.h.b16 %v723
    %v1653 = vunpack.c.l.b16 %v724
    %v1654 = vunpack.c.h.b16 %v724
    %v1655 = vunpack.c.l.b16 %v725
    %v1656 = vunpack.c.h.b16 %v725
    %v1657 = vunpack.c.l.b16 %v726
    %v1658 = vunpack.c.h.b16 %v726
    %v1659 = vunpack.c.l.b16 %v727
    %v1660 = vunpack.c.h.b16 %v727
    %v1661 = vunpack.c.l.b16 %v728
    %v1662 = vunpack.c.h.b16 %v728
    %v1663 = vunpack.c.l.b16 %v729
    %v1664 = vunpack.c.h.b16 %v729
    %v1665 = vunpack.c.l.b16 %v730
    %v1666 = vunpack.c.h.b16 %v730
    %v1667 = vunpack.c.l.b16 %v731
    %v1668 = vunpack.c.h.b16 %v731
    %v1669 = vunpack.c.l.b16 %v732
    %v1670 = vunpack.c.h.b16 %v732
    %v1671 = vunpack.c.l.b16 %v733
    %v1672 = vunpack.c.h.b16 %v733
    %v1673 = vunpack.c.l.b16 %v734
    %v1674 = vunpack.c.h.b16 %v734
    %v1675 = vunpack.c.l.b16 %v735
    %v1676 = vunpack.c.h.b16 %v735
    %v1677 = vunpack.c.l.b16 %v736
    %v1678 = vunpack.c.h.b16 %v736
    %v1679 = vunpack.c.l.b16 %v737
    %v1680 = vunpack.c.h.b16 %v737
    %v1681 = vunpack.c.l.b16 %v738
    %v1682 = vunpack.c.h.b16 %v738
    %v1683 = vunpack.c.l.b16 %v739
    %v1684 = vunpack.c.h.b16 %v739
    %v1685 = vunpack.c.l.b16 %v740
    %v1686 = vunpack.c.h.b16 %v740
    %v1687 = vunpack.c.l.b16 %v741
    %v1688 = vunpack.c.h.b16 %v741
    %v1689 = vunpack.c.l.b16 %v742
    %v1690 = vunpack.c.h.b16 %v742
    %v1691 = vunpack.c.l.b16 %v743
    %v1692 = vunpack.c.h.b16 %v743
    %v1693 = vunpack.c.l.b16 %v744
    %v1694 = vunpack.c.h.b16 %v744
    %v1695 = vunpack.c.l.b16 %v745
    %v1696 = vunpack.c.h.b16 %v745
    %v1697 = vunpack.c.l.b16 %v746
    %v1698 = vunpack.c.h.b16 %v746
    %v1699 = vunpack.c.l.b16 %v747
    %v1700 = vunpack.c.h.b16 %v747
    %v1701 = vunpack.c.l.b16 %v748
    %v1702 = vunpack.c.h.b16 %v748
    %v1703 = vunpack.c.l.b16 %v749
    %v1704 = vunpack.c.h.b16 %v749
    %v1705 = vunpack.c.l.b16 %v750
    %v1706 = vunpack.c.h.b16 %v750
    %v1707 = vunpack.c.l.b16 %v751
    %v1708 = vunpack.c.h.b16 %v751
    %v1709 = vunpack.c.l.b16 %v752
    %v1710 = vunpack.c.h.b16 %v752
    %v1711 = vunpack.c.l.b16 %v753
    %v1712 = vunpack.c.h.b16 %v753
    %v1713 = vunpack.c.l.b16 %v754
    %v1714 = vunpack.c.h.b16 %v754
    %v1715 = vunpack.c.l.b16 %v755
    %v1716 = vunpack.c.h.b16 %v755
    %v1717 = vunpack.c.l.b16 %v756
    %v1718 = vunpack.c.h.b16 %v756
    %v1719 = vunpack.c.l.b16 %v757
    %v1720 = vunpack.c.h.b16 %v757
    %v1721 = vunpack.c.l.b16 %v758
    %v1722 = vunpack.c.h.b16 %v758
    %v1723 = vunpack.c.l.b16 %v759
    %v1724 = vunpack.c.h.b16 %v759
    %v1725 = vunpack.c.l.b16 %v760
    %v1726 = vunpack.c.h.b16 %v760
    %v1727 = vunpack.c.l.b16 %v761
    %v1728 = vunpack.c.h.b16 %v761
    %v1729 = vunpack.c.l.b16 %v762
    %v1730 = vunpack.c.h.b16 %v762
    %v1731 = vunpack.c.l.b16 %v763
    %v1732 = vunpack.c.h.b16 %v763
    %v1733 = vunpack.c.l.b16 %v764
    %v1734 = vunpack.c.h.b16 %v764
    %v1735 = vunpack.c.l.b16 %v765
    %v1736 = vunpack.c.h.b16 %v765
    %v1737 = vunpack.c.l.b16 %v766
    %v1738 = vunpack.c.h.b16 %v766
    %v1739 = vunpack.c.l.b16 %v767
    %v1740 = vunpack.c.h.b16 %v767
    %v1741 = vunpack.c.l.b16 %v768
    %v1742 = vunpack.c.h.b16 %v768
    %v1743 = vunpack.c.l.b16 %v769
    %v1744 = vunpack.c.h.b16 %v769
    %v1745 = vunpack.c.l.b16 %v770
    %v1746 = vunpack.c.h.b16 %v770
    %v1747 = vunpack.c.l.b16 %v771
    %v1748 = vunpack.c.h.b16 %v771
    %v1749 = vunpack.c.l.b16 %v772
    %v1750 = vunpack.c.h.b16 %v772
    %v1751 = vunpack.c.l.b16 %v773
    %v1752 = vunpack.c.h.b16 %v773
    %v1753 = vunpack.c.l.b16 %v774
    %v1754 = vunpack.c.h.b16 %v774
    %v1755 = vunpack.c.l.b16 %v775
    %v1756 = vunpack.c.h.b16 %v775
    %v1757 = vunpack.c.l.b16 %v776
    %v1758 = vunpack.c.h.b16 %v776
    %v1759 = vunpack.c.l.b16 %v777
    %v1760 = vunpack.c.h.b16 %v777
    %v1761 = vunpack.c.l.b16 %v778
    %v1762 = vunpack.c.h.b16 %v778
    %v1763 = vunpack.c.l.b16 %v779
    %v1764 = vunpack.c.h.b16 %v779
    %v1765 = vunpack.c.l.b16 %v780
    %v1766 = vunpack.c.h.b16 %v780
    %v1767 = vunpack.c.l.b16 %v781
    %v1768 = vunpack.c.h.b16 %v781
    %v1769 = vunpack.c.l.b16 %v782
    %v1770 = vunpack.c.h.b16 %v782
    %v1771 = vunpack.c.l.b16 %v783
    %v1772 = vunpack.c.h.b16 %v783
    %v1773 = vunpack.c.l.b16 %v784
    %v1774 = vunpack.c.h.b16 %v784
    %v1775 = vunpack.c.l.b16 %v785
    %v1776 = vunpack.c.h.b16 %v785
    %v1777 = vunpack.c.l.b16 %v786
    %v1778 = vunpack.c.h.b16 %v786
    %v1779 = vunpack.c.l.b16 %v787
    %v1780 = vunpack.c.h.b16 %v787
    %v1781 = vunpack.c.l.b16 %v788
    %v1782 = vunpack.c.h.b16 %v788
    %v1783 = vunpack.c.l.b16 %v789
    %v1784 = vunpack.c.h.b16 %v789
    %v1785 = vunpack.c.l.b16 %v790
    %v1786 = vunpack.c.h.b16 %v790
    %v1787 = vunpack.c.l.b16 %v791
    %v1788 = vunpack.c.h.b16 %v791
    %v1789 = vunpack.c.l.b16 %v792
    %v1790 = vunpack.c.h.b16 %v792
    %v1791 = vunpack.c.l.b16 %v793
    %v1792 = vunpack.c.h.b16 %v793
    %v1793 = vunpack.c.l.b16 %v794
    %v1794 = vunpack.c.h.b16 %v794
    %v1795 = vunpack.c.l.b16 %v795
    %v1796 = vunpack.c.h.b16 %v795
    %v1797 = vunpack.c.l.b16 %v796
    %v1798 = vunpack.c.h.b16 %v796
    %v1799 = vunpack.c.l.b16 %v797
    %v1800 = vunpack.c.h.b16 %v797
    %v1801 = vunpack.c.l.b16 %v798
    %v1802 = vunpack.c.h.b16 %v798
    %v1803 = vunpack.c.l.b16 %v799
    %v1804 = vunpack.c.h.b16 %v799
    %v1805 = vunpack.c.l.b16 %v800
    %v1806 = vunpack.c.h.b16 %v800
    %v1807 = vunpack.c.l.b16 %v801
    %v1808 = vunpack.c.h.b16 %v801
    %v1809 = vunpack.c.l.b16 %v802
    %v1810 = vunpack.c.h.b16 %v802
    %v1811 = vunpack.c.l.b16 %v803
    %v1812 = vunpack.c.h.b16 %v803
    %v1813 = vunpack.c.l.b16 %v804
    %v1814 = vunpack.c.h.b16 %v804
    %v1815 = vunpack.c.l.b16 %v805
    %v1816 = vunpack.c.h.b16 %v805
    %v1817 = vunpack.c.l.b16 %v806
    %v1818 = vunpack.c.h.b16 %v806
    %v1819 = vunpack.c.l.b16 %v807
    %v1820 = vunpack.c.h.b16 %v807
    %v1821 = vunpack.c.l.b16 %v808
    %v1822 = vunpack.c.h.b16 %v808
    %v1823 = vunpack.c.l.b16 %v809
    %v1824 = vunpack.c.h.b16 %v809
    %v1825 = vunpack.c.l.b16 %v810
    %v1826 = vunpack.c.h.b16 %v810
    %v1827 = vunpack.c.l.b16 %v811
    %v1828 = vunpack.c.h.b16 %v811
    %v1829 = vunpack.c.l.b16 %v812
    %v1830 = vunpack.c.h.b16 %v812
    %v1831 = vunpack.c.l.b16 %v813
    %v1832 = vunpack.c.h.b16 %v813
    %v1833 = vunpack.c.l.b16 %v814
    %v1834 = vunpack.c.h.b16 %v814
    %v1835 = vunpack.c.l.b16 %v815
    %v1836 = vunpack.c.h.b16 %v815
    %v1837 = vunpack.c.l.b16 %v816
    %v1838 = vunpack.c.h.b16 %v816
    %v1839 = vunpack.c.l.b16 %v817
    %v1840 = vunpack.c.h.b16 %v817
    %v1841 = vunpack.c.l.b16 %v818
    %v1842 = vunpack.c.h.b16 %v818
    %v1843 = vunpack.c.l.b16 %v819
    %v1844 = vunpack.c.h.b16 %v819
    %v1845 = vunpack.c.l.b16 %v820
    %v1846 = vunpack.c.h.b16 %v820
    %v1847 = vunpack.c.l.b16 %v821
    %v1848 = vunpack.c.h.b16 %v821
    %v1849 = vunpack.c.l.b16 %v822
    %v1850 = vunpack.c.h.b16 %v822
    %v1851 = vunpack.c.l.b16 %v823
    %v1852 = vunpack.c.h.b16 %v823
    %v1853 = vunpack.c.l.b16 %v824
    %v1854 = vunpack.c.h.b16 %v824
    %v1855 = vunpack.c.l.b16 %v825
    %v1856 = vunpack.c.h.b16 %v825
    %v1857 = vunpack.c.l.b16 %v826
    %v1858 = vunpack.c.h.b16 %v826
    %v1859 = vunpack.c.l.b16 %v827
    %v1860 = vunpack.c.h.b16 %v827
    %v1861 = vunpack.c.l.b16 %v828
    %v1862 = vunpack.c.h.b16 %v828
    %v1863 = vunpack.c.l.b16 %v829
    %v1864 = vunpack.c.h.b16 %v829
    %v1865 = vunpack.c.l.b16 %v830
    %v1866 = vunpack.c.h.b16 %v830
    %v1867 = vunpack.c.l.b16 %v831
    %v1868 = vunpack.c.h.b16 %v831
    %v1869 = vunpack.c.l.b16 %v832
    %v1870 = vunpack.c.h.b16 %v832
    %v1871 = vunpack.c.l.b16 %v833
    %v1872 = vunpack.c.h.b16 %v833
    %v1873 = vunpack.c.l.b16 %v834
    %v1874 = vunpack.c.h.b16 %v834
    %v1875 = vunpack.c.l.b16 %v835
    %v1876 = vunpack.c.h.b16 %v835
    %v1877 = vunpack.c.l.b16 %v836
    %v1878 = vunpack.c.h.b16 %v836
    %v1879 = vunpack.c.l.b16 %v837
    %v1880 = vunpack.c.h.b16 %v837
    %v1881 = vunpack.c.l.b16 %v838
    %v1882 = vunpack.c.h.b16 %v838
    %v1883 = vunpack.c.l.b16 %v839
    %v1884 = vunpack.c.h.b16 %v839
    %v1885 = vunpack.c.l.b16 %v840
    %v1886 = vunpack.c.h.b16 %v840
    %v1887 = vunpack.c.l.b16 %v841
    %v1888 = vunpack.c.h.b16 %v841
    %v1889 = vunpack.c.l.b16 %v842
    %v1890 = vunpack.c.h.b16 %v842
    %v1891 = vunpack.c.l.b16 %v843
    %v1892 = vunpack.c.h.b16 %v843
    %v1893 = vunpack.c.l.b16 %v844
    %v1894 = vunpack.c.h.b16 %v844
    %v1895 = vunpack.c.l.b16 %v845
    %v1896 = vunpack.c.h.b16 %v845
    %v1897 = vunpack.c.l.b16 %v846
    %v1898 = vunpack.c.h.b16 %v846
    %v1899 = vunpack.c.l.b16 %v847
    %v1900 = vunpack.c.h.b16 %v847
    %v1901 = vunpack.c.l.b16 %v848
    %v1902 = vunpack.c.h.b16 %v848
    %v1903 = vunpack.c.l.b16 %v849
    %v1904 = vunpack.c.h.b16 %v849
    %v1905 = vunpack.c.l.b16 %v850
    %v1906 = vunpack.c.h.b16 %v850
    %v1907 = vunpack.c.l.b16 %v851
    %v1908 = vunpack.c.h.b16 %v851
    %v1909 = vunpack.c.l.b16 %v852
    %v1910 = vunpack.c.h.b16 %v852
    %v1911 = vunpack.c.l.b16 %v853
    %v1912 = vunpack.c.h.b16 %v853
    %v1913 = vunpack.c.l.b16 %v854
    %v1914 = vunpack.c.h.b16 %v854
    %v1915 = vunpack.c.l.b16 %v855
    %v1916 = vunpack.c.h.b16 %v855
    %v1917 = vunpack.c.l.b16 %v856
    %v1918 = vunpack.c.h.b16 %v856
    %v1919 = vunpack.c.l.b16 %v857
    %v1920 = vunpack.c.h.b16 %v857
    %v1921 = vunpack.c.l.b16 %v858
    %v1922 = vunpack.c.h.b16 %v858
    %v1923 = vunpack.c.l.b16 %v859
    %v1924 = vunpack.c.h.b16 %v859
    %v1925 = vunpack.c.l.b16 %v860
    %v1926 = vunpack.c.h.b16 %v860
    %v1927 = vunpack.c.l.b16 %v861
    %v1928 = vunpack.c.h.b16 %v861
    %v1929 = vunpack.c.l.b16 %v862
    %v1930 = vunpack.c.h.b16 %v862
    %v1931 = vunpack.c.l.b16 %v863
    %v1932 = vunpack.c.h.b16 %v863
    %v1933 = vunpack.c.l.b16 %v864
    %v1934 = vunpack.c.h.b16 %v864
    %v1935 = vunpack.c.l.b16 %v865
    %v1936 = vunpack.c.h.b16 %v865
    %v1937 = vunpack.c.l.b16 %v866
    %v1938 = vunpack.c.h.b16 %v866
    %v1939 = vunpack.c.l.b16 %v867
    %v1940 = vunpack.c.h.b16 %v867
    %v1941 = vunpack.c.l.b16 %v868
    %v1942 = vunpack.c.h.b16 %v868
    %v1943 = vunpack.c.l.b16 %v869
    %v1944 = vunpack.c.h.b16 %v869
    %v1945 = vunpack.c.l.b16 %v870
    %v1946 = vunpack.c.h.b16 %v870
    %v1947 = vunpack.c.l.b16 %v871
    %v1948 = vunpack.c.h.b16 %v871
    %v1949 = vunpack.c.l.b16 %v872
    %v1950 = vunpack.c.h.b16 %v872
    %v1951 = vunpack.c.l.b16 %v873
    %v1952 = vunpack.c.h.b16 %v873
    %v1953 = vunpack.c.l.b16 %v874
    %v1954 = vunpack.c.h.b16 %v874
    %v1955 = vunpack.c.l.b16 %v875
    %v1956 = vunpack.c.h.b16 %v875
    %v1957 = vunpack.c.l.b16 %v876
    %v1958 = vunpack.c.h.b16 %v876
    %v1959 = vunpack.c.l.b16 %v877
    %v1960 = vunpack.c.h.b16 %v877
    %v1961 = vunpack.c.l.b16 %v878
    %v1962 = vunpack.c.h.b16 %v878
    %v1963 = vunpack.c.l.b16 %v879
    %v1964 = vunpack.c.h.b16 %v879
    %v1965 = vunpack.c.l.b16 %v880
    %v1966 = vunpack.c.h.b16 %v880
    %v1967 = vunpack.c.l.b16 %v881
    %v1968 = vunpack.c.h.b16 %v881
    %v1969 = vunpack.c.l.b16 %v882
    %v1970 = vunpack.c.h.b16 %v882
    %v1971 = vunpack.c.l.b16 %v883
    %v1972 = vunpack.c.h.b16 %v883
    %v1973 = vunpack.c.l.b16 %v884
    %v1974 = vunpack.c.h.b16 %v884
    %v1975 = vunpack.c.l.b16 %v885
    %v1976 = vunpack.c.h.b16 %v885
    %v1977 = vunpack.c.l.b16 %v886
    %v1978 = vunpack.c.h.b16 %v886
    %v1979 = vunpack.c.l.b16 %v887
    %v1980 = vunpack.c.h.b16 %v887
    %v1981 = vunpack.c.l.b16 %v888
    %v1982 = vunpack.c.h.b16 %v888
    %v1983 = vunpack.c.l.b16 %v889
    %v1984 = vunpack.c.h.b16 %v889
    %v1985 = vunpack.c.l.b16 %v890
    %v1986 = vunpack.c.h.b16 %v890
    %v1987 = vunpack.c.l.b16 %v891
    %v1988 = vunpack.c.h.b16 %v891
    %v1989 = vunpack.c.l.b16 %v892
    %v1990 = vunpack.c.h.b16 %v892
    %v1991 = vunpack.c.l.b16 %v893
    %v1992 = vunpack.c.h.b16 %v893
    %v1993 = vunpack.c.l.b16 %v894
    %v1994 = vunpack.c.h.b16 %v894
    %v1995 = vunpack.c.l.b16 %v895
    %v1996 = vunpack.c.h.b16 %v895
    %v1997 = vunpack.c.l.b16 %v896
    %v1998 = vunpack.c.h.b16 %v896
    %v1999 = vunpack.c.l.b16 %v897
    %v2000 = vunpack.c.h.b16 %v897
    %v2001 = vunpack.c.l.b16 %v898
    %v2002 = vunpack.c.h.b16 %v898
    %v2003 = vunpack.c.l.b16 %v899
    %v2004 = vunpack.c.h.b16 %v899
    %v2005 = vunpack.c.l.b16 %v900
    %v2006 = vunpack.c.h.b16 %v900
    %v2007 = vunpack.c.l.b16 %v901
    %v2008 = vunpack.c.h.b16 %v901
    %v2009 = vunpack.c.l.b16 %v902
    %v2010 = vunpack.c.h.b16 %v902
    %v2011 = vunpack.c.l.b16 %v903
    %v2012 = vunpack.c.h.b16 %v903
    %v2013 = vunpack.c.l.b16 %v904
    %v2014 = vunpack.c.h.b16 %v904
    %v2015 = vunpack.c.l.b16 %v905
    %v2016 = vunpack.c.h.b16 %v905
    %v2017 = vunpack.c.l.b16 %v906
    %v2018 = vunpack.c.h.b16 %v906
    %v2019 = vunpack.c.l.b16 %v907
    %v2020 = vunpack.c.h.b16 %v907
    %v2021 = vunpack.c.l.b16 %v908
    %v2022 = vunpack.c.h.b16 %v908
    %v2023 = vunpack.c.l.b16 %v909
    %v2024 = vunpack.c.h.b16 %v909
    %v2025 = vunpack.c.l.b16 %v910
    %v2026 = vunpack.c.h.b16 %v910
    %v2027 = vunpack.c.l.b16 %v911
    %v2028 = vunpack.c.h.b16 %v911
    %v2029 = vunpack.c.l.b16 %v912
    %v2030 = vunpack.c.h.b16 %v912
    %v2031 = vunpack.c.l.b16 %v913
    %v2032 = vunpack.c.h.b16 %v913
    %v2033 = vunpack.c.l.b16 %v914
    %v2034 = vunpack.c.h.b16 %v914
    %v2035 = vunpack.c.l.b16 %v915
    %v2036 = vunpack.c.h.b16 %v915
    %v2037 = vunpack.c.l.b16 %v916
    %v2038 = vunpack.c.h.b16 %v916
    %v2039 = vunpack.c.l.b16 %v917
    %v2040 = vunpack.c.h.b16 %v917
    %v2041 = vunpack.c.l.b16 %v918
    %v2042 = vunpack.c.h.b16 %v918
    %v2043 = vunpack.c.l.b16 %v919
    %v2044 = vunpack.c.h.b16 %v919
    %v2045 = vunpack.c.l.b16 %v920
    %v2046 = vunpack.c.h.b16 %v920
    %v2047 = vunpack.c.l.b16 %v921
    %v2048 = vunpack.c.h.b16 %v921
    %v2049 = vunpack.c.l.b16 %v922
    %v2050 = vunpack.c.h.b16 %v922
    %v2051 = vunpack.c.l.b16 %v923
    %v2052 = vunpack.c.h.b16 %v923
    %v2053 = vunpack.c.l.b16 %v924
    %v2054 = vunpack.c.h.b16 %v924
    %v2055 = vunpack.c.l.b16 %v925
    %v2056 = vunpack.c.h.b16 %v925
    %v2057 = vunpack.c.l.b16 %v926
    %v2058 = vunpack.c.h.b16 %v926
    %v2059 = vunpack.c.l.b16 %v927
    %v2060 = vunpack.c.h.b16 %v927
    %v2061 = vunpack.c.l.b16 %v928
    %v2062 = vunpack.c.h.b16 %v928
    %v2063 = vunpack.c.l.b16 %v929
    %v2064 = vunpack.c.h.b16 %v929
    %v2065 = vunpack.c.l.b16 %v930
    %v2066 = vunpack.c.h.b16 %v930
    %v2067 = vunpack.c.l.b16 %v931
    %v2068 = vunpack.c.h.b16 %v931
    %v2069 = vunpack.c.l.b16 %v932
    %v2070 = vunpack.c.h.b16 %v932
    %v2071 = vunpack.c.l.b16 %v933
    %v2072 = vunpack.c.h.b16 %v933
    %v2073 = vunpack.c.l.b16 %v934
    %v2074 = vunpack.c.h.b16 %v934
    %v2075 = vunpack.c.l.b16 %v935
    %v2076 = vunpack.c.h.b16 %v935
    %v2077 = vunpack.c.l.b16 %v936
    %v2078 = vunpack.c.h.b16 %v936
    %v2079 = vunpack.c.l.b16 %v937
    %v2080 = vunpack.c.h.b16 %v937
    %v2081 = vunpack.c.l.b16 %v938
    %v2082 = vunpack.c.h.b16 %v938
    %v2083 = vunpack.c.l.b16 %v939
    %v2084 = vunpack.c.h.b16 %v939
    %v2085 = vunpack.c.l.b16 %v940
    %v2086 = vunpack.c.h.b16 %v940
    %v2087 = vunpack.c.l.b16 %v941
    %v2088 = vunpack.c.h.b16 %v941
    %v2089 = vunpack.c.l.b16 %v942
    %v2090 = vunpack.c.h.b16 %v942
    %v2091 = vunpack.c.l.b16 %v943
    %v2092 = vunpack.c.h.b16 %v943
    %v2093 = vunpack.c.l.b16 %v944
    %v2094 = vunpack.c.h.b16 %v944
    %v2095 = vunpack.c.l.b16 %v945
    %v2096 = vunpack.c.h.b16 %v945
    %v2097 = vunpack.c.l.b16 %v946
    %v2098 = vunpack.c.h.b16 %v946
    %v2099 = vunpack.c.l.b16 %v947
    %v2100 = vunpack.c.h.b16 %v947
    %v2101 = vunpack.c.l.b16 %v948
    %v2102 = vunpack.c.h.b16 %v948
    %v2103 = vunpack.c.l.b16 %v949
    %v2104 = vunpack.c.h.b16 %v949
    %v2105 = vunpack.c.l.b16 %v950
    %v2106 = vunpack.c.h.b16 %v950
    %v2107 = vunpack.c.l.b16 %v951
    %v2108 = vunpack.c.h.b16 %v951
    %v2109 = vunpack.c.l.b16 %v952
    %v2110 = vunpack.c.h.b16 %v952
    %v2111 = vunpack.c.l.b16 %v953
    %v2112 = vunpack.c.h.b16 %v953
    %v2113 = vunpack.c.l.b16 %v954
    %v2114 = vunpack.c.h.b16 %v954
    %v2115 = vunpack.c.l.b16 %v955
    %v2116 = vunpack.c.h.b16 %v955
    %v2117 = vunpack.c.l.b16 %v956
    %v2118 = vunpack.c.h.b16 %v956
    %v2119 = vunpack.c.l.b16 %v957
    %v2120 = vunpack.c.h.b16 %v957
    %v2121 = vunpack.c.l.b16 %v958
    %v2122 = vunpack.c.h.b16 %v958
    %v2123 = vunpack.c.l.b16 %v959
    %v2124 = vunpack.c.h.b16 %v959
    %v2125 = vunpack.c.l.b16 %v960
    %v2126 = vunpack.c.h.b16 %v960
    %v2127 = vunpack.c.l.b16 %v961
    %v2128 = vunpack.c.h.b16 %v961
    %v2129 = vunpack.c.l.b16 %v962
    %v2130 = vunpack.c.h.b16 %v962
    %v2131 = vunpack.c.l.b16 %v963
    %v2132 = vunpack.c.h.b16 %v963
    %v2133 = vunpack.c.l.b16 %v964
    %v2134 = vunpack.c.h.b16 %v964
    %v2135 = vunpack.c.l.b16 %v965
    %v2136 = vunpack.c.h.b16 %v965
    %v2137 = vunpack.c.l.b16 %v966
    %v2138 = vunpack.c.h.b16 %v966
    %v2139 = vunpack.c.l.b16 %v967
    %v2140 = vunpack.c.h.b16 %v967
    %v2141 = vunpack.c.l.b16 %v968
    %v2142 = vunpack.c.h.b16 %v968
    %v2143 = vunpack.c.l.b16 %v969
    %v2144 = vunpack.c.h.b16 %v969
    %v2145 = vunpack.c.l.b16 %v970
    %v2146 = vunpack.c.h.b16 %v970
    %v2147 = vunpack.c.l.b16 %v971
    %v2148 = vunpack.c.h.b16 %v971
    %v2149 = vunpack.c.l.b16 %v972
    %v2150 = vunpack.c.h.b16 %v972
    %v2151 = vunpack.c.l.b16 %v973
    %v2152 = vunpack.c.h.b16 %v973
    %v2153 = vunpack.c.l.b16 %v974
    %v2154 = vunpack.c.h.b16 %v974
    %v2155 = vunpack.c.l.b16 %v975
    %v2156 = vunpack.c.h.b16 %v975
    %v2157 = vunpack.c.l.b16 %v976
    %v2158 = vunpack.c.h.b16 %v976
    %v2159 = vunpack.c.l.b16 %v977
    %v2160 = vunpack.c.h.b16 %v977
    %v2161 = vunpack.c.l.b16 %v978
    %v2162 = vunpack.c.h.b16 %v978
    %v2163 = vunpack.c.l.b16 %v979
    %v2164 = vunpack.c.h.b16 %v979
    %v2165 = vunpack.c.l.b16 %v980
    %v2166 = vunpack.c.h.b16 %v980
    %v2167 = vunpack.c.l.b16 %v981
    %v2168 = vunpack.c.h.b16 %v981
    %v2169 = vunpack.c.l.b16 %v982
    %v2170 = vunpack.c.h.b16 %v982
    %v2171 = vunpack.c.l.b16 %v983
    %v2172 = vunpack.c.h.b16 %v983
    %v2173 = vunpack.c.l.b16 %v984
    %v2174 = vunpack.c.h.b16 %v984
    %v2175 = vunpack.c.l.b16 %v985
    %v2176 = vunpack.c.h.b16 %v985
    %v2177 = vunpack.c.l.b16 %v986
    %v2178 = vunpack.c.h.b16 %v986
    %v2179 = vunpack.c.l.b16 %v987
    %v2180 = vunpack.c.h.b16 %v987
    %v2181 = vunpack.c.l.b16 %v988
    %v2182 = vunpack.c.h.b16 %v988
    %v2183 = vunpack.c.l.b16 %v989
    %v2184 = vunpack.c.h.b16 %v989
    %v2185 = vunpack.c.l.b16 %v990
    %v2186 = vunpack.c.h.b16 %v990
    %v2187 = vunpack.c.l.b16 %v991
    %v2188 = vunpack.c.h.b16 %v991
    %v2189 = vunpack.c.l.b16 %v992
    %v2190 = vunpack.c.h.b16 %v992
    %v2191 = vunpack.c.l.b16 %v993
    %v2192 = vunpack.c.h.b16 %v993
    %v2193 = vunpack.c.l.b16 %v994
    %v2194 = vunpack.c.h.b16 %v994
    %v2195 = vunpack.c.l.b16 %v995
    %v2196 = vunpack.c.h.b16 %v995
    %v2197 = vunpack.c.l.b16 %v996
    %v2198 = vunpack.c.h.b16 %v996
    %v2199 = vunpack.c.l.b16 %v997
    %v2200 = vunpack.c.h.b16 %v997
    %v2201 = vunpack.c.l.b16 %v998
    %v2202 = vunpack.c.h.b16 %v998
    %v2203 = vunpack.c.l.b16 %v999
    %v2204 = vunpack.c.h.b16 %v999
    %v2205 = vunpack.c.l.b16 %v1000
    %v2206 = vunpack.c.h.b16 %v1000
    %v2207 = vunpack.c.l.b16 %v1001
    %v2208 = vunpack.c.h.b16 %v1001
    %v2209 = vunpack.c.l.b16 %v1002
    %v2210 = vunpack.c.h.b16 %v1002
    %v2211 = vunpack.c.l.b16 %v1003
    %v2212 = vunpack.c.h.b16 %v1003
    %v2213 = vunpack.c.l.b16 %v1004
    %v2214 = vunpack.c.h.b16 %v1004
    %v2215 = vunpack.c.l.b16 %v1005
    %v2216 = vunpack.c.h.b16 %v1005
    %v2217 = vunpack.c.l.b16 %v1006
    %v2218 = vunpack.c.h.b16 %v1006
    %v2219 = vunpack.c.l.b16 %v1007
    %v2220 = vunpack.c.h.b16 %v1007
    %v2221 = vunpack.c.l.b16 %v1008
    %v2222 = vunpack.c.h.b16 %v1008
    %v2223 = vunpack.c.l.b16 %v1009
    %v2224 = vunpack.c.h.b16 %v1009
    %v2225 = vunpack.c.l.b16 %v1010
    %v2226 = vunpack.c.h.b16 %v1010
    %v2227 = vunpack.c.l.b16 %v1011
    %v2228 = vunpack.c.h.b16 %v1011
    %v2229 = vunpack.c.l.b16 %v1012
    %v2230 = vunpack.c.h.b16 %v1012
    %v2231 = vunpack.c.l.b16 %v1013
    %v2232 = vunpack.c.h.b16 %v1013
    %v2233 = vunpack.c.l.b16 %v1014
    %v2234 = vunpack.c.h.b16 %v1014
    %v2235 = vunpack.c.l.b16 %v1015
    %v2236 = vunpack.c.h.b16 %v1015
    %v2237 = vunpack.c.l.b16 %v1016
    %v2238 = vunpack.c.h.b16 %v1016
    %v2239 = vunpack.c.l.b16 %v1017
    %v2240 = vunpack.c.h.b16 %v1017
    %v2241 = vunpack.c.l.b16 %v1018
    %v2242 = vunpack.c.h.b16 %v1018
    %v2243 = vunpack.c.l.b16 %v1019
    %v2244 = vunpack.c.h.b16 %v1019
    %v2245 = vunpack.c.l.b16 %v1020
    %v2246 = vunpack.c.h.b16 %v1020
    %v2247 = vunpack.c.l.b16 %v1021
    %v2248 = vunpack.c.h.b16 %v1021
    %v2249 = vunpack.c.l.b16 %v1022
    %v2250 = vunpack.c.h.b16 %v1022
    %v2251 = vunpack.c.l.b16 %v1023
    %v2252 = vunpack.c.h.b16 %v1023
    %v2253 = vunpack.c.l.b16 %v1024
    %v2254 = vunpack.c.h.b16 %v1024
    %v2255 = vunpack.c.l.b16 %v1025
    %v2256 = vunpack.c.h.b16 %v1025
    %v2257 = vunpack.c.l.b16 %v1026
    %v2258 = vunpack.c.h.b16 %v1026
    %v2259 = vunpack.c.l.b16 %v1027
    %v2260 = vunpack.c.h.b16 %v1027
    %v2261 = vunpack.c.l.b16 %v1028
    %v2262 = vunpack.c.h.b16 %v1028
    %v2263 = vunpack.c.l.b16 %v1029
    %v2264 = vunpack.c.h.b16 %v1029
    %v2265 = vunpack.c.l.b16 %v1030
    %v2266 = vunpack.c.h.b16 %v1030
    %v2267 = vunpack.c.l.b16 %v1031
    %v2268 = vunpack.c.h.b16 %v1031
    %v2269 = vunpack.c.l.b16 %v1032
    %v2270 = vunpack.c.h.b16 %v1032
    %v2271 = vunpack.c.l.b16 %v1033
    %v2272 = vunpack.c.h.b16 %v1033
    %v2273 = vunpack.c.l.b16 %v1034
    %v2274 = vunpack.c.h.b16 %v1034
    %v2275 = vunpack.c.l.b16 %v1035
    %v2276 = vunpack.c.h.b16 %v1035
    %v2277 = vunpack.c.l.b16 %v1036
    %v2278 = vunpack.c.h.b16 %v1036
    %v2279 = vunpack.c.l.b16 %v1037
    %v2280 = vunpack.c.h.b16 %v1037
    %v2281 = vunpack.c.l.b16 %v1038
    %v2282 = vunpack.c.h.b16 %v1038
    %v2283 = vunpack.c.l.b16 %v1039
    %v2284 = vunpack.c.h.b16 %v1039
    %v2285 = vunpack.c.l.b16 %v1040
    %v2286 = vunpack.c.h.b16 %v1040
    %v2287 = vunpack.c.l.b16 %v1041
    %v2288 = vunpack.c.h.b16 %v1041
    %v2289 = vunpack.c.l.b16 %v1042
    %v2290 = vunpack.c.h.b16 %v1042
    %v2291 = vunpack.c.l.b16 %v1043
    %v2292 = vunpack.c.h.b16 %v1043
    %v2293 = vunpack.c.l.b16 %v1044
    %v2294 = vunpack.c.h.b16 %v1044
    %v2295 = vunpack.c.l.b16 %v1045
    %v2296 = vunpack.c.h.b16 %v1045
    %v2297 = vunpack.c.l.b16 %v1046
    %v2298 = vunpack.c.h.b16 %v1046
    %v2299 = vunpack.c.l.b16 %v1047
    %v2300 = vunpack.c.h.b16 %v1047
    %v2301 = vunpack.c.l.b16 %v1048
    %v2302 = vunpack.c.h.b16 %v1048
    %v2303 = vunpack.c.l.b16 %v1049
    %v2304 = vunpack.c.h.b16 %v1049
    %v2305 = vunpack.c.l.b16 %v1050
    %v2306 = vunpack.c.h.b16 %v1050
    %v2307 = vunpack.c.l.b16 %v1051
    %v2308 = vunpack.c.h.b16 %v1051
    %v2309 = vunpack.c.l.b16 %v1052
    %v2310 = vunpack.c.h.b16 %v1052
    %v2311 = vunpack.c.l.b16 %v1053
    %v2312 = vunpack.c.h.b16 %v1053
    %v2313 = vunpack.c.l.b16 %v1054
    %v2314 = vunpack.c.h.b16 %v1054
    %v2315 = vunpack.c.l.b16 %v1055
    %v2316 = vunpack.c.h.b16 %v1055
    %v2317 = vunpack.c.l.b16 %v1056
    %v2318 = vunpack.c.h.b16 %v1056
    %v2319 = vunpack.c.l.b16 %v1057
    %v2320 = vunpack.c.h.b16 %v1057
    %v2321 = vunpack.c.l.b16 %v1058
    %v2322 = vunpack.c.h.b16 %v1058
    %v2323 = vunpack.c.l.b16 %v1059
    %v2324 = vunpack.c.h.b16 %v1059
    %v2325 = vunpack.c.l.b16 %v1060
    %v2326 = vunpack.c.h.b16 %v1060
    %v2327 = vunpack.c.l.b16 %v1061
    %v2328 = vunpack.c.h.b16 %v1061
    %v2329 = vunpack.c.l.b16 %v1062
    %v2330 = vunpack.c.h.b16 %v1062
    %v2331 = vunpack.c.l.b16 %v1063
    %v2332 = vunpack.c.h.b16 %v1063
    %v2333 = vunpack.c.l.b16 %v1064
    %v2334 = vunpack.c.h.b16 %v1064
    %v2335 = vunpack.c.l.b16 %v1065
    %v2336 = vunpack.c.h.b16 %v1065
    %v2337 = vunpack.c.l.b16 %v1066
    %v2338 = vunpack.c.h.b16 %v1066
    %v2339 = vunpack.c.l.b16 %v1067
    %v2340 = vunpack.c.h.b16 %v1067
    %v2341 = vunpack.c.l.b16 %v1068
    %v2342 = vunpack.c.h.b16 %v1068
    %v2343 = vunpack.c.l.b16 %v1069
    %v2344 = vunpack.c.h.b16 %v1069
    %v2345 = vunpack.c.l.b16 %v1070
    %v2346 = vunpack.c.h.b16 %v1070
    %v2347 = vunpack.c.l.b16 %v1071
    %v2348 = vunpack.c.h.b16 %v1071
    %v2349 = vunpack.c.l.b16 %v1072
    %v2350 = vunpack.c.h.b16 %v1072
    %v2351 = vunpack.c.l.b16 %v1073
    %v2352 = vunpack.c.h.b16 %v1073
    %v2353 = vunpack.c.l.b16 %v1074
    %v2354 = vunpack.c.h.b16 %v1074
    %v2355 = vunpack.c.l.b16 %v1075
    %v2356 = vunpack.c.h.b16 %v1075
    %v2357 = vunpack.c.l.b16 %v1076
    %v2358 = vunpack.c.h.b16 %v1076
    %v2359 = vunpack.c.l.b16 %v1077
    %v2360 = vunpack.c.h.b16 %v1077
    %v2361 = vunpack.c.l.b16 %v1078
    %v2362 = vunpack.c.h.b16 %v1078
    %v2363 = vunpack.c.l.b16 %v1079
    %v2364 = vunpack.c.h.b16 %v1079
    %v2365 = vunpack.c.l.b16 %v1080
    %v2366 = vunpack.c.h.b16 %v1080
    %v2367 = vunpack.c.l.b16 %v1081
    %v2368 = vunpack.c.h.b16 %v1081
    %v2369 = vunpack.c.l.b16 %v1082
    %v2370 = vunpack.c.h.b16 %v1082
    %v2371 = vunpack.c.l.b16 %v1083
    %v2372 = vunpack.c.h.b16 %v1083
    %v2373 = vunpack.c.l.b16 %v1084
    %v2374 = vunpack.c.h.b16 %v1084
    %v2375 = vunpack.c.l.b16 %v1085
    %v2376 = vunpack.c.h.b16 %v1085
    %v2377 = vunpack.c.l.b16 %v1086
    %v2378 = vunpack.c.h.b16 %v1086
    %v2379 = vunpack.c.l.b16 %v1087
    %v2380 = vunpack.c.h.b16 %v1087
    %v2381 = vunpack.c.l.b16 %v1088
    %v2382 = vunpack.c.h.b16 %v1088
    %v2383 = vunpack.c.l.b16 %v1089
    %v2384 = vunpack.c.h.b16 %v1089
    %v2385 = vunpack.c.l.b16 %v1090
    %v2386 = vunpack.c.h.b16 %v1090
    %v2387 = vunpack.c.l.b16 %v1091
    %v2388 = vunpack.c.h.b16 %v1091
    %v2389 = vunpack.c.l.b16 %v1092
    %v2390 = vunpack.c.h.b16 %v1092
    %v2391 = vunpack.c.l.b16 %v1093
    %v2392 = vunpack.c.h.b16 %v1093
    %v2393 = vunpack.c.l.b16 %v1094
    %v2394 = vunpack.c.h.b16 %v1094
    %v2395 = vunpack.c.l.b16 %v1095
    %v2396 = vunpack.c.h.b16 %v1095
    %v2397 = vunpack.c.l.b16 %v1096
    %v2398 = vunpack.c.h.b16 %v1096
    %v2399 = vunpack.c.l.b16 %v1097
    %v2400 = vunpack.c.h.b16 %v1097
    %v2401 = vunpack.c.l.b16 %v1098
    %v2402 = vunpack.c.h.b16 %v1098
    %v2403 = vunpack.c.l.b16 %v1099
    %v2404 = vunpack.c.h.b16 %v1099
    %v2405 = vunpack.c.l.b16 %v1100
    %v2406 = vunpack.c.h.b16 %v1100
    %v2407 = vunpack.c.l.b16 %v1101
    %v2408 = vunpack.c.h.b16 %v1101
    %v2409 = vunpack.c.l.b16 %v1102
    %v2410 = vunpack.c.h.b16 %v1102
    %v2411 = vunpack.c.l.b16 %v1103
    %v2412 = vunpack.c.h.b16 %v1103
    %v2413 = vunpack.c.l.b16 %v1104
    %v2414 = vunpack.c.h.b16 %v1104
    %v2415 = vunpack.c.l.b16 %v1105
    %v2416 = vunpack.c.h.b16 %v1105
    %v2417 = vunpack.c.l.b16 %v1106
    %v2418 = vunpack.c.h.b16 %v1106
    %v2419 = vunpack.c.l.b16 %v1107
    %v2420 = vunpack.c.h.b16 %v1107
    %v2421 = vunpack.c.l.b16 %v1108
    %v2422 = vunpack.c.h.b16 %v1108
    %v2423 = vunpack.c.l.b16 %v1109
    %v2424 = vunpack.c.h.b16 %v1109
    %v2425 = vunpack.c.l.b16 %v1110
    %v2426 = vunpack.c.h.b16 %v1110
    %v2427 = vunpack.c.l.b16 %v1111
    %v2428 = vunpack.c.h.b16 %v1111
    %v2429 = vunpack.c.l.b16 %v1112
    %v2430 = vunpack.c.h.b16 %v1112
    %v2431 = vunpack.c.l.b16 %v1113
    %v2432 = vunpack.c.h.b16 %v1113
    %v2433 = vunpack.c.l.b16 %v1114
    %v2434 = vunpack.c.h.b16 %v1114
    %v2435 = vunpack.c.l.b16 %v1115
    %v2436 = vunpack.c.h.b16 %v1115
    %v2437 = vunpack.c.l.b16 %v1116
    %v2438 = vunpack.c.h.b16 %v1116
    %v2439 = vunpack.c.l.b16 %v1117
    %v2440 = vunpack.c.h.b16 %v1117
    %v2441 = vunpack.c.l.b16 %v1118
    %v2442 = vunpack.c.h.b16 %v1118
    %v2443 = vunpack.c.l.b16 %v1119
    %v2444 = vunpack.c.h.b16 %v1119
    %v2445 = vunpack.c.l.b16 %v1120
    %v2446 = vunpack.c.h.b16 %v1120
    %v2447 = vunpack.c.l.b16 %v1121
    %v2448 = vunpack.c.h.b16 %v1121
    %v2449 = vunpack.c.l.b16 %v1122
    %v2450 = vunpack.c.h.b16 %v1122
    %v2451 = vunpack.c.l.b16 %v1123
    %v2452 = vunpack.c.h.b16 %v1123
    %v2453 = vunpack.c.l.b16 %v1124
    %v2454 = vunpack.c.h.b16 %v1124
    %v2455 = vunpack.c.l.b16 %v1125
    %v2456 = vunpack.c.h.b16 %v1125
    %v2457 = vunpack.c.l.b16 %v1126
    %v2458 = vunpack.c.h.b16 %v1126
    %v2459 = vunpack.c.l.b16 %v1127
    %v2460 = vunpack.c.h.b16 %v1127
    %v2461 = vunpack.c.l.b16 %v1128
    %v2462 = vunpack.c.h.b16 %v1128
    %v2463 = vunpack.c.l.b16 %v1129
    %v2464 = vunpack.c.h.b16 %v1129
    %v2465 = vunpack.c.l.b16 %v1130
    %v2466 = vunpack.c.h.b16 %v1130
    %v2467 = vunpack.c.l.b16 %v1131
    %v2468 = vunpack.c.h.b16 %v1131
    %v2469 = vunpack.c.l.b16 %v1132
    %v2470 = vunpack.c.h.b16 %v1132
    %v2471 = vunpack.c.l.b16 %v1133
    %v2472 = vunpack.c.h.b16 %v1133
    %v2473 = vunpack.c.l.b16 %v1134
    %v2474 = vunpack.c.h.b16 %v1134
    %v2475 = vunpack.c.l.b16 %v1135
    %v2476 = vunpack.c.h.b16 %v1135
    %v2477 = vunpack.c.l.b16 %v1136
    %v2478 = vunpack.c.h.b16 %v1136
    %v2479 = vunpack.c.l.b16 %v1137
    %v2480 = vunpack.c.h.b16 %v1137
    %v2481 = vunpack.c.l.b16 %v1138
    %v2482 = vunpack.c.h.b16 %v1138
    %v2483 = vunpack.c.l.b16 %v1139
    %v2484 = vunpack.c.h.b16 %v1139
    %v2485 = vunpack.c.l.b16 %v1140
    %v2486 = vunpack.c.h.b16 %v1140
    %v2487 = vunpack.c.l.b16 %v1141
    %v2488 = vunpack.c.h.b16 %v1141
    %v2489 = vunpack.c.l.b16 %v1142
    %v2490 = vunpack.c.h.b16 %v1142
    %v2491 = vunpack.c.l.b16 %v1143
    %v2492 = vunpack.c.h.b16 %v1143
    %v2493 = vunpack.c.l.b16 %v1144
    %v2494 = vunpack.c.h.b16 %v1144
    %v2495 = vunpack.c.l.b16 %v1145
    %v2496 = vunpack.c.h.b16 %v1145
    %v2497 = vunpack.c.l.b16 %v1146
    %v2498 = vunpack.c.h.b16 %v1146
    %v2499 = vunpack.c.l.b16 %v1147
    %v2500 = vunpack.c.h.b16 %v1147
    %v2501 = vunpack.c.l.b16 %v1148
    %v2502 = vunpack.c.h.b16 %v1148
    %v2503 = vunpack.c.l.b16 %v1149
    %v2504 = vunpack.c.h.b16 %v1149
    %v2505 = vunpack.c.l.b16 %v1150
    %v2506 = vunpack.c.h.b16 %v1150
    %v2507 = vpack.c.b16 %v1611, %v1603
    %v2508 = vpack.c.b16 %v1612, %v1604
    %v2509 = vpack.c.b16 %v1613, %v1605
    %v2510 = vpack.c.b16 %v1614, %v1606
    %v2511 = vpack.c.b16 %v1615, %v1607
    %v2512 = vpack.c.b16 %v1616, %v1608
    %v2513 = vpack.c.b16 %v1617, %v1609
    %v2514 = vpack.c.b16 %v1618, %v1610
    %v2515 = vpack.c.b16 %v1627, %v1619
    %v2516 = vpack.c.b16 %v1628, %v1620
    %v2517 = vpack.c.b16 %v1629, %v1621
    %v2518 = vpack.c.b16 %v1630, %v1622
    %v2519 = vpack.c.b16 %v1631, %v1623
    %v2520 = vpack.c.b16 %v1632, %v1624
    %v2521 = vpack.c.b16 %v1633, %v1625
    %v2522 = vpack.c.b16 %v1634, %v1626
    %v2523 = vpack.c.b16 %v1643, %v1635
    %v2524 = vpack.c.b16 %v1644, %v1636
    %v2525 = vpack.c.b16 %v1645, %v1637
    %v2526 = vpack.c.b16 %v1646, %v1638
    %v2527 = vpack.c.b16 %v1647, %v1639
    %v2528 = vpack.c.b16 %v1648, %v1640
    %v2529 = vpack.c.b16 %v1649, %v1641
    %v2530 = vpack.c.b16 %v1650, %v1642
    %v2531 = vpack.c.b16 %v1659, %v1651
    %v2532 = vpack.c.b16 %v1660, %v1652
    %v2533 = vpack.c.b16 %v1661, %v1653
    %v2534 = vpack.c.b16 %v1662, %v1654
    %v2535 = vpack.c.b16 %v1663, %v1655
    %v2536 = vpack.c.b16 %v1664, %v1656
    %v2537 = vpack.c.b16 %v1665, %v1657
    %v2538 = vpack.c.b16 %v1666, %v1658
    %v2539 = vpack.c.b16 %v1675, %v1667
    %v2540 = vpack.c.b16 %v1676, %v1668
    %v2541 = vpack.c.b16 %v1677, %v1669
    %v2542 = vpack.c.b16 %v1678, %v1670
    %v2543 = vpack.c.b16 %v1679, %v1671
    %v2544 = vpack.c.b16 %v1680, %v1672
    %v2545 = vpack.c.b16 %v1681, %v1673
    %v2546 = vpack.c.b16 %v1682, %v1674
    %v2547 = vpack.c.b16 %v1691, %v1683
    %v2548 = vpack.c.b16 %v1692, %v1684
    %v2549 = vpack.c.b16 %v1693, %v1685
    %v2550 = vpack.c.b16 %v1694, %v1686
    %v2551 = vpack.c.b16 %v1695, %v1687
    %v2552 = vpack.c.b16 %v1696, %v1688
    %v2553 = vpack.c.b16 %v1697, %v1689
    %v2554 = vpack.c.b16 %v1698, %v1690
    %v2555 = vpack.c.b16 %v1707, %v1699
    %v2556 = vpack.c.b16 %v1708, %v1700
    %v2557 = vpack.c.b16 %v1709, %v1701
    %v2558 = vpack.c.b16 %v1710, %v1702
    %v2559 = vpack.c.b16 %v1711, %v1703
    %v2560 = vpack.c.b16 %v1712, %v1704
    %v2561 = vpack.c.b16 %v1713, %v1705
    %v2562 = vpack.c.b16 %v1714, %v1706
    %v2563 = vpack.c.b16 %v1723, %v1715
    %v2564 = vpack.c.b16 %v1724, %v1716
    %v2565 = vpack.c.b16 %v1725, %v1717
    %v2566 = vpack.c.b16 %v1726, %v1718
    %v2567 = vpack.c.b16 %v1727, %v1719
    %v2568 = vpack.c.b16 %v1728, %v1720
    %v2569 = vpack.c.b16 %v1729, %v1721
    %v2570 = vpack.c.b16 %v1730, %v1722
    %v2571 = vpack.c.b16 %v1739, %v1731
    %v2572 = vpack.c.b16 %v1740, %v1732
    %v2573 = vpack.c.b16 %v1741, %v1733
    %v2574 = vpack.c.b16 %v1742, %v1734
    %v2575 = vpack.c.b16 %v1743, %v1735
    %v2576 = vpack.c.b16 %v1744, %v1736
    %v2577 = vpack.c.b16 %v1745, %v1737
    %v2578 = vpack.c.b16 %v1746, %v1738
    %v2579 = vpack.c.b16 %v1755, %v1747
    %v2580 = vpack.c.b16 %v1756, %v1748
    %v2581 = vpack.c.b16 %v1757, %v1749
    %v2582 = vpack.c.b16 %v1758, %v1750
    %v2583 = vpack.c.b16 %v1759, %v1751
    %v2584 = vpack.c.b16 %v1760, %v1752
    %v2585 = vpack.c.b16 %v1761, %v1753
    %v2586 = vpack.c.b16 %v1762, %v1754
    %v2587 = vpack.c.b16 %v1771, %v1763
    %v2588 = vpack.c.b16 %v1772, %v1764
    %v2589 = vpack.c.b16 %v1773, %v1765
    %v2590 = vpack.c.b16 %v1774, %v1766
    %v2591 = vpack.c.b16 %v1775, %v1767
    %v2592 = vpack.c.b16 %v1776, %v1768
    %v2593 = vpack.c.b16 %v1777, %v1769
    %v2594 = vpack.c.b16 %v1778, %v1770
    %v2595 = vpack.c.b16 %v1787, %v1779
    %v2596 = vpack.c.b16 %v1788, %v1780
    %v2597 = vpack.c.b16 %v1789, %v1781
    %v2598 = vpack.c.b16 %v1790, %v1782
    %v2599 = vpack.c.b16 %v1791, %v1783
    %v2600 = vpack.c.b16 %v1792, %v1784
    %v2601 = vpack.c.b16 %v1793, %v1785
    %v2602 = vpack.c.b16 %v1794, %v1786
    %v2603 = vpack.c.b16 %v1803, %v1795
    %v2604 = vpack.c.b16 %v1804, %v1796
    %v2605 = vpack.c.b16 %v1805, %v1797
    %v2606 = vpack.c.b16 %v1806, %v1798
    %v2607 = vpack.c.b16 %v1807, %v1799
    %v2608 = vpack.c.b16 %v1808, %v1800
    %v2609 = vpack.c.b16 %v1809, %v1801
    %v2610 = vpack.c.b16 %v1810, %v1802
    %v2611 = vpack.c.b16 %v1819, %v1811
    %v2612 = vpack.c.b16 %v1820, %v1812
    %v2613 = vpack.c.b16 %v1821, %v1813
    %v2614 = vpack.c.b16 %v1822, %v1814
    %v2615 = vpack.c.b16 %v1823, %v1815
    %v2616 = vpack.c.b16 %v1824, %v1816
    %v2617 = vpack.c.b16 %v1825, %v1817
    %v2618 = vpack.c.b16 %v1826, %v1818
    %v2619 = vpack.c.b16 %v1835, %v1827
    %v2620 = vpack.c.b16 %v1836, %v1828
    %v2621 = vpack.c.b16 %v1837, %v1829
    %v2622 = vpack.c.b16 %v1838, %v1830
    %v2623 = vpack.c.b16 %v1839, %v1831
    %v2624 = vpack.c.b16 %v1840, %v1832
    %v2625 = vpack.c.b16 %v1841, %v1833
    %v2626 = vpack.c.b16 %v1842, %v1834
    %v2627 = vpack.c.b16 %v1851, %v1843
    %v2628 = vpack.c.b16 %v1852, %v1844
    %v2629 = vpack.c.b16 %v1853, %v1845
    %v2630 = vpack.c.b16 %v1854, %v1846
    %v2631 = vpack.c.b16 %v1855, %v1847
    %v2632 = vpack.c.b16 %v1856, %v1848
    %v2633 = vpack.c.b16 %v1857, %v1849
    %v2634 = vpack.c.b16 %v1858, %v1850
    %v2635 = vpack.c.b16 %v1867, %v1859
    %v2636 = vpack.c.b16 %v1868, %v1860
    %v2637 = vpack.c.b16 %v1869, %v1861
    %v2638 = vpack.c.b16 %v1870, %v1862
    %v2639 = vpack.c.b16 %v1871, %v1863
    %v2640 = vpack.c.b16 %v1872, %v1864
    %v2641 = vpack.c.b16 %v1873, %v1865
    %v2642 = vpack.c.b16 %v1874, %v1866
    %v2643 = vpack.c.b16 %v1883, %v1875
    %v2644 = vpack.c.b16 %v1884, %v1876
    %v2645 = vpack.c.b16 %v1885, %v1877
    %v2646 = vpack.c.b16 %v1886, %v1878
    %v2647 = vpack.c.b16 %v1887, %v1879
    %v2648 = vpack.c.b16 %v1888, %v1880
    %v2649 = vpack.c.b16 %v1889, %v1881
    %v2650 = vpack.c.b16 %v1890, %v1882
    %v2651 = vpack.c.b16 %v1899, %v1891
    %v2652 = vpack.c.b16 %v1900, %v1892
    %v2653 = vpack.c.b16 %v1901, %v1893
    %v2654 = vpack.c.b16 %v1902, %v1894
    %v2655 = vpack.c.b16 %v1903, %v1895
    %v2656 = vpack.c.b16 %v1904, %v1896
    %v2657 = vpack.c.b16 %v1905, %v1897
    %v2658 = vpack.c.b16 %v1906, %v1898
    %v2659 = vpack.c.b16 %v1915, %v1907
    %v2660 = vpack.c.b16 %v1916, %v1908
    %v2661 = vpack.c.b16 %v1917, %v1909
    %v2662 = vpack.c.b16 %v1918, %v1910
    %v2663 = vpack.c.b16 %v1919, %v1911
    %v2664 = vpack.c.b16 %v1920, %v1912
    %v2665 = vpack.c.b16 %v1921, %v1913
    %v2666 = vpack.c.b16 %v1922, %v1914
    %v2667 = vpack.c.b16 %v1931, %v1923
    %v2668 = vpack.c.b16 %v1932, %v1924
    %v2669 = vpack.c.b16 %v1933, %v1925
    %v2670 = vpack.c.b16 %v1934, %v1926
    %v2671 = vpack.c.b16 %v1935, %v1927
    %v2672 = vpack.c.b16 %v1936, %v1928
    %v2673 = vpack.c.b16 %v1937, %v1929
    %v2674 = vpack.c.b16 %v1938, %v1930
    %v2675 = vpack.c.b16 %v1947, %v1939
    %v2676 = vpack.c.b16 %v1948, %v1940
    %v2677 = vpack.c.b16 %v1949, %v1941
    %v2678 = vpack.c.b16 %v1950, %v1942
    %v2679 = vpack.c.b16 %v1951, %v1943
    %v2680 = vpack.c.b16 %v1952, %v1944
    %v2681 = vpack.c.b16 %v1953, %v1945
    %v2682 = vpack.c.b16 %v1954, %v1946
    %v2683 = vpack.c.b16 %v1963, %v1955
    %v2684 = vpack.c.b16 %v1964, %v1956
    %v2685 = vpack.c.b16 %v1965, %v1957
    %v2686 = vpack.c.b16 %v1966, %v1958
    %v2687 = vpack.c.b16 %v1967, %v1959
    %v2688 = vpack.c.b16 %v1968, %v1960
    %v2689 = vpack.c.b16 %v1969, %v1961
    %v2690 = vpack.c.b16 %v1970, %v1962
    %v2691 = vpack.c.b16 %v1979, %v1971
    %v2692 = vpack.c.b16 %v1980, %v1972
    %v2693 = vpack.c.b16 %v1981, %v1973
    %v2694 = vpack.c.b16 %v1982, %v1974
    %v2695 = vpack.c.b16 %v1983, %v1975
    %v2696 = vpack.c.b16 %v1984, %v1976
    %v2697 = vpack.c.b16 %v1985, %v1977
    %v2698 = vpack.c.b16 %v1986, %v1978
    %v2699 = vpack.c.b16 %v1995, %v1987
    %v2700 = vpack.c.b16 %v1996, %v1988
    %v2701 = vpack.c.b16 %v1997, %v1989
    %v2702 = vpack.c.b16 %v1998, %v1990
    %v2703 = vpack.c.b16 %v1999, %v1991
    %v2704 = vpack.c.b16 %v2000, %v1992
    %v2705 = vpack.c.b16 %v2001, %v1993
    %v2706 = vpack.c.b16 %v2002, %v1994
    %v2707 = vpack.c.b16 %v2011, %v2003
    %v2708 = vpack.c.b16 %v2012, %v2004
    %v2709 = vpack.c.b16 %v2013, %v2005
    %v2710 = vpack.c.b16 %v2014, %v2006
    %v2711 = vpack.c.b16 %v2015, %v2007
    %v2712 = vpack.c.b16 %v2016, %v2008
    %v2713 = vpack.c.b16 %v2017, %v2009
    %v2714 = vpack.c.b16 %v2018, %v2010
    %v2715 = vpack.c.b16 %v2027, %v2019
    %v2716 = vpack.c.b16 %v2028, %v2020
    %v2717 = vpack.c.b16 %v2029, %v2021
    %v2718 = vpack.c.b16 %v2030, %v2022
    %v2719 = vpack.c.b16 %v2031, %v2023
    %v2720 = vpack.c.b16 %v2032, %v2024
    %v2721 = vpack.c.b16 %v2033, %v2025
    %v2722 = vpack.c.b16 %v2034, %v2026
    %v2723 = vpack.c.b16 %v2043, %v2035
    %v2724 = vpack.c.b16 %v2044, %v2036
    %v2725 = vpack.c.b16 %v2045, %v2037
    %v2726 = vpack.c.b16 %v2046, %v2038
    %v2727 = vpack.c.b16 %v2047, %v2039
    %v2728 = vpack.c.b16 %v2048, %v2040
    %v2729 = vpack.c.b16 %v2049, %v2041
    %v2730 = vpack.c.b16 %v2050, %v2042
    %v2731 = vpack.c.b16 %v2059, %v2051
    %v2732 = vpack.c.b16 %v2060, %v2052
    %v2733 = vpack.c.b16 %v2061, %v2053
    %v2734 = vpack.c.b16 %v2062, %v2054
    %v2735 = vpack.c.b16 %v2063, %v2055
    %v2736 = vpack.c.b16 %v2064, %v2056
    %v2737 = vpack.c.b16 %v2065, %v2057
    %v2738 = vpack.c.b16 %v2066, %v2058
    %v2739 = vpack.c.b16 %v2075, %v2067
    %v2740 = vpack.c.b16 %v2076, %v2068
    %v2741 = vpack.c.b16 %v2077, %v2069
    %v2742 = vpack.c.b16 %v2078, %v2070
    %v2743 = vpack.c.b16 %v2079, %v2071
    %v2744 = vpack.c.b16 %v2080, %v2072
    %v2745 = vpack.c.b16 %v2081, %v2073
    %v2746 = vpack.c.b16 %v2082, %v2074
    %v2747 = vpack.c.b16 %v2091, %v2083
    %v2748 = vpack.c.b16 %v2092, %v2084
    %v2749 = vpack.c.b16 %v2093, %v2085
    %v2750 = vpack.c.b16 %v2094, %v2086
    %v2751 = vpack.c.b16 %v2095, %v2087
    %v2752 = vpack.c.b16 %v2096, %v2088
    %v2753 = vpack.c.b16 %v2097, %v2089
    %v2754 = vpack.c.b16 %v2098, %v2090
    %v2755 = vpack.c.b16 %v2107, %v2099
    %v2756 = vpack.c.b16 %v2108, %v2100
    %v2757 = vpack.c.b16 %v2109, %v2101
    %v2758 = vpack.c.b16 %v2110, %v2102
    %v2759 = vpack.c.b16 %v2111, %v2103
    %v2760 = vpack.c.b16 %v2112, %v2104
    %v2761 = vpack.c.b16 %v2113, %v2105
    %v2762 = vpack.c.b16 %v2114, %v2106
    %v2763 = vpack.c.b16 %v2123, %v2115
    %v2764 = vpack.c.b16 %v2124, %v2116
    %v2765 = vpack.c.b16 %v2125, %v2117
    %v2766 = vpack.c.b16 %v2126, %v2118
    %v2767 = vpack.c.b16 %v2127, %v2119
    %v2768 = vpack.c.b16 %v2128, %v2120
    %v2769 = vpack.c.b16 %v2129, %v2121
    %v2770 = vpack.c.b16 %v2130, %v2122
    %v2771 = vpack.c.b16 %v2139, %v2131
    %v2772 = vpack.c.b16 %v2140, %v2132
    %v2773 = vpack.c.b16 %v2141, %v2133
    %v2774 = vpack.c.b16 %v2142, %v2134
    %v2775 = vpack.c.b16 %v2143, %v2135
    %v2776 = vpack.c.b16 %v2144, %v2136
    %v2777 = vpack.c.b16 %v2145, %v2137
    %v2778 = vpack.c.b16 %v2146, %v2138
    %v2779 = vpack.c.b16 %v2155, %v2147
    %v2780 = vpack.c.b16 %v2156, %v2148
    %v2781 = vpack.c.b16 %v2157, %v2149
    %v2782 = vpack.c.b16 %v2158, %v2150
    %v2783 = vpack.c.b16 %v2159, %v2151
    %v2784 = vpack.c.b16 %v2160, %v2152
    %v2785 = vpack.c.b16 %v2161, %v2153
    %v2786 = vpack.c.b16 %v2162, %v2154
    %v2787 = vpack.c.b16 %v2171, %v2163
    %v2788 = vpack.c.b16 %v2172, %v2164
    %v2789 = vpack.c.b16 %v2173, %v2165
    %v2790 = vpack.c.b16 %v2174, %v2166
    %v2791 = vpack.c.b16 %v2175, %v2167
    %v2792 = vpack.c.b16 %v2176, %v2168
    %v2793 = vpack.c.b16 %v2177, %v2169
    %v2794 = vpack.c.b16 %v2178, %v2170
    %v2795 = vpack.c.b16 %v2187, %v2179
    %v2796 = vpack.c.b16 %v2188, %v2180
    %v2797 = vpack.c.b16 %v2189, %v2181
    %v2798 = vpack.c.b16 %v2190, %v2182
    %v2799 = vpack.c.b16 %v2191, %v2183
    %v2800 = vpack.c.b16 %v2192, %v2184
    %v2801 = vpack.c.b16 %v2193, %v2185
    %v2802 = vpack.c.b16 %v2194, %v2186
    %v2803 = vpack.c.b16 %v2203, %v2195
    %v2804 = vpack.c.b16 %v2204, %v2196
    %v2805 = vpack.c.b16 %v2205, %v2197
    %v2806 = vpack.c.b16 %v2206, %v2198
    %v2807 = vpack.c.b16 %v2207, %v2199
    %v2808 = vpack.c.b16 %v2208, %v2200
    %v2809 = vpack.c.b16 %v2209, %v2201
    %v2810 = vpack.c.b16 %v2210, %v2202
    %v2811 = vpack.c.b16 %v2219, %v2211
    %v2812 = vpack.c.b16 %v2220, %v2212
    %v2813 = vpack.c.b16 %v2221, %v2213
    %v2814 = vpack.c.b16 %v2222, %v2214
    %v2815 = vpack.c.b16 %v2223, %v2215
    %v2816 = vpack.c.b16 %v2224, %v2216
    %v2817 = vpack.c.b16 %v2225, %v2217
    %v2818 = vpack.c.b16 %v2226, %v2218
    %v2819 = vpack.c.b16 %v2235, %v2227
    %v2820 = vpack.c.b16 %v2236, %v2228
    %v2821 = vpack.c.b16 %v2237, %v2229
    %v2822 = vpack.c.b16 %v2238, %v2230
    %v2823 = vpack.c.b16 %v2239, %v2231
    %v2824 = vpack.c.b16 %v2240, %v2232
    %v2825 = vpack.c.b16 %v2241, %v2233
    %v2826 = vpack.c.b16 %v2242, %v2234
    %v2827 = vpack.c.b16 %v2251, %v2243
    %v2828 = vpack.c.b16 %v2252, %v2244
    %v2829 = vpack.c.b16 %v2253, %v2245
    %v2830 = vpack.c.b16 %v2254, %v2246
    %v2831 = vpack.c.b16 %v2255, %v2247
    %v2832 = vpack.c.b16 %v2256, %v2248
    %v2833 = vpack.c.b16 %v2257, %v2249
    %v2834 = vpack.c.b16 %v2258, %v2250
    %v2835 = vpack.c.b16 %v2267, %v2259
    %v2836 = vpack.c.b16 %v2268, %v2260
    %v2837 = vpack.c.b16 %v2269, %v2261
    %v2838 = vpack.c.b16 %v2270, %v2262
    %v2839 = vpack.c.b16 %v2271, %v2263
    %v2840 = vpack.c.b16 %v2272, %v2264
    %v2841 = vpack.c.b16 %v2273, %v2265
    %v2842 = vpack.c.b16 %v2274, %v2266
    %v2843 = vpack.c.b16 %v2283, %v2275
    %v2844 = vpack.c.b16 %v2284, %v2276
    %v2845 = vpack.c.b16 %v2285, %v2277
    %v2846 = vpack.c.b16 %v2286, %v2278
    %v2847 = vpack.c.b16 %v2287, %v2279
    %v2848 = vpack.c.b16 %v2288, %v2280
    %v2849 = vpack.c.b16 %v2289, %v2281
    %v2850 = vpack.c.b16 %v2290, %v2282
    %v2851 = vpack.c.b16 %v2299, %v2291
    %v2852 = vpack.c.b16 %v2300, %v2292
    %v2853 = vpack.c.b16 %v2301, %v2293
    %v2854 = vpack.c.b16 %v2302, %v2294
    %v2855 = vpack.c.b16 %v2303, %v2295
    %v2856 = vpack.c.b16 %v2304, %v2296
    %v2857 = vpack.c.b16 %v2305, %v2297
    %v2858 = vpack.c.b16 %v2306, %v2298
    %v2859 = vpack.c.b16 %v2315, %v2307
    %v2860 = vpack.c.b16 %v2316, %v2308
    %v2861 = vpack.c.b16 %v2317, %v2309
    %v2862 = vpack.c.b16 %v2318, %v2310
    %v2863 = vpack.c.b16 %v2319, %v2311
    %v2864 = vpack.c.b16 %v2320, %v2312
    %v2865 = vpack.c.b16 %v2321, %v2313
    %v2866 = vpack.c.b16 %v2322, %v2314
    %v2867 = vpack.c.b16 %v2331, %v2323
    %v2868 = vpack.c.b16 %v2332, %v2324
    %v2869 = vpack.c.b16 %v2333, %v2325
    %v2870 = vpack.c.b16 %v2334, %v2326
    %v2871 = vpack.c.b16 %v2335, %v2327
    %v2872 = vpack.c.b16 %v2336, %v2328
    %v2873 = vpack.c.b16 %v2337, %v2329
    %v2874 = vpack.c.b16 %v2338, %v2330
    %v2875 = vpack.c.b16 %v2347, %v2339
    %v2876 = vpack.c.b16 %v2348, %v2340
    %v2877 = vpack.c.b16 %v2349, %v2341
    %v2878 = vpack.c.b16 %v2350, %v2342
    %v2879 = vpack.c.b16 %v2351, %v2343
    %v2880 = vpack.c.b16 %v2352, %v2344
    %v2881 = vpack.c.b16 %v2353, %v2345
    %v2882 = vpack.c.b16 %v2354, %v2346
    %v2883 = vpack.c.b16 %v2363, %v2355
    %v2884 = vpack.c.b16 %v2364, %v2356
    %v2885 = vpack.c.b16 %v2365, %v2357
    %v2886 = vpack.c.b16 %v2366, %v2358
    %v2887 = vpack.c.b16 %v2367, %v2359
    %v2888 = vpack.c.b16 %v2368, %v2360
    %v2889 = vpack.c.b16 %v2369, %v2361
    %v2890 = vpack.c.b16 %v2370, %v2362
    %v2891 = vpack.c.b16 %v2379, %v2371
    %v2892 = vpack.c.b16 %v2380, %v2372
    %v2893 = vpack.c.b16 %v2381, %v2373
    %v2894 = vpack.c.b16 %v2382, %v2374
    %v2895 = vpack.c.b16 %v2383, %v2375
    %v2896 = vpack.c.b16 %v2384, %v2376
    %v2897 = vpack.c.b16 %v2385, %v2377
    %v2898 = vpack.c.b16 %v2386, %v2378
    %v2899 = vpack.c.b16 %v2395, %v2387
    %v2900 = vpack.c.b16 %v2396, %v2388
    %v2901 = vpack.c.b16 %v2397, %v2389
    %v2902 = vpack.c.b16 %v2398, %v2390
    %v2903 = vpack.c.b16 %v2399, %v2391
    %v2904 = vpack.c.b16 %v2400, %v2392
    %v2905 = vpack.c.b16 %v2401, %v2393
    %v2906 = vpack.c.b16 %v2402, %v2394
    %v2907 = vpack.c.b16 %v2411, %v2403
    %v2908 = vpack.c.b16 %v2412, %v2404
    %v2909 = vpack.c.b16 %v2413, %v2405
    %v2910 = vpack.c.b16 %v2414, %v2406
    %v2911 = vpack.c.b16 %v2415, %v2407
    %v2912 = vpack.c.b16 %v2416, %v2408
    %v2913 = vpack.c.b16 %v2417, %v2409
    %v2914 = vpack.c.b16 %v2418, %v2410
    %v2915 = vpack.c.b16 %v2427, %v2419
    %v2916 = vpack.c.b16 %v2428, %v2420
    %v2917 = vpack.c.b16 %v2429, %v2421
    %v2918 = vpack.c.b16 %v2430, %v2422
    %v2919 = vpack.c.b16 %v2431, %v2423
    %v2920 = vpack.c.b16 %v2432, %v2424
    %v2921 = vpack.c.b16 %v2433, %v2425
    %v2922 = vpack.c.b16 %v2434, %v2426
    %v2923 = vpack.c.b16 %v2443, %v2435
    %v2924 = vpack.c.b16 %v2444, %v2436
    %v2925 = vpack.c.b16 %v2445, %v2437
    %v2926 = vpack.c.b16 %v2446, %v2438
    %v2927 = vpack.c.b16 %v2447, %v2439
    %v2928 = vpack.c.b16 %v2448, %v2440
    %v2929 = vpack.c.b16 %v2449, %v2441
    %v2930 = vpack.c.b16 %v2450, %v2442
    %v2931 = vpack.c.b16 %v2459, %v2451
    %v2932 = vpack.c.b16 %v2460, %v2452
    %v2933 = vpack.c.b16 %v2461, %v2453
    %v2934 = vpack.c.b16 %v2462, %v2454
    %v2935 = vpack.c.b16 %v2463, %v2455
    %v2936 = vpack.c.b16 %v2464, %v2456
    %v2937 = vpack.c.b16 %v2465, %v2457
    %v2938 = vpack.c.b16 %v2466, %v2458
    %v2939 = vpack.c.b16 %v2475, %v2467
    %v2940 = vpack.c.b16 %v2476, %v2468
    %v2941 = vpack.c.b16 %v2477, %v2469
    %v2942 = vpack.c.b16 %v2478, %v2470
    %v2943 = vpack.c.b16 %v2479, %v2471
    %v2944 = vpack.c.b16 %v2480, %v2472
    %v2945 = vpack.c.b16 %v2481, %v2473
    %v2946 = vpack.c.b16 %v2482, %v2474
    %v2947 = vpack.c.b16 %v2491, %v2483
    %v2948 = vpack.c.b16 %v2492, %v2484
    %v2949 = vpack.c.b16 %v2493, %v2485
    %v2950 = vpack.c.b16 %v2494, %v2486
    %v2951 = vpack.c.b16 %v2495, %v2487
    %v2952 = vpack.c.b16 %v2496, %v2488
    %v2953 = vpack.c.b16 %v2497, %v2489
    %v2954 = vpack.c.b16 %v2498, %v2490
    %v2955 = vpack.c.b16 %v2499, %v2499
    %v2956 = vpack.c.b16 %v2500, %v2500
    %v2957 = vpack.c.b16 %v2501, %v2501
    %v2958 = vpack.c.b16 %v2502, %v2502
    %v2959 = vpack.c.b16 %v2503, %v2503
    %v2960 = vpack.c.b16 %v2504, %v2504
    %v2961 = vpack.c.b16 %v2505, %v2505
    %v2962 = vpack.c.b16 %v2506, %v2506
    %vm3411 = vcmask 31744
    %v3413 = vsel %vm3411, %v698, 0
    %vm3415 = vcmask 1041408
    %v3417 = vsel %vm3415, %v2955, 0
    %v3420 = vsel %vm3415, %v2956, 0
    %v3423 = vsel %vm3415, %v2957, 0
    %v3426 = vsel %vm3415, %v2958, 0
    %v3429 = vsel %vm3415, %v2959, 0
    %v3432 = vsel %vm3415, %v2960, 0
    %v3435 = vsel %vm3415, %v2961, 0
    %v3438 = vsel %vm3415, %v2962, 0
    %3440 = vmatprep.subr.bf16.mxu0 %v2508
    %3441 = vmatpush1.bf16.msra.mxu0 %v2507
    %3442 = vmatprep.subr.bf16.mxu0 %v2516
    %3443 = vmatpush1.bf16.msra.mxu0 %v2515
    %3444 = vmatprep.subr.bf16.mxu0 %v2524
    %3445 = vmatpush1.bf16.msra.mxu0 %v2523
    %3446 = vmatprep.subr.bf16.mxu0 %v2532
    %3447 = vmatpush1.bf16.msra.mxu0 %v2531
    %3448 = vmatprep.subr.bf16.mxu0 %v2540
    %3449 = vmatpush1.bf16.msra.mxu0 %v2539
    %3450 = vmatprep.subr.bf16.mxu0 %v2548
    %3451 = vmatpush1.bf16.msra.mxu0 %v2547
    %3452 = vmatprep.subr.bf16.mxu0 %v2556
    %3453 = vmatpush1.bf16.msra.mxu0 %v2555
    %3454 = vmatprep.subr.bf16.mxu0 %v2564
    %3455 = vmatpush1.bf16.msra.mxu0 %v2563
    %3456 = vmatprep.subr.bf16.mxu0 %v2572
    %3457 = vmatpush1.bf16.msra.mxu0 %v2571
    %3458 = vmatprep.subr.bf16.mxu0 %v2580
    %3459 = vmatpush1.bf16.msra.mxu0 %v2579
    %3460 = vmatprep.subr.bf16.mxu0 %v2588
    %3461 = vmatpush1.bf16.msra.mxu0 %v2587
    %3462 = vmatprep.subr.bf16.mxu0 %v2596
    %3463 = vmatpush1.bf16.msra.mxu0 %v2595
    %3464 = vmatprep.subr.bf16.mxu0 %v2604
    %3465 = vmatpush1.bf16.msra.mxu0 %v2603
    %3466 = vmatprep.subr.bf16.mxu0 %v2612
    %3467 = vmatpush1.bf16.msra.mxu0 %v2611
    %3468 = vmatprep.subr.bf16.mxu0 %v2620
    %3469 = vmatpush1.bf16.msra.mxu0 %v2619
    %3470 = vmatprep.subr.bf16.mxu0 %v2628
    %3471 = vmatpush1.bf16.msra.mxu0 %v2627
    %3472 = vmatprep.mubr.bf16.mxu0 %v692
    %3473 = vmatmul.mubr.bf16.gmra.mrb[0].mxu0 %v691
    %v3474 = vpop.f32.mrb[0].mxu0
    %v3475 = vadd.f32 0.0, %v3474
    %v3476 = vpop.f32.mrb[0].mxu0
    %v3477 = vadd.f32 0.0, %v3476
    %v3478 = vpop.f32.mrb[0].mxu0
    %v3479 = vpop.f32.mrb[0].mxu0
    %3480 = vdwg.mxu0
    %3481 = vmatprep.subr.bf16.mxu0 %v2636
    %3482 = vmatpush1.bf16.msra.mxu0 %v2635
    %3483 = vmatprep.subr.bf16.mxu0 %v2644
    %3484 = vmatpush1.bf16.msra.mxu0 %v2643
    %3485 = vmatprep.subr.bf16.mxu0 %v2652
    %3486 = vmatpush1.bf16.msra.mxu0 %v2651
    %3487 = vmatprep.subr.bf16.mxu0 %v2660
    %3488 = vmatpush1.bf16.msra.mxu0 %v2659
    %3489 = vmatprep.subr.bf16.mxu0 %v2668
    %3490 = vmatpush1.bf16.msra.mxu0 %v2667
    %3491 = vmatprep.subr.bf16.mxu0 %v2676
    %3492 = vmatpush1.bf16.msra.mxu0 %v2675
    %3493 = vmatprep.subr.bf16.mxu0 %v2684
    %3494 = vmatpush1.bf16.msra.mxu0 %v2683
    %3495 = vmatprep.subr.bf16.mxu0 %v2692
    %3496 = vmatpush1.bf16.msra.mxu0 %v2691
    %3497 = vmatprep.subr.bf16.mxu0 %v2700
    %3498 = vmatpush1.bf16.msra.mxu0 %v2699
    %3499 = vmatprep.subr.bf16.mxu0 %v2708
    %3500 = vmatpush1.bf16.msra.mxu0 %v2707
    %3501 = vmatprep.subr.bf16.mxu0 %v2716
    %3502 = vmatpush1.bf16.msra.mxu0 %v2715
    %3503 = vmatprep.subr.bf16.mxu0 %v2724
    %3504 = vmatpush1.bf16.msra.mxu0 %v2723
    %3505 = vmatprep.subr.bf16.mxu0 %v2732
    %3506 = vmatpush1.bf16.msra.mxu0 %v2731
    %3507 = vmatprep.subr.bf16.mxu0 %v2740
    %3508 = vmatpush1.bf16.msra.mxu0 %v2739
    %3509 = vmatprep.subr.bf16.mxu0 %v2748
    %3510 = vmatpush1.bf16.msra.mxu0 %v2747
    %3511 = vmatprep.subr.bf16.mxu0 %v2756
    %3512 = vmatpush1.bf16.msra.mxu0 %v2755
    %3513 = vmatprep.mubr.bf16.mxu0 %v694
    %3514 = vmatmul.mubr.bf16.gmra.mrb[0].mxu0 %v693
    %v3515 = vpop.f32.mrb[0].mxu0
    %v3516 = vadd.f32 %v3475, %v3515
    %v3517 = vpop.f32.mrb[0].mxu0
    %v3518 = vadd.f32 %v3477, %v3517
    %v3519 = vpop.f32.mrb[0].mxu0
    %v3520 = vpop.f32.mrb[0].mxu0
    %3521 = vdwg.mxu0
    %3522 = vmatprep.subr.bf16.mxu0 %v2764
    %3523 = vmatpush1.bf16.msra.mxu0 %v2763
    %3524 = vmatprep.subr.bf16.mxu0 %v2772
    %3525 = vmatpush1.bf16.msra.mxu0 %v2771
    %3526 = vmatprep.subr.bf16.mxu0 %v2780
    %3527 = vmatpush1.bf16.msra.mxu0 %v2779
    %3528 = vmatprep.subr.bf16.mxu0 %v2788
    %3529 = vmatpush1.bf16.msra.mxu0 %v2787
    %3530 = vmatprep.subr.bf16.mxu0 %v2796
    %3531 = vmatpush1.bf16.msra.mxu0 %v2795
    %3532 = vmatprep.subr.bf16.mxu0 %v2804
    %3533 = vmatpush1.bf16.msra.mxu0 %v2803
    %3534 = vmatprep.subr.bf16.mxu0 %v2812
    %3535 = vmatpush1.bf16.msra.mxu0 %v2811
    %3536 = vmatprep.subr.bf16.mxu0 %v2820
    %3537 = vmatpush1.bf16.msra.mxu0 %v2819
    %3538 = vmatprep.subr.bf16.mxu0 %v2828
    %3539 = vmatpush1.bf16.msra.mxu0 %v2827
    %3540 = vmatprep.subr.bf16.mxu0 %v2836
    %3541 = vmatpush1.bf16.msra.mxu0 %v2835
    %3542 = vmatprep.subr.bf16.mxu0 %v2844
    %3543 = vmatpush1.bf16.msra.mxu0 %v2843
    %3544 = vmatprep.subr.bf16.mxu0 %v2852
    %3545 = vmatpush1.bf16.msra.mxu0 %v2851
    %3546 = vmatprep.subr.bf16.mxu0 %v2860
    %3547 = vmatpush1.bf16.msra.mxu0 %v2859
    %3548 = vmatprep.subr.bf16.mxu0 %v2868
    %3549 = vmatpush1.bf16.msra.mxu0 %v2867
    %3550 = vmatprep.subr.bf16.mxu0 %v2876
    %3551 = vmatpush1.bf16.msra.mxu0 %v2875
    %3552 = vmatprep.subr.bf16.mxu0 %v2884
    %3553 = vmatpush1.bf16.msra.mxu0 %v2883
    %3554 = vmatprep.mubr.bf16.mxu0 %v696
    %3555 = vmatmul.mubr.bf16.gmra.mrb[0].mxu0 %v695
    %v3556 = vpop.f32.mrb[0].mxu0
    %v3557 = vadd.f32 %v3516, %v3556
    %v3558 = vpop.f32.mrb[0].mxu0
    %v3559 = vadd.f32 %v3518, %v3558
    %v3560 = vpop.f32.mrb[0].mxu0
    %v3561 = vpop.f32.mrb[0].mxu0
    %3562 = vdwg.mxu0
    %3563 = vmatprep.subr.bf16.mxu0 %v2892
    %3564 = vmatpush1.bf16.msra.mxu0 %v2891
    %3565 = vmatprep.subr.bf16.mxu0 %v2900
    %3566 = vmatpush1.bf16.msra.mxu0 %v2899
    %3567 = vmatprep.subr.bf16.mxu0 %v2908
    %3568 = vmatpush1.bf16.msra.mxu0 %v2907
    %3569 = vmatprep.subr.bf16.mxu0 %v2916
    %3570 = vmatpush1.bf16.msra.mxu0 %v2915
    %3571 = vmatprep.subr.bf16.mxu0 %v2924
    %3572 = vmatpush1.bf16.msra.mxu0 %v2923
    %3573 = vmatprep.subr.bf16.mxu0 %v2932
    %3574 = vmatpush1.bf16.msra.mxu0 %v2931
    %3575 = vmatprep.subr.bf16.mxu0 %v2940
    %3576 = vmatpush1.bf16.msra.mxu0 %v2939
    %3577 = vmatprep.subr.bf16.mxu0 %v2948
    %3578 = vmatpush1.bf16.msra.mxu0 %v2947
    %3579 = vmatprep.subr.bf16.mxu0 %v3420
    %3580 = vmatpush1.bf16.msra.mxu0 %v3417
    %3581 = vmatprep.subr.bf16.mxu0 0
    %3582 = vmatpush1.bf16.msra.mxu0 0
    %3583 = vmatprep.subr.bf16.mxu0 0
    %3584 = vmatpush1.bf16.msra.mxu0 0
    %3585 = vmatprep.subr.bf16.mxu0 0
    %3586 = vmatpush1.bf16.msra.mxu0 0
    %3587 = vmatprep.subr.bf16.mxu0 0
    %3588 = vmatpush1.bf16.msra.mxu0 0
    %3589 = vmatprep.subr.bf16.mxu0 0
    %3590 = vmatpush1.bf16.msra.mxu0 0
    %3591 = vmatprep.subr.bf16.mxu0 0
    %3592 = vmatpush1.bf16.msra.mxu0 0
    %3593 = vmatprep.subr.bf16.mxu0 0
    %3594 = vmatpush1.bf16.msra.mxu0 0
    %3595 = vmatprep.mubr.bf16.mxu0 %v3413
    %3596 = vmatmul.mubr.bf16.gmra.mrb[0].mxu0 %v697
    %v3597 = vpop.f32.mrb[0].mxu0
    %v3598 = vadd.f32 %v3557, %v3597
    %v3599 = vpop.f32.mrb[0].mxu0
    %v3600 = vadd.f32 %v3559, %v3599
    %v3601 = vpop.f32.mrb[0].mxu0
    %v3602 = vpop.f32.mrb[0].mxu0
    %3603 = vdwg.mxu0
    %3604 = vmatprep.subr.bf16.mxu0 %v2510
    %3605 = vmatpush1.bf16.msra.mxu0 %v2509
    %3606 = vmatprep.subr.bf16.mxu0 %v2518
    %3607 = vmatpush1.bf16.msra.mxu0 %v2517
    %3608 = vmatprep.subr.bf16.mxu0 %v2526
    %3609 = vmatpush1.bf16.msra.mxu0 %v2525
    %3610 = vmatprep.subr.bf16.mxu0 %v2534
    %3611 = vmatpush1.bf16.msra.mxu0 %v2533
    %3612 = vmatprep.subr.bf16.mxu0 %v2542
    %3613 = vmatpush1.bf16.msra.mxu0 %v2541
    %3614 = vmatprep.subr.bf16.mxu0 %v2550
    %3615 = vmatpush1.bf16.msra.mxu0 %v2549
    %3616 = vmatprep.subr.bf16.mxu0 %v2558
    %3617 = vmatpush1.bf16.msra.mxu0 %v2557
    %3618 = vmatprep.subr.bf16.mxu0 %v2566
    %3619 = vmatpush1.bf16.msra.mxu0 %v2565
    %3620 = vmatprep.subr.bf16.mxu0 %v2574
    %3621 = vmatpush1.bf16.msra.mxu0 %v2573
    %3622 = vmatprep.subr.bf16.mxu0 %v2582
    %3623 = vmatpush1.bf16.msra.mxu0 %v2581
    %3624 = vmatprep.subr.bf16.mxu0 %v2590
    %3625 = vmatpush1.bf16.msra.mxu0 %v2589
    %3626 = vmatprep.subr.bf16.mxu0 %v2598
    %3627 = vmatpush1.bf16.msra.mxu0 %v2597
    %3628 = vmatprep.subr.bf16.mxu0 %v2606
    %3629 = vmatpush1.bf16.msra.mxu0 %v2605
    %3630 = vmatprep.subr.bf16.mxu0 %v2614
    %3631 = vmatpush1.bf16.msra.mxu0 %v2613
    %3632 = vmatprep.subr.bf16.mxu0 %v2622
    %3633 = vmatpush1.bf16.msra.mxu0 %v2621
    %3634 = vmatprep.subr.bf16.mxu0 %v2630
    %3635 = vmatpush1.bf16.msra.mxu0 %v2629
    %3636 = vmatprep.mubr.bf16.mxu0 %v692
    %3637 = vmatmul.mubr.bf16.gmra.mrb[0].mxu0 %v691
    %v3638 = vpop.f32.mrb[0].mxu0
    %v3639 = vadd.f32 0.0, %v3638
    %v3640 = vpop.f32.mrb[0].mxu0
    %v3641 = vadd.f32 0.0, %v3640
    %v3642 = vpop.f32.mrb[0].mxu0
    %v3643 = vpop.f32.mrb[0].mxu0
    %3644 = vdwg.mxu0
    %3645 = vmatprep.subr.bf16.mxu0 %v2638
    %3646 = vmatpush1.bf16.msra.mxu0 %v2637
    %3647 = vmatprep.subr.bf16.mxu0 %v2646
    %3648 = vmatpush1.bf16.msra.mxu0 %v2645
    %3649 = vmatprep.subr.bf16.mxu0 %v2654
    %3650 = vmatpush1.bf16.msra.mxu0 %v2653
    %3651 = vmatprep.subr.bf16.mxu0 %v2662
    %3652 = vmatpush1.bf16.msra.mxu0 %v2661
    %3653 = vmatprep.subr.bf16.mxu0 %v2670
    %3654 = vmatpush1.bf16.msra.mxu0 %v2669
    %3655 = vmatprep.subr.bf16.mxu0 %v2678
    %3656 = vmatpush1.bf16.msra.mxu0 %v2677
    %3657 = vmatprep.subr.bf16.mxu0 %v2686
    %3658 = vmatpush1.bf16.msra.mxu0 %v2685
    %3659 = vmatprep.subr.bf16.mxu0 %v2694
    %3660 = vmatpush1.bf16.msra.mxu0 %v2693
    %3661 = vmatprep.subr.bf16.mxu0 %v2702
    %3662 = vmatpush1.bf16.msra.mxu0 %v2701
    %3663 = vmatprep.subr.bf16.mxu0 %v2710
    %3664 = vmatpush1.bf16.msra.mxu0 %v2709
    %3665 = vmatprep.subr.bf16.mxu0 %v2718
    %3666 = vmatpush1.bf16.msra.mxu0 %v2717
    %3667 = vmatprep.subr.bf16.mxu0 %v2726
    %3668 = vmatpush1.bf16.msra.mxu0 %v2725
    %3669 = vmatprep.subr.bf16.mxu0 %v2734
    %3670 = vmatpush1.bf16.msra.mxu0 %v2733
    %3671 = vmatprep.subr.bf16.mxu0 %v2742
    %3672 = vmatpush1.bf16.msra.mxu0 %v2741
    %3673 = vmatprep.subr.bf16.mxu0 %v2750
    %3674 = vmatpush1.bf16.msra.mxu0 %v2749
    %3675 = vmatprep.subr.bf16.mxu0 %v2758
    %3676 = vmatpush1.bf16.msra.mxu0 %v2757
    %3677 = vmatprep.mubr.bf16.mxu0 %v694
    %3678 = vmatmul.mubr.bf16.gmra.mrb[0].mxu0 %v693
    %v3679 = vpop.f32.mrb[0].mxu0
    %v3680 = vadd.f32 %v3639, %v3679
    %v3681 = vpop.f32.mrb[0].mxu0
    %v3682 = vadd.f32 %v3641, %v3681
    %v3683 = vpop.f32.mrb[0].mxu0
    %v3684 = vpop.f32.mrb[0].mxu0
    %3685 = vdwg.mxu0
    %3686 = vmatprep.subr.bf16.mxu0 %v2766
    %3687 = vmatpush1.bf16.msra.mxu0 %v2765
    %3688 = vmatprep.subr.bf16.mxu0 %v2774
    %3689 = vmatpush1.bf16.msra.mxu0 %v2773
    %3690 = vmatprep.subr.bf16.mxu0 %v2782
    %3691 = vmatpush1.bf16.msra.mxu0 %v2781
    %3692 = vmatprep.subr.bf16.mxu0 %v2790
    %3693 = vmatpush1.bf16.msra.mxu0 %v2789
    %3694 = vmatprep.subr.bf16.mxu0 %v2798
    %3695 = vmatpush1.bf16.msra.mxu0 %v2797
    %3696 = vmatprep.subr.bf16.mxu0 %v2806
    %3697 = vmatpush1.bf16.msra.mxu0 %v2805
    %3698 = vmatprep.subr.bf16.mxu0 %v2814
    %3699 = vmatpush1.bf16.msra.mxu0 %v2813
    %3700 = vmatprep.subr.bf16.mxu0 %v2822
    %3701 = vmatpush1.bf16.msra.mxu0 %v2821
    %3702 = vmatprep.subr.bf16.mxu0 %v2830
    %3703 = vmatpush1.bf16.msra.mxu0 %v2829
    %3704 = vmatprep.subr.bf16.mxu0 %v2838
    %3705 = vmatpush1.bf16.msra.mxu0 %v2837
    %3706 = vmatprep.subr.bf16.mxu0 %v2846
    %3707 = vmatpush1.bf16.msra.mxu0 %v2845
    %3708 = vmatprep.subr.bf16.mxu0 %v2854
    %3709 = vmatpush1.bf16.msra.mxu0 %v2853
    %3710 = vmatprep.subr.bf16.mxu0 %v2862
    %3711 = vmatpush1.bf16.msra.mxu0 %v2861
    %3712 = vmatprep.subr.bf16.mxu0 %v2870
    %3713 = vmatpush1.bf16.msra.mxu0 %v2869
    %3714 = vmatprep.subr.bf16.mxu0 %v2878
    %3715 = vmatpush1.bf16.msra.mxu0 %v2877
    %3716 = vmatprep.subr.bf16.mxu0 %v2886
    %3717 = vmatpush1.bf16.msra.mxu0 %v2885
    %3718 = vmatprep.mubr.bf16.mxu0 %v696
    %3719 = vmatmul.mubr.bf16.gmra.mrb[0].mxu0 %v695
    %v3720 = vpop.f32.mrb[0].mxu0
    %v3721 = vadd.f32 %v3680, %v3720
    %v3722 = vpop.f32.mrb[0].mxu0
    %v3723 = vadd.f32 %v3682, %v3722
    %v3724 = vpop.f32.mrb[0].mxu0
    %v3725 = vpop.f32.mrb[0].mxu0
    %3726 = vdwg.mxu0
    %3727 = vmatprep.subr.bf16.mxu0 %v2894
    %3728 = vmatpush1.bf16.msra.mxu0 %v2893
    %3729 = vmatprep.subr.bf16.mxu0 %v2902
    %3730 = vmatpush1.bf16.msra.mxu0 %v2901
    %3731 = vmatprep.subr.bf16.mxu0 %v2910
    %3732 = vmatpush1.bf16.msra.mxu0 %v2909
    %3733 = vmatprep.subr.bf16.mxu0 %v2918
    %3734 = vmatpush1.bf16.msra.mxu0 %v2917
    %3735 = vmatprep.subr.bf16.mxu0 %v2926
    %3736 = vmatpush1.bf16.msra.mxu0 %v2925
    %3737 = vmatprep.subr.bf16.mxu0 %v2934
    %3738 = vmatpush1.bf16.msra.mxu0 %v2933
    %3739 = vmatprep.subr.bf16.mxu0 %v2942
    %3740 = vmatpush1.bf16.msra.mxu0 %v2941
    %3741 = vmatprep.subr.bf16.mxu0 %v2950
    %3742 = vmatpush1.bf16.msra.mxu0 %v2949
    %3743 = vmatprep.subr.bf16.mxu0 %v3426
    %3744 = vmatpush1.bf16.msra.mxu0 %v3423
    %3745 = vmatprep.subr.bf16.mxu0 0
    %3746 = vmatpush1.bf16.msra.mxu0 0
    %3747 = vmatprep.subr.bf16.mxu0 0
    %3748 = vmatpush1.bf16.msra.mxu0 0
    %3749 = vmatprep.subr.bf16.mxu0 0
    %3750 = vmatpush1.bf16.msra.mxu0 0
    %3751 = vmatprep.subr.bf16.mxu0 0
    %3752 = vmatpush1.bf16.msra.mxu0 0
    %3753 = vmatprep.subr.bf16.mxu0 0
    %3754 = vmatpush1.bf16.msra.mxu0 0
    %3755 = vmatprep.subr.bf16.mxu0 0
    %3756 = vmatpush1.bf16.msra.mxu0 0
    %3757 = vmatprep.subr.bf16.mxu0 0
    %3758 = vmatpush1.bf16.msra.mxu0 0
    %3759 = vmatprep.mubr.bf16.mxu0 %v3413
    %3760 = vmatmul.mubr.bf16.gmra.mrb[0].mxu0 %v697
    %v3761 = vpop.f32.mrb[0].mxu0
    %v3762 = vadd.f32 %v3721, %v3761
    %v3763 = vpop.f32.mrb[0].mxu0
    %v3764 = vadd.f32 %v3723, %v3763
    %v3765 = vpop.f32.mrb[0].mxu0
    %v3766 = vpop.f32.mrb[0].mxu0
    %3767 = vdwg.mxu0
    %3768 = vmatprep.subr.bf16.mxu0 %v2512
    %3769 = vmatpush1.bf16.msra.mxu0 %v2511
    %3770 = vmatprep.subr.bf16.mxu0 %v2520
    %3771 = vmatpush1.bf16.msra.mxu0 %v2519
    %3772 = vmatprep.subr.bf16.mxu0 %v2528
    %3773 = vmatpush1.bf16.msra.mxu0 %v2527
    %3774 = vmatprep.subr.bf16.mxu0 %v2536
    %3775 = vmatpush1.bf16.msra.mxu0 %v2535
    %3776 = vmatprep.subr.bf16.mxu0 %v2544
    %3777 = vmatpush1.bf16.msra.mxu0 %v2543
    %3778 = vmatprep.subr.bf16.mxu0 %v2552
    %3779 = vmatpush1.bf16.msra.mxu0 %v2551
    %3780 = vmatprep.subr.bf16.mxu0 %v2560
    %3781 = vmatpush1.bf16.msra.mxu0 %v2559
    %3782 = vmatprep.subr.bf16.mxu0 %v2568
    %3783 = vmatpush1.bf16.msra.mxu0 %v2567
    %3784 = vmatprep.subr.bf16.mxu0 %v2576
    %3785 = vmatpush1.bf16.msra.mxu0 %v2575
    %3786 = vmatprep.subr.bf16.mxu0 %v2584
    %3787 = vmatpush1.bf16.msra.mxu0 %v2583
    %3788 = vmatprep.subr.bf16.mxu0 %v2592
    %3789 = vmatpush1.bf16.msra.mxu0 %v2591
    %3790 = vmatprep.subr.bf16.mxu0 %v2600
    %3791 = vmatpush1.bf16.msra.mxu0 %v2599
    %3792 = vmatprep.subr.bf16.mxu0 %v2608
    %3793 = vmatpush1.bf16.msra.mxu0 %v2607
    %3794 = vmatprep.subr.bf16.mxu0 %v2616
    %3795 = vmatpush1.bf16.msra.mxu0 %v2615
    %3796 = vmatprep.subr.bf16.mxu0 %v2624
    %3797 = vmatpush1.bf16.msra.mxu0 %v2623
    %3798 = vmatprep.subr.bf16.mxu0 %v2632
    %3799 = vmatpush1.bf16.msra.mxu0 %v2631
    %3800 = vmatprep.mubr.bf16.mxu0 %v692
    %3801 = vmatmul.mubr.bf16.gmra.mrb[0].mxu0 %v691
    %v3802 = vpop.f32.mrb[0].mxu0
    %v3803 = vadd.f32 0.0, %v3802
    %v3804 = vpop.f32.mrb[0].mxu0
    %v3805 = vadd.f32 0.0, %v3804
    %v3806 = vpop.f32.mrb[0].mxu0
    %v3807 = vpop.f32.mrb[0].mxu0
    %3808 = vdwg.mxu0
    %3809 = vmatprep.subr.bf16.mxu0 %v2640
    %3810 = vmatpush1.bf16.msra.mxu0 %v2639
    %3811 = vmatprep.subr.bf16.mxu0 %v2648
    %3812 = vmatpush1.bf16.msra.mxu0 %v2647
    %3813 = vmatprep.subr.bf16.mxu0 %v2656
    %3814 = vmatpush1.bf16.msra.mxu0 %v2655
    %3815 = vmatprep.subr.bf16.mxu0 %v2664
    %3816 = vmatpush1.bf16.msra.mxu0 %v2663
    %3817 = vmatprep.subr.bf16.mxu0 %v2672
    %3818 = vmatpush1.bf16.msra.mxu0 %v2671
    %3819 = vmatprep.subr.bf16.mxu0 %v2680
    %3820 = vmatpush1.bf16.msra.mxu0 %v2679
    %3821 = vmatprep.subr.bf16.mxu0 %v2688
    %3822 = vmatpush1.bf16.msra.mxu0 %v2687
    %3823 = vmatprep.subr.bf16.mxu0 %v2696
    %3824 = vmatpush1.bf16.msra.mxu0 %v2695
    %3825 = vmatprep.subr.bf16.mxu0 %v2704
    %3826 = vmatpush1.bf16.msra.mxu0 %v2703
    %3827 = vmatprep.subr.bf16.mxu0 %v2712
    %3828 = vmatpush1.bf16.msra.mxu0 %v2711
    %3829 = vmatprep.subr.bf16.mxu0 %v2720
    %3830 = vmatpush1.bf16.msra.mxu0 %v2719
    %3831 = vmatprep.subr.bf16.mxu0 %v2728
    %3832 = vmatpush1.bf16.msra.mxu0 %v2727
    %3833 = vmatprep.subr.bf16.mxu0 %v2736
    %3834 = vmatpush1.bf16.msra.mxu0 %v2735
    %3835 = vmatprep.subr.bf16.mxu0 %v2744
    %3836 = vmatpush1.bf16.msra.mxu0 %v2743
    %3837 = vmatprep.subr.bf16.mxu0 %v2752
    %3838 = vmatpush1.bf16.msra.mxu0 %v2751
    %3839 = vmatprep.subr.bf16.mxu0 %v2760
    %3840 = vmatpush1.bf16.msra.mxu0 %v2759
    %3841 = vmatprep.mubr.bf16.mxu0 %v694
    %3842 = vmatmul.mubr.bf16.gmra.mrb[0].mxu0 %v693
    %v3843 = vpop.f32.mrb[0].mxu0
    %v3844 = vadd.f32 %v3803, %v3843
    %v3845 = vpop.f32.mrb[0].mxu0
    %v3846 = vadd.f32 %v3805, %v3845
    %v3847 = vpop.f32.mrb[0].mxu0
    %v3848 = vpop.f32.mrb[0].mxu0
    %3849 = vdwg.mxu0
    %3850 = vmatprep.subr.bf16.mxu0 %v2768
    %3851 = vmatpush1.bf16.msra.mxu0 %v2767
    %3852 = vmatprep.subr.bf16.mxu0 %v2776
    %3853 = vmatpush1.bf16.msra.mxu0 %v2775
    %3854 = vmatprep.subr.bf16.mxu0 %v2784
    %3855 = vmatpush1.bf16.msra.mxu0 %v2783
    %3856 = vmatprep.subr.bf16.mxu0 %v2792
    %3857 = vmatpush1.bf16.msra.mxu0 %v2791
    %3858 = vmatprep.subr.bf16.mxu0 %v2800
    %3859 = vmatpush1.bf16.msra.mxu0 %v2799
    %3860 = vmatprep.subr.bf16.mxu0 %v2808
    %3861 = vmatpush1.bf16.msra.mxu0 %v2807
    %3862 = vmatprep.subr.bf16.mxu0 %v2816
    %3863 = vmatpush1.bf16.msra.mxu0 %v2815
    %3864 = vmatprep.subr.bf16.mxu0 %v2824
    %3865 = vmatpush1.bf16.msra.mxu0 %v2823
    %3866 = vmatprep.subr.bf16.mxu0 %v2832
    %3867 = vmatpush1.bf16.msra.mxu0 %v2831
    %3868 = vmatprep.subr.bf16.mxu0 %v2840
    %3869 = vmatpush1.bf16.msra.mxu0 %v2839
    %3870 = vmatprep.subr.bf16.mxu0 %v2848
    %3871 = vmatpush1.bf16.msra.mxu0 %v2847
    %3872 = vmatprep.subr.bf16.mxu0 %v2856
    %3873 = vmatpush1.bf16.msra.mxu0 %v2855
    %3874 = vmatprep.subr.bf16.mxu0 %v2864
    %3875 = vmatpush1.bf16.msra.mxu0 %v2863
    %3876 = vmatprep.subr.bf16.mxu0 %v2872
    %3877 = vmatpush1.bf16.msra.mxu0 %v2871
    %3878 = vmatprep.subr.bf16.mxu0 %v2880
    %3879 = vmatpush1.bf16.msra.mxu0 %v2879
    %3880 = vmatprep.subr.bf16.mxu0 %v2888
    %3881 = vmatpush1.bf16.msra.mxu0 %v2887
    %3882 = vmatprep.mubr.bf16.mxu0 %v696
    %3883 = vmatmul.mubr.bf16.gmra.mrb[0].mxu0 %v695
    %v3884 = vpop.f32.mrb[0].mxu0
    %v3885 = vadd.f32 %v3844, %v3884
    %v3886 = vpop.f32.mrb[0].mxu0
    %v3887 = vadd.f32 %v3846, %v3886
    %v3888 = vpop.f32.mrb[0].mxu0
    %v3889 = vpop.f32.mrb[0].mxu0
    %3890 = vdwg.mxu0
    %3891 = vmatprep.subr.bf16.mxu0 %v2896
    %3892 = vmatpush1.bf16.msra.mxu0 %v2895
    %3893 = vmatprep.subr.bf16.mxu0 %v2904
    %3894 = vmatpush1.bf16.msra.mxu0 %v2903
    %3895 = vmatprep.subr.bf16.mxu0 %v2912
    %3896 = vmatpush1.bf16.msra.mxu0 %v2911
    %3897 = vmatprep.subr.bf16.mxu0 %v2920
    %3898 = vmatpush1.bf16.msra.mxu0 %v2919
    %3899 = vmatprep.subr.bf16.mxu0 %v2928
    %3900 = vmatpush1.bf16.msra.mxu0 %v2927
    %3901 = vmatprep.subr.bf16.mxu0 %v2936
    %3902 = vmatpush1.bf16.msra.mxu0 %v2935
    %3903 = vmatprep.subr.bf16.mxu0 %v2944
    %3904 = vmatpush1.bf16.msra.mxu0 %v2943
    %3905 = vmatprep.subr.bf16.mxu0 %v2952
    %3906 = vmatpush1.bf16.msra.mxu0 %v2951
    %3907 = vmatprep.subr.bf16.mxu0 %v3432
    %3908 = vmatpush1.bf16.msra.mxu0 %v3429
    %3909 = vmatprep.subr.bf16.mxu0 0
    %3910 = vmatpush1.bf16.msra.mxu0 0
    %3911 = vmatprep.subr.bf16.mxu0 0
    %3912 = vmatpush1.bf16.msra.mxu0 0
    %3913 = vmatprep.subr.bf16.mxu0 0
    %3914 = vmatpush1.bf16.msra.mxu0 0
    %3915 = vmatprep.subr.bf16.mxu0 0
    %3916 = vmatpush1.bf16.msra.mxu0 0
    %3917 = vmatprep.subr.bf16.mxu0 0
    %3918 = vmatpush1.bf16.msra.mxu0 0
    %3919 = vmatprep.subr.bf16.mxu0 0
    %3920 = vmatpush1.bf16.msra.mxu0 0
    %3921 = vmatprep.subr.bf16.mxu0 0
    %3922 = vmatpush1.bf16.msra.mxu0 0
    %3923 = vmatprep.mubr.bf16.mxu0 %v3413
    %3924 = vmatmul.mubr.bf16.gmra.mrb[0].mxu0 %v697
    %v3925 = vpop.f32.mrb[0].mxu0
    %v3926 = vadd.f32 %v3885, %v3925
    %v3927 = vpop.f32.mrb[0].mxu0
    %v3928 = vadd.f32 %v3887, %v3927
    %v3929 = vpop.f32.mrb[0].mxu0
    %v3930 = vpop.f32.mrb[0].mxu0
    %3931 = vdwg.mxu0
    %3932 = vmatprep.subr.bf16.mxu0 %v2514
    %3933 = vmatpush1.bf16.msra.mxu0 %v2513
    %3934 = vmatprep.subr.bf16.mxu0 %v2522
    %3935 = vmatpush1.bf16.msra.mxu0 %v2521
    %3936 = vmatprep.subr.bf16.mxu0 %v2530
    %3937 = vmatpush1.bf16.msra.mxu0 %v2529
    %3938 = vmatprep.subr.bf16.mxu0 %v2538
    %3939 = vmatpush1.bf16.msra.mxu0 %v2537
    %3940 = vmatprep.subr.bf16.mxu0 %v2546
    %3941 = vmatpush1.bf16.msra.mxu0 %v2545
    %3942 = vmatprep.subr.bf16.mxu0 %v2554
    %3943 = vmatpush1.bf16.msra.mxu0 %v2553
    %3944 = vmatprep.subr.bf16.mxu0 %v2562
    %3945 = vmatpush1.bf16.msra.mxu0 %v2561
    %3946 = vmatprep.subr.bf16.mxu0 %v2570
    %3947 = vmatpush1.bf16.msra.mxu0 %v2569
    %3948 = vmatprep.subr.bf16.mxu0 %v2578
    %3949 = vmatpush1.bf16.msra.mxu0 %v2577
    %3950 = vmatprep.subr.bf16.mxu0 %v2586
    %3951 = vmatpush1.bf16.msra.mxu0 %v2585
    %3952 = vmatprep.subr.bf16.mxu0 %v2594
    %3953 = vmatpush1.bf16.msra.mxu0 %v2593
    %3954 = vmatprep.subr.bf16.mxu0 %v2602
    %3955 = vmatpush1.bf16.msra.mxu0 %v2601
    %3956 = vmatprep.subr.bf16.mxu0 %v2610
    %3957 = vmatpush1.bf16.msra.mxu0 %v2609
    %3958 = vmatprep.subr.bf16.mxu0 %v2618
    %3959 = vmatpush1.bf16.msra.mxu0 %v2617
    %3960 = vmatprep.subr.bf16.mxu0 %v2626
    %3961 = vmatpush1.bf16.msra.mxu0 %v2625
    %3962 = vmatprep.subr.bf16.mxu0 %v2634
    %3963 = vmatpush1.bf16.msra.mxu0 %v2633
    %3964 = vmatprep.mubr.bf16.mxu0 %v692
    %3965 = vmatmul.mubr.bf16.gmra.mrb[0].mxu0 %v691
    %v3966 = vpop.f32.mrb[0].mxu0
    %v3967 = vadd.f32 0.0, %v3966
    %v3968 = vpop.f32.mrb[0].mxu0
    %v3969 = vadd.f32 0.0, %v3968
    %v3970 = vpop.f32.mrb[0].mxu0
    %v3971 = vpop.f32.mrb[0].mxu0
    %3972 = vdwg.mxu0
    %3973 = vmatprep.subr.bf16.mxu0 %v2642
    %3974 = vmatpush1.bf16.msra.mxu0 %v2641
    %3975 = vmatprep.subr.bf16.mxu0 %v2650
    %3976 = vmatpush1.bf16.msra.mxu0 %v2649
    %3977 = vmatprep.subr.bf16.mxu0 %v2658
    %3978 = vmatpush1.bf16.msra.mxu0 %v2657
    %3979 = vmatprep.subr.bf16.mxu0 %v2666
    %3980 = vmatpush1.bf16.msra.mxu0 %v2665
    %3981 = vmatprep.subr.bf16.mxu0 %v2674
    %3982 = vmatpush1.bf16.msra.mxu0 %v2673
    %3983 = vmatprep.subr.bf16.mxu0 %v2682
    %3984 = vmatpush1.bf16.msra.mxu0 %v2681
    %3985 = vmatprep.subr.bf16.mxu0 %v2690
    %3986 = vmatpush1.bf16.msra.mxu0 %v2689
    %3987 = vmatprep.subr.bf16.mxu0 %v2698
    %3988 = vmatpush1.bf16.msra.mxu0 %v2697
    %3989 = vmatprep.subr.bf16.mxu0 %v2706
    %3990 = vmatpush1.bf16.msra.mxu0 %v2705
    %3991 = vmatprep.subr.bf16.mxu0 %v2714
    %3992 = vmatpush1.bf16.msra.mxu0 %v2713
    %3993 = vmatprep.subr.bf16.mxu0 %v2722
    %3994 = vmatpush1.bf16.msra.mxu0 %v2721
    %3995 = vmatprep.subr.bf16.mxu0 %v2730
    %3996 = vmatpush1.bf16.msra.mxu0 %v2729
    %3997 = vmatprep.subr.bf16.mxu0 %v2738
    %3998 = vmatpush1.bf16.msra.mxu0 %v2737
    %3999 = vmatprep.subr.bf16.mxu0 %v2746
    %4000 = vmatpush1.bf16.msra.mxu0 %v2745
    %4001 = vmatprep.subr.bf16.mxu0 %v2754
    %4002 = vmatpush1.bf16.msra.mxu0 %v2753
    %4003 = vmatprep.subr.bf16.mxu0 %v2762
    %4004 = vmatpush1.bf16.msra.mxu0 %v2761
    %4005 = vmatprep.mubr.bf16.mxu0 %v694
    %4006 = vmatmul.mubr.bf16.gmra.mrb[0].mxu0 %v693
    %v4007 = vpop.f32.mrb[0].mxu0
    %v4008 = vadd.f32 %v3967, %v4007
    %v4009 = vpop.f32.mrb[0].mxu0
    %v4010 = vadd.f32 %v3969, %v4009
    %v4011 = vpop.f32.mrb[0].mxu0
    %v4012 = vpop.f32.mrb[0].mxu0
    %4013 = vdwg.mxu0
    %4014 = vmatprep.subr.bf16.mxu0 %v2770
    %4015 = vmatpush1.bf16.msra.mxu0 %v2769
    %4016 = vmatprep.subr.bf16.mxu0 %v2778
    %4017 = vmatpush1.bf16.msra.mxu0 %v2777
    %4018 = vmatprep.subr.bf16.mxu0 %v2786
    %4019 = vmatpush1.bf16.msra.mxu0 %v2785
    %4020 = vmatprep.subr.bf16.mxu0 %v2794
    %4021 = vmatpush1.bf16.msra.mxu0 %v2793
    %4022 = vmatprep.subr.bf16.mxu0 %v2802
    %4023 = vmatpush1.bf16.msra.mxu0 %v2801
    %4024 = vmatprep.subr.bf16.mxu0 %v2810
    %4025 = vmatpush1.bf16.msra.mxu0 %v2809
    %4026 = vmatprep.subr.bf16.mxu0 %v2818
    %4027 = vmatpush1.bf16.msra.mxu0 %v2817
    %4028 = vmatprep.subr.bf16.mxu0 %v2826
    %4029 = vmatpush1.bf16.msra.mxu0 %v2825
    %4030 = vmatprep.subr.bf16.mxu0 %v2834
    %4031 = vmatpush1.bf16.msra.mxu0 %v2833
    %4032 = vmatprep.subr.bf16.mxu0 %v2842
    %4033 = vmatpush1.bf16.msra.mxu0 %v2841
    %4034 = vmatprep.subr.bf16.mxu0 %v2850
    %4035 = vmatpush1.bf16.msra.mxu0 %v2849
    %4036 = vmatprep.subr.bf16.mxu0 %v2858
    %4037 = vmatpush1.bf16.msra.mxu0 %v2857
    %4038 = vmatprep.subr.bf16.mxu0 %v2866
    %4039 = vmatpush1.bf16.msra.mxu0 %v2865
    %4040 = vmatprep.subr.bf16.mxu0 %v2874
    %4041 = vmatpush1.bf16.msra.mxu0 %v2873
    %4042 = vmatprep.subr.bf16.mxu0 %v2882
    %4043 = vmatpush1.bf16.msra.mxu0 %v2881
    %4044 = vmatprep.subr.bf16.mxu0 %v2890
    %4045 = vmatpush1.bf16.msra.mxu0 %v2889
    %4046 = vmatprep.mubr.bf16.mxu0 %v696
    %4047 = vmatmul.mubr.bf16.gmra.mrb[0].mxu0 %v695
    %v4048 = vpop.f32.mrb[0].mxu0
    %v4049 = vadd.f32 %v4008, %v4048
    %v4050 = vpop.f32.mrb[0].mxu0
    %v4051 = vadd.f32 %v4010, %v4050
    %v4052 = vpop.f32.mrb[0].mxu0
    %v4053 = vpop.f32.mrb[0].mxu0
    %4054 = vdwg.mxu0
    %4055 = vmatprep.subr.bf16.mxu0 %v2898
    %4056 = vmatpush1.bf16.msra.mxu0 %v2897
    %4057 = vmatprep.subr.bf16.mxu0 %v2906
    %4058 = vmatpush1.bf16.msra.mxu0 %v2905
    %4059 = vmatprep.subr.bf16.mxu0 %v2914
    %4060 = vmatpush1.bf16.msra.mxu0 %v2913
    %4061 = vmatprep.subr.bf16.mxu0 %v2922
    %4062 = vmatpush1.bf16.msra.mxu0 %v2921
    %4063 = vmatprep.subr.bf16.mxu0 %v2930
    %4064 = vmatpush1.bf16.msra.mxu0 %v2929
    %4065 = vmatprep.subr.bf16.mxu0 %v2938
    %4066 = vmatpush1.bf16.msra.mxu0 %v2937
    %4067 = vmatprep.subr.bf16.mxu0 %v2946
    %4068 = vmatpush1.bf16.msra.mxu0 %v2945
    %4069 = vmatprep.subr.bf16.mxu0 %v2954
    %4070 = vmatpush1.bf16.msra.mxu0 %v2953
    %4071 = vmatprep.subr.bf16.mxu0 %v3438
    %4072 = vmatpush1.bf16.msra.mxu0 %v3435
    %4073 = vmatprep.subr.bf16.mxu0 0
    %4074 = vmatpush1.bf16.msra.mxu0 0
    %4075 = vmatprep.subr.bf16.mxu0 0
    %4076 = vmatpush1.bf16.msra.mxu0 0
    %4077 = vmatprep.subr.bf16.mxu0 0
    %4078 = vmatpush1.bf16.msra.mxu0 0
    %4079 = vmatprep.subr.bf16.mxu0 0
    %4080 = vmatpush1.bf16.msra.mxu0 0
    %4081 = vmatprep.subr.bf16.mxu0 0
    %4082 = vmatpush1.bf16.msra.mxu0 0
    %4083 = vmatprep.subr.bf16.mxu0 0
    %4084 = vmatpush1.bf16.msra.mxu0 0
    %4085 = vmatprep.subr.bf16.mxu0 0
    %4086 = vmatpush1.bf16.msra.mxu0 0
    %4087 = vmatprep.mubr.bf16.mxu0 %v3413
    %4088 = vmatmul.mubr.bf16.gmra.mrb[0].mxu0 %v697
    %v4089 = vpop.f32.mrb[0].mxu0
    %v4090 = vadd.f32 %v4049, %v4089
    %v4091 = vpop.f32.mrb[0].mxu0
    %v4092 = vadd.f32 %v4051, %v4091
    %v4093 = vpop.f32.mrb[0].mxu0
    %v4094 = vpop.f32.mrb[0].mxu0
    %4095 = vdwg.mxu0
    %v4096 = vmax.f32 %v3598, 0.0
    %v4097 = vmax.f32 %v3600, 0.0
    %v4098 = vmax.f32 %v3762, 0.0
    %v4099 = vmax.f32 %v3764, 0.0
    %v4100 = vmax.f32 %v3926, 0.0
    %v4101 = vmax.f32 %v3928, 0.0
    %v4102 = vmax.f32 %v4090, 0.0
    %v4103 = vmax.f32 %v4092, 0.0
    %v4104 = vpack.c.bf16 %v4096, %v4096
    %v4105 = vpack.c.bf16 %v4097, %v4097
    %v4106 = vpack.c.bf16 %v4098, %v4098
    %v4107 = vpack.c.bf16 %v4099, %v4099
    %v4108 = vpack.c.bf16 %v4100, %v4100
    %v4109 = vpack.c.bf16 %v4101, %v4101
    %v4110 = vpack.c.bf16 %v4102, %v4102
    %v4111 = vpack.c.bf16 %v4103, %v4103
    %v4112 = vld [vmem:[%s4] sm:$0xff]
    %v4113 = vld [vmem:[%s4 + $0x8] sm:$0xff]
    %v4114 = vld [vmem:[%s4 + $0x10] sm:$0xff]
    %v4115 = vld [vmem:[%s4 + $0x18] sm:$0xff]
    %v4116 = vld [vmem:[%s4 + $0x20] sm:$0xff]
    %v4117 = vld [vmem:[%s4 + $0x28] sm:$0xff]
    %v4118 = vld [vmem:[%s4 + $0x30] sm:$0xff]
    %v4119 = vld [vmem:[%s4 + $0x38] sm:$0xff]
    %v4120 = vld [vmem:[%s4 + $0x40] sm:$0xff]
    %v4121 = vld [vmem:[%s4 + $0x48] sm:$0xff]
    %v4122 = vld [vmem:[%s4 + $0x50] sm:$0xff]
    %v4123 = vld [vmem:[%s4 + $0x58] sm:$0xff]
    %v4124 = vld [vmem:[%s4 + $0x60] sm:$0xff]
    %v4125 = vld [vmem:[%s4 + $0x68] sm:$0xff]
    %v4126 = vld [vmem:[%s4 + $0x70] sm:$0xff]
    %v4127 = vld [vmem:[%s4 + $0x78] sm:$0xff]
    %v4128 = vld [vmem:[%s4 + $0x80] sm:$0xff]
    %v4129 = vld [vmem:[%s4 + $0x88] sm:$0xff]
    %v4130 = vld [vmem:[%s4 + $0x90] sm:$0xff]
    %v4131 = vld [vmem:[%s4 + $0x98] sm:$0xff]
    %v4132 = vld [vmem:[%s4 + $0xa0] sm:$0xff]
    %v4133 = vld [vmem:[%s4 + $0xa8] sm:$0xff]
    %v4134 = vld [vmem:[%s4 + $0xb0] sm:$0xff]
    %v4135 = vld [vmem:[%s4 + $0xb8] sm:$0xff]
    %v4136 = vld [vmem:[%s4 + $0xc0] sm:$0xff]
    %v4137 = vld [vmem:[%s4 + $0xc8] sm:$0xff]
    %v4138 = vld [vmem:[%s4 + $0xd0] sm:$0xff]
    %v4139 = vld [vmem:[%s4 + $0xd8] sm:$0xff]
    %v4140 = vld [vmem:[%s4 + $0xe0] sm:$0xff]
    %v4141 = vld [vmem:[%s4 + $0xe8] sm:$0xff]
    %v4142 = vld [vmem:[%s4 + $0xf0] sm:$0xff]
    %v4143 = vld [vmem:[%s4 + $0xf8] sm:$0xff]
    %v4144 = vld [vmem:[%s4 + $0x100] sm:$0xff]
    %v4145 = vld [vmem:[%s4 + $0x108] sm:$0xff]
    %v4146 = vld [vmem:[%s4 + $0x110] sm:$0xff]
    %v4147 = vld [vmem:[%s4 + $0x118] sm:$0xff]
    %v4148 = vld [vmem:[%s4 + $0x120] sm:$0xff]
    %v4149 = vld [vmem:[%s4 + $0x128] sm:$0xff]
    %v4150 = vld [vmem:[%s4 + $0x130] sm:$0xff]
    %v4151 = vld [vmem:[%s4 + $0x138] sm:$0xff]
    %v4152 = vld [vmem:[%s4 + $0x140] sm:$0xff]
    %v4153 = vld [vmem:[%s4 + $0x148] sm:$0xff]
    %v4154 = vld [vmem:[%s4 + $0x150] sm:$0xff]
    %v4155 = vld [vmem:[%s4 + $0x158] sm:$0xff]
    %v4156 = vld [vmem:[%s4 + $0x160] sm:$0xff]
    %v4157 = vld [vmem:[%s4 + $0x168] sm:$0xff]
    %v4158 = vld [vmem:[%s4 + $0x170] sm:$0xff]
    %v4159 = vld [vmem:[%s4 + $0x178] sm:$0xff]
    %v4160 = vld [vmem:[%s4 + $0x180] sm:$0xff]
    %v4161 = vld [vmem:[%s4 + $0x188] sm:$0xff]
    %v4162 = vld [vmem:[%s4 + $0x190] sm:$0xff]
    %v4163 = vld [vmem:[%s4 + $0x198] sm:$0xff]
    %v4164 = vld [vmem:[%s4 + $0x1a0] sm:$0xff]
    %v4165 = vld [vmem:[%s4 + $0x1a8] sm:$0xff]
    %v4166 = vld [vmem:[%s4 + $0x1b0] sm:$0xff]
    %v4167 = vld [vmem:[%s4 + $0x1b8] sm:$0xff]
    %v4168 = vld [vmem:[%s4 + $0x1c0] sm:$0xff]
    %v4169 = vld [vmem:[%s4 + $0x1c8] sm:$0xff]
    %v4170 = vld [vmem:[%s4 + $0x1d0] sm:$0xff]
    %v4171 = vld [vmem:[%s4 + $0x1d8] sm:$0xff]
    %v4172 = vld [vmem:[%s4 + $0x1e0] sm:$0xff]
    %v4173 = vld [vmem:[%s4 + $0x1e8] sm:$0xff]
    %v4174 = vld [vmem:[%s4 + $0x1f0] sm:$0xff]
    %v4175 = vld [vmem:[%s4 + $0x1f8] sm:$0xff]
    %v4176 = vld [vmem:[%s4 + $0x200] sm:$0xff]
    %v4177 = vld [vmem:[%s4 + $0x208] sm:$0xff]
    %v4178 = vld [vmem:[%s4 + $0x210] sm:$0xff]
    %v4179 = vld [vmem:[%s4 + $0x218] sm:$0xff]
    %v4180 = vld [vmem:[%s4 + $0x220] sm:$0xff]
    %v4181 = vld [vmem:[%s4 + $0x228] sm:$0xff]
    %v4182 = vld [vmem:[%s4 + $0x230] sm:$0xff]
    %v4183 = vld [vmem:[%s4 + $0x238] sm:$0xff]
    %v4184 = vld [vmem:[%s4 + $0x240] sm:$0xff]
    %v4185 = vld [vmem:[%s4 + $0x248] sm:$0xff]
    %v4186 = vld [vmem:[%s4 + $0x250] sm:$0xff]
    %v4187 = vld [vmem:[%s4 + $0x258] sm:$0xff]
    %v4188 = vld [vmem:[%s4 + $0x260] sm:$0xff]
    %v4189 = vld [vmem:[%s4 + $0x268] sm:$0xff]
    %v4190 = vld [vmem:[%s4 + $0x270] sm:$0xff]
    %v4191 = vld [vmem:[%s4 + $0x278] sm:$0xff]
    %v4192 = vld [vmem:[%s4 + $0x280] sm:$0xff]
    %v4193 = vld [vmem:[%s4 + $0x288] sm:$0xff]
    %v4194 = vld [vmem:[%s4 + $0x290] sm:$0xff]
    %v4195 = vld [vmem:[%s4 + $0x298] sm:$0xff]
    %v4196 = vld [vmem:[%s4 + $0x2a0] sm:$0xff]
    %v4197 = vld [vmem:[%s4 + $0x2a8] sm:$0xff]
    %v4198 = vld [vmem:[%s4 + $0x2b0] sm:$0xff]
    %v4199 = vld [vmem:[%s4 + $0x2b8] sm:$0xff]
    %v4200 = vld [vmem:[%s4 + $0x2c0] sm:$0xff]
    %v4201 = vld [vmem:[%s4 + $0x2c8] sm:$0xff]
    %v4202 = vld [vmem:[%s4 + $0x2d0] sm:$0xff]
    %v4203 = vld [vmem:[%s4 + $0x2d8] sm:$0xff]
    %v4204 = vld [vmem:[%s4 + $0x2e0] sm:$0xff]
    %v4205 = vld [vmem:[%s4 + $0x2e8] sm:$0xff]
    %v4206 = vld [vmem:[%s4 + $0x2f0] sm:$0xff]
    %v4207 = vld [vmem:[%s4 + $0x2f8] sm:$0xff]
    %v4208 = vld [vmem:[%s4 + $0x300] sm:$0xff]
    %v4209 = vld [vmem:[%s4 + $0x308] sm:$0xff]
    %v4210 = vld [vmem:[%s4 + $0x310] sm:$0xff]
    %v4211 = vld [vmem:[%s4 + $0x318] sm:$0xff]
    %v4212 = vld [vmem:[%s4 + $0x320] sm:$0xff]
    %v4213 = vld [vmem:[%s4 + $0x328] sm:$0xff]
    %v4214 = vld [vmem:[%s4 + $0x330] sm:$0xff]
    %v4215 = vld [vmem:[%s4 + $0x338] sm:$0xff]
    %v4216 = vld [vmem:[%s4 + $0x340] sm:$0xff]
    %v4217 = vld [vmem:[%s4 + $0x348] sm:$0xff]
    %v4218 = vld [vmem:[%s4 + $0x350] sm:$0xff]
    %v4219 = vld [vmem:[%s4 + $0x358] sm:$0xff]
    %v4220 = vld [vmem:[%s4 + $0x360] sm:$0xff]
    %v4221 = vld [vmem:[%s4 + $0x368] sm:$0xff]
    %v4222 = vld [vmem:[%s4 + $0x370] sm:$0xff]
    %v4223 = vld [vmem:[%s4 + $0x378] sm:$0xff]
    %v4224 = vld [vmem:[%s4 + $0x380] sm:$0xff]
    %v4225 = vld [vmem:[%s4 + $0x388] sm:$0xff]
    %v4226 = vld [vmem:[%s4 + $0x390] sm:$0xff]
    %v4227 = vld [vmem:[%s4 + $0x398] sm:$0xff]
    %v4228 = vld [vmem:[%s4 + $0x3a0] sm:$0xff]
    %v4229 = vld [vmem:[%s4 + $0x3a8] sm:$0xff]
    %v4230 = vld [vmem:[%s4 + $0x3b0] sm:$0xff]
    %v4231 = vld [vmem:[%s4 + $0x3b8] sm:$0xff]
    %v4232 = vld [vmem:[%s4 + $0x3c0] sm:$0xff]
    %v4233 = vld [vmem:[%s4 + $0x3c8] sm:$0xff]
    %v4234 = vld [vmem:[%s4 + $0x3d0] sm:$0xff]
    %v4235 = vld [vmem:[%s4 + $0x3d8] sm:$0xff]
    %v4236 = vld [vmem:[%s4 + $0x3e0] sm:$0xff]
    %v4237 = vld [vmem:[%s4 + $0x3e8] sm:$0xff]
    %v4238 = vld [vmem:[%s4 + $0x3f0] sm:$0xff]
    %v4239 = vld [vmem:[%s4 + $0x3f8] sm:$0xff]
    %v4240 = vld [vmem:[%s4 + $0x400] sm:$0xff]
    %v4241 = vld [vmem:[%s4 + $0x408] sm:$0xff]
    %v4242 = vld [vmem:[%s4 + $0x410] sm:$0xff]
    %v4243 = vld [vmem:[%s4 + $0x418] sm:$0xff]
    %v4244 = vld [vmem:[%s4 + $0x420] sm:$0xff]
    %v4245 = vld [vmem:[%s4 + $0x428] sm:$0xff]
    %v4246 = vld [vmem:[%s4 + $0x430] sm:$0xff]
    %v4247 = vld [vmem:[%s4 + $0x438] sm:$0xff]
    %v4248 = vld [vmem:[%s4 + $0x440] sm:$0xff]
    %v4249 = vld [vmem:[%s4 + $0x448] sm:$0xff]
    %v4250 = vld [vmem:[%s4 + $0x450] sm:$0xff]
    %v4251 = vld [vmem:[%s4 + $0x458] sm:$0xff]
    %v4252 = vld [vmem:[%s4 + $0x460] sm:$0xff]
    %v4253 = vld [vmem:[%s4 + $0x468] sm:$0xff]
    %v4254 = vld [vmem:[%s4 + $0x470] sm:$0xff]
    %v4255 = vld [vmem:[%s4 + $0x478] sm:$0xff]
    %v4256 = vld [vmem:[%s4 + $0x480] sm:$0xff]
    %v4257 = vld [vmem:[%s4 + $0x488] sm:$0xff]
    %v4258 = vld [vmem:[%s4 + $0x490] sm:$0xff]
    %v4259 = vld [vmem:[%s4 + $0x498] sm:$0xff]
    %v4260 = vld [vmem:[%s4 + $0x4a0] sm:$0xff]
    %v4261 = vld [vmem:[%s4 + $0x4a8] sm:$0xff]
    %v4262 = vld [vmem:[%s4 + $0x4b0] sm:$0xff]
    %v4263 = vld [vmem:[%s4 + $0x4b8] sm:$0xff]
    %v4264 = vld [vmem:[%s4 + $0x4c0] sm:$0xff]
    %v4265 = vld [vmem:[%s4 + $0x4c8] sm:$0xff]
    %v4266 = vld [vmem:[%s4 + $0x4d0] sm:$0xff]
    %v4267 = vld [vmem:[%s4 + $0x4d8] sm:$0xff]
    %v4268 = vld [vmem:[%s4 + $0x4e0] sm:$0xff]
    %v4269 = vld [vmem:[%s4 + $0x4e8] sm:$0xff]
    %v4270 = vld [vmem:[%s4 + $0x4f0] sm:$0xff]
    %v4271 = vld [vmem:[%s4 + $0x4f8] sm:$0xff]
    %v4272 = vld [vmem:[%s4 + $0x500] sm:$0xff]
    %v4273 = vld [vmem:[%s4 + $0x508] sm:$0xff]
    %v4274 = vld [vmem:[%s4 + $0x510] sm:$0xff]
    %v4275 = vld [vmem:[%s4 + $0x518] sm:$0xff]
    %v4276 = vld [vmem:[%s4 + $0x520] sm:$0xff]
    %v4277 = vld [vmem:[%s4 + $0x528] sm:$0xff]
    %v4278 = vld [vmem:[%s4 + $0x530] sm:$0xff]
    %v4279 = vld [vmem:[%s4 + $0x538] sm:$0xff]
    %v4280 = vld [vmem:[%s4 + $0x540] sm:$0xff]
    %v4281 = vld [vmem:[%s4 + $0x548] sm:$0xff]
    %v4282 = vld [vmem:[%s4 + $0x550] sm:$0xff]
    %v4283 = vld [vmem:[%s4 + $0x558] sm:$0xff]
    %v4284 = vld [vmem:[%s4 + $0x560] sm:$0xff]
    %v4285 = vld [vmem:[%s4 + $0x568] sm:$0xff]
    %v4286 = vld [vmem:[%s4 + $0x570] sm:$0xff]
    %v4287 = vld [vmem:[%s4 + $0x578] sm:$0xff]
    %v4288 = vld [vmem:[%s4 + $0x580] sm:$0xff]
    %v4289 = vld [vmem:[%s4 + $0x588] sm:$0xff]
    %v4290 = vld [vmem:[%s4 + $0x590] sm:$0xff]
    %v4291 = vld [vmem:[%s4 + $0x598] sm:$0xff]
    %v4292 = vld [vmem:[%s4 + $0x5a0] sm:$0xff]
    %v4293 = vld [vmem:[%s4 + $0x5a8] sm:$0xff]
    %v4294 = vld [vmem:[%s4 + $0x5b0] sm:$0xff]
    %v4295 = vld [vmem:[%s4 + $0x5b8] sm:$0xff]
    %v4296 = vld [vmem:[%s4 + $0x5c0] sm:$0xff]
    %v4297 = vld [vmem:[%s4 + $0x5c8] sm:$0xff]
    %v4298 = vld [vmem:[%s4 + $0x5d0] sm:$0xff]
    %v4299 = vld [vmem:[%s4 + $0x5d8] sm:$0xff]
    %v4300 = vld [vmem:[%s4 + $0x5e0] sm:$0xff]
    %v4301 = vld [vmem:[%s4 + $0x5e8] sm:$0xff]
    %v4302 = vld [vmem:[%s4 + $0x5f0] sm:$0xff]
    %v4303 = vld [vmem:[%s4 + $0x5f8] sm:$0xff]
    %v4304 = vld [vmem:[%s4 + $0x600] sm:$0xff]
    %v4305 = vld [vmem:[%s4 + $0x608] sm:$0xff]
    %v4306 = vld [vmem:[%s4 + $0x610] sm:$0xff]
    %v4307 = vld [vmem:[%s4 + $0x618] sm:$0xff]
    %v4308 = vld [vmem:[%s4 + $0x620] sm:$0xff]
    %v4309 = vld [vmem:[%s4 + $0x628] sm:$0xff]
    %v4310 = vld [vmem:[%s4 + $0x630] sm:$0xff]
    %v4311 = vld [vmem:[%s4 + $0x638] sm:$0xff]
    %v4312 = vld [vmem:[%s4 + $0x640] sm:$0xff]
    %v4313 = vld [vmem:[%s4 + $0x648] sm:$0xff]
    %v4314 = vld [vmem:[%s4 + $0x650] sm:$0xff]
    %v4315 = vld [vmem:[%s4 + $0x658] sm:$0xff]
    %v4316 = vld [vmem:[%s4 + $0x660] sm:$0xff]
    %v4317 = vld [vmem:[%s4 + $0x668] sm:$0xff]
    %v4318 = vld [vmem:[%s4 + $0x670] sm:$0xff]
    %v4319 = vld [vmem:[%s4 + $0x678] sm:$0xff]
    %v4320 = vld [vmem:[%s4 + $0x680] sm:$0xff]
    %v4321 = vld [vmem:[%s4 + $0x688] sm:$0xff]
    %v4322 = vld [vmem:[%s4 + $0x690] sm:$0xff]
    %v4323 = vld [vmem:[%s4 + $0x698] sm:$0xff]
    %v4324 = vld [vmem:[%s4 + $0x6a0] sm:$0xff]
    %v4325 = vld [vmem:[%s4 + $0x6a8] sm:$0xff]
    %v4326 = vld [vmem:[%s4 + $0x6b0] sm:$0xff]
    %v4327 = vld [vmem:[%s4 + $0x6b8] sm:$0xff]
    %v4328 = vld [vmem:[%s4 + $0x6c0] sm:$0xff]
    %v4329 = vld [vmem:[%s4 + $0x6c8] sm:$0xff]
    %v4330 = vld [vmem:[%s4 + $0x6d0] sm:$0xff]
    %v4331 = vld [vmem:[%s4 + $0x6d8] sm:$0xff]
    %v4332 = vld [vmem:[%s4 + $0x6e0] sm:$0xff]
    %v4333 = vld [vmem:[%s4 + $0x6e8] sm:$0xff]
    %v4334 = vld [vmem:[%s4 + $0x6f0] sm:$0xff]
    %v4335 = vld [vmem:[%s4 + $0x6f8] sm:$0xff]
    %v4336 = vld [vmem:[%s4 + $0x700] sm:$0xff]
    %v4337 = vld [vmem:[%s4 + $0x708] sm:$0xff]
    %v4338 = vld [vmem:[%s4 + $0x710] sm:$0xff]
    %v4339 = vld [vmem:[%s4 + $0x718] sm:$0xff]
    %v4340 = vld [vmem:[%s4 + $0x720] sm:$0xff]
    %v4341 = vld [vmem:[%s4 + $0x728] sm:$0xff]
    %v4342 = vld [vmem:[%s4 + $0x730] sm:$0xff]
    %v4343 = vld [vmem:[%s4 + $0x738] sm:$0xff]
    %v4344 = vld [vmem:[%s4 + $0x740] sm:$0xff]
    %v4345 = vld [vmem:[%s4 + $0x748] sm:$0xff]
    %v4346 = vld [vmem:[%s4 + $0x750] sm:$0xff]
    %v4347 = vld [vmem:[%s4 + $0x758] sm:$0xff]
    %v4348 = vld [vmem:[%s4 + $0x760] sm:$0xff]
    %v4349 = vld [vmem:[%s4 + $0x768] sm:$0xff]
    %v4350 = vld [vmem:[%s4 + $0x770] sm:$0xff]
    %v4351 = vld [vmem:[%s4 + $0x778] sm:$0xff]
    %v4352 = vld [vmem:[%s4 + $0x780] sm:$0xff]
    %v4353 = vld [vmem:[%s4 + $0x788] sm:$0xff]
    %v4354 = vld [vmem:[%s4 + $0x790] sm:$0xff]
    %v4355 = vld [vmem:[%s4 + $0x798] sm:$0xff]
    %v4356 = vld [vmem:[%s4 + $0x7a0] sm:$0xff]
    %v4357 = vld [vmem:[%s4 + $0x7a8] sm:$0xff]
    %v4358 = vld [vmem:[%s4 + $0x7b0] sm:$0xff]
    %v4359 = vld [vmem:[%s4 + $0x7b8] sm:$0xff]
    %v4360 = vld [vmem:[%s4 + $0x7c0] sm:$0xff]
    %v4361 = vld [vmem:[%s4 + $0x7c8] sm:$0xff]
    %v4362 = vld [vmem:[%s4 + $0x7d0] sm:$0xff]
    %v4363 = vld [vmem:[%s4 + $0x7d8] sm:$0xff]
    %v4364 = vld [vmem:[%s4 + $0x7e0] sm:$0xff]
    %v4365 = vld [vmem:[%s4 + $0x7e8] sm:$0xff]
    %v4366 = vld [vmem:[%s4 + $0x7f0] sm:$0xff]
    %v4367 = vld [vmem:[%s4 + $0x7f8] sm:$0xff]
    %v4624 = vunpack.c.l.b16 %v4112
    %v4625 = vunpack.c.h.b16 %v4112
    %v4626 = vunpack.c.l.b16 %v4113
    %v4627 = vunpack.c.h.b16 %v4113
    %v4628 = vunpack.c.l.b16 %v4114
    %v4629 = vunpack.c.h.b16 %v4114
    %v4630 = vunpack.c.l.b16 %v4115
    %v4631 = vunpack.c.h.b16 %v4115
    %v4632 = vunpack.c.l.b16 %v4116
    %v4633 = vunpack.c.h.b16 %v4116
    %v4634 = vunpack.c.l.b16 %v4117
    %v4635 = vunpack.c.h.b16 %v4117
    %v4636 = vunpack.c.l.b16 %v4118
    %v4637 = vunpack.c.h.b16 %v4118
    %v4638 = vunpack.c.l.b16 %v4119
    %v4639 = vunpack.c.h.b16 %v4119
    %v4640 = vunpack.c.l.b16 %v4120
    %v4641 = vunpack.c.h.b16 %v4120
    %v4642 = vunpack.c.l.b16 %v4121
    %v4643 = vunpack.c.h.b16 %v4121
    %v4644 = vunpack.c.l.b16 %v4122
    %v4645 = vunpack.c.h.b16 %v4122
    %v4646 = vunpack.c.l.b16 %v4123
    %v4647 = vunpack.c.h.b16 %v4123
    %v4648 = vunpack.c.l.b16 %v4124
    %v4649 = vunpack.c.h.b16 %v4124
    %v4650 = vunpack.c.l.b16 %v4125
    %v4651 = vunpack.c.h.b16 %v4125
    %v4652 = vunpack.c.l.b16 %v4126
    %v4653 = vunpack.c.h.b16 %v4126
    %v4654 = vunpack.c.l.b16 %v4127
    %v4655 = vunpack.c.h.b16 %v4127
    %v4656 = vunpack.c.l.b16 %v4128
    %v4657 = vunpack.c.h.b16 %v4128
    %v4658 = vunpack.c.l.b16 %v4129
    %v4659 = vunpack.c.h.b16 %v4129
    %v4660 = vunpack.c.l.b16 %v4130
    %v4661 = vunpack.c.h.b16 %v4130
    %v4662 = vunpack.c.l.b16 %v4131
    %v4663 = vunpack.c.h.b16 %v4131
    %v4664 = vunpack.c.l.b16 %v4132
    %v4665 = vunpack.c.h.b16 %v4132
    %v4666 = vunpack.c.l.b16 %v4133
    %v4667 = vunpack.c.h.b16 %v4133
    %v4668 = vunpack.c.l.b16 %v4134
    %v4669 = vunpack.c.h.b16 %v4134
    %v4670 = vunpack.c.l.b16 %v4135
    %v4671 = vunpack.c.h.b16 %v4135
    %v4672 = vunpack.c.l.b16 %v4136
    %v4673 = vunpack.c.h.b16 %v4136
    %v4674 = vunpack.c.l.b16 %v4137
    %v4675 = vunpack.c.h.b16 %v4137
    %v4676 = vunpack.c.l.b16 %v4138
    %v4677 = vunpack.c.h.b16 %v4138
    %v4678 = vunpack.c.l.b16 %v4139
    %v4679 = vunpack.c.h.b16 %v4139
    %v4680 = vunpack.c.l.b16 %v4140
    %v4681 = vunpack.c.h.b16 %v4140
    %v4682 = vunpack.c.l.b16 %v4141
    %v4683 = vunpack.c.h.b16 %v4141
    %v4684 = vunpack.c.l.b16 %v4142
    %v4685 = vunpack.c.h.b16 %v4142
    %v4686 = vunpack.c.l.b16 %v4143
    %v4687 = vunpack.c.h.b16 %v4143
    %v4688 = vunpack.c.l.b16 %v4144
    %v4689 = vunpack.c.h.b16 %v4144
    %v4690 = vunpack.c.l.b16 %v4145
    %v4691 = vunpack.c.h.b16 %v4145
    %v4692 = vunpack.c.l.b16 %v4146
    %v4693 = vunpack.c.h.b16 %v4146
    %v4694 = vunpack.c.l.b16 %v4147
    %v4695 = vunpack.c.h.b16 %v4147
    %v4696 = vunpack.c.l.b16 %v4148
    %v4697 = vunpack.c.h.b16 %v4148
    %v4698 = vunpack.c.l.b16 %v4149
    %v4699 = vunpack.c.h.b16 %v4149
    %v4700 = vunpack.c.l.b16 %v4150
    %v4701 = vunpack.c.h.b16 %v4150
    %v4702 = vunpack.c.l.b16 %v4151
    %v4703 = vunpack.c.h.b16 %v4151
    %v4704 = vunpack.c.l.b16 %v4152
    %v4705 = vunpack.c.h.b16 %v4152
    %v4706 = vunpack.c.l.b16 %v4153
    %v4707 = vunpack.c.h.b16 %v4153
    %v4708 = vunpack.c.l.b16 %v4154
    %v4709 = vunpack.c.h.b16 %v4154
    %v4710 = vunpack.c.l.b16 %v4155
    %v4711 = vunpack.c.h.b16 %v4155
    %v4712 = vunpack.c.l.b16 %v4156
    %v4713 = vunpack.c.h.b16 %v4156
    %v4714 = vunpack.c.l.b16 %v4157
    %v4715 = vunpack.c.h.b16 %v4157
    %v4716 = vunpack.c.l.b16 %v4158
    %v4717 = vunpack.c.h.b16 %v4158
    %v4718 = vunpack.c.l.b16 %v4159
    %v4719 = vunpack.c.h.b16 %v4159
    %v4720 = vunpack.c.l.b16 %v4160
    %v4721 = vunpack.c.h.b16 %v4160
    %v4722 = vunpack.c.l.b16 %v4161
    %v4723 = vunpack.c.h.b16 %v4161
    %v4724 = vunpack.c.l.b16 %v4162
    %v4725 = vunpack.c.h.b16 %v4162
    %v4726 = vunpack.c.l.b16 %v4163
    %v4727 = vunpack.c.h.b16 %v4163
    %v4728 = vunpack.c.l.b16 %v4164
    %v4729 = vunpack.c.h.b16 %v4164
    %v4730 = vunpack.c.l.b16 %v4165
    %v4731 = vunpack.c.h.b16 %v4165
    %v4732 = vunpack.c.l.b16 %v4166
    %v4733 = vunpack.c.h.b16 %v4166
    %v4734 = vunpack.c.l.b16 %v4167
    %v4735 = vunpack.c.h.b16 %v4167
    %v4736 = vunpack.c.l.b16 %v4168
    %v4737 = vunpack.c.h.b16 %v4168
    %v4738 = vunpack.c.l.b16 %v4169
    %v4739 = vunpack.c.h.b16 %v4169
    %v4740 = vunpack.c.l.b16 %v4170
    %v4741 = vunpack.c.h.b16 %v4170
    %v4742 = vunpack.c.l.b16 %v4171
    %v4743 = vunpack.c.h.b16 %v4171
    %v4744 = vunpack.c.l.b16 %v4172
    %v4745 = vunpack.c.h.b16 %v4172
    %v4746 = vunpack.c.l.b16 %v4173
    %v4747 = vunpack.c.h.b16 %v4173
    %v4748 = vunpack.c.l.b16 %v4174
    %v4749 = vunpack.c.h.b16 %v4174
    %v4750 = vunpack.c.l.b16 %v4175
    %v4751 = vunpack.c.h.b16 %v4175
    %v4752 = vunpack.c.l.b16 %v4176
    %v4753 = vunpack.c.h.b16 %v4176
    %v4754 = vunpack.c.l.b16 %v4177
    %v4755 = vunpack.c.h.b16 %v4177
    %v4756 = vunpack.c.l.b16 %v4178
    %v4757 = vunpack.c.h.b16 %v4178
    %v4758 = vunpack.c.l.b16 %v4179
    %v4759 = vunpack.c.h.b16 %v4179
    %v4760 = vunpack.c.l.b16 %v4180
    %v4761 = vunpack.c.h.b16 %v4180
    %v4762 = vunpack.c.l.b16 %v4181
    %v4763 = vunpack.c.h.b16 %v4181
    %v4764 = vunpack.c.l.b16 %v4182
    %v4765 = vunpack.c.h.b16 %v4182
    %v4766 = vunpack.c.l.b16 %v4183
    %v4767 = vunpack.c.h.b16 %v4183
    %v4768 = vunpack.c.l.b16 %v4184
    %v4769 = vunpack.c.h.b16 %v4184
    %v4770 = vunpack.c.l.b16 %v4185
    %v4771 = vunpack.c.h.b16 %v4185
    %v4772 = vunpack.c.l.b16 %v4186
    %v4773 = vunpack.c.h.b16 %v4186
    %v4774 = vunpack.c.l.b16 %v4187
    %v4775 = vunpack.c.h.b16 %v4187
    %v4776 = vunpack.c.l.b16 %v4188
    %v4777 = vunpack.c.h.b16 %v4188
    %v4778 = vunpack.c.l.b16 %v4189
    %v4779 = vunpack.c.h.b16 %v4189
    %v4780 = vunpack.c.l.b16 %v4190
    %v4781 = vunpack.c.h.b16 %v4190
    %v4782 = vunpack.c.l.b16 %v4191
    %v4783 = vunpack.c.h.b16 %v4191
    %v4784 = vunpack.c.l.b16 %v4192
    %v4785 = vunpack.c.h.b16 %v4192
    %v4786 = vunpack.c.l.b16 %v4193
    %v4787 = vunpack.c.h.b16 %v4193
    %v4788 = vunpack.c.l.b16 %v4194
    %v4789 = vunpack.c.h.b16 %v4194
    %v4790 = vunpack.c.l.b16 %v4195
    %v4791 = vunpack.c.h.b16 %v4195
    %v4792 = vunpack.c.l.b16 %v4196
    %v4793 = vunpack.c.h.b16 %v4196
    %v4794 = vunpack.c.l.b16 %v4197
    %v4795 = vunpack.c.h.b16 %v4197
    %v4796 = vunpack.c.l.b16 %v4198
    %v4797 = vunpack.c.h.b16 %v4198
    %v4798 = vunpack.c.l.b16 %v4199
    %v4799 = vunpack.c.h.b16 %v4199
    %v4800 = vunpack.c.l.b16 %v4200
    %v4801 = vunpack.c.h.b16 %v4200
    %v4802 = vunpack.c.l.b16 %v4201
    %v4803 = vunpack.c.h.b16 %v4201
    %v4804 = vunpack.c.l.b16 %v4202
    %v4805 = vunpack.c.h.b16 %v4202
    %v4806 = vunpack.c.l.b16 %v4203
    %v4807 = vunpack.c.h.b16 %v4203
    %v4808 = vunpack.c.l.b16 %v4204
    %v4809 = vunpack.c.h.b16 %v4204
    %v4810 = vunpack.c.l.b16 %v4205
    %v4811 = vunpack.c.h.b16 %v4205
    %v4812 = vunpack.c.l.b16 %v4206
    %v4813 = vunpack.c.h.b16 %v4206
    %v4814 = vunpack.c.l.b16 %v4207
    %v4815 = vunpack.c.h.b16 %v4207
    %v4816 = vunpack.c.l.b16 %v4208
    %v4817 = vunpack.c.h.b16 %v4208
    %v4818 = vunpack.c.l.b16 %v4209
    %v4819 = vunpack.c.h.b16 %v4209
    %v4820 = vunpack.c.l.b16 %v4210
    %v4821 = vunpack.c.h.b16 %v4210
    %v4822 = vunpack.c.l.b16 %v4211
    %v4823 = vunpack.c.h.b16 %v4211
    %v4824 = vunpack.c.l.b16 %v4212
    %v4825 = vunpack.c.h.b16 %v4212
    %v4826 = vunpack.c.l.b16 %v4213
    %v4827 = vunpack.c.h.b16 %v4213
    %v4828 = vunpack.c.l.b16 %v4214
    %v4829 = vunpack.c.h.b16 %v4214
    %v4830 = vunpack.c.l.b16 %v4215
    %v4831 = vunpack.c.h.b16 %v4215
    %v4832 = vunpack.c.l.b16 %v4216
    %v4833 = vunpack.c.h.b16 %v4216
    %v4834 = vunpack.c.l.b16 %v4217
    %v4835 = vunpack.c.h.b16 %v4217
    %v4836 = vunpack.c.l.b16 %v4218
    %v4837 = vunpack.c.h.b16 %v4218
    %v4838 = vunpack.c.l.b16 %v4219
    %v4839 = vunpack.c.h.b16 %v4219
    %v4840 = vunpack.c.l.b16 %v4220
    %v4841 = vunpack.c.h.b16 %v4220
    %v4842 = vunpack.c.l.b16 %v4221
    %v4843 = vunpack.c.h.b16 %v4221
    %v4844 = vunpack.c.l.b16 %v4222
    %v4845 = vunpack.c.h.b16 %v4222
    %v4846 = vunpack.c.l.b16 %v4223
    %v4847 = vunpack.c.h.b16 %v4223
    %v4848 = vunpack.c.l.b16 %v4224
    %v4849 = vunpack.c.h.b16 %v4224
    %v4850 = vunpack.c.l.b16 %v4225
    %v4851 = vunpack.c.h.b16 %v4225
    %v4852 = vunpack.c.l.b16 %v4226
    %v4853 = vunpack.c.h.b16 %v4226
    %v4854 = vunpack.c.l.b16 %v4227
    %v4855 = vunpack.c.h.b16 %v4227
    %v4856 = vunpack.c.l.b16 %v4228
    %v4857 = vunpack.c.h.b16 %v4228
    %v4858 = vunpack.c.l.b16 %v4229
    %v4859 = vunpack.c.h.b16 %v4229
    %v4860 = vunpack.c.l.b16 %v4230
    %v4861 = vunpack.c.h.b16 %v4230
    %v4862 = vunpack.c.l.b16 %v4231
    %v4863 = vunpack.c.h.b16 %v4231
    %v4864 = vunpack.c.l.b16 %v4232
    %v4865 = vunpack.c.h.b16 %v4232
    %v4866 = vunpack.c.l.b16 %v4233
    %v4867 = vunpack.c.h.b16 %v4233
    %v4868 = vunpack.c.l.b16 %v4234
    %v4869 = vunpack.c.h.b16 %v4234
    %v4870 = vunpack.c.l.b16 %v4235
    %v4871 = vunpack.c.h.b16 %v4235
    %v4872 = vunpack.c.l.b16 %v4236
    %v4873 = vunpack.c.h.b16 %v4236
    %v4874 = vunpack.c.l.b16 %v4237
    %v4875 = vunpack.c.h.b16 %v4237
    %v4876 = vunpack.c.l.b16 %v4238
    %v4877 = vunpack.c.h.b16 %v4238
    %v4878 = vunpack.c.l.b16 %v4239
    %v4879 = vunpack.c.h.b16 %v4239
    %v4880 = vunpack.c.l.b16 %v4240
    %v4881 = vunpack.c.h.b16 %v4240
    %v4882 = vunpack.c.l.b16 %v4241
    %v4883 = vunpack.c.h.b16 %v4241
    %v4884 = vunpack.c.l.b16 %v4242
    %v4885 = vunpack.c.h.b16 %v4242
    %v4886 = vunpack.c.l.b16 %v4243
    %v4887 = vunpack.c.h.b16 %v4243
    %v4888 = vunpack.c.l.b16 %v4244
    %v4889 = vunpack.c.h.b16 %v4244
    %v4890 = vunpack.c.l.b16 %v4245
    %v4891 = vunpack.c.h.b16 %v4245
    %v4892 = vunpack.c.l.b16 %v4246
    %v4893 = vunpack.c.h.b16 %v4246
    %v4894 = vunpack.c.l.b16 %v4247
    %v4895 = vunpack.c.h.b16 %v4247
    %v4896 = vunpack.c.l.b16 %v4248
    %v4897 = vunpack.c.h.b16 %v4248
    %v4898 = vunpack.c.l.b16 %v4249
    %v4899 = vunpack.c.h.b16 %v4249
    %v4900 = vunpack.c.l.b16 %v4250
    %v4901 = vunpack.c.h.b16 %v4250
    %v4902 = vunpack.c.l.b16 %v4251
    %v4903 = vunpack.c.h.b16 %v4251
    %v4904 = vunpack.c.l.b16 %v4252
    %v4905 = vunpack.c.h.b16 %v4252
    %v4906 = vunpack.c.l.b16 %v4253
    %v4907 = vunpack.c.h.b16 %v4253
    %v4908 = vunpack.c.l.b16 %v4254
    %v4909 = vunpack.c.h.b16 %v4254
    %v4910 = vunpack.c.l.b16 %v4255
    %v4911 = vunpack.c.h.b16 %v4255
    %v4912 = vunpack.c.l.b16 %v4256
    %v4913 = vunpack.c.h.b16 %v4256
    %v4914 = vunpack.c.l.b16 %v4257
    %v4915 = vunpack.c.h.b16 %v4257
    %v4916 = vunpack.c.l.b16 %v4258
    %v4917 = vunpack.c.h.b16 %v4258
    %v4918 = vunpack.c.l.b16 %v4259
    %v4919 = vunpack.c.h.b16 %v4259
    %v4920 = vunpack.c.l.b16 %v4260
    %v4921 = vunpack.c.h.b16 %v4260
    %v4922 = vunpack.c.l.b16 %v4261
    %v4923 = vunpack.c.h.b16 %v4261
    %v4924 = vunpack.c.l.b16 %v4262
    %v4925 = vunpack.c.h.b16 %v4262
    %v4926 = vunpack.c.l.b16 %v4263
    %v4927 = vunpack.c.h.b16 %v4263
    %v4928 = vunpack.c.l.b16 %v4264
    %v4929 = vunpack.c.h.b16 %v4264
    %v4930 = vunpack.c.l.b16 %v4265
    %v4931 = vunpack.c.h.b16 %v4265
    %v4932 = vunpack.c.l.b16 %v4266
    %v4933 = vunpack.c.h.b16 %v4266
    %v4934 = vunpack.c.l.b16 %v4267
    %v4935 = vunpack.c.h.b16 %v4267
    %v4936 = vunpack.c.l.b16 %v4268
    %v4937 = vunpack.c.h.b16 %v4268
    %v4938 = vunpack.c.l.b16 %v4269
    %v4939 = vunpack.c.h.b16 %v4269
    %v4940 = vunpack.c.l.b16 %v4270
    %v4941 = vunpack.c.h.b16 %v4270
    %v4942 = vunpack.c.l.b16 %v4271
    %v4943 = vunpack.c.h.b16 %v4271
    %v4944 = vunpack.c.l.b16 %v4272
    %v4945 = vunpack.c.h.b16 %v4272
    %v4946 = vunpack.c.l.b16 %v4273
    %v4947 = vunpack.c.h.b16 %v4273
    %v4948 = vunpack.c.l.b16 %v4274
    %v4949 = vunpack.c.h.b16 %v4274
    %v4950 = vunpack.c.l.b16 %v4275
    %v4951 = vunpack.c.h.b16 %v4275
    %v4952 = vunpack.c.l.b16 %v4276
    %v4953 = vunpack.c.h.b16 %v4276
    %v4954 = vunpack.c.l.b16 %v4277
    %v4955 = vunpack.c.h.b16 %v4277
    %v4956 = vunpack.c.l.b16 %v4278
    %v4957 = vunpack.c.h.b16 %v4278
    %v4958 = vunpack.c.l.b16 %v4279
    %v4959 = vunpack.c.h.b16 %v4279
    %v4960 = vunpack.c.l.b16 %v4280
    %v4961 = vunpack.c.h.b16 %v4280
    %v4962 = vunpack.c.l.b16 %v4281
    %v4963 = vunpack.c.h.b16 %v4281
    %v4964 = vunpack.c.l.b16 %v4282
    %v4965 = vunpack.c.h.b16 %v4282
    %v4966 = vunpack.c.l.b16 %v4283
    %v4967 = vunpack.c.h.b16 %v4283
    %v4968 = vunpack.c.l.b16 %v4284
    %v4969 = vunpack.c.h.b16 %v4284
    %v4970 = vunpack.c.l.b16 %v4285
    %v4971 = vunpack.c.h.b16 %v4285
    %v4972 = vunpack.c.l.b16 %v4286
    %v4973 = vunpack.c.h.b16 %v4286
    %v4974 = vunpack.c.l.b16 %v4287
    %v4975 = vunpack.c.h.b16 %v4287
    %v4976 = vunpack.c.l.b16 %v4288
    %v4977 = vunpack.c.h.b16 %v4288
    %v4978 = vunpack.c.l.b16 %v4289
    %v4979 = vunpack.c.h.b16 %v4289
    %v4980 = vunpack.c.l.b16 %v4290
    %v4981 = vunpack.c.h.b16 %v4290
    %v4982 = vunpack.c.l.b16 %v4291
    %v4983 = vunpack.c.h.b16 %v4291
    %v4984 = vunpack.c.l.b16 %v4292
    %v4985 = vunpack.c.h.b16 %v4292
    %v4986 = vunpack.c.l.b16 %v4293
    %v4987 = vunpack.c.h.b16 %v4293
    %v4988 = vunpack.c.l.b16 %v4294
    %v4989 = vunpack.c.h.b16 %v4294
    %v4990 = vunpack.c.l.b16 %v4295
    %v4991 = vunpack.c.h.b16 %v4295
    %v4992 = vunpack.c.l.b16 %v4296
    %v4993 = vunpack.c.h.b16 %v4296
    %v4994 = vunpack.c.l.b16 %v4297
    %v4995 = vunpack.c.h.b16 %v4297
    %v4996 = vunpack.c.l.b16 %v4298
    %v4997 = vunpack.c.h.b16 %v4298
    %v4998 = vunpack.c.l.b16 %v4299
    %v4999 = vunpack.c.h.b16 %v4299
    %v5000 = vunpack.c.l.b16 %v4300
    %v5001 = vunpack.c.h.b16 %v4300
    %v5002 = vunpack.c.l.b16 %v4301
    %v5003 = vunpack.c.h.b16 %v4301
    %v5004 = vunpack.c.l.b16 %v4302
    %v5005 = vunpack.c.h.b16 %v4302
    %v5006 = vunpack.c.l.b16 %v4303
    %v5007 = vunpack.c.h.b16 %v4303
    %v5008 = vunpack.c.l.b16 %v4304
    %v5009 = vunpack.c.h.b16 %v4304
    %v5010 = vunpack.c.l.b16 %v4305
    %v5011 = vunpack.c.h.b16 %v4305
    %v5012 = vunpack.c.l.b16 %v4306
    %v5013 = vunpack.c.h.b16 %v4306
    %v5014 = vunpack.c.l.b16 %v4307
    %v5015 = vunpack.c.h.b16 %v4307
    %v5016 = vunpack.c.l.b16 %v4308
    %v5017 = vunpack.c.h.b16 %v4308
    %v5018 = vunpack.c.l.b16 %v4309
    %v5019 = vunpack.c.h.b16 %v4309
    %v5020 = vunpack.c.l.b16 %v4310
    %v5021 = vunpack.c.h.b16 %v4310
    %v5022 = vunpack.c.l.b16 %v4311
    %v5023 = vunpack.c.h.b16 %v4311
    %v5024 = vunpack.c.l.b16 %v4312
    %v5025 = vunpack.c.h.b16 %v4312
    %v5026 = vunpack.c.l.b16 %v4313
    %v5027 = vunpack.c.h.b16 %v4313
    %v5028 = vunpack.c.l.b16 %v4314
    %v5029 = vunpack.c.h.b16 %v4314
    %v5030 = vunpack.c.l.b16 %v4315
    %v5031 = vunpack.c.h.b16 %v4315
    %v5032 = vunpack.c.l.b16 %v4316
    %v5033 = vunpack.c.h.b16 %v4316
    %v5034 = vunpack.c.l.b16 %v4317
    %v5035 = vunpack.c.h.b16 %v4317
    %v5036 = vunpack.c.l.b16 %v4318
    %v5037 = vunpack.c.h.b16 %v4318
    %v5038 = vunpack.c.l.b16 %v4319
    %v5039 = vunpack.c.h.b16 %v4319
    %v5040 = vunpack.c.l.b16 %v4320
    %v5041 = vunpack.c.h.b16 %v4320
    %v5042 = vunpack.c.l.b16 %v4321
    %v5043 = vunpack.c.h.b16 %v4321
    %v5044 = vunpack.c.l.b16 %v4322
    %v5045 = vunpack.c.h.b16 %v4322
    %v5046 = vunpack.c.l.b16 %v4323
    %v5047 = vunpack.c.h.b16 %v4323
    %v5048 = vunpack.c.l.b16 %v4324
    %v5049 = vunpack.c.h.b16 %v4324
    %v5050 = vunpack.c.l.b16 %v4325
    %v5051 = vunpack.c.h.b16 %v4325
    %v5052 = vunpack.c.l.b16 %v4326
    %v5053 = vunpack.c.h.b16 %v4326
    %v5054 = vunpack.c.l.b16 %v4327
    %v5055 = vunpack.c.h.b16 %v4327
    %v5056 = vunpack.c.l.b16 %v4328
    %v5057 = vunpack.c.h.b16 %v4328
    %v5058 = vunpack.c.l.b16 %v4329
    %v5059 = vunpack.c.h.b16 %v4329
    %v5060 = vunpack.c.l.b16 %v4330
    %v5061 = vunpack.c.h.b16 %v4330
    %v5062 = vunpack.c.l.b16 %v4331
    %v5063 = vunpack.c.h.b16 %v4331
    %v5064 = vunpack.c.l.b16 %v4332
    %v5065 = vunpack.c.h.b16 %v4332
    %v5066 = vunpack.c.l.b16 %v4333
    %v5067 = vunpack.c.h.b16 %v4333
    %v5068 = vunpack.c.l.b16 %v4334
    %v5069 = vunpack.c.h.b16 %v4334
    %v5070 = vunpack.c.l.b16 %v4335
    %v5071 = vunpack.c.h.b16 %v4335
    %v5072 = vunpack.c.l.b16 %v4336
    %v5073 = vunpack.c.h.b16 %v4336
    %v5074 = vunpack.c.l.b16 %v4337
    %v5075 = vunpack.c.h.b16 %v4337
    %v5076 = vunpack.c.l.b16 %v4338
    %v5077 = vunpack.c.h.b16 %v4338
    %v5078 = vunpack.c.l.b16 %v4339
    %v5079 = vunpack.c.h.b16 %v4339
    %v5080 = vunpack.c.l.b16 %v4340
    %v5081 = vunpack.c.h.b16 %v4340
    %v5082 = vunpack.c.l.b16 %v4341
    %v5083 = vunpack.c.h.b16 %v4341
    %v5084 = vunpack.c.l.b16 %v4342
    %v5085 = vunpack.c.h.b16 %v4342
    %v5086 = vunpack.c.l.b16 %v4343
    %v5087 = vunpack.c.h.b16 %v4343
    %v5088 = vunpack.c.l.b16 %v4344
    %v5089 = vunpack.c.h.b16 %v4344
    %v5090 = vunpack.c.l.b16 %v4345
    %v5091 = vunpack.c.h.b16 %v4345
    %v5092 = vunpack.c.l.b16 %v4346
    %v5093 = vunpack.c.h.b16 %v4346
    %v5094 = vunpack.c.l.b16 %v4347
    %v5095 = vunpack.c.h.b16 %v4347
    %v5096 = vunpack.c.l.b16 %v4348
    %v5097 = vunpack.c.h.b16 %v4348
    %v5098 = vunpack.c.l.b16 %v4349
    %v5099 = vunpack.c.h.b16 %v4349
    %v5100 = vunpack.c.l.b16 %v4350
    %v5101 = vunpack.c.h.b16 %v4350
    %v5102 = vunpack.c.l.b16 %v4351
    %v5103 = vunpack.c.h.b16 %v4351
    %v5104 = vunpack.c.l.b16 %v4352
    %v5105 = vunpack.c.h.b16 %v4352
    %v5106 = vunpack.c.l.b16 %v4353
    %v5107 = vunpack.c.h.b16 %v4353
    %v5108 = vunpack.c.l.b16 %v4354
    %v5109 = vunpack.c.h.b16 %v4354
    %v5110 = vunpack.c.l.b16 %v4355
    %v5111 = vunpack.c.h.b16 %v4355
    %v5112 = vunpack.c.l.b16 %v4356
    %v5113 = vunpack.c.h.b16 %v4356
    %v5114 = vunpack.c.l.b16 %v4357
    %v5115 = vunpack.c.h.b16 %v4357
    %v5116 = vunpack.c.l.b16 %v4358
    %v5117 = vunpack.c.h.b16 %v4358
    %v5118 = vunpack.c.l.b16 %v4359
    %v5119 = vunpack.c.h.b16 %v4359
    %v5120 = vunpack.c.l.b16 %v4360
    %v5121 = vunpack.c.h.b16 %v4360
    %v5122 = vunpack.c.l.b16 %v4361
    %v5123 = vunpack.c.h.b16 %v4361
    %v5124 = vunpack.c.l.b16 %v4362
    %v5125 = vunpack.c.h.b16 %v4362
    %v5126 = vunpack.c.l.b16 %v4363
    %v5127 = vunpack.c.h.b16 %v4363
    %v5128 = vunpack.c.l.b16 %v4364
    %v5129 = vunpack.c.h.b16 %v4364
    %v5130 = vunpack.c.l.b16 %v4365
    %v5131 = vunpack.c.h.b16 %v4365
    %v5132 = vunpack.c.l.b16 %v4366
    %v5133 = vunpack.c.h.b16 %v4366
    %v5134 = vunpack.c.l.b16 %v4367
    %v5135 = vunpack.c.h.b16 %v4367
    %v5136 = vpack.c.b16 %v4628, %v4624
    %v5137 = vpack.c.b16 %v4629, %v4625
    %v5138 = vpack.c.b16 %v4630, %v4626
    %v5139 = vpack.c.b16 %v4631, %v4627
    %v5140 = vpack.c.b16 %v4636, %v4632
    %v5141 = vpack.c.b16 %v4637, %v4633
    %v5142 = vpack.c.b16 %v4638, %v4634
    %v5143 = vpack.c.b16 %v4639, %v4635
    %v5144 = vpack.c.b16 %v4644, %v4640
    %v5145 = vpack.c.b16 %v4645, %v4641
    %v5146 = vpack.c.b16 %v4646, %v4642
    %v5147 = vpack.c.b16 %v4647, %v4643
    %v5148 = vpack.c.b16 %v4652, %v4648
    %v5149 = vpack.c.b16 %v4653, %v4649
    %v5150 = vpack.c.b16 %v4654, %v4650
    %v5151 = vpack.c.b16 %v4655, %v4651
    %v5152 = vpack.c.b16 %v4660, %v4656
    %v5153 = vpack.c.b16 %v4661, %v4657
    %v5154 = vpack.c.b16 %v4662, %v4658
    %v5155 = vpack.c.b16 %v4663, %v4659
    %v5156 = vpack.c.b16 %v4668, %v4664
    %v5157 = vpack.c.b16 %v4669, %v4665
    %v5158 = vpack.c.b16 %v4670, %v4666
    %v5159 = vpack.c.b16 %v4671, %v4667
    %v5160 = vpack.c.b16 %v4676, %v4672
    %v5161 = vpack.c.b16 %v4677, %v4673
    %v5162 = vpack.c.b16 %v4678, %v4674
    %v5163 = vpack.c.b16 %v4679, %v4675
    %v5164 = vpack.c.b16 %v4684, %v4680
    %v5165 = vpack.c.b16 %v4685, %v4681
    %v5166 = vpack.c.b16 %v4686, %v4682
    %v5167 = vpack.c.b16 %v4687, %v4683
    %v5168 = vpack.c.b16 %v4692, %v4688
    %v5169 = vpack.c.b16 %v4693, %v4689
    %v5170 = vpack.c.b16 %v4694, %v4690
    %v5171 = vpack.c.b16 %v4695, %v4691
    %v5172 = vpack.c.b16 %v4700, %v4696
    %v5173 = vpack.c.b16 %v4701, %v4697
    %v5174 = vpack.c.b16 %v4702, %v4698
    %v5175 = vpack.c.b16 %v4703, %v4699
    %v5176 = vpack.c.b16 %v4708, %v4704
    %v5177 = vpack.c.b16 %v4709, %v4705
    %v5178 = vpack.c.b16 %v4710, %v4706
    %v5179 = vpack.c.b16 %v4711, %v4707
    %v5180 = vpack.c.b16 %v4716, %v4712
    %v5181 = vpack.c.b16 %v4717, %v4713
    %v5182 = vpack.c.b16 %v4718, %v4714
    %v5183 = vpack.c.b16 %v4719, %v4715
    %v5184 = vpack.c.b16 %v4724, %v4720
    %v5185 = vpack.c.b16 %v4725, %v4721
    %v5186 = vpack.c.b16 %v4726, %v4722
    %v5187 = vpack.c.b16 %v4727, %v4723
    %v5188 = vpack.c.b16 %v4732, %v4728
    %v5189 = vpack.c.b16 %v4733, %v4729
    %v5190 = vpack.c.b16 %v4734, %v4730
    %v5191 = vpack.c.b16 %v4735, %v4731
    %v5192 = vpack.c.b16 %v4740, %v4736
    %v5193 = vpack.c.b16 %v4741, %v4737
    %v5194 = vpack.c.b16 %v4742, %v4738
    %v5195 = vpack.c.b16 %v4743, %v4739
    %v5196 = vpack.c.b16 %v4748, %v4744
    %v5197 = vpack.c.b16 %v4749, %v4745
    %v5198 = vpack.c.b16 %v4750, %v4746
    %v5199 = vpack.c.b16 %v4751, %v4747
    %v5200 = vpack.c.b16 %v4756, %v4752
    %v5201 = vpack.c.b16 %v4757, %v4753
    %v5202 = vpack.c.b16 %v4758, %v4754
    %v5203 = vpack.c.b16 %v4759, %v4755
    %v5204 = vpack.c.b16 %v4764, %v4760
    %v5205 = vpack.c.b16 %v4765, %v4761
    %v5206 = vpack.c.b16 %v4766, %v4762
    %v5207 = vpack.c.b16 %v4767, %v4763
    %v5208 = vpack.c.b16 %v4772, %v4768
    %v5209 = vpack.c.b16 %v4773, %v4769
    %v5210 = vpack.c.b16 %v4774, %v4770
    %v5211 = vpack.c.b16 %v4775, %v4771
    %v5212 = vpack.c.b16 %v4780, %v4776
    %v5213 = vpack.c.b16 %v4781, %v4777
    %v5214 = vpack.c.b16 %v4782, %v4778
    %v5215 = vpack.c.b16 %v4783, %v4779
    %v5216 = vpack.c.b16 %v4788, %v4784
    %v5217 = vpack.c.b16 %v4789, %v4785
    %v5218 = vpack.c.b16 %v4790, %v4786
    %v5219 = vpack.c.b16 %v4791, %v4787
    %v5220 = vpack.c.b16 %v4796, %v4792
    %v5221 = vpack.c.b16 %v4797, %v4793
    %v5222 = vpack.c.b16 %v4798, %v4794
    %v5223 = vpack.c.b16 %v4799, %v4795
    %v5224 = vpack.c.b16 %v4804, %v4800
    %v5225 = vpack.c.b16 %v4805, %v4801
    %v5226 = vpack.c.b16 %v4806, %v4802
    %v5227 = vpack.c.b16 %v4807, %v4803
    %v5228 = vpack.c.b16 %v4812, %v4808
    %v5229 = vpack.c.b16 %v4813, %v4809
    %v5230 = vpack.c.b16 %v4814, %v4810
    %v5231 = vpack.c.b16 %v4815, %v4811
    %v5232 = vpack.c.b16 %v4820, %v4816
    %v5233 = vpack.c.b16 %v4821, %v4817
    %v5234 = vpack.c.b16 %v4822, %v4818
    %v5235 = vpack.c.b16 %v4823, %v4819
    %v5236 = vpack.c.b16 %v4828, %v4824
    %v5237 = vpack.c.b16 %v4829, %v4825
    %v5238 = vpack.c.b16 %v4830, %v4826
    %v5239 = vpack.c.b16 %v4831, %v4827
    %v5240 = vpack.c.b16 %v4836, %v4832
    %v5241 = vpack.c.b16 %v4837, %v4833
    %v5242 = vpack.c.b16 %v4838, %v4834
    %v5243 = vpack.c.b16 %v4839, %v4835
    %v5244 = vpack.c.b16 %v4844, %v4840
    %v5245 = vpack.c.b16 %v4845, %v4841
    %v5246 = vpack.c.b16 %v4846, %v4842
    %v5247 = vpack.c.b16 %v4847, %v4843
    %v5248 = vpack.c.b16 %v4852, %v4848
    %v5249 = vpack.c.b16 %v4853, %v4849
    %v5250 = vpack.c.b16 %v4854, %v4850
    %v5251 = vpack.c.b16 %v4855, %v4851
    %v5252 = vpack.c.b16 %v4860, %v4856
    %v5253 = vpack.c.b16 %v4861, %v4857
    %v5254 = vpack.c.b16 %v4862, %v4858
    %v5255 = vpack.c.b16 %v4863, %v4859
    %v5256 = vpack.c.b16 %v4868, %v4864
    %v5257 = vpack.c.b16 %v4869, %v4865
    %v5258 = vpack.c.b16 %v4870, %v4866
    %v5259 = vpack.c.b16 %v4871, %v4867
    %v5260 = vpack.c.b16 %v4876, %v4872
    %v5261 = vpack.c.b16 %v4877, %v4873
    %v5262 = vpack.c.b16 %v4878, %v4874
    %v5263 = vpack.c.b16 %v4879, %v4875
    %v5264 = vpack.c.b16 %v4884, %v4880
    %v5265 = vpack.c.b16 %v4885, %v4881
    %v5266 = vpack.c.b16 %v4886, %v4882
    %v5267 = vpack.c.b16 %v4887, %v4883
    %v5268 = vpack.c.b16 %v4892, %v4888
    %v5269 = vpack.c.b16 %v4893, %v4889
    %v5270 = vpack.c.b16 %v4894, %v4890
    %v5271 = vpack.c.b16 %v4895, %v4891
    %v5272 = vpack.c.b16 %v4900, %v4896
    %v5273 = vpack.c.b16 %v4901, %v4897
    %v5274 = vpack.c.b16 %v4902, %v4898
    %v5275 = vpack.c.b16 %v4903, %v4899
    %v5276 = vpack.c.b16 %v4908, %v4904
    %v5277 = vpack.c.b16 %v4909, %v4905
    %v5278 = vpack.c.b16 %v4910, %v4906
    %v5279 = vpack.c.b16 %v4911, %v4907
    %v5280 = vpack.c.b16 %v4916, %v4912
    %v5281 = vpack.c.b16 %v4917, %v4913
    %v5282 = vpack.c.b16 %v4918, %v4914
    %v5283 = vpack.c.b16 %v4919, %v4915
    %v5284 = vpack.c.b16 %v4924, %v4920
    %v5285 = vpack.c.b16 %v4925, %v4921
    %v5286 = vpack.c.b16 %v4926, %v4922
    %v5287 = vpack.c.b16 %v4927, %v4923
    %v5288 = vpack.c.b16 %v4932, %v4928
    %v5289 = vpack.c.b16 %v4933, %v4929
    %v5290 = vpack.c.b16 %v4934, %v4930
    %v5291 = vpack.c.b16 %v4935, %v4931
    %v5292 = vpack.c.b16 %v4940, %v4936
    %v5293 = vpack.c.b16 %v4941, %v4937
    %v5294 = vpack.c.b16 %v4942, %v4938
    %v5295 = vpack.c.b16 %v4943, %v4939
    %v5296 = vpack.c.b16 %v4948, %v4944
    %v5297 = vpack.c.b16 %v4949, %v4945
    %v5298 = vpack.c.b16 %v4950, %v4946
    %v5299 = vpack.c.b16 %v4951, %v4947
    %v5300 = vpack.c.b16 %v4956, %v4952
    %v5301 = vpack.c.b16 %v4957, %v4953
    %v5302 = vpack.c.b16 %v4958, %v4954
    %v5303 = vpack.c.b16 %v4959, %v4955
    %v5304 = vpack.c.b16 %v4964, %v4960
    %v5305 = vpack.c.b16 %v4965, %v4961
    %v5306 = vpack.c.b16 %v4966, %v4962
    %v5307 = vpack.c.b16 %v4967, %v4963
    %v5308 = vpack.c.b16 %v4972, %v4968
    %v5309 = vpack.c.b16 %v4973, %v4969
    %v5310 = vpack.c.b16 %v4974, %v4970
    %v5311 = vpack.c.b16 %v4975, %v4971
    %v5312 = vpack.c.b16 %v4980, %v4976
    %v5313 = vpack.c.b16 %v4981, %v4977
    %v5314 = vpack.c.b16 %v4982, %v4978
    %v5315 = vpack.c.b16 %v4983, %v4979
    %v5316 = vpack.c.b16 %v4988, %v4984
    %v5317 = vpack.c.b16 %v4989, %v4985
    %v5318 = vpack.c.b16 %v4990, %v4986
    %v5319 = vpack.c.b16 %v4991, %v4987
    %v5320 = vpack.c.b16 %v4996, %v4992
    %v5321 = vpack.c.b16 %v4997, %v4993
    %v5322 = vpack.c.b16 %v4998, %v4994
    %v5323 = vpack.c.b16 %v4999, %v4995
    %v5324 = vpack.c.b16 %v5004, %v5000
    %v5325 = vpack.c.b16 %v5005, %v5001
    %v5326 = vpack.c.b16 %v5006, %v5002
    %v5327 = vpack.c.b16 %v5007, %v5003
    %v5328 = vpack.c.b16 %v5012, %v5008
    %v5329 = vpack.c.b16 %v5013, %v5009
    %v5330 = vpack.c.b16 %v5014, %v5010
    %v5331 = vpack.c.b16 %v5015, %v5011
    %v5332 = vpack.c.b16 %v5020, %v5016
    %v5333 = vpack.c.b16 %v5021, %v5017
    %v5334 = vpack.c.b16 %v5022, %v5018
    %v5335 = vpack.c.b16 %v5023, %v5019
    %v5336 = vpack.c.b16 %v5028, %v5024
    %v5337 = vpack.c.b16 %v5029, %v5025
    %v5338 = vpack.c.b16 %v5030, %v5026
    %v5339 = vpack.c.b16 %v5031, %v5027
    %v5340 = vpack.c.b16 %v5036, %v5032
    %v5341 = vpack.c.b16 %v5037, %v5033
    %v5342 = vpack.c.b16 %v5038, %v5034
    %v5343 = vpack.c.b16 %v5039, %v5035
    %v5344 = vpack.c.b16 %v5044, %v5040
    %v5345 = vpack.c.b16 %v5045, %v5041
    %v5346 = vpack.c.b16 %v5046, %v5042
    %v5347 = vpack.c.b16 %v5047, %v5043
    %v5348 = vpack.c.b16 %v5052, %v5048
    %v5349 = vpack.c.b16 %v5053, %v5049
    %v5350 = vpack.c.b16 %v5054, %v5050
    %v5351 = vpack.c.b16 %v5055, %v5051
    %v5352 = vpack.c.b16 %v5060, %v5056
    %v5353 = vpack.c.b16 %v5061, %v5057
    %v5354 = vpack.c.b16 %v5062, %v5058
    %v5355 = vpack.c.b16 %v5063, %v5059
    %v5356 = vpack.c.b16 %v5068, %v5064
    %v5357 = vpack.c.b16 %v5069, %v5065
    %v5358 = vpack.c.b16 %v5070, %v5066
    %v5359 = vpack.c.b16 %v5071, %v5067
    %v5360 = vpack.c.b16 %v5076, %v5072
    %v5361 = vpack.c.b16 %v5077, %v5073
    %v5362 = vpack.c.b16 %v5078, %v5074
    %v5363 = vpack.c.b16 %v5079, %v5075
    %v5364 = vpack.c.b16 %v5084, %v5080
    %v5365 = vpack.c.b16 %v5085, %v5081
    %v5366 = vpack.c.b16 %v5086, %v5082
    %v5367 = vpack.c.b16 %v5087, %v5083
    %v5368 = vpack.c.b16 %v5092, %v5088
    %v5369 = vpack.c.b16 %v5093, %v5089
    %v5370 = vpack.c.b16 %v5094, %v5090
    %v5371 = vpack.c.b16 %v5095, %v5091
    %v5372 = vpack.c.b16 %v5100, %v5096
    %v5373 = vpack.c.b16 %v5101, %v5097
    %v5374 = vpack.c.b16 %v5102, %v5098
    %v5375 = vpack.c.b16 %v5103, %v5099
    %v5376 = vpack.c.b16 %v5108, %v5104
    %v5377 = vpack.c.b16 %v5109, %v5105
    %v5378 = vpack.c.b16 %v5110, %v5106
    %v5379 = vpack.c.b16 %v5111, %v5107
    %v5380 = vpack.c.b16 %v5116, %v5112
    %v5381 = vpack.c.b16 %v5117, %v5113
    %v5382 = vpack.c.b16 %v5118, %v5114
    %v5383 = vpack.c.b16 %v5119, %v5115
    %v5384 = vpack.c.b16 %v5124, %v5120
    %v5385 = vpack.c.b16 %v5125, %v5121
    %v5386 = vpack.c.b16 %v5126, %v5122
    %v5387 = vpack.c.b16 %v5127, %v5123
    %v5388 = vpack.c.b16 %v5132, %v5128
    %v5389 = vpack.c.b16 %v5133, %v5129
    %v5390 = vpack.c.b16 %v5134, %v5130
    %v5391 = vpack.c.b16 %v5135, %v5131
    %5648 = vmatprep.subr.bf16.mxu0 %v5137
    %5649 = vmatpush1.bf16.msra.mxu0 %v5136
    %5650 = vmatprep.subr.bf16.mxu0 %v5141
    %5651 = vmatpush1.bf16.msra.mxu0 %v5140
    %5652 = vmatprep.subr.bf16.mxu0 %v5145
    %5653 = vmatpush1.bf16.msra.mxu0 %v5144
    %5654 = vmatprep.subr.bf16.mxu0 %v5149
    %5655 = vmatpush1.bf16.msra.mxu0 %v5148
    %5656 = vmatprep.subr.bf16.mxu0 %v5153
    %5657 = vmatpush1.bf16.msra.mxu0 %v5152
    %5658 = vmatprep.subr.bf16.mxu0 %v5157
    %5659 = vmatpush1.bf16.msra.mxu0 %v5156
    %5660 = vmatprep.subr.bf16.mxu0 %v5161
    %5661 = vmatpush1.bf16.msra.mxu0 %v5160
    %5662 = vmatprep.subr.bf16.mxu0 %v5165
    %5663 = vmatpush1.bf16.msra.mxu0 %v5164
    %5664 = vmatprep.subr.bf16.mxu0 %v5169
    %5665 = vmatpush1.bf16.msra.mxu0 %v5168
    %5666 = vmatprep.subr.bf16.mxu0 %v5173
    %5667 = vmatpush1.bf16.msra.mxu0 %v5172
    %5668 = vmatprep.subr.bf16.mxu0 %v5177
    %5669 = vmatpush1.bf16.msra.mxu0 %v5176
    %5670 = vmatprep.subr.bf16.mxu0 %v5181
    %5671 = vmatpush1.bf16.msra.mxu0 %v5180
    %5672 = vmatprep.subr.bf16.mxu0 %v5185
    %5673 = vmatpush1.bf16.msra.mxu0 %v5184
    %5674 = vmatprep.subr.bf16.mxu0 %v5189
    %5675 = vmatpush1.bf16.msra.mxu0 %v5188
    %5676 = vmatprep.subr.bf16.mxu0 %v5193
    %5677 = vmatpush1.bf16.msra.mxu0 %v5192
    %5678 = vmatprep.subr.bf16.mxu0 %v5197
    %5679 = vmatpush1.bf16.msra.mxu0 %v5196
    %5680 = vmatprep.mubr.bf16.mxu0 %v4105
    %5681 = vmatmul.mubr.bf16.gmra.mrb[0].mxu0 %v4104
    %v5682 = vpop.f32.mrb[0].mxu0
    %v5683 = vadd.f32 0.0, %v5682
    %v5684 = vpop.f32.mrb[0].mxu0
    %v5685 = vadd.f32 0.0, %v5684
    %v5686 = vpop.f32.mrb[0].mxu0
    %v5687 = vpop.f32.mrb[0].mxu0
    %5688 = vdwg.mxu0
    %5689 = vmatprep.subr.bf16.mxu0 %v5201
    %5690 = vmatpush1.bf16.msra.mxu0 %v5200
    %5691 = vmatprep.subr.bf16.mxu0 %v5205
    %5692 = vmatpush1.bf16.msra.mxu0 %v5204
    %5693 = vmatprep.subr.bf16.mxu0 %v5209
    %5694 = vmatpush1.bf16.msra.mxu0 %v5208
    %5695 = vmatprep.subr.bf16.mxu0 %v5213
    %5696 = vmatpush1.bf16.msra.mxu0 %v5212
    %5697 = vmatprep.subr.bf16.mxu0 %v5217
    %5698 = vmatpush1.bf16.msra.mxu0 %v5216
    %5699 = vmatprep.subr.bf16.mxu0 %v5221
    %5700 = vmatpush1.bf16.msra.mxu0 %v5220
    %5701 = vmatprep.subr.bf16.mxu0 %v5225
    %5702 = vmatpush1.bf16.msra.mxu0 %v5224
    %5703 = vmatprep.subr.bf16.mxu0 %v5229
    %5704 = vmatpush1.bf16.msra.mxu0 %v5228
    %5705 = vmatprep.subr.bf16.mxu0 %v5233
    %5706 = vmatpush1.bf16.msra.mxu0 %v5232
    %5707 = vmatprep.subr.bf16.mxu0 %v5237
    %5708 = vmatpush1.bf16.msra.mxu0 %v5236
    %5709 = vmatprep.subr.bf16.mxu0 %v5241
    %5710 = vmatpush1.bf16.msra.mxu0 %v5240
    %5711 = vmatprep.subr.bf16.mxu0 %v5245
    %5712 = vmatpush1.bf16.msra.mxu0 %v5244
    %5713 = vmatprep.subr.bf16.mxu0 %v5249
    %5714 = vmatpush1.bf16.msra.mxu0 %v5248
    %5715 = vmatprep.subr.bf16.mxu0 %v5253
    %5716 = vmatpush1.bf16.msra.mxu0 %v5252
    %5717 = vmatprep.subr.bf16.mxu0 %v5257
    %5718 = vmatpush1.bf16.msra.mxu0 %v5256
    %5719 = vmatprep.subr.bf16.mxu0 %v5261
    %5720 = vmatpush1.bf16.msra.mxu0 %v5260
    %5721 = vmatprep.mubr.bf16.mxu0 %v4107
    %5722 = vmatmul.mubr.bf16.gmra.mrb[0].mxu0 %v4106
    %v5723 = vpop.f32.mrb[0].mxu0
    %v5724 = vadd.f32 %v5683, %v5723
    %v5725 = vpop.f32.mrb[0].mxu0
    %v5726 = vadd.f32 %v5685, %v5725
    %v5727 = vpop.f32.mrb[0].mxu0
    %v5728 = vpop.f32.mrb[0].mxu0
    %5729 = vdwg.mxu0
    %5730 = vmatprep.subr.bf16.mxu0 %v5265
    %5731 = vmatpush1.bf16.msra.mxu0 %v5264
    %5732 = vmatprep.subr.bf16.mxu0 %v5269
    %5733 = vmatpush1.bf16.msra.mxu0 %v5268
    %5734 = vmatprep.subr.bf16.mxu0 %v5273
    %5735 = vmatpush1.bf16.msra.mxu0 %v5272
    %5736 = vmatprep.subr.bf16.mxu0 %v5277
    %5737 = vmatpush1.bf16.msra.mxu0 %v5276
    %5738 = vmatprep.subr.bf16.mxu0 %v5281
    %5739 = vmatpush1.bf16.msra.mxu0 %v5280
    %5740 = vmatprep.subr.bf16.mxu0 %v5285
    %5741 = vmatpush1.bf16.msra.mxu0 %v5284
    %5742 = vmatprep.subr.bf16.mxu0 %v5289
    %5743 = vmatpush1.bf16.msra.mxu0 %v5288
    %5744 = vmatprep.subr.bf16.mxu0 %v5293
    %5745 = vmatpush1.bf16.msra.mxu0 %v5292
    %5746 = vmatprep.subr.bf16.mxu0 %v5297
    %5747 = vmatpush1.bf16.msra.mxu0 %v5296
    %5748 = vmatprep.subr.bf16.mxu0 %v5301
    %5749 = vmatpush1.bf16.msra.mxu0 %v5300
    %5750 = vmatprep.subr.bf16.mxu0 %v5305
    %5751 = vmatpush1.bf16.msra.mxu0 %v5304
    %5752 = vmatprep.subr.bf16.mxu0 %v5309
    %5753 = vmatpush1.bf16.msra.mxu0 %v5308
    %5754 = vmatprep.subr.bf16.mxu0 %v5313
    %5755 = vmatpush1.bf16.msra.mxu0 %v5312
    %5756 = vmatprep.subr.bf16.mxu0 %v5317
    %5757 = vmatpush1.bf16.msra.mxu0 %v5316
    %5758 = vmatprep.subr.bf16.mxu0 %v5321
    %5759 = vmatpush1.bf16.msra.mxu0 %v5320
    %5760 = vmatprep.subr.bf16.mxu0 %v5325
    %5761 = vmatpush1.bf16.msra.mxu0 %v5324
    %5762 = vmatprep.mubr.bf16.mxu0 %v4109
    %5763 = vmatmul.mubr.bf16.gmra.mrb[0].mxu0 %v4108
    %v5764 = vpop.f32.mrb[0].mxu0
    %v5765 = vadd.f32 %v5724, %v5764
    %v5766 = vpop.f32.mrb[0].mxu0
    %v5767 = vadd.f32 %v5726, %v5766
    %v5768 = vpop.f32.mrb[0].mxu0
    %v5769 = vpop.f32.mrb[0].mxu0
    %5770 = vdwg.mxu0
    %5771 = vmatprep.subr.bf16.mxu0 %v5329
    %5772 = vmatpush1.bf16.msra.mxu0 %v5328
    %5773 = vmatprep.subr.bf16.mxu0 %v5333
    %5774 = vmatpush1.bf16.msra.mxu0 %v5332
    %5775 = vmatprep.subr.bf16.mxu0 %v5337
    %5776 = vmatpush1.bf16.msra.mxu0 %v5336
    %5777 = vmatprep.subr.bf16.mxu0 %v5341
    %5778 = vmatpush1.bf16.msra.mxu0 %v5340
    %5779 = vmatprep.subr.bf16.mxu0 %v5345
    %5780 = vmatpush1.bf16.msra.mxu0 %v5344
    %5781 = vmatprep.subr.bf16.mxu0 %v5349
    %5782 = vmatpush1.bf16.msra.mxu0 %v5348
    %5783 = vmatprep.subr.bf16.mxu0 %v5353
    %5784 = vmatpush1.bf16.msra.mxu0 %v5352
    %5785 = vmatprep.subr.bf16.mxu0 %v5357
    %5786 = vmatpush1.bf16.msra.mxu0 %v5356
    %5787 = vmatprep.subr.bf16.mxu0 %v5361
    %5788 = vmatpush1.bf16.msra.mxu0 %v5360
    %5789 = vmatprep.subr.bf16.mxu0 %v5365
    %5790 = vmatpush1.bf16.msra.mxu0 %v5364
    %5791 = vmatprep.subr.bf16.mxu0 %v5369
    %5792 = vmatpush1.bf16.msra.mxu0 %v5368
    %5793 = vmatprep.subr.bf16.mxu0 %v5373
    %5794 = vmatpush1.bf16.msra.mxu0 %v5372
    %5795 = vmatprep.subr.bf16.mxu0 %v5377
    %5796 = vmatpush1.bf16.msra.mxu0 %v5376
    %5797 = vmatprep.subr.bf16.mxu0 %v5381
    %5798 = vmatpush1.bf16.msra.mxu0 %v5380
    %5799 = vmatprep.subr.bf16.mxu0 %v5385
    %5800 = vmatpush1.bf16.msra.mxu0 %v5384
    %5801 = vmatprep.subr.bf16.mxu0 %v5389
    %5802 = vmatpush1.bf16.msra.mxu0 %v5388
    %5803 = vmatprep.mubr.bf16.mxu0 %v4111
    %5804 = vmatmul.mubr.bf16.gmra.mrb[0].mxu0 %v4110
    %v5805 = vpop.f32.mrb[0].mxu0
    %v5806 = vadd.f32 %v5765, %v5805
    %v5807 = vpop.f32.mrb[0].mxu0
    %v5808 = vadd.f32 %v5767, %v5807
    %v5809 = vpop.f32.mrb[0].mxu0
    %v5810 = vpop.f32.mrb[0].mxu0
    %5811 = vdwg.mxu0
    %5812 = vmatprep.subr.bf16.mxu0 %v5139
    %5813 = vmatpush1.bf16.msra.mxu0 %v5138
    %5814 = vmatprep.subr.bf16.mxu0 %v5143
    %5815 = vmatpush1.bf16.msra.mxu0 %v5142
    %5816 = vmatprep.subr.bf16.mxu0 %v5147
    %5817 = vmatpush1.bf16.msra.mxu0 %v5146
    %5818 = vmatprep.subr.bf16.mxu0 %v5151
    %5819 = vmatpush1.bf16.msra.mxu0 %v5150
    %5820 = vmatprep.subr.bf16.mxu0 %v5155
    %5821 = vmatpush1.bf16.msra.mxu0 %v5154
    %5822 = vmatprep.subr.bf16.mxu0 %v5159
    %5823 = vmatpush1.bf16.msra.mxu0 %v5158
    %5824 = vmatprep.subr.bf16.mxu0 %v5163
    %5825 = vmatpush1.bf16.msra.mxu0 %v5162
    %5826 = vmatprep.subr.bf16.mxu0 %v5167
    %5827 = vmatpush1.bf16.msra.mxu0 %v5166
    %5828 = vmatprep.subr.bf16.mxu0 %v5171
    %5829 = vmatpush1.bf16.msra.mxu0 %v5170
    %5830 = vmatprep.subr.bf16.mxu0 %v5175
    %5831 = vmatpush1.bf16.msra.mxu0 %v5174
    %5832 = vmatprep.subr.bf16.mxu0 %v5179
    %5833 = vmatpush1.bf16.msra.mxu0 %v5178
    %5834 = vmatprep.subr.bf16.mxu0 %v5183
    %5835 = vmatpush1.bf16.msra.mxu0 %v5182
    %5836 = vmatprep.subr.bf16.mxu0 %v5187
    %5837 = vmatpush1.bf16.msra.mxu0 %v5186
    %5838 = vmatprep.subr.bf16.mxu0 %v5191
    %5839 = vmatpush1.bf16.msra.mxu0 %v5190
    %5840 = vmatprep.subr.bf16.mxu0 %v5195
    %5841 = vmatpush1.bf16.msra.mxu0 %v5194
    %5842 = vmatprep.subr.bf16.mxu0 %v5199
    %5843 = vmatpush1.bf16.msra.mxu0 %v5198
    %5844 = vmatprep.mubr.bf16.mxu0 %v4105
    %5845 = vmatmul.mubr.bf16.gmra.mrb[0].mxu0 %v4104
    %v5846 = vpop.f32.mrb[0].mxu0
    %v5847 = vadd.f32 0.0, %v5846
    %v5848 = vpop.f32.mrb[0].mxu0
    %v5849 = vadd.f32 0.0, %v5848
    %v5850 = vpop.f32.mrb[0].mxu0
    %v5851 = vpop.f32.mrb[0].mxu0
    %5852 = vdwg.mxu0
    %5853 = vmatprep.subr.bf16.mxu0 %v5203
    %5854 = vmatpush1.bf16.msra.mxu0 %v5202
    %5855 = vmatprep.subr.bf16.mxu0 %v5207
    %5856 = vmatpush1.bf16.msra.mxu0 %v5206
    %5857 = vmatprep.subr.bf16.mxu0 %v5211
    %5858 = vmatpush1.bf16.msra.mxu0 %v5210
    %5859 = vmatprep.subr.bf16.mxu0 %v5215
    %5860 = vmatpush1.bf16.msra.mxu0 %v5214
    %5861 = vmatprep.subr.bf16.mxu0 %v5219
    %5862 = vmatpush1.bf16.msra.mxu0 %v5218
    %5863 = vmatprep.subr.bf16.mxu0 %v5223
    %5864 = vmatpush1.bf16.msra.mxu0 %v5222
    %5865 = vmatprep.subr.bf16.mxu0 %v5227
    %5866 = vmatpush1.bf16.msra.mxu0 %v5226
    %5867 = vmatprep.subr.bf16.mxu0 %v5231
    %5868 = vmatpush1.bf16.msra.mxu0 %v5230
    %5869 = vmatprep.subr.bf16.mxu0 %v5235
    %5870 = vmatpush1.bf16.msra.mxu0 %v5234
    %5871 = vmatprep.subr.bf16.mxu0 %v5239
    %5872 = vmatpush1.bf16.msra.mxu0 %v5238
    %5873 = vmatprep.subr.bf16.mxu0 %v5243
    %5874 = vmatpush1.bf16.msra.mxu0 %v5242
    %5875 = vmatprep.subr.bf16.mxu0 %v5247
    %5876 = vmatpush1.bf16.msra.mxu0 %v5246
    %5877 = vmatprep.subr.bf16.mxu0 %v5251
    %5878 = vmatpush1.bf16.msra.mxu0 %v5250
    %5879 = vmatprep.subr.bf16.mxu0 %v5255
    %5880 = vmatpush1.bf16.msra.mxu0 %v5254
    %5881 = vmatprep.subr.bf16.mxu0 %v5259
    %5882 = vmatpush1.bf16.msra.mxu0 %v5258
    %5883 = vmatprep.subr.bf16.mxu0 %v5263
    %5884 = vmatpush1.bf16.msra.mxu0 %v5262
    %5885 = vmatprep.mubr.bf16.mxu0 %v4107
    %5886 = vmatmul.mubr.bf16.gmra.mrb[0].mxu0 %v4106
    %v5887 = vpop.f32.mrb[0].mxu0
    %v5888 = vadd.f32 %v5847, %v5887
    %v5889 = vpop.f32.mrb[0].mxu0
    %v5890 = vadd.f32 %v5849, %v5889
    %v5891 = vpop.f32.mrb[0].mxu0
    %v5892 = vpop.f32.mrb[0].mxu0
    %5893 = vdwg.mxu0
    %5894 = vmatprep.subr.bf16.mxu0 %v5267
    %5895 = vmatpush1.bf16.msra.mxu0 %v5266
    %5896 = vmatprep.subr.bf16.mxu0 %v5271
    %5897 = vmatpush1.bf16.msra.mxu0 %v5270
    %5898 = vmatprep.subr.bf16.mxu0 %v5275
    %5899 = vmatpush1.bf16.msra.mxu0 %v5274
    %5900 = vmatprep.subr.bf16.mxu0 %v5279
    %5901 = vmatpush1.bf16.msra.mxu0 %v5278
    %5902 = vmatprep.subr.bf16.mxu0 %v5283
    %5903 = vmatpush1.bf16.msra.mxu0 %v5282
    %5904 = vmatprep.subr.bf16.mxu0 %v5287
    %5905 = vmatpush1.bf16.msra.mxu0 %v5286
    %5906 = vmatprep.subr.bf16.mxu0 %v5291
    %5907 = vmatpush1.bf16.msra.mxu0 %v5290
    %5908 = vmatprep.subr.bf16.mxu0 %v5295
    %5909 = vmatpush1.bf16.msra.mxu0 %v5294
    %5910 = vmatprep.subr.bf16.mxu0 %v5299
    %5911 = vmatpush1.bf16.msra.mxu0 %v5298
    %5912 = vmatprep.subr.bf16.mxu0 %v5303
    %5913 = vmatpush1.bf16.msra.mxu0 %v5302
    %5914 = vmatprep.subr.bf16.mxu0 %v5307
    %5915 = vmatpush1.bf16.msra.mxu0 %v5306
    %5916 = vmatprep.subr.bf16.mxu0 %v5311
    %5917 = vmatpush1.bf16.msra.mxu0 %v5310
    %5918 = vmatprep.subr.bf16.mxu0 %v5315
    %5919 = vmatpush1.bf16.msra.mxu0 %v5314
    %5920 = vmatprep.subr.bf16.mxu0 %v5319
    %5921 = vmatpush1.bf16.msra.mxu0 %v5318
    %5922 = vmatprep.subr.bf16.mxu0 %v5323
    %5923 = vmatpush1.bf16.msra.mxu0 %v5322
    %5924 = vmatprep.subr.bf16.mxu0 %v5327
    %5925 = vmatpush1.bf16.msra.mxu0 %v5326
    %5926 = vmatprep.mubr.bf16.mxu0 %v4109
    %5927 = vmatmul.mubr.bf16.gmra.mrb[0].mxu0 %v4108
    %v5928 = vpop.f32.mrb[0].mxu0
    %v5929 = vadd.f32 %v5888, %v5928
    %v5930 = vpop.f32.mrb[0].mxu0
    %v5931 = vadd.f32 %v5890, %v5930
    %v5932 = vpop.f32.mrb[0].mxu0
    %v5933 = vpop.f32.mrb[0].mxu0
    %5934 = vdwg.mxu0
    %5935 = vmatprep.subr.bf16.mxu0 %v5331
    %5936 = vmatpush1.bf16.msra.mxu0 %v5330
    %5937 = vmatprep.subr.bf16.mxu0 %v5335
    %5938 = vmatpush1.bf16.msra.mxu0 %v5334
    %5939 = vmatprep.subr.bf16.mxu0 %v5339
    %5940 = vmatpush1.bf16.msra.mxu0 %v5338
    %5941 = vmatprep.subr.bf16.mxu0 %v5343
    %5942 = vmatpush1.bf16.msra.mxu0 %v5342
    %5943 = vmatprep.subr.bf16.mxu0 %v5347
    %5944 = vmatpush1.bf16.msra.mxu0 %v5346
    %5945 = vmatprep.subr.bf16.mxu0 %v5351
    %5946 = vmatpush1.bf16.msra.mxu0 %v5350
    %5947 = vmatprep.subr.bf16.mxu0 %v5355
    %5948 = vmatpush1.bf16.msra.mxu0 %v5354
    %5949 = vmatprep.subr.bf16.mxu0 %v5359
    %5950 = vmatpush1.bf16.msra.mxu0 %v5358
    %5951 = vmatprep.subr.bf16.mxu0 %v5363
    %5952 = vmatpush1.bf16.msra.mxu0 %v5362
    %5953 = vmatprep.subr.bf16.mxu0 %v5367
    %5954 = vmatpush1.bf16.msra.mxu0 %v5366
    %5955 = vmatprep.subr.bf16.mxu0 %v5371
    %5956 = vmatpush1.bf16.msra.mxu0 %v5370
    %5957 = vmatprep.subr.bf16.mxu0 %v5375
    %5958 = vmatpush1.bf16.msra.mxu0 %v5374
    %5959 = vmatprep.subr.bf16.mxu0 %v5379
    %5960 = vmatpush1.bf16.msra.mxu0 %v5378
    %5961 = vmatprep.subr.bf16.mxu0 %v5383
    %5962 = vmatpush1.bf16.msra.mxu0 %v5382
    %5963 = vmatprep.subr.bf16.mxu0 %v5387
    %5964 = vmatpush1.bf16.msra.mxu0 %v5386
    %5965 = vmatprep.subr.bf16.mxu0 %v5391
    %5966 = vmatpush1.bf16.msra.mxu0 %v5390
    %5967 = vmatprep.mubr.bf16.mxu0 %v4111
    %5968 = vmatmul.mubr.bf16.gmra.mrb[0].mxu0 %v4110
    %v5969 = vpop.f32.mrb[0].mxu0
    %v5970 = vadd.f32 %v5929, %v5969
    %v5971 = vpop.f32.mrb[0].mxu0
    %v5972 = vadd.f32 %v5931, %v5971
    %v5973 = vpop.f32.mrb[0].mxu0
    %v5974 = vpop.f32.mrb[0].mxu0
    %5975 = vdwg.mxu0
    %v5976 = vmax.f32 %v5806, 0.0
    %v5977 = vmax.f32 %v5808, 0.0
    %v5978 = vmax.f32 %v5970, 0.0
    %v5979 = vmax.f32 %v5972, 0.0
    %v5980 = vpack.c.bf16 %v5976, %v5976
    %v5981 = vpack.c.bf16 %v5977, %v5977
    %v5982 = vpack.c.bf16 %v5978, %v5978
    %v5983 = vpack.c.bf16 %v5979, %v5979
    %v5984 = vld [vmem:[#allocation2] sm:$0xf]
    %v5985 = vld [vmem:[#allocation2 + $0x4] sm:$0xf]
    %v5986 = vld [vmem:[#allocation2 + $0x8] sm:$0xf]
    %v5987 = vld [vmem:[#allocation2 + $0xc] sm:$0xf]
    %v5988 = vld [vmem:[#allocation2 + $0x10] sm:$0xf]
    %v5989 = vld [vmem:[#allocation2 + $0x14] sm:$0xf]
    %v5990 = vld [vmem:[#allocation2 + $0x18] sm:$0xf]
    %v5991 = vld [vmem:[#allocation2 + $0x1c] sm:$0xf]
    %v5992 = vld [vmem:[#allocation2 + $0x20] sm:$0xf]
    %v5993 = vld [vmem:[#allocation2 + $0x24] sm:$0xf]
    %v5994 = vld [vmem:[#allocation2 + $0x28] sm:$0xf]
    %v5995 = vld [vmem:[#allocation2 + $0x2c] sm:$0xf]
    %v5996 = vld [vmem:[#allocation2 + $0x30] sm:$0xf]
    %v5997 = vld [vmem:[#allocation2 + $0x34] sm:$0xf]
    %v5998 = vld [vmem:[#allocation2 + $0x38] sm:$0xf]
    %v5999 = vld [vmem:[#allocation2 + $0x3c] sm:$0xf]
    %v6000 = vld [vmem:[#allocation2 + $0x40] sm:$0xf]
    %v6001 = vld [vmem:[#allocation2 + $0x44] sm:$0xf]
    %v6002 = vld [vmem:[#allocation2 + $0x48] sm:$0xf]
    %v6003 = vld [vmem:[#allocation2 + $0x4c] sm:$0xf]
    %v6004 = vld [vmem:[#allocation2 + $0x50] sm:$0xf]
    %v6005 = vld [vmem:[#allocation2 + $0x54] sm:$0xf]
    %v6006 = vld [vmem:[#allocation2 + $0x58] sm:$0xf]
    %v6007 = vld [vmem:[#allocation2 + $0x5c] sm:$0xf]
    %v6008 = vld [vmem:[#allocation2 + $0x60] sm:$0xf]
    %v6009 = vld [vmem:[#allocation2 + $0x64] sm:$0xf]
    %v6010 = vld [vmem:[#allocation2 + $0x68] sm:$0xf]
    %v6011 = vld [vmem:[#allocation2 + $0x6c] sm:$0xf]
    %v6012 = vld [vmem:[#allocation2 + $0x70] sm:$0xf]
    %v6013 = vld [vmem:[#allocation2 + $0x74] sm:$0xf]
    %v6014 = vld [vmem:[#allocation2 + $0x78] sm:$0xf]
    %v6015 = vld [vmem:[#allocation2 + $0x7c] sm:$0xf]
    %v6016 = vld [vmem:[#allocation2 + $0x80] sm:$0xf]
    %v6017 = vld [vmem:[#allocation2 + $0x84] sm:$0xf]
    %v6018 = vld [vmem:[#allocation2 + $0x88] sm:$0xf]
    %v6019 = vld [vmem:[#allocation2 + $0x8c] sm:$0xf]
    %v6020 = vld [vmem:[#allocation2 + $0x90] sm:$0xf]
    %v6021 = vld [vmem:[#allocation2 + $0x94] sm:$0xf]
    %v6022 = vld [vmem:[#allocation2 + $0x98] sm:$0xf]
    %v6023 = vld [vmem:[#allocation2 + $0x9c] sm:$0xf]
    %v6024 = vld [vmem:[#allocation2 + $0xa0] sm:$0xf]
    %v6025 = vld [vmem:[#allocation2 + $0xa4] sm:$0xf]
    %v6026 = vld [vmem:[#allocation2 + $0xa8] sm:$0xf]
    %v6027 = vld [vmem:[#allocation2 + $0xac] sm:$0xf]
    %v6028 = vld [vmem:[#allocation2 + $0xb0] sm:$0xf]
    %v6029 = vld [vmem:[#allocation2 + $0xb4] sm:$0xf]
    %v6030 = vld [vmem:[#allocation2 + $0xb8] sm:$0xf]
    %v6031 = vld [vmem:[#allocation2 + $0xbc] sm:$0xf]
    %v6032 = vld [vmem:[#allocation2 + $0xc0] sm:$0xf]
    %v6033 = vld [vmem:[#allocation2 + $0xc4] sm:$0xf]
    %v6034 = vld [vmem:[#allocation2 + $0xc8] sm:$0xf]
    %v6035 = vld [vmem:[#allocation2 + $0xcc] sm:$0xf]
    %v6036 = vld [vmem:[#allocation2 + $0xd0] sm:$0xf]
    %v6037 = vld [vmem:[#allocation2 + $0xd4] sm:$0xf]
    %v6038 = vld [vmem:[#allocation2 + $0xd8] sm:$0xf]
    %v6039 = vld [vmem:[#allocation2 + $0xdc] sm:$0xf]
    %v6040 = vld [vmem:[#allocation2 + $0xe0] sm:$0xf]
    %v6041 = vld [vmem:[#allocation2 + $0xe4] sm:$0xf]
    %v6042 = vld [vmem:[#allocation2 + $0xe8] sm:$0xf]
    %v6043 = vld [vmem:[#allocation2 + $0xec] sm:$0xf]
    %v6044 = vld [vmem:[#allocation2 + $0xf0] sm:$0xf]
    %v6045 = vld [vmem:[#allocation2 + $0xf4] sm:$0xf]
    %v6046 = vld [vmem:[#allocation2 + $0xf8] sm:$0xf]
    %v6047 = vld [vmem:[#allocation2 + $0xfc] sm:$0xf]
    %v6112 = vunpack.c.l.b16 %v5984
    %v6113 = vunpack.c.l.b16 %v5985
    %v6114 = vunpack.c.l.b16 %v5986
    %v6115 = vunpack.c.l.b16 %v5987
    %v6116 = vunpack.c.l.b16 %v5988
    %v6117 = vunpack.c.l.b16 %v5989
    %v6118 = vunpack.c.l.b16 %v5990
    %v6119 = vunpack.c.l.b16 %v5991
    %v6120 = vunpack.c.l.b16 %v5992
    %v6121 = vunpack.c.l.b16 %v5993
    %v6122 = vunpack.c.l.b16 %v5994
    %v6123 = vunpack.c.l.b16 %v5995
    %v6124 = vunpack.c.l.b16 %v5996
    %v6125 = vunpack.c.l.b16 %v5997
    %v6126 = vunpack.c.l.b16 %v5998
    %v6127 = vunpack.c.l.b16 %v5999
    %v6128 = vunpack.c.l.b16 %v6000
    %v6129 = vunpack.c.l.b16 %v6001
    %v6130 = vunpack.c.l.b16 %v6002
    %v6131 = vunpack.c.l.b16 %v6003
    %v6132 = vunpack.c.l.b16 %v6004
    %v6133 = vunpack.c.l.b16 %v6005
    %v6134 = vunpack.c.l.b16 %v6006
    %v6135 = vunpack.c.l.b16 %v6007
    %v6136 = vunpack.c.l.b16 %v6008
    %v6137 = vunpack.c.l.b16 %v6009
    %v6138 = vunpack.c.l.b16 %v6010
    %v6139 = vunpack.c.l.b16 %v6011
    %v6140 = vunpack.c.l.b16 %v6012
    %v6141 = vunpack.c.l.b16 %v6013
    %v6142 = vunpack.c.l.b16 %v6014
    %v6143 = vunpack.c.l.b16 %v6015
    %v6144 = vunpack.c.l.b16 %v6016
    %v6145 = vunpack.c.l.b16 %v6017
    %v6146 = vunpack.c.l.b16 %v6018
    %v6147 = vunpack.c.l.b16 %v6019
    %v6148 = vunpack.c.l.b16 %v6020
    %v6149 = vunpack.c.l.b16 %v6021
    %v6150 = vunpack.c.l.b16 %v6022
    %v6151 = vunpack.c.l.b16 %v6023
    %v6152 = vunpack.c.l.b16 %v6024
    %v6153 = vunpack.c.l.b16 %v6025
    %v6154 = vunpack.c.l.b16 %v6026
    %v6155 = vunpack.c.l.b16 %v6027
    %v6156 = vunpack.c.l.b16 %v6028
    %v6157 = vunpack.c.l.b16 %v6029
    %v6158 = vunpack.c.l.b16 %v6030
    %v6159 = vunpack.c.l.b16 %v6031
    %v6160 = vunpack.c.l.b16 %v6032
    %v6161 = vunpack.c.l.b16 %v6033
    %v6162 = vunpack.c.l.b16 %v6034
    %v6163 = vunpack.c.l.b16 %v6035
    %v6164 = vunpack.c.l.b16 %v6036
    %v6165 = vunpack.c.l.b16 %v6037
    %v6166 = vunpack.c.l.b16 %v6038
    %v6167 = vunpack.c.l.b16 %v6039
    %v6168 = vunpack.c.l.b16 %v6040
    %v6169 = vunpack.c.l.b16 %v6041
    %v6170 = vunpack.c.l.b16 %v6042
    %v6171 = vunpack.c.l.b16 %v6043
    %v6172 = vunpack.c.l.b16 %v6044
    %v6173 = vunpack.c.l.b16 %v6045
    %v6174 = vunpack.c.l.b16 %v6046
    %v6175 = vunpack.c.l.b16 %v6047
    %v6176 = vpack.c.b16 %v6113, %v6112
    %v6177 = vpack.c.b16 %v6115, %v6114
    %v6178 = vpack.c.b16 %v6117, %v6116
    %v6179 = vpack.c.b16 %v6119, %v6118
    %v6180 = vpack.c.b16 %v6121, %v6120
    %v6181 = vpack.c.b16 %v6123, %v6122
    %v6182 = vpack.c.b16 %v6125, %v6124
    %v6183 = vpack.c.b16 %v6127, %v6126
    %v6184 = vpack.c.b16 %v6129, %v6128
    %v6185 = vpack.c.b16 %v6131, %v6130
    %v6186 = vpack.c.b16 %v6133, %v6132
    %v6187 = vpack.c.b16 %v6135, %v6134
    %v6188 = vpack.c.b16 %v6137, %v6136
    %v6189 = vpack.c.b16 %v6139, %v6138
    %v6190 = vpack.c.b16 %v6141, %v6140
    %v6191 = vpack.c.b16 %v6143, %v6142
    %v6192 = vpack.c.b16 %v6145, %v6144
    %v6193 = vpack.c.b16 %v6147, %v6146
    %v6194 = vpack.c.b16 %v6149, %v6148
    %v6195 = vpack.c.b16 %v6151, %v6150
    %v6196 = vpack.c.b16 %v6153, %v6152
    %v6197 = vpack.c.b16 %v6155, %v6154
    %v6198 = vpack.c.b16 %v6157, %v6156
    %v6199 = vpack.c.b16 %v6159, %v6158
    %v6200 = vpack.c.b16 %v6161, %v6160
    %v6201 = vpack.c.b16 %v6163, %v6162
    %v6202 = vpack.c.b16 %v6165, %v6164
    %v6203 = vpack.c.b16 %v6167, %v6166
    %v6204 = vpack.c.b16 %v6169, %v6168
    %v6205 = vpack.c.b16 %v6171, %v6170
    %v6206 = vpack.c.b16 %v6173, %v6172
    %v6207 = vpack.c.b16 %v6175, %v6174
    %6240 = vmatprep.subr.bf16.mxu0 0
    %6241 = vmatpush1.bf16.msra.mxu0 %v6176
    %6242 = vmatprep.subr.bf16.mxu0 0
    %6243 = vmatpush1.bf16.msra.mxu0 %v6177
    %6244 = vmatprep.subr.bf16.mxu0 0
    %6245 = vmatpush1.bf16.msra.mxu0 %v6178
    %6246 = vmatprep.subr.bf16.mxu0 0
    %6247 = vmatpush1.bf16.msra.mxu0 %v6179
    %6248 = vmatprep.subr.bf16.mxu0 0
    %6249 = vmatpush1.bf16.msra.mxu0 %v6180
    %6250 = vmatprep.subr.bf16.mxu0 0
    %6251 = vmatpush1.bf16.msra.mxu0 %v6181
    %6252 = vmatprep.subr.bf16.mxu0 0
    %6253 = vmatpush1.bf16.msra.mxu0 %v6182
    %6254 = vmatprep.subr.bf16.mxu0 0
    %6255 = vmatpush1.bf16.msra.mxu0 %v6183
    %6256 = vmatprep.subr.bf16.mxu0 0
    %6257 = vmatpush1.bf16.msra.mxu0 %v6184
    %6258 = vmatprep.subr.bf16.mxu0 0
    %6259 = vmatpush1.bf16.msra.mxu0 %v6185
    %6260 = vmatprep.subr.bf16.mxu0 0
    %6261 = vmatpush1.bf16.msra.mxu0 %v6186
    %6262 = vmatprep.subr.bf16.mxu0 0
    %6263 = vmatpush1.bf16.msra.mxu0 %v6187
    %6264 = vmatprep.subr.bf16.mxu0 0
    %6265 = vmatpush1.bf16.msra.mxu0 %v6188
    %6266 = vmatprep.subr.bf16.mxu0 0
    %6267 = vmatpush1.bf16.msra.mxu0 %v6189
    %6268 = vmatprep.subr.bf16.mxu0 0
    %6269 = vmatpush1.bf16.msra.mxu0 %v6190
    %6270 = vmatprep.subr.bf16.mxu0 0
    %6271 = vmatpush1.bf16.msra.mxu0 %v6191
    %6272 = vmatprep.mubr.bf16.mxu0 %v5981
    %6273 = vmatmul.mubr.bf16.gmra.mrb[0].mxu0 %v5980
    %v6274 = vpop.f32.mrb[0].mxu0
    %v6275 = vadd.f32 0.0, %v6274
    %v6276 = vpop.f32.mrb[0].mxu0
    %v6277 = vpop.f32.mrb[0].mxu0
    %v6278 = vpop.f32.mrb[0].mxu0
    %6279 = vdwg.mxu0
    %6280 = vmatprep.subr.bf16.mxu0 0
    %6281 = vmatpush1.bf16.msra.mxu0 %v6192
    %6282 = vmatprep.subr.bf16.mxu0 0
    %6283 = vmatpush1.bf16.msra.mxu0 %v6193
    %6284 = vmatprep.subr.bf16.mxu0 0
    %6285 = vmatpush1.bf16.msra.mxu0 %v6194
    %6286 = vmatprep.subr.bf16.mxu0 0
    %6287 = vmatpush1.bf16.msra.mxu0 %v6195
    %6288 = vmatprep.subr.bf16.mxu0 0
    %6289 = vmatpush1.bf16.msra.mxu0 %v6196
    %6290 = vmatprep.subr.bf16.mxu0 0
    %6291 = vmatpush1.bf16.msra.mxu0 %v6197
    %6292 = vmatprep.subr.bf16.mxu0 0
    %6293 = vmatpush1.bf16.msra.mxu0 %v6198
    %6294 = vmatprep.subr.bf16.mxu0 0
    %6295 = vmatpush1.bf16.msra.mxu0 %v6199
    %6296 = vmatprep.subr.bf16.mxu0 0
    %6297 = vmatpush1.bf16.msra.mxu0 %v6200
    %6298 = vmatprep.subr.bf16.mxu0 0
    %6299 = vmatpush1.bf16.msra.mxu0 %v6201
    %6300 = vmatprep.subr.bf16.mxu0 0
    %6301 = vmatpush1.bf16.msra.mxu0 %v6202
    %6302 = vmatprep.subr.bf16.mxu0 0
    %6303 = vmatpush1.bf16.msra.mxu0 %v6203
    %6304 = vmatprep.subr.bf16.mxu0 0
    %6305 = vmatpush1.bf16.msra.mxu0 %v6204
    %6306 = vmatprep.subr.bf16.mxu0 0
    %6307 = vmatpush1.bf16.msra.mxu0 %v6205
    %6308 = vmatprep.subr.bf16.mxu0 0
    %6309 = vmatpush1.bf16.msra.mxu0 %v6206
    %6310 = vmatprep.subr.bf16.mxu0 0
    %6311 = vmatpush1.bf16.msra.mxu0 %v6207
    %6312 = vmatprep.mubr.bf16.mxu0 %v5983
    %6313 = vmatmul.mubr.bf16.gmra.mrb[0].mxu0 %v5982
    %v6314 = vpop.f32.mrb[0].mxu0
    %v6315 = vadd.f32 %v6275, %v6314
    %v6316 = vpop.f32.mrb[0].mxu0
    %v6317 = vpop.f32.mrb[0].mxu0
    %v6318 = vpop.f32.mrb[0].mxu0
    %6319 = vdwg.mxu0
    %v6320 = vmax.f32 %v6315, 0.0
    %v6321 = vpack.c.bf16 %v6320, %v6320
    %v6322 = vld [vmem:[%s6] sm:$0xf]
    %v6323 = vld [vmem:[%s6 + $0x4] sm:$0xf]
    %v6324 = vld [vmem:[%s6 + $0x8] sm:$0xf]
    %v6325 = vld [vmem:[%s6 + $0xc] sm:$0xf]
    %v6326 = vld [vmem:[%s6 + $0x10] sm:$0xf]
    %v6327 = vld [vmem:[%s6 + $0x14] sm:$0xf]
    %v6328 = vld [vmem:[%s6 + $0x18] sm:$0xf]
    %v6329 = vld [vmem:[%s6 + $0x1c] sm:$0xf]
    %v6330 = vld [vmem:[%s6 + $0x20] sm:$0xf]
    %v6331 = vld [vmem:[%s6 + $0x24] sm:$0xf]
    %v6332 = vld [vmem:[%s6 + $0x28] sm:$0xf]
    %v6333 = vld [vmem:[%s6 + $0x2c] sm:$0xf]
    %v6334 = vld [vmem:[%s6 + $0x30] sm:$0xf]
    %v6335 = vld [vmem:[%s6 + $0x34] sm:$0xf]
    %v6336 = vld [vmem:[%s6 + $0x38] sm:$0xf]
    %v6337 = vld [vmem:[%s6 + $0x3c] sm:$0xf]
    %v6354 = vunpack.c.l.b16 %v6322
    %v6355 = vunpack.c.l.b16 %v6323
    %v6356 = vunpack.c.l.b16 %v6324
    %v6357 = vunpack.c.l.b16 %v6325
    %v6358 = vunpack.c.l.b16 %v6326
    %v6359 = vunpack.c.l.b16 %v6327
    %v6360 = vunpack.c.l.b16 %v6328
    %v6361 = vunpack.c.l.b16 %v6329
    %v6362 = vunpack.c.l.b16 %v6330
    %v6363 = vunpack.c.l.b16 %v6331
    %v6364 = vunpack.c.l.b16 %v6332
    %v6365 = vunpack.c.l.b16 %v6333
    %v6366 = vunpack.c.l.b16 %v6334
    %v6367 = vunpack.c.l.b16 %v6335
    %v6368 = vunpack.c.l.b16 %v6336
    %v6369 = vunpack.c.l.b16 %v6337
    %v6370 = vpack.c.b16 %v6355, %v6354
    %v6371 = vpack.c.b16 %v6357, %v6356
    %v6372 = vpack.c.b16 %v6359, %v6358
    %v6373 = vpack.c.b16 %v6361, %v6360
    %v6374 = vpack.c.b16 %v6363, %v6362
    %v6375 = vpack.c.b16 %v6365, %v6364
    %v6376 = vpack.c.b16 %v6367, %v6366
    %v6377 = vpack.c.b16 %v6369, %v6368
    %6386 = vmatprep.subr.bf16.mxu0 0
    %6387 = vmatpush1.bf16.msra.mxu0 %v6370
    %6388 = vmatprep.subr.bf16.mxu0 0
    %6389 = vmatpush1.bf16.msra.mxu0 %v6371
    %6390 = vmatprep.subr.bf16.mxu0 0
    %6391 = vmatpush1.bf16.msra.mxu0 %v6372
    %6392 = vmatprep.subr.bf16.mxu0 0
    %6393 = vmatpush1.bf16.msra.mxu0 %v6373
    %6394 = vmatprep.subr.bf16.mxu0 0
    %6395 = vmatpush1.bf16.msra.mxu0 %v6374
    %6396 = vmatprep.subr.bf16.mxu0 0
    %6397 = vmatpush1.bf16.msra.mxu0 %v6375
    %6398 = vmatprep.subr.bf16.mxu0 0
    %6399 = vmatpush1.bf16.msra.mxu0 %v6376
    %6400 = vmatprep.subr.bf16.mxu0 0
    %6401 = vmatpush1.bf16.msra.mxu0 %v6377
    %6402 = vmatprep.subr.bf16.mxu0 0
    %6403 = vmatpush1.bf16.msra.mxu0 0
    %6404 = vmatprep.subr.bf16.mxu0 0
    %6405 = vmatpush1.bf16.msra.mxu0 0
    %6406 = vmatprep.subr.bf16.mxu0 0
    %6407 = vmatpush1.bf16.msra.mxu0 0
    %6408 = vmatprep.subr.bf16.mxu0 0
    %6409 = vmatpush1.bf16.msra.mxu0 0
    %6410 = vmatprep.subr.bf16.mxu0 0
    %6411 = vmatpush1.bf16.msra.mxu0 0
    %6412 = vmatprep.subr.bf16.mxu0 0
    %6413 = vmatpush1.bf16.msra.mxu0 0
    %6414 = vmatprep.subr.bf16.mxu0 0
    %6415 = vmatpush1.bf16.msra.mxu0 0
    %6416 = vmatprep.subr.bf16.mxu0 0
    %6417 = vmatpush1.bf16.msra.mxu0 0
    %6418 = vmatprep.mubr.bf16.mxu0 0
    %6419 = vmatmul.mubr.bf16.gmra.mrb[0].mxu0 %v6321
    %v6420 = vpop.f32.mrb[0].mxu0
    %v6421 = vadd.f32 0.0, %v6420
    %v6422 = vpop.f32.mrb[0].mxu0
    %v6423 = vpop.f32.mrb[0].mxu0
    %v6424 = vpop.f32.mrb[0].mxu0
    %6425 = vdwg.mxu0
    %v6426 = vmax.f32 %v6421, 0.0
    %v6427 = vpack.c.bf16 %v6426, %v6426
    %v6428 = vld [vmem:[%s7] sm:$0xf]
    %v6429 = vld [vmem:[%s7 + $0x4] sm:$0xf]
    %v6430 = vld [vmem:[%s7 + $0x8] sm:$0xf]
    %v6431 = vld [vmem:[%s7 + $0xc] sm:$0xf]
    %v6432 = vld [vmem:[%s7 + $0x10] sm:$0xf]
    %v6433 = vld [vmem:[%s7 + $0x14] sm:$0xf]
    %v6434 = vld [vmem:[%s7 + $0x18] sm:$0xf]
    %v6435 = vld [vmem:[%s7 + $0x1c] sm:$0xf]
    %v6444 = vunpack.c.l.b16 %v6428
    %v6445 = vunpack.c.l.b16 %v6429
    %v6446 = vunpack.c.l.b16 %v6430
    %v6447 = vunpack.c.l.b16 %v6431
    %v6448 = vunpack.c.l.b16 %v6432
    %v6449 = vunpack.c.l.b16 %v6433
    %v6450 = vunpack.c.l.b16 %v6434
    %v6451 = vunpack.c.l.b16 %v6435
    %v6452 = vpack.c.b16 %v6445, %v6444
    %v6453 = vpack.c.b16 %v6447, %v6446
    %v6454 = vpack.c.b16 %v6449, %v6448
    %v6455 = vpack.c.b16 %v6451, %v6450
    %vm6460 = vcmask 523264
    %v6462 = vsel %vm6460, %v6427, 0
    %6464 = vmatprep.subr.bf16.mxu0 0
    %6465 = vmatpush1.bf16.msra.mxu0 %v6452
    %6466 = vmatprep.subr.bf16.mxu0 0
    %6467 = vmatpush1.bf16.msra.mxu0 %v6453
    %6468 = vmatprep.subr.bf16.mxu0 0
    %6469 = vmatpush1.bf16.msra.mxu0 %v6454
    %6470 = vmatprep.subr.bf16.mxu0 0
    %6471 = vmatpush1.bf16.msra.mxu0 %v6455
    %6472 = vmatprep.subr.bf16.mxu0 0
    %6473 = vmatpush1.bf16.msra.mxu0 0
    %6474 = vmatprep.subr.bf16.mxu0 0
    %6475 = vmatpush1.bf16.msra.mxu0 0
    %6476 = vmatprep.subr.bf16.mxu0 0
    %6477 = vmatpush1.bf16.msra.mxu0 0
    %6478 = vmatprep.subr.bf16.mxu0 0
    %6479 = vmatpush1.bf16.msra.mxu0 0
    %6480 = vmatprep.subr.bf16.mxu0 0
    %6481 = vmatpush1.bf16.msra.mxu0 0
    %6482 = vmatprep.subr.bf16.mxu0 0
    %6483 = vmatpush1.bf16.msra.mxu0 0
    %6484 = vmatprep.subr.bf16.mxu0 0
    %6485 = vmatpush1.bf16.msra.mxu0 0
    %6486 = vmatprep.subr.bf16.mxu0 0
    %6487 = vmatpush1.bf16.msra.mxu0 0
    %6488 = vmatprep.subr.bf16.mxu0 0
    %6489 = vmatpush1.bf16.msra.mxu0 0
    %6490 = vmatprep.subr.bf16.mxu0 0
    %6491 = vmatpush1.bf16.msra.mxu0 0
    %6492 = vmatprep.subr.bf16.mxu0 0
    %6493 = vmatpush1.bf16.msra.mxu0 0
    %6494 = vmatprep.subr.bf16.mxu0 0
    %6495 = vmatpush1.bf16.msra.mxu0 0
    %6496 = vmatprep.mubr.bf16.mxu0 0
    %6497 = vmatmul.mubr.bf16.gmra.mrb[0].mxu0 %v6462
    %v6498 = vpop.f32.mrb[0].mxu0
    %v6499 = vadd.f32 0.0, %v6498
    %v6500 = vpop.f32.mrb[0].mxu0
    %v6501 = vpop.f32.mrb[0].mxu0
    %v6502 = vpop.f32.mrb[0].mxu0
    %6503 = vdwg.mxu0
    %vm6504 = vcmask 74752
    %6505 = vst.msk [vmem:[#allocation5] sm:$0x3] %vm6504, %v6499
    // Predicated region
    $region38: #{lighter_forward.3} parent=1 // pred_check
      _
    $region39: #{lighter_forward.3} parent=1 // pred_check_branch
      %6507 = sbr.rel (0) target = $region41
    $region40: #{lighter_forward.3} parent=1 // pred_region
      %s6509 = ssub.s32 32, 32
      %6510 = vsyncadd [#allocation4], %s6509
      %s6512 = sshll.u32 [#allocation5], 4
      %s6513 = int_to_ptr.vmem [resolvable:$true] %s6512
      %6515 = dma.vmem_to_hbm [thread:$0]  %s6513, 32, %s8, [#allocation4]
    $region41: #{lighter_forward.3} parent=1 // pred_fallthru
      _
    // Predicated region
    $region42: #{lighter_forward.3} parent=1 // pred_check
      _
    $region43: #{lighter_forward.3} parent=1 // pred_check_branch
      %6517 = sbr.rel (0) target = $region45
    $region44: #{lighter_forward.3} parent=1 // pred_region
      %6518 = dma.done [#allocation4], 32
    $region45: #{lighter_forward.3} parent=1 // pred_fallthru
      _
    %6519 = vsyncpa [#allocation3], 1
    %6520 = vsyncpa [#allocation4], 1

</llo_original>
